<compile_context>
chip_gen: v7x
topology: tpu7x:2x2x1
jax: 0.10.0
libtpu: 0.0.40
codegen_flags: <defaults>
</compile_context>

<pallas_src>
import functools

import jax
import jax.numpy as jnp
from jax.experimental import pallas as pl
from jax.experimental.pallas import tpu as pltpu


# ----------------------------------------------------------------------------
# Fused RDB kernel factory
# ----------------------------------------------------------------------------
def _make_rdb_kernel(nb, in_dim, gr, H, W, tile_h, hs):
    """Fused RDB kernel for fixed static shapes.

    Scratch layout:
      feat : (tile_h + 2*nb, W + 2, Ctot) bf16 -- padded, resident dense features
    """
    halo = nb                       # receptive field grows 1 row per 3x3 layer
    hb = tile_h + 2 * halo          # buffered rows (tile + halo)
    ctot = in_dim + nb * gr

    def kernel(*refs):
        xp_ref, xc_ref, xn_ref = refs[0], refs[1], refs[2]
        layer_refs = refs[3:3 + 2 * nb]          # interleaved (w_i, b_i)
        w1_ref = refs[3 + 2 * nb]                # (Ctot, in_dim) bf16
        b1_ref = refs[4 + 2 * nb]                # (1, in_dim)    f32
        o_ref = refs[5 + 2 * nb]                 # (1, tile_h, W, in_dim)
        feat = refs[6 + 2 * nb]                  # VMEM scratch (bf16)

        t = pl.program_id(1)
        num_t = pl.num_programs(1)

        # ---- zero ONLY the two conv-pad columns (interior is fully rewritten) --
        feat[:, 0:1, :] = jnp.zeros((hb, 1, ctot), feat.dtype)
        feat[:, W + 1:W + 2, :] = jnp.zeros((hb, 1, ctot), feat.dtype)

        # ---- stage x (+ halo rows) into the feature buffer ----------------------
        feat[halo:halo + tile_h, 1:W + 1, 0:in_dim] = xc_ref[0].astype(feat.dtype)
        prev_ok = (t > 0).astype(jnp.float32)          # rows < 0 -> conv zero-pad
        feat[0:halo, 1:W + 1, 0:in_dim] = (
            xp_ref[0, hs - halo:hs, :, :] * prev_ok).astype(feat.dtype)
        next_ok = (t < num_t - 1).astype(jnp.float32)  # rows >= H -> conv zero-pad
        feat[halo + tile_h:hb, 1:W + 1, 0:in_dim] = (
            xn_ref[0, 0:halo, :, :] * next_ok).astype(feat.dtype)

        # ---- dense layers: 3x3 conv as 9 shifted MXU matmuls + bias + ReLU -----
        for i in range(nb):
            cin = in_dim + i * gr
            rs, re = i + 1, hb - 1 - i            # layer-i output rows we need
            nrows = re - rs
            w_ref = layer_refs[2 * i]             # (9*cin, gr) bf16
            b_ref = layer_refs[2 * i + 1]         # (1, gr)     f32

            acc = None
            for kh in range(3):
                for kw in range(3):
                    k = kh * 3 + kw
                    lhs = feat[rs - 1 + kh:rs - 1 + kh + nrows, kw:kw + W, 0:cin]
                    part = jax.lax.dot_general(
                        lhs, w_ref[k * cin:(k + 1) * cin, :],
                        (((2,), (0,)), ((), ())),
                        preferred_element_type=jnp.float32)   # (nrows, W, gr)
                    acc = part if acc is None else acc + part
            acc = jnp.maximum(acc + b_ref[0][None, None, :], 0.0)

            # Rows outside the image must stay exactly zero: they act as the next
            # layer's conv zero padding (bias+ReLU would otherwise make them !=0).
            row_img = (jax.lax.broadcasted_iota(jnp.int32, (nrows, 1, 1), 0)
                       + (t * tile_h - halo + rs))
            in_img = ((row_img >= 0) & (row_img < H)).astype(acc.dtype)
            acc = acc * in_img

            c0 = in_dim + i * gr
            feat[rs:re, 1:W + 1, c0:c0 + gr] = acc.astype(feat.dtype)

        # ---- 1x1 projection + bias + residual -----------------------------------
        fin = feat[halo:halo + tile_h, 1:W + 1, 0:ctot]          # bf16
        y = jax.lax.dot_general(
            fin, w1_ref[...], (((2,), (0,)), ((), ())),
            preferred_element_type=jnp.float32)                  # (tile_h, W, in_dim)
        y = y + b1_ref[0][None, None, :] + xc_ref[0].astype(jnp.float32)
        o_ref[0] = y.astype(o_ref.dtype)

    return kernel


# ----------------------------------------------------------------------------
# VMEM budgeting / tiling helpers (generation-aware)
# ----------------------------------------------------------------------------
def _rup(v, m):
    return (v + m - 1) // m * m


def _vmem_capacity_bytes():
    try:
        cap = getattr(pltpu.get_tpu_info(), "vmem_capacity_bytes", None)
        if cap:
            return int(cap)
    except Exception:
        pass
    return 64 * 1024 * 1024      # conservative fallback (v7x per-core VMEM)


def _halo_block_rows(tile_h, halo):
    """Smallest divisor of tile_h that still covers the conv halo."""
    for d in range(1, tile_h + 1):
        if tile_h % d == 0 and d >= halo:
            return d
    return tile_h


def _estimate_vmem_bytes(tile_h, nb, in_dim, gr, W, x_itemsize):
    """Rough per-grid-step VMEM footprint (layout-padded, double-buffered)."""
    halo = nb
    hb = tile_h + 2 * halo
    hs = _halo_block_rows(tile_h, halo)
    ctot = in_dim + nb * gr
    lane = 128
    c_pad = _rup(in_dim, lane)
    ctot_pad = _rup(ctot, lane)
    gr_pad = _rup(gr, lane)
    wp = _rup(W + 2, 16)
    w8 = _rup(W, 8)
    feat = hb * wp * ctot_pad * 2                       # bf16 resident features
    xc = 2 * tile_h * w8 * c_pad * x_itemsize           # center tile (2 buffers)
    xh = 2 * 2 * hs * w8 * c_pad * x_itemsize           # two halo inputs
    out = 2 * tile_h * w8 * c_pad * x_itemsize          # output tile
    fin = tile_h * w8 * ctot_pad * 2                    # 1x1 lhs slab (transient)
    acc = 2 * hb * w8 * gr_pad * 4                      # f32 layer accumulator/tmp
    wts = sum(2 * _rup(9 * (in_dim + i * gr), 16) * gr_pad * 2 for i in range(nb))
    wts += 2 * _rup(ctot, 16) * c_pad * 2
    return feat + xc + xh + out + fin + acc + wts


def _pick_tile_h(H, nb, in_dim, gr, W, x_itemsize, budget):
    """Largest divisor of H (>= nb) whose estimated VMEM fits the budget."""
    divisors = [d for d in range(1, H + 1) if H % d == 0 and d >= nb]
    if not divisors:
        return H
    best = divisors[0]          # best-effort fallback: smallest legal tile
    for d in divisors:          # ascending -> keep the largest that fits
        if _estimate_vmem_bytes(d, nb, in_dim, gr, W, x_itemsize) <= budget:
            best = d
    return best


# ----------------------------------------------------------------------------
# Host wrappers
# ----------------------------------------------------------------------------
def denoise_rdb_forward_nhwc(params, x_nhwc, tile_h=None):
    """Fused DenoiseRDB forward on an NHWC tensor."""
    N, H, W, C = x_nhwc.shape
    nb = len(params["layers"])
    gr = params["layers"][0][0].shape[-1]
    ctot = C + nb * gr
    halo = nb

    vmem_cap = _vmem_capacity_bytes()
    vmem_limit = max(32 * 1024 * 1024, int(vmem_cap * 0.8))
    if tile_h is None:
        tile_h = _pick_tile_h(H, nb, C, gr, W, x_nhwc.dtype.itemsize,
                              int(vmem_limit * 0.85))
    assert H % tile_h == 0, "H must be divisible by tile_h"
    assert tile_h >= halo, "tile_h must cover the conv halo (>= nb_layers)"
    num_t = H // tile_h
    hb = tile_h + 2 * halo
    hs = _halo_block_rows(tile_h, halo)     # halo input block rows
    r = tile_h // hs                        # hs-blocks per tile
    nblk = H // hs                          # hs-blocks in the whole image

    # x is passed three times: prev-halo / current tile / next-halo.  The halo
    # views use small hs-row blocks (clamped at the image boundary; masked in-kernel).
    x_block = (1, tile_h, W, C)
    h_block = (1, hs, W, C)
    in_specs = [
        pl.BlockSpec(h_block, lambda n, t: (n, jnp.maximum(t * r - 1, 0), 0, 0)),
        pl.BlockSpec(x_block, lambda n, t: (n, t, 0, 0)),
        pl.BlockSpec(h_block, lambda n, t: (n, jnp.minimum((t + 1) * r, nblk - 1), 0, 0)),
    ]
    inputs = [x_nhwc, x_nhwc, x_nhwc]

    for i, (w, b) in enumerate(params["layers"]):
        cin = C + i * gr
        assert w.shape == (3, 3, cin, gr)
        inputs.append(w.reshape(9 * cin, gr).astype(jnp.bfloat16))   # (kh,kw,cin) flat
        in_specs.append(pl.BlockSpec((9 * cin, gr), lambda n, t: (0, 0)))
        inputs.append(b.reshape(1, gr).astype(jnp.float32))
        in_specs.append(pl.BlockSpec((1, gr), lambda n, t: (0, 0)))

    w1, b1 = params["conv1x1"]
    assert w1.shape == (ctot, C)
    inputs.append(w1.astype(jnp.bfloat16))
    in_specs.append(pl.BlockSpec((ctot, C), lambda n, t: (0, 0)))
    inputs.append(b1.reshape(1, C).astype(jnp.float32))
    in_specs.append(pl.BlockSpec((1, C), lambda n, t: (0, 0)))

    kernel = _make_rdb_kernel(nb, C, gr, H, W, tile_h, hs)

    return pl.pallas_call(
        kernel,
        out_shape=jax.ShapeDtypeStruct((N, H, W, C), x_nhwc.dtype),
        grid_spec=pltpu.PrefetchScalarGridSpec(
            num_scalar_prefetch=0,
            grid=(N, num_t),
            in_specs=in_specs,
            out_specs=pl.BlockSpec(x_block, lambda n, t: (n, t, 0, 0)),
            scratch_shapes=[
                pltpu.VMEM((hb, W + 2, ctot), jnp.bfloat16),   # resident features
            ],
        ),
        compiler_params=pltpu.CompilerParams(
            dimension_semantics=("parallel", "parallel"),
            vmem_limit_bytes=vmem_limit),
    )(*inputs)


def denoise_rdb_forward_nchw(params, x_nchw, tile_h=None):
    """Matches DenoiseRDB.forward with NCHW input (PyTorch convention)."""
    x = jnp.transpose(x_nchw, (0, 2, 3, 1))       # -> NHWC once, at the boundary
    out = denoise_rdb_forward_nhwc(params, x, tile_h=tile_h)
    return jnp.transpose(out, (0, 3, 1, 2))       # -> NCHW


# ----------------------------------------------------------------------------
# Parameter construction (PyTorch-default uniform init)
# ----------------------------------------------------------------------------
def init_denoise_rdb_params(key, nb_layers, input_dim, growth_rate):
    params = {"layers": [], "conv1x1": None}
    keys = jax.random.split(key, nb_layers + 1)
    for i in range(nb_layers):
        cin = input_dim + i * growth_rate
        kw_key, kb_key = jax.random.split(keys[i])
        bound = 1.0 / ((cin * 9) ** 0.5)
        w = jax.random.uniform(kw_key, (3, 3, cin, growth_rate),
                               jnp.float32, -bound, bound)
        b = jax.random.uniform(kb_key, (growth_rate,), jnp.float32, -bound, bound)
        params["layers"].append((w, b))
    ctot = input_dim + nb_layers * growth_rate
    kw_key, kb_key = jax.random.split(keys[-1])
    bound = 1.0 / (ctot ** 0.5)
    w1 = jax.random.uniform(kw_key, (ctot, input_dim), jnp.float32, -bound, bound)
    b1 = jax.random.uniform(kb_key, (input_dim,), jnp.float32, -bound, bound)
    params["conv1x1"] = (w1, b1)
    return params


# ----------------------------------------------------------------------------
# Pure-JAX reference (bf16 matmul operands, f32 accumulation — same numerics)
# ----------------------------------------------------------------------------
def _ref_forward_nchw(params, x_nchw):
    x = jnp.transpose(x_nchw, (0, 2, 3, 1)).astype(jnp.float32)
    feat = x
    for (w, b) in params["layers"]:
        dn = jax.lax.conv_dimension_numbers(feat.shape, w.shape,
                                            ("NHWC", "HWIO", "NHWC"))
        y = jax.lax.conv_general_dilated(
            feat.astype(jnp.bfloat16), w.astype(jnp.bfloat16), (1, 1), "SAME",
            dimension_numbers=dn, preferred_element_type=jnp.float32)
        y = jnp.maximum(y + b[None, None, None, :], 0.0)
        feat = jnp.concatenate([feat, y], axis=-1)
    w1, b1 = params["conv1x1"]
    out = jax.lax.dot_general(
        feat.astype(jnp.bfloat16), w1.astype(jnp.bfloat16),
        (((3,), (0,)), ((), ())), preferred_element_type=jnp.float32)
    out = out + b1[None, None, None, :] + x
    return jnp.transpose(out, (0, 3, 1, 2))


if __name__ == "__main__":
    nb_layers = 3
    input_dim = 4
    growth_rate = 4
    N, H, W = 2, 16, 16

    key = jax.random.PRNGKey(0)
    pkey, xkey = jax.random.split(key)
    params = init_denoise_rdb_params(pkey, nb_layers, input_dim, growth_rate)
    x = jax.random.normal(xkey, (N, input_dim, H, W), jnp.float32)   # NCHW input

    ref = jax.block_until_ready(_ref_forward_nchw(params, x))

    # tile_h=8 -> grid (N=2, H/8=2): exercises the halo-tiled path (hs=4 halo blocks).
    fwd = jax.jit(functools.partial(denoise_rdb_forward_nchw, params, tile_h=8))
    out = jax.block_until_ready(fwd(x))
    assert out.shape == (N, input_dim, H, W)
    max_err = float(jnp.max(jnp.abs(out - ref)))
    assert jnp.allclose(out, ref, atol=1e-2, rtol=1e-2), f"mismatch: {max_err}"

    # Auto tile_h (VMEM-budget-derived): exercises the single-tile / clamp path.
    fwd_auto = jax.jit(functools.partial(denoise_rdb_forward_nchw, params, tile_h=None))
    out_auto = jax.block_until_ready(fwd_auto(x))
    max_err_auto = float(jnp.max(jnp.abs(out_auto - ref)))
    assert jnp.allclose(out_auto, ref, atol=1e-2, rtol=1e-2), f"mismatch: {max_err_auto}"

    print("KERNEL_OK")
</pallas_src>

<mosaic_0001>
module attributes {stable_mosaic.version = 11 : i64} {
  func.func @kernel(%arg0: i32, %arg1: i32, %arg2: memref<1x4x16x4xf32, #tpu.memory_space<vmem>>, %arg3: memref<1x8x16x4xf32, #tpu.memory_space<vmem>>, %arg4: memref<1x4x16x4xf32, #tpu.memory_space<vmem>>, %arg5: memref<36x4xbf16, #tpu.memory_space<vmem>>, %arg6: memref<1x4xf32, #tpu.memory_space<vmem>>, %arg7: memref<72x4xbf16, #tpu.memory_space<vmem>>, %arg8: memref<1x4xf32, #tpu.memory_space<vmem>>, %arg9: memref<108x4xbf16, #tpu.memory_space<vmem>>, %arg10: memref<1x4xf32, #tpu.memory_space<vmem>>, %arg11: memref<16x4xbf16, #tpu.memory_space<vmem>>, %arg12: memref<1x4xf32, #tpu.memory_space<vmem>>, %arg13: memref<1x8x16x4xf32, #tpu.memory_space<vmem>>, %arg14: memref<14x18x16xbf16, #tpu.memory_space<vmem>>) attributes {dimension_semantics = [#tpu.dimension_semantics<parallel>, #tpu.dimension_semantics<parallel>], iteration_bounds = array<i64: 2, 2>, scalar_prefetch = 0 : i64, scratch_operands = 1 : i64, tpu.core_type = #tpu.core_type<tc>, window_params = [{transform_indices = @transform_0, window_bounds = array<i64: 1, 4, 16, 4>}, {transform_indices = @transform_1, window_bounds = array<i64: 1, 8, 16, 4>}, {transform_indices = @transform_2, window_bounds = array<i64: 1, 4, 16, 4>}, {pipeline_mode = #tpu.pipeline_mode<synchronous>, transform_indices = @transform_3, window_bounds = array<i64: 36, 4>}, {pipeline_mode = #tpu.pipeline_mode<synchronous>, transform_indices = @transform_4, window_bounds = array<i64: 1, 4>}, {pipeline_mode = #tpu.pipeline_mode<synchronous>, transform_indices = @transform_5, window_bounds = array<i64: 72, 4>}, {pipeline_mode = #tpu.pipeline_mode<synchronous>, transform_indices = @transform_6, window_bounds = array<i64: 1, 4>}, {pipeline_mode = #tpu.pipeline_mode<synchronous>, transform_indices = @transform_7, window_bounds = array<i64: 108, 4>}, {pipeline_mode = #tpu.pipeline_mode<synchronous>, transform_indices = @transform_8, window_bounds = array<i64: 1, 4>}, {pipeline_mode = #tpu.pipeline_mode<synchronous>, transform_indices = @transform_9, window_bounds = array<i64: 16, 4>}, {pipeline_mode = #tpu.pipeline_mode<synchronous>, transform_indices = @transform_10, window_bounds = array<i64: 1, 4>}, {transform_indices = @transform_11, window_bounds = array<i64: 1, 8, 16, 4>}]} {
    %cst = arith.constant 0.000000e+00 : bf16
    %0 = vector.broadcast %cst : bf16 to vector<14x1x16xbf16>
    %c0 = arith.constant 0 : index
    %c0_0 = arith.constant 0 : index
    %c0_1 = arith.constant 0 : index
    %1 = vector.load %arg14[%c0, %c0_0, %c0_1] : memref<14x18x16xbf16, #tpu.memory_space<vmem>>, vector<14x1x16xbf16>
    tpu.vector_store %arg14[%c0, %c0_0, %c0_1], %0 {strides = array<i32>} : memref<14x18x16xbf16, #tpu.memory_space<vmem>>, vector<14x1x16xbf16>,
    %cst_2 = arith.constant 0.000000e+00 : bf16
    %2 = vector.broadcast %cst_2 : bf16 to vector<14x1x16xbf16>
    %c0_3 = arith.constant 0 : index
    %c17 = arith.constant 17 : index
    %c0_4 = arith.constant 0 : index
    %3 = vector.load %arg14[%c0_3, %c17, %c0_4] : memref<14x18x16xbf16, #tpu.memory_space<vmem>>, vector<14x1x16xbf16>
    tpu.vector_store %arg14[%c0_3, %c17, %c0_4], %2 {strides = array<i32>} : memref<14x18x16xbf16, #tpu.memory_space<vmem>>, vector<14x1x16xbf16>,
    %c0_5 = arith.constant 0 : index
    %c0_6 = arith.constant 0 : index
    %c0_7 = arith.constant 0 : index
    %c0_8 = arith.constant 0 : index
    %4 = vector.load %arg3[%c0_5, %c0_6, %c0_7, %c0_8] : memref<1x8x16x4xf32, #tpu.memory_space<vmem>>, vector<1x8x16x4xf32>
    %5 = vector.shape_cast %4 : vector<1x8x16x4xf32> to vector<8x16x4xf32>
    %6 = arith.truncf %5 : vector<8x16x4xf32> to vector<8x16x4xbf16>
    %c3 = arith.constant 3 : index
    %c1 = arith.constant 1 : index
    %c0_9 = arith.constant 0 : index
    %7 = vector.load %arg14[%c3, %c1, %c0_9] : memref<14x18x16xbf16, #tpu.memory_space<vmem>>, vector<8x16x4xbf16>
    tpu.vector_store %arg14[%c3, %c1, %c0_9], %6 {strides = array<i32>} : memref<14x18x16xbf16, #tpu.memory_space<vmem>>, vector<8x16x4xbf16>,
    %c0_i32 = arith.constant 0 : i32
    %8 = arith.cmpi sgt, %arg1, %c0_i32 : i32
    %9 = arith.extui %8 : i1 to i32
    %10 = arith.sitofp %9 : i32 to f32
    %c0_10 = arith.constant 0 : index
    %c1_11 = arith.constant 1 : index
    %c0_12 = arith.constant 0 : index
    %c0_13 = arith.constant 0 : index
    %11 = vector.load %arg2[%c0_10, %c1_11, %c0_12, %c0_13] : memref<1x4x16x4xf32, #tpu.memory_space<vmem>>, vector<1x3x16x4xf32>
    %12 = vector.shape_cast %11 : vector<1x3x16x4xf32> to vector<3x16x4xf32>
    %13 = vector.broadcast %10 : f32 to vector<3x16x4xf32>
    %14 = arith.mulf %12, %13 : vector<3x16x4xf32>
    %15 = arith.truncf %14 : vector<3x16x4xf32> to vector<3x16x4xbf16>
    %c0_14 = arith.constant 0 : index
    %c1_15 = arith.constant 1 : index
    %c0_16 = arith.constant 0 : index
    %16 = vector.load %arg14[%c0_14, %c1_15, %c0_16] : memref<14x18x16xbf16, #tpu.memory_space<vmem>>, vector<3x16x4xbf16>
    tpu.vector_store %arg14[%c0_14, %c1_15, %c0_16], %15 {strides = array<i32>} : memref<14x18x16xbf16, #tpu.memory_space<vmem>>, vector<3x16x4xbf16>,
    %c1_i32 = arith.constant 1 : i32
    %17 = arith.cmpi slt, %arg1, %c1_i32 : i32
    %18 = arith.extui %17 : i1 to i32
    %19 = arith.sitofp %18 : i32 to f32
    %c0_17 = arith.constant 0 : index
    %c0_18 = arith.constant 0 : index
    %c0_19 = arith.constant 0 : index
    %c0_20 = arith.constant 0 : index
    %20 = vector.load %arg4[%c0_17, %c0_18, %c0_19, %c0_20] : memref<1x4x16x4xf32, #tpu.memory_space<vmem>>, vector<1x3x16x4xf32>
    %21 = vector.shape_cast %20 : vector<1x3x16x4xf32> to vector<3x16x4xf32>
    %22 = vector.broadcast %19 : f32 to vector<3x16x4xf32>
    %23 = arith.mulf %21, %22 : vector<3x16x4xf32>
    %24 = arith.truncf %23 : vector<3x16x4xf32> to vector<3x16x4xbf16>
    %c11 = arith.constant 11 : index
    %c1_21 = arith.constant 1 : index
    %c0_22 = arith.constant 0 : index
    %25 = vector.load %arg14[%c11, %c1_21, %c0_22] : memref<14x18x16xbf16, #tpu.memory_space<vmem>>, vector<3x16x4xbf16>
    tpu.vector_store %arg14[%c11, %c1_21, %c0_22], %24 {strides = array<i32>} : memref<14x18x16xbf16, #tpu.memory_space<vmem>>, vector<3x16x4xbf16>,
    %c0_23 = arith.constant 0 : index
    %c0_24 = arith.constant 0 : index
    %c0_25 = arith.constant 0 : index
    %26 = vector.load %arg14[%c0_23, %c0_24, %c0_25] : memref<14x18x16xbf16, #tpu.memory_space<vmem>>, vector<12x16x4xbf16>
    %c0_26 = arith.constant 0 : index
    %c0_27 = arith.constant 0 : index
    %27 = vector.load %arg5[%c0_26, %c0_27] : memref<36x4xbf16, #tpu.memory_space<vmem>>, vector<4x4xbf16>
    %cst_28 = arith.constant dense<0.000000e+00> : vector<12x16x4xf32>
    %28 = tpu.matmul %26, %27, %cst_28 {dimension_numbers = #tpu.dot_dimension_numbers<[2], [0], [0, 1], [1], [0, 0, 0, 1, 1, 1], [], []>} : vector<12x16x4xbf16>, vector<4x4xbf16>, vector<12x16x4xf32> -> vector<12x16x4xf32>
    %c0_29 = arith.constant 0 : index
    %c1_30 = arith.constant 1 : index
    %c0_31 = arith.constant 0 : index
    %29 = vector.load %arg14[%c0_29, %c1_30, %c0_31] : memref<14x18x16xbf16, #tpu.memory_space<vmem>>, vector<12x16x4xbf16>
    %c4 = arith.constant 4 : index
    %c0_32 = arith.constant 0 : index
    %30 = vector.load %arg5[%c4, %c0_32] : memref<36x4xbf16, #tpu.memory_space<vmem>>, vector<4x4xbf16>
    %cst_33 = arith.constant dense<0.000000e+00> : vector<12x16x4xf32>
    %31 = tpu.matmul %29, %30, %cst_33 {dimension_numbers = #tpu.dot_dimension_numbers<[2], [0], [0, 1], [1], [0, 0, 0, 1, 1, 1], [], []>} : vector<12x16x4xbf16>, vector<4x4xbf16>, vector<12x16x4xf32> -> vector<12x16x4xf32>
    %32 = arith.addf %28, %31 : vector<12x16x4xf32>
    %c0_34 = arith.constant 0 : index
    %c2 = arith.constant 2 : index
    %c0_35 = arith.constant 0 : index
    %33 = vector.load %arg14[%c0_34, %c2, %c0_35] : memref<14x18x16xbf16, #tpu.memory_space<vmem>>, vector<12x16x4xbf16>
    %c8 = arith.constant 8 : index
    %c0_36 = arith.constant 0 : index
    %34 = vector.load %arg5[%c8, %c0_36] : memref<36x4xbf16, #tpu.memory_space<vmem>>, vector<4x4xbf16>
    %cst_37 = arith.constant dense<0.000000e+00> : vector<12x16x4xf32>
    %35 = tpu.matmul %33, %34, %cst_37 {dimension_numbers = #tpu.dot_dimension_numbers<[2], [0], [0, 1], [1], [0, 0, 0, 1, 1, 1], [], []>} : vector<12x16x4xbf16>, vector<4x4xbf16>, vector<12x16x4xf32> -> vector<12x16x4xf32>
    %36 = arith.addf %32, %35 : vector<12x16x4xf32>
    %c1_38 = arith.constant 1 : index
    %c0_39 = arith.constant 0 : index
    %c0_40 = arith.constant 0 : index
    %37 = vector.load %arg14[%c1_38, %c0_39, %c0_40] : memref<14x18x16xbf16, #tpu.memory_space<vmem>>, vector<12x16x4xbf16>
    %c12 = arith.constant 12 : index
    %c0_41 = arith.constant 0 : index
    %38 = vector.load %arg5[%c12, %c0_41] : memref<36x4xbf16, #tpu.memory_space<vmem>>, vector<4x4xbf16>
    %cst_42 = arith.constant dense<0.000000e+00> : vector<12x16x4xf32>
    %39 = tpu.matmul %37, %38, %cst_42 {dimension_numbers = #tpu.dot_dimension_numbers<[2], [0], [0, 1], [1], [0, 0, 0, 1, 1, 1], [], []>} : vector<12x16x4xbf16>, vector<4x4xbf16>, vector<12x16x4xf32> -> vector<12x16x4xf32>
    %40 = arith.addf %36, %39 : vector<12x16x4xf32>
    %c1_43 = arith.constant 1 : index
    %c1_44 = arith.constant 1 : index
    %c0_45 = arith.constant 0 : index
    %41 = vector.load %arg14[%c1_43, %c1_44, %c0_45] : memref<14x18x16xbf16, #tpu.memory_space<vmem>>, vector<12x16x4xbf16>
    %c16 = arith.constant 16 : index
    %c0_46 = arith.constant 0 : index
    %42 = vector.load %arg5[%c16, %c0_46] : memref<36x4xbf16, #tpu.memory_space<vmem>>, vector<4x4xbf16>
    %cst_47 = arith.constant dense<0.000000e+00> : vector<12x16x4xf32>
    %43 = tpu.matmul %41, %42, %cst_47 {dimension_numbers = #tpu.dot_dimension_numbers<[2], [0], [0, 1], [1], [0, 0, 0, 1, 1, 1], [], []>} : vector<12x16x4xbf16>, vector<4x4xbf16>, vector<12x16x4xf32> -> vector<12x16x4xf32>
    %44 = arith.addf %40, %43 : vector<12x16x4xf32>
    %c1_48 = arith.constant 1 : index
    %c2_49 = arith.constant 2 : index
    %c0_50 = arith.constant 0 : index
    %45 = vector.load %arg14[%c1_48, %c2_49, %c0_50] : memref<14x18x16xbf16, #tpu.memory_space<vmem>>, vector<12x16x4xbf16>
    %c20 = arith.constant 20 : index
    %c0_51 = arith.constant 0 : index
    %46 = vector.load %arg5[%c20, %c0_51] : memref<36x4xbf16, #tpu.memory_space<vmem>>, vector<4x4xbf16>
    %cst_52 = arith.constant dense<0.000000e+00> : vector<12x16x4xf32>
    %47 = tpu.matmul %45, %46, %cst_52 {dimension_numbers = #tpu.dot_dimension_numbers<[2], [0], [0, 1], [1], [0, 0, 0, 1, 1, 1], [], []>} : vector<12x16x4xbf16>, vector<4x4xbf16>, vector<12x16x4xf32> -> vector<12x16x4xf32>
    %48 = arith.addf %44, %47 : vector<12x16x4xf32>
    %c2_53 = arith.constant 2 : index
    %c0_54 = arith.constant 0 : index
    %c0_55 = arith.constant 0 : index
    %49 = vector.load %arg14[%c2_53, %c0_54, %c0_55] : memref<14x18x16xbf16, #tpu.memory_space<vmem>>, vector<12x16x4xbf16>
    %c24 = arith.constant 24 : index
    %c0_56 = arith.constant 0 : index
    %50 = vector.load %arg5[%c24, %c0_56] : memref<36x4xbf16, #tpu.memory_space<vmem>>, vector<4x4xbf16>
    %cst_57 = arith.constant dense<0.000000e+00> : vector<12x16x4xf32>
    %51 = tpu.matmul %49, %50, %cst_57 {dimension_numbers = #tpu.dot_dimension_numbers<[2], [0], [0, 1], [1], [0, 0, 0, 1, 1, 1], [], []>} : vector<12x16x4xbf16>, vector<4x4xbf16>, vector<12x16x4xf32> -> vector<12x16x4xf32>
    %52 = arith.addf %48, %51 : vector<12x16x4xf32>
    %c2_58 = arith.constant 2 : index
    %c1_59 = arith.constant 1 : index
    %c0_60 = arith.constant 0 : index
    %53 = vector.load %arg14[%c2_58, %c1_59, %c0_60] : memref<14x18x16xbf16, #tpu.memory_space<vmem>>, vector<12x16x4xbf16>
    %c28 = arith.constant 28 : index
    %c0_61 = arith.constant 0 : index
    %54 = vector.load %arg5[%c28, %c0_61] : memref<36x4xbf16, #tpu.memory_space<vmem>>, vector<4x4xbf16>
    %cst_62 = arith.constant dense<0.000000e+00> : vector<12x16x4xf32>
    %55 = tpu.matmul %53, %54, %cst_62 {dimension_numbers = #tpu.dot_dimension_numbers<[2], [0], [0, 1], [1], [0, 0, 0, 1, 1, 1], [], []>} : vector<12x16x4xbf16>, vector<4x4xbf16>, vector<12x16x4xf32> -> vector<12x16x4xf32>
    %56 = arith.addf %52, %55 : vector<12x16x4xf32>
    %c2_63 = arith.constant 2 : index
    %c2_64 = arith.constant 2 : index
    %c0_65 = arith.constant 0 : index
    %57 = vector.load %arg14[%c2_63, %c2_64, %c0_65] : memref<14x18x16xbf16, #tpu.memory_space<vmem>>, vector<12x16x4xbf16>
    %c32 = arith.constant 32 : index
    %c0_66 = arith.constant 0 : index
    %58 = vector.load %arg5[%c32, %c0_66] : memref<36x4xbf16, #tpu.memory_space<vmem>>, vector<4x4xbf16>
    %cst_67 = arith.constant dense<0.000000e+00> : vector<12x16x4xf32>
    %59 = tpu.matmul %57, %58, %cst_67 {dimension_numbers = #tpu.dot_dimension_numbers<[2], [0], [0, 1], [1], [0, 0, 0, 1, 1, 1], [], []>} : vector<12x16x4xbf16>, vector<4x4xbf16>, vector<12x16x4xf32> -> vector<12x16x4xf32>
    %60 = arith.addf %56, %59 : vector<12x16x4xf32>
    %c0_68 = arith.constant 0 : index
    %c0_69 = arith.constant 0 : index
    %61 = vector.load %arg6[%c0_68, %c0_69] : memref<1x4xf32, #tpu.memory_space<vmem>>, vector<1x4xf32>
    %62 = vector.shape_cast %61 : vector<1x4xf32> to vector<4xf32>
    %63 = vector.shape_cast %62 : vector<4xf32> to vector<1x1x4xf32>
    %64 = vector.broadcast %63 : vector<1x1x4xf32> to vector<12x16x4xf32>
    %65 = arith.addf %60, %64 : vector<12x16x4xf32>
    %cst_70 = arith.constant 0.000000e+00 : f32
    %66 = vector.broadcast %cst_70 : f32 to vector<12x16x4xf32>
    %67 = arith.maximumf %65, %66 : vector<12x16x4xf32>
    %68 = tpu.iota {dimensions = array<i32: 0>} : vector<12x1x1xi32>
    %c8_i32 = arith.constant 8 : i32
    %69 = arith.muli %arg1, %c8_i32 : i32
    %c3_i32 = arith.constant 3 : i32
    %70 = arith.subi %69, %c3_i32 : i32
    %c1_i32_71 = arith.constant 1 : i32
    %71 = arith.addi %70, %c1_i32_71 : i32
    %72 = vector.broadcast %71 : i32 to vector<12x1x1xi32>
    %73 = arith.addi %68, %72 : vector<12x1x1xi32>
    %c0_i32_72 = arith.constant 0 : i32
    %74 = vector.broadcast %c0_i32_72 : i32 to vector<12x1x1xi32>
    %75 = arith.cmpi sge, %73, %74 : vector<12x1x1xi32>
    %c16_i32 = arith.constant 16 : i32
    %76 = vector.broadcast %c16_i32 : i32 to vector<12x1x1xi32>
    %77 = arith.cmpi slt, %73, %76 : vector<12x1x1xi32>
    %78 = arith.andi %75, %77 : vector<12x1x1xi1>
    %79 = arith.extui %78 : vector<12x1x1xi1> to vector<12x1x1xi32>
    %80 = arith.sitofp %79 : vector<12x1x1xi32> to vector<12x1x1xf32>
    %81 = vector.broadcast %80 : vector<12x1x1xf32> to vector<12x16x4xf32>
    %82 = arith.mulf %67, %81 : vector<12x16x4xf32>
    %83 = arith.truncf %82 : vector<12x16x4xf32> to vector<12x16x4xbf16>
    %c1_73 = arith.constant 1 : index
    %c1_74 = arith.constant 1 : index
    %c4_75 = arith.constant 4 : index
    %84 = vector.load %arg14[%c1_73, %c1_74, %c4_75] : memref<14x18x16xbf16, #tpu.memory_space<vmem>>, vector<12x16x4xbf16>
    tpu.vector_store %arg14[%c1_73, %c1_74, %c4_75], %83 {strides = array<i32>} : memref<14x18x16xbf16, #tpu.memory_space<vmem>>, vector<12x16x4xbf16>,
    %c1_76 = arith.constant 1 : index
    %c0_77 = arith.constant 0 : index
    %c0_78 = arith.constant 0 : index
    %85 = vector.load %arg14[%c1_76, %c0_77, %c0_78] : memref<14x18x16xbf16, #tpu.memory_space<vmem>>, vector<10x16x8xbf16>
    %c0_79 = arith.constant 0 : index
    %c0_80 = arith.constant 0 : index
    %86 = vector.load %arg7[%c0_79, %c0_80] : memref<72x4xbf16, #tpu.memory_space<vmem>>, vector<8x4xbf16>
    %cst_81 = arith.constant dense<0.000000e+00> : vector<10x16x4xf32>
    %87 = tpu.matmul %85, %86, %cst_81 {dimension_numbers = #tpu.dot_dimension_numbers<[2], [0], [0, 1], [1], [0, 0, 0, 1, 1, 1], [], []>} : vector<10x16x8xbf16>, vector<8x4xbf16>, vector<10x16x4xf32> -> vector<10x16x4xf32>
    %c1_82 = arith.constant 1 : index
    %c1_83 = arith.constant 1 : index
    %c0_84 = arith.constant 0 : index
    %88 = vector.load %arg14[%c1_82, %c1_83, %c0_84] : memref<14x18x16xbf16, #tpu.memory_space<vmem>>, vector<10x16x8xbf16>
    %c8_85 = arith.constant 8 : index
    %c0_86 = arith.constant 0 : index
    %89 = vector.load %arg7[%c8_85, %c0_86] : memref<72x4xbf16, #tpu.memory_space<vmem>>, vector<8x4xbf16>
    %cst_87 = arith.constant dense<0.000000e+00> : vector<10x16x4xf32>
    %90 = tpu.matmul %88, %89, %cst_87 {dimension_numbers = #tpu.dot_dimension_numbers<[2], [0], [0, 1], [1], [0, 0, 0, 1, 1, 1], [], []>} : vector<10x16x8xbf16>, vector<8x4xbf16>, vector<10x16x4xf32> -> vector<10x16x4xf32>
    %91 = arith.addf %87, %90 : vector<10x16x4xf32>
    %c1_88 = arith.constant 1 : index
    %c2_89 = arith.constant 2 : index
    %c0_90 = arith.constant 0 : index
    %92 = vector.load %arg14[%c1_88, %c2_89, %c0_90] : memref<14x18x16xbf16, #tpu.memory_space<vmem>>, vector<10x16x8xbf16>
    %c16_91 = arith.constant 16 : index
    %c0_92 = arith.constant 0 : index
    %93 = vector.load %arg7[%c16_91, %c0_92] : memref<72x4xbf16, #tpu.memory_space<vmem>>, vector<8x4xbf16>
    %cst_93 = arith.constant dense<0.000000e+00> : vector<10x16x4xf32>
    %94 = tpu.matmul %92, %93, %cst_93 {dimension_numbers = #tpu.dot_dimension_numbers<[2], [0], [0, 1], [1], [0, 0, 0, 1, 1, 1], [], []>} : vector<10x16x8xbf16>, vector<8x4xbf16>, vector<10x16x4xf32> -> vector<10x16x4xf32>
    %95 = arith.addf %91, %94 : vector<10x16x4xf32>
    %c2_94 = arith.constant 2 : index
    %c0_95 = arith.constant 0 : index
    %c0_96 = arith.constant 0 : index
    %96 = vector.load %arg14[%c2_94, %c0_95, %c0_96] : memref<14x18x16xbf16, #tpu.memory_space<vmem>>, vector<10x16x8xbf16>
    %c24_97 = arith.constant 24 : index
    %c0_98 = arith.constant 0 : index
    %97 = vector.load %arg7[%c24_97, %c0_98] : memref<72x4xbf16, #tpu.memory_space<vmem>>, vector<8x4xbf16>
    %cst_99 = arith.constant dense<0.000000e+00> : vector<10x16x4xf32>
    %98 = tpu.matmul %96, %97, %cst_99 {dimension_numbers = #tpu.dot_dimension_numbers<[2], [0], [0, 1], [1], [0, 0, 0, 1, 1, 1], [], []>} : vector<10x16x8xbf16>, vector<8x4xbf16>, vector<10x16x4xf32> -> vector<10x16x4xf32>
    %99 = arith.addf %95, %98 : vector<10x16x4xf32>
    %c2_100 = arith.constant 2 : index
    %c1_101 = arith.constant 1 : index
    %c0_102 = arith.constant 0 : index
    %100 = vector.load %arg14[%c2_100, %c1_101, %c0_102] : memref<14x18x16xbf16, #tpu.memory_space<vmem>>, vector<10x16x8xbf16>
    %c32_103 = arith.constant 32 : index
    %c0_104 = arith.constant 0 : index
    %101 = vector.load %arg7[%c32_103, %c0_104] : memref<72x4xbf16, #tpu.memory_space<vmem>>, vector<8x4xbf16>
    %cst_105 = arith.constant dense<0.000000e+00> : vector<10x16x4xf32>
    %102 = tpu.matmul %100, %101, %cst_105 {dimension_numbers = #tpu.dot_dimension_numbers<[2], [0], [0, 1], [1], [0, 0, 0, 1, 1, 1], [], []>} : vector<10x16x8xbf16>, vector<8x4xbf16>, vector<10x16x4xf32> -> vector<10x16x4xf32>
    %103 = arith.addf %99, %102 : vector<10x16x4xf32>
    %c2_106 = arith.constant 2 : index
    %c2_107 = arith.constant 2 : index
    %c0_108 = arith.constant 0 : index
    %104 = vector.load %arg14[%c2_106, %c2_107, %c0_108] : memref<14x18x16xbf16, #tpu.memory_space<vmem>>, vector<10x16x8xbf16>
    %c40 = arith.constant 40 : index
    %c0_109 = arith.constant 0 : index
    %105 = vector.load %arg7[%c40, %c0_109] : memref<72x4xbf16, #tpu.memory_space<vmem>>, vector<8x4xbf16>
    %cst_110 = arith.constant dense<0.000000e+00> : vector<10x16x4xf32>
    %106 = tpu.matmul %104, %105, %cst_110 {dimension_numbers = #tpu.dot_dimension_numbers<[2], [0], [0, 1], [1], [0, 0, 0, 1, 1, 1], [], []>} : vector<10x16x8xbf16>, vector<8x4xbf16>, vector<10x16x4xf32> -> vector<10x16x4xf32>
    %107 = arith.addf %103, %106 : vector<10x16x4xf32>
    %c3_111 = arith.constant 3 : index
    %c0_112 = arith.constant 0 : index
    %c0_113 = arith.constant 0 : index
    %108 = vector.load %arg14[%c3_111, %c0_112, %c0_113] : memref<14x18x16xbf16, #tpu.memory_space<vmem>>, vector<10x16x8xbf16>
    %c48 = arith.constant 48 : index
    %c0_114 = arith.constant 0 : index
    %109 = vector.load %arg7[%c48, %c0_114] : memref<72x4xbf16, #tpu.memory_space<vmem>>, vector<8x4xbf16>
    %cst_115 = arith.constant dense<0.000000e+00> : vector<10x16x4xf32>
    %110 = tpu.matmul %108, %109, %cst_115 {dimension_numbers = #tpu.dot_dimension_numbers<[2], [0], [0, 1], [1], [0, 0, 0, 1, 1, 1], [], []>} : vector<10x16x8xbf16>, vector<8x4xbf16>, vector<10x16x4xf32> -> vector<10x16x4xf32>
    %111 = arith.addf %107, %110 : vector<10x16x4xf32>
    %c3_116 = arith.constant 3 : index
    %c1_117 = arith.constant 1 : index
    %c0_118 = arith.constant 0 : index
    %112 = vector.load %arg14[%c3_116, %c1_117, %c0_118] : memref<14x18x16xbf16, #tpu.memory_space<vmem>>, vector<10x16x8xbf16>
    %c56 = arith.constant 56 : index
    %c0_119 = arith.constant 0 : index
    %113 = vector.load %arg7[%c56, %c0_119] : memref<72x4xbf16, #tpu.memory_space<vmem>>, vector<8x4xbf16>
    %cst_120 = arith.constant dense<0.000000e+00> : vector<10x16x4xf32>
    %114 = tpu.matmul %112, %113, %cst_120 {dimension_numbers = #tpu.dot_dimension_numbers<[2], [0], [0, 1], [1], [0, 0, 0, 1, 1, 1], [], []>} : vector<10x16x8xbf16>, vector<8x4xbf16>, vector<10x16x4xf32> -> vector<10x16x4xf32>
    %115 = arith.addf %111, %114 : vector<10x16x4xf32>
    %c3_121 = arith.constant 3 : index
    %c2_122 = arith.constant 2 : index
    %c0_123 = arith.constant 0 : index
    %116 = vector.load %arg14[%c3_121, %c2_122, %c0_123] : memref<14x18x16xbf16, #tpu.memory_space<vmem>>, vector<10x16x8xbf16>
    %c64 = arith.constant 64 : index
    %c0_124 = arith.constant 0 : index
    %117 = vector.load %arg7[%c64, %c0_124] : memref<72x4xbf16, #tpu.memory_space<vmem>>, vector<8x4xbf16>
    %cst_125 = arith.constant dense<0.000000e+00> : vector<10x16x4xf32>
    %118 = tpu.matmul %116, %117, %cst_125 {dimension_numbers = #tpu.dot_dimension_numbers<[2], [0], [0, 1], [1], [0, 0, 0, 1, 1, 1], [], []>} : vector<10x16x8xbf16>, vector<8x4xbf16>, vector<10x16x4xf32> -> vector<10x16x4xf32>
    %119 = arith.addf %115, %118 : vector<10x16x4xf32>
    %c0_126 = arith.constant 0 : index
    %c0_127 = arith.constant 0 : index
    %120 = vector.load %arg8[%c0_126, %c0_127] : memref<1x4xf32, #tpu.memory_space<vmem>>, vector<1x4xf32>
    %121 = vector.shape_cast %120 : vector<1x4xf32> to vector<4xf32>
    %122 = vector.shape_cast %121 : vector<4xf32> to vector<1x1x4xf32>
    %123 = vector.broadcast %122 : vector<1x1x4xf32> to vector<10x16x4xf32>
    %124 = arith.addf %119, %123 : vector<10x16x4xf32>
    %cst_128 = arith.constant 0.000000e+00 : f32
    %125 = vector.broadcast %cst_128 : f32 to vector<10x16x4xf32>
    %126 = arith.maximumf %124, %125 : vector<10x16x4xf32>
    %127 = tpu.iota {dimensions = array<i32: 0>} : vector<10x1x1xi32>
    %c8_i32_129 = arith.constant 8 : i32
    %128 = arith.muli %arg1, %c8_i32_129 : i32
    %c3_i32_130 = arith.constant 3 : i32
    %129 = arith.subi %128, %c3_i32_130 : i32
    %c2_i32 = arith.constant 2 : i32
    %130 = arith.addi %129, %c2_i32 : i32
    %131 = vector.broadcast %130 : i32 to vector<10x1x1xi32>
    %132 = arith.addi %127, %131 : vector<10x1x1xi32>
    %c0_i32_131 = arith.constant 0 : i32
    %133 = vector.broadcast %c0_i32_131 : i32 to vector<10x1x1xi32>
    %134 = arith.cmpi sge, %132, %133 : vector<10x1x1xi32>
    %c16_i32_132 = arith.constant 16 : i32
    %135 = vector.broadcast %c16_i32_132 : i32 to vector<10x1x1xi32>
    %136 = arith.cmpi slt, %132, %135 : vector<10x1x1xi32>
    %137 = arith.andi %134, %136 : vector<10x1x1xi1>
    %138 = arith.extui %137 : vector<10x1x1xi1> to vector<10x1x1xi32>
    %139 = arith.sitofp %138 : vector<10x1x1xi32> to vector<10x1x1xf32>
    %140 = vector.broadcast %139 : vector<10x1x1xf32> to vector<10x16x4xf32>
    %141 = arith.mulf %126, %140 : vector<10x16x4xf32>
    %142 = arith.truncf %141 : vector<10x16x4xf32> to vector<10x16x4xbf16>
    %c2_133 = arith.constant 2 : index
    %c1_134 = arith.constant 1 : index
    %c8_135 = arith.constant 8 : index
    %143 = vector.load %arg14[%c2_133, %c1_134, %c8_135] : memref<14x18x16xbf16, #tpu.memory_space<vmem>>, vector<10x16x4xbf16>
    tpu.vector_store %arg14[%c2_133, %c1_134, %c8_135], %142 {strides = array<i32>} : memref<14x18x16xbf16, #tpu.memory_space<vmem>>, vector<10x16x4xbf16>,
    %c2_136 = arith.constant 2 : index
    %c0_137 = arith.constant 0 : index
    %c0_138 = arith.constant 0 : index
    %144 = vector.load %arg14[%c2_136, %c0_137, %c0_138] : memref<14x18x16xbf16, #tpu.memory_space<vmem>>, vector<8x16x12xbf16>
    %c0_139 = arith.constant 0 : index
    %c0_140 = arith.constant 0 : index
    %145 = vector.load %arg9[%c0_139, %c0_140] : memref<108x4xbf16, #tpu.memory_space<vmem>>, vector<12x4xbf16>
    %cst_141 = arith.constant dense<0.000000e+00> : vector<8x16x4xf32>
    %146 = tpu.matmul %144, %145, %cst_141 {dimension_numbers = #tpu.dot_dimension_numbers<[2], [0], [0, 1], [1], [0, 0, 0, 1, 1, 1], [], []>} : vector<8x16x12xbf16>, vector<12x4xbf16>, vector<8x16x4xf32> -> vector<8x16x4xf32>
    %c2_142 = arith.constant 2 : index
    %c1_143 = arith.constant 1 : index
    %c0_144 = arith.constant 0 : index
    %147 = vector.load %arg14[%c2_142, %c1_143, %c0_144] : memref<14x18x16xbf16, #tpu.memory_space<vmem>>, vector<8x16x12xbf16>
    %c12_145 = arith.constant 12 : index
    %c0_146 = arith.constant 0 : index
    %148 = vector.load %arg9[%c12_145, %c0_146] : memref<108x4xbf16, #tpu.memory_space<vmem>>, vector<12x4xbf16>
    %cst_147 = arith.constant dense<0.000000e+00> : vector<8x16x4xf32>
    %149 = tpu.matmul %147, %148, %cst_147 {dimension_numbers = #tpu.dot_dimension_numbers<[2], [0], [0, 1], [1], [0, 0, 0, 1, 1, 1], [], []>} : vector<8x16x12xbf16>, vector<12x4xbf16>, vector<8x16x4xf32> -> vector<8x16x4xf32>
    %150 = arith.addf %146, %149 : vector<8x16x4xf32>
    %c2_148 = arith.constant 2 : index
    %c2_149 = arith.constant 2 : index
    %c0_150 = arith.constant 0 : index
    %151 = vector.load %arg14[%c2_148, %c2_149, %c0_150] : memref<14x18x16xbf16, #tpu.memory_space<vmem>>, vector<8x16x12xbf16>
    %c24_151 = arith.constant 24 : index
    %c0_152 = arith.constant 0 : index
    %152 = vector.load %arg9[%c24_151, %c0_152] : memref<108x4xbf16, #tpu.memory_space<vmem>>, vector<12x4xbf16>
    %cst_153 = arith.constant dense<0.000000e+00> : vector<8x16x4xf32>
    %153 = tpu.matmul %151, %152, %cst_153 {dimension_numbers = #tpu.dot_dimension_numbers<[2], [0], [0, 1], [1], [0, 0, 0, 1, 1, 1], [], []>} : vector<8x16x12xbf16>, vector<12x4xbf16>, vector<8x16x4xf32> -> vector<8x16x4xf32>
    %154 = arith.addf %150, %153 : vector<8x16x4xf32>
    %c3_154 = arith.constant 3 : index
    %c0_155 = arith.constant 0 : index
    %c0_156 = arith.constant 0 : index
    %155 = vector.load %arg14[%c3_154, %c0_155, %c0_156] : memref<14x18x16xbf16, #tpu.memory_space<vmem>>, vector<8x16x12xbf16>
    %c36 = arith.constant 36 : index
    %c0_157 = arith.constant 0 : index
    %156 = vector.load %arg9[%c36, %c0_157] : memref<108x4xbf16, #tpu.memory_space<vmem>>, vector<12x4xbf16>
    %cst_158 = arith.constant dense<0.000000e+00> : vector<8x16x4xf32>
    %157 = tpu.matmul %155, %156, %cst_158 {dimension_numbers = #tpu.dot_dimension_numbers<[2], [0], [0, 1], [1], [0, 0, 0, 1, 1, 1], [], []>} : vector<8x16x12xbf16>, vector<12x4xbf16>, vector<8x16x4xf32> -> vector<8x16x4xf32>
    %158 = arith.addf %154, %157 : vector<8x16x4xf32>
    %c3_159 = arith.constant 3 : index
    %c1_160 = arith.constant 1 : index
    %c0_161 = arith.constant 0 : index
    %159 = vector.load %arg14[%c3_159, %c1_160, %c0_161] : memref<14x18x16xbf16, #tpu.memory_space<vmem>>, vector<8x16x12xbf16>
    %c48_162 = arith.constant 48 : index
    %c0_163 = arith.constant 0 : index
    %160 = vector.load %arg9[%c48_162, %c0_163] : memref<108x4xbf16, #tpu.memory_space<vmem>>, vector<12x4xbf16>
    %cst_164 = arith.constant dense<0.000000e+00> : vector<8x16x4xf32>
    %161 = tpu.matmul %159, %160, %cst_164 {dimension_numbers = #tpu.dot_dimension_numbers<[2], [0], [0, 1], [1], [0, 0, 0, 1, 1, 1], [], []>} : vector<8x16x12xbf16>, vector<12x4xbf16>, vector<8x16x4xf32> -> vector<8x16x4xf32>
    %162 = arith.addf %158, %161 : vector<8x16x4xf32>
    %c3_165 = arith.constant 3 : index
    %c2_166 = arith.constant 2 : index
    %c0_167 = arith.constant 0 : index
    %163 = vector.load %arg14[%c3_165, %c2_166, %c0_167] : memref<14x18x16xbf16, #tpu.memory_space<vmem>>, vector<8x16x12xbf16>
    %c60 = arith.constant 60 : index
    %c0_168 = arith.constant 0 : index
    %164 = vector.load %arg9[%c60, %c0_168] : memref<108x4xbf16, #tpu.memory_space<vmem>>, vector<12x4xbf16>
    %cst_169 = arith.constant dense<0.000000e+00> : vector<8x16x4xf32>
    %165 = tpu.matmul %163, %164, %cst_169 {dimension_numbers = #tpu.dot_dimension_numbers<[2], [0], [0, 1], [1], [0, 0, 0, 1, 1, 1], [], []>} : vector<8x16x12xbf16>, vector<12x4xbf16>, vector<8x16x4xf32> -> vector<8x16x4xf32>
    %166 = arith.addf %162, %165 : vector<8x16x4xf32>
    %c4_170 = arith.constant 4 : index
    %c0_171 = arith.constant 0 : index
    %c0_172 = arith.constant 0 : index
    %167 = vector.load %arg14[%c4_170, %c0_171, %c0_172] : memref<14x18x16xbf16, #tpu.memory_space<vmem>>, vector<8x16x12xbf16>
    %c72 = arith.constant 72 : index
    %c0_173 = arith.constant 0 : index
    %168 = vector.load %arg9[%c72, %c0_173] : memref<108x4xbf16, #tpu.memory_space<vmem>>, vector<12x4xbf16>
    %cst_174 = arith.constant dense<0.000000e+00> : vector<8x16x4xf32>
    %169 = tpu.matmul %167, %168, %cst_174 {dimension_numbers = #tpu.dot_dimension_numbers<[2], [0], [0, 1], [1], [0, 0, 0, 1, 1, 1], [], []>} : vector<8x16x12xbf16>, vector<12x4xbf16>, vector<8x16x4xf32> -> vector<8x16x4xf32>
    %170 = arith.addf %166, %169 : vector<8x16x4xf32>
    %c4_175 = arith.constant 4 : index
    %c1_176 = arith.constant 1 : index
    %c0_177 = arith.constant 0 : index
    %171 = vector.load %arg14[%c4_175, %c1_176, %c0_177] : memref<14x18x16xbf16, #tpu.memory_space<vmem>>, vector<8x16x12xbf16>
    %c84 = arith.constant 84 : index
    %c0_178 = arith.constant 0 : index
    %172 = vector.load %arg9[%c84, %c0_178] : memref<108x4xbf16, #tpu.memory_space<vmem>>, vector<12x4xbf16>
    %cst_179 = arith.constant dense<0.000000e+00> : vector<8x16x4xf32>
    %173 = tpu.matmul %171, %172, %cst_179 {dimension_numbers = #tpu.dot_dimension_numbers<[2], [0], [0, 1], [1], [0, 0, 0, 1, 1, 1], [], []>} : vector<8x16x12xbf16>, vector<12x4xbf16>, vector<8x16x4xf32> -> vector<8x16x4xf32>
    %174 = arith.addf %170, %173 : vector<8x16x4xf32>
    %c4_180 = arith.constant 4 : index
    %c2_181 = arith.constant 2 : index
    %c0_182 = arith.constant 0 : index
    %175 = vector.load %arg14[%c4_180, %c2_181, %c0_182] : memref<14x18x16xbf16, #tpu.memory_space<vmem>>, vector<8x16x12xbf16>
    %c96 = arith.constant 96 : index
    %c0_183 = arith.constant 0 : index
    %176 = vector.load %arg9[%c96, %c0_183] : memref<108x4xbf16, #tpu.memory_space<vmem>>, vector<12x4xbf16>
    %cst_184 = arith.constant dense<0.000000e+00> : vector<8x16x4xf32>
    %177 = tpu.matmul %175, %176, %cst_184 {dimension_numbers = #tpu.dot_dimension_numbers<[2], [0], [0, 1], [1], [0, 0, 0, 1, 1, 1], [], []>} : vector<8x16x12xbf16>, vector<12x4xbf16>, vector<8x16x4xf32> -> vector<8x16x4xf32>
    %178 = arith.addf %174, %177 : vector<8x16x4xf32>
    %c0_185 = arith.constant 0 : index
    %c0_186 = arith.constant 0 : index
    %179 = vector.load %arg10[%c0_185, %c0_186] : memref<1x4xf32, #tpu.memory_space<vmem>>, vector<1x4xf32>
    %180 = vector.shape_cast %179 : vector<1x4xf32> to vector<4xf32>
    %181 = vector.shape_cast %180 : vector<4xf32> to vector<1x1x4xf32>
    %182 = vector.broadcast %181 : vector<1x1x4xf32> to vector<8x16x4xf32>
    %183 = arith.addf %178, %182 : vector<8x16x4xf32>
    %cst_187 = arith.constant 0.000000e+00 : f32
    %184 = vector.broadcast %cst_187 : f32 to vector<8x16x4xf32>
    %185 = arith.maximumf %183, %184 : vector<8x16x4xf32>
    %186 = tpu.iota {dimensions = array<i32: 0>} : vector<8x1x1xi32>
    %c8_i32_188 = arith.constant 8 : i32
    %187 = arith.muli %arg1, %c8_i32_188 : i32
    %c3_i32_189 = arith.constant 3 : i32
    %188 = arith.subi %187, %c3_i32_189 : i32
    %c3_i32_190 = arith.constant 3 : i32
    %189 = arith.addi %188, %c3_i32_190 : i32
    %190 = vector.broadcast %189 : i32 to vector<8x1x1xi32>
    %191 = arith.addi %186, %190 : vector<8x1x1xi32>
    %c0_i32_191 = arith.constant 0 : i32
    %192 = vector.broadcast %c0_i32_191 : i32 to vector<8x1x1xi32>
    %193 = arith.cmpi sge, %191, %192 : vector<8x1x1xi32>
    %c16_i32_192 = arith.constant 16 : i32
    %194 = vector.broadcast %c16_i32_192 : i32 to vector<8x1x1xi32>
    %195 = arith.cmpi slt, %191, %194 : vector<8x1x1xi32>
    %196 = arith.andi %193, %195 : vector<8x1x1xi1>
    %197 = arith.extui %196 : vector<8x1x1xi1> to vector<8x1x1xi32>
    %198 = arith.sitofp %197 : vector<8x1x1xi32> to vector<8x1x1xf32>
    %199 = vector.broadcast %198 : vector<8x1x1xf32> to vector<8x16x4xf32>
    %200 = arith.mulf %185, %199 : vector<8x16x4xf32>
    %201 = arith.truncf %200 : vector<8x16x4xf32> to vector<8x16x4xbf16>
    %c3_193 = arith.constant 3 : index
    %c1_194 = arith.constant 1 : index
    %c12_195 = arith.constant 12 : index
    %202 = vector.load %arg14[%c3_193, %c1_194, %c12_195] : memref<14x18x16xbf16, #tpu.memory_space<vmem>>, vector<8x16x4xbf16>
    tpu.vector_store %arg14[%c3_193, %c1_194, %c12_195], %201 {strides = array<i32>} : memref<14x18x16xbf16, #tpu.memory_space<vmem>>, vector<8x16x4xbf16>,
    %c3_196 = arith.constant 3 : index
    %c1_197 = arith.constant 1 : index
    %c0_198 = arith.constant 0 : index
    %203 = vector.load %arg14[%c3_196, %c1_197, %c0_198] : memref<14x18x16xbf16, #tpu.memory_space<vmem>>, vector<8x16x16xbf16>
    %c0_199 = arith.constant 0 : index
    %c0_200 = arith.constant 0 : index
    %204 = vector.load %arg11[%c0_199, %c0_200] : memref<16x4xbf16, #tpu.memory_space<vmem>>, vector<16x4xbf16>
    %cst_201 = arith.constant dense<0.000000e+00> : vector<8x16x4xf32>
    %205 = tpu.matmul %203, %204, %cst_201 {dimension_numbers = #tpu.dot_dimension_numbers<[2], [0], [0, 1], [1], [0, 0, 0, 1, 1, 1], [], []>} : vector<8x16x16xbf16>, vector<16x4xbf16>, vector<8x16x4xf32> -> vector<8x16x4xf32>
    %c0_202 = arith.constant 0 : index
    %c0_203 = arith.constant 0 : index
    %206 = vector.load %arg12[%c0_202, %c0_203] : memref<1x4xf32, #tpu.memory_space<vmem>>, vector<1x4xf32>
    %207 = vector.shape_cast %206 : vector<1x4xf32> to vector<4xf32>
    %208 = vector.shape_cast %207 : vector<4xf32> to vector<1x1x4xf32>
    %209 = vector.broadcast %208 : vector<1x1x4xf32> to vector<8x16x4xf32>
    %210 = arith.addf %205, %209 : vector<8x16x4xf32>
    %c0_204 = arith.constant 0 : index
    %c0_205 = arith.constant 0 : index
    %c0_206 = arith.constant 0 : index
    %c0_207 = arith.constant 0 : index
    %211 = vector.load %arg3[%c0_204, %c0_205, %c0_206, %c0_207] : memref<1x8x16x4xf32, #tpu.memory_space<vmem>>, vector<1x8x16x4xf32>
    %212 = vector.shape_cast %211 : vector<1x8x16x4xf32> to vector<8x16x4xf32>
    %213 = arith.addf %210, %212 : vector<8x16x4xf32>
    %c0_208 = arith.constant 0 : index
    %c0_209 = arith.constant 0 : index
    %c0_210 = arith.constant 0 : index
    %c0_211 = arith.constant 0 : index
    %214 = vector.load %arg13[%c0_208, %c0_209, %c0_210, %c0_211] : memref<1x8x16x4xf32, #tpu.memory_space<vmem>>, vector<1x8x16x4xf32>
    %215 = vector.shape_cast %214 : vector<1x8x16x4xf32> to vector<8x16x4xf32>
    %216 = vector.shape_cast %213 : vector<8x16x4xf32> to vector<1x8x16x4xf32>
    tpu.vector_store %arg13[%c0_208, %c0_209, %c0_210, %c0_211], %216 {strides = array<i32>} : memref<1x8x16x4xf32, #tpu.memory_space<vmem>>, vector<1x8x16x4xf32>,
    return
  }
  func.func @transform_0(%arg0: i32, %arg1: i32) -> (i32, i32, i32, i32) {
    %c2_i32 = arith.constant 2 : i32
    %0 = arith.muli %arg1, %c2_i32 : i32
    %c1_i32 = arith.constant 1 : i32
    %1 = arith.subi %0, %c1_i32 : i32
    %c0_i32 = arith.constant 0 : i32
    %2 = arith.maxsi %1, %c0_i32 : i32
    %c0_i32_0 = arith.constant 0 : i32
    %c0_i32_1 = arith.constant 0 : i32
    %c0_i32_2 = arith.constant 0 : i32
    return %arg0, %2, %c0_i32_0, %c0_i32_1 : i32, i32, i32, i32
  }
  func.func @transform_1(%arg0: i32, %arg1: i32) -> (i32, i32, i32, i32) {
    %c0_i32 = arith.constant 0 : i32
    %c0_i32_0 = arith.constant 0 : i32
    %c0_i32_1 = arith.constant 0 : i32
    return %arg0, %arg1, %c0_i32, %c0_i32_0 : i32, i32, i32, i32
  }
  func.func @transform_2(%arg0: i32, %arg1: i32) -> (i32, i32, i32, i32) {
    %c1_i32 = arith.constant 1 : i32
    %0 = arith.addi %arg1, %c1_i32 : i32
    %c2_i32 = arith.constant 2 : i32
    %1 = arith.muli %0, %c2_i32 : i32
    %c3_i32 = arith.constant 3 : i32
    %2 = arith.minsi %1, %c3_i32 : i32
    %c0_i32 = arith.constant 0 : i32
    %c0_i32_0 = arith.constant 0 : i32
    %c0_i32_1 = arith.constant 0 : i32
    return %arg0, %2, %c0_i32, %c0_i32_0 : i32, i32, i32, i32
  }
  func.func @transform_3(%arg0: i32, %arg1: i32) -> (i32, i32) {
    %c0_i32 = arith.constant 0 : i32
    %c0_i32_0 = arith.constant 0 : i32
    %c0_i32_1 = arith.constant 0 : i32
    return %c0_i32, %c0_i32_0 : i32, i32
  }
  func.func @transform_4(%arg0: i32, %arg1: i32) -> (i32, i32) {
    %c0_i32 = arith.constant 0 : i32
    %c0_i32_0 = arith.constant 0 : i32
    %c0_i32_1 = arith.constant 0 : i32
    return %c0_i32, %c0_i32_0 : i32, i32
  }
  func.func @transform_5(%arg0: i32, %arg1: i32) -> (i32, i32) {
    %c0_i32 = arith.constant 0 : i32
    %c0_i32_0 = arith.constant 0 : i32
    %c0_i32_1 = arith.constant 0 : i32
    return %c0_i32, %c0_i32_0 : i32, i32
  }
  func.func @transform_6(%arg0: i32, %arg1: i32) -> (i32, i32) {
    %c0_i32 = arith.constant 0 : i32
    %c0_i32_0 = arith.constant 0 : i32
    %c0_i32_1 = arith.constant 0 : i32
    return %c0_i32, %c0_i32_0 : i32, i32
  }
  func.func @transform_7(%arg0: i32, %arg1: i32) -> (i32, i32) {
    %c0_i32 = arith.constant 0 : i32
    %c0_i32_0 = arith.constant 0 : i32
    %c0_i32_1 = arith.constant 0 : i32
    return %c0_i32, %c0_i32_0 : i32, i32
  }
  func.func @transform_8(%arg0: i32, %arg1: i32) -> (i32, i32) {
    %c0_i32 = arith.constant 0 : i32
    %c0_i32_0 = arith.constant 0 : i32
    %c0_i32_1 = arith.constant 0 : i32
    return %c0_i32, %c0_i32_0 : i32, i32
  }
  func.func @transform_9(%arg0: i32, %arg1: i32) -> (i32, i32) {
    %c0_i32 = arith.constant 0 : i32
    %c0_i32_0 = arith.constant 0 : i32
    %c0_i32_1 = arith.constant 0 : i32
    return %c0_i32, %c0_i32_0 : i32, i32
  }
  func.func @transform_10(%arg0: i32, %arg1: i32) -> (i32, i32) {
    %c0_i32 = arith.constant 0 : i32
    %c0_i32_0 = arith.constant 0 : i32
    %c0_i32_1 = arith.constant 0 : i32
    return %c0_i32, %c0_i32_0 : i32, i32
  }
  func.func @transform_11(%arg0: i32, %arg1: i32) -> (i32, i32, i32, i32) {
    %c0_i32 = arith.constant 0 : i32
    %c0_i32_0 = arith.constant 0 : i32
    %c0_i32_1 = arith.constant 0 : i32
    return %arg0, %arg1, %c0_i32, %c0_i32_0 : i32, i32, i32, i32
  }
}

</mosaic_0001>

<llo_original>
// kernel: denoise_rdb_forward_nchw.1
$region0: #{denoise_rdb_forward_nchw.1}
  #allocation0 [shape = 'u32[]', space=smem, size = 0x4, offset = 0x4, fixed_abs, tag = 'smem constant byte address 0x4 - core index']
  #allocation1 [shape = 'u32[144,128]{1,0:T(1,128)}', space=vmem, size = 0x12000, scoped, tag = 'internal scratch']
  #allocation2 [shape = 'bf16[14,18,16]{2,1,0:T(8,128)(2,1)}', space=vmem, size = 0x15000, scoped, tag = 'scratch operand']
  %s0 = inlined_call_operand.vmem [shape: f32[2,16,16,4], index: 0, kind: input, shape index: {}, may-alias: {0,1,2}]
  %s1 = inlined_call_operand.vmem [shape: f32[2,16,16,4], index: 1, kind: input, shape index: {}, may-alias: {0,1,2}]
  %s2 = inlined_call_operand.vmem [shape: f32[2,16,16,4], index: 2, kind: input, shape index: {}, may-alias: {0,1,2}]
  %s3 = inlined_call_operand.vmem [shape: bf16[36,4], index: 3, kind: input, shape index: {}]
  %s4 = inlined_call_operand.vmem [shape: f32[1,4], index: 4, kind: input, shape index: {}]
  %s5 = inlined_call_operand.vmem [shape: bf16[72,4], index: 5, kind: input, shape index: {}]
  %s6 = inlined_call_operand.vmem [shape: f32[1,4], index: 6, kind: input, shape index: {}]
  %s7 = inlined_call_operand.vmem [shape: bf16[108,4], index: 7, kind: input, shape index: {}]
  %s8 = inlined_call_operand.vmem [shape: f32[1,4], index: 8, kind: input, shape index: {}]
  %s9 = inlined_call_operand.vmem [shape: bf16[16,4], index: 9, kind: input, shape index: {}]
  %s10 = inlined_call_operand.vmem [shape: f32[1,4], index: 10, kind: input, shape index: {}]
  %s11 = inlined_call_operand.vmem [shape: f32[2,16,16,4], index: 11, kind: output, shape index: {}]
  %s12 = sld [smem:[#allocation0]]
  $region77: #{denoise_rdb_forward_nchw.1} parent=0
    _
  %s14 = ssub.s32 1, %s12
  %s15 = scalar_select 0, %s14, %s12
  loop: start=0, step=1, limit=6
  $region2: #{denoise_rdb_forward_nchw.1} parent=0 // loop_pre_header
    _
  $region3: #{denoise_rdb_forward_nchw.1} parent=0 // loop_header
    %s17 = sphi 0, %s21
    %p18 = scmp.ge.s32.totalorder %s17, 6
    %s24 = sphi 0, %s36
    %s25 = sphi 0, %s32
    %s26 = sphi 0, %s24
    %s27 = sphi 0, %s25
    %s28 = sphi 0, %s26
    %s29 = sphi 0, %s27
    %s49 = sphi 0, %s51
    %s52 = sphi 0, %s49
    %s53 = sphi 0, %s52
    %s69 = sphi 0, %s53
    %s77 = sphi 0, %s79
    %s80 = sphi 0, %s77
    %s81 = sphi 0, %s80
    %s97 = sphi 0, %s81
    %s113 = sphi 0, %s115
    %s116 = sphi 0, %s113
    %s117 = sphi 0, %s116
    %s133 = sphi 0, %s117
    %s137 = sphi 0, %s137
    %s139 = sphi 0, %s137
    %s140 = sphi 0, %s139
    %s154 = sphi 0, %s140
    %s158 = sphi 0, %s158
    %s160 = sphi 0, %s158
    %s161 = sphi 0, %s160
    %s175 = sphi 0, %s161
    %s179 = sphi 0, %s179
    %s181 = sphi 0, %s179
    %s182 = sphi 0, %s181
    %s196 = sphi 0, %s182
    %s200 = sphi 0, %s200
    %s202 = sphi 0, %s200
    %s203 = sphi 0, %s202
    %s217 = sphi 0, %s203
    %s221 = sphi 0, %s221
    %s223 = sphi 0, %s221
    %s224 = sphi 0, %s223
    %s238 = sphi 0, %s224
    %s242 = sphi 0, %s242
    %s244 = sphi 0, %s242
    %s245 = sphi 0, %s244
    %s259 = sphi 0, %s245
    %s263 = sphi 0, %s263
    %s265 = sphi 0, %s263
    %s266 = sphi 0, %s265
    %s280 = sphi 0, %s266
    %s284 = sphi 0, %s284
    %s286 = sphi 0, %s284
    %s287 = sphi 0, %s286
    %s301 = sphi 0, %s287
    %s309 = sphi 0, %s311
    %s312 = sphi 0, %s309
    %s313 = sphi 0, %s312
    %s329 = sphi 0, %s313
  $region4: #{denoise_rdb_forward_nchw.1} parent=0 // loop_header_branch
    %20 = sbr.rel (%p18) target = $region8
  $region5: #{denoise_rdb_forward_nchw.1} parent=0 // loop_body
    %s22 = ssub.s32 %s17, 1
    %s23 = ssub.s32 %s17, 2
    %s30 = sadd.s32 1, %s25
    %p31 = scmp.ge.s32.totalorder %s30, 2
    %s32 = scalar_select %p31, 0, %s30
    %s33 = sadd.s32 1, %s24
    %s34 = scalar_select %p31, %s33, %s24
    %p35 = scmp.ge.s32.totalorder %s34, 2
    %s36 = scalar_select %p35, 0, %s34
    %s37 = smul.u32 %s25, 2
    %s38 = ssub.s32 %s37, 1
    %p39 = scmp.gt.s32.totalorder %s38, 0
    %s40 = scalar_select %p39, %s38, 0
    %s41 = smul.u32 %s32, 2
    %s42 = ssub.s32 %s41, 1
    %p43 = scmp.gt.s32.totalorder %s42, 0
    %s44 = scalar_select %p43, %s42, 0
    %s45 = ssub.s32 %s24, %s36
    %s46 = ssub.s32 %s40, %s44
    %s47 = sor.u32 %s45, %s46
    %p48 = scmp.eq.s32.totalorder %s47, 0
    %s50 = sadd.s32 %s49, 1
    %s51 = scalar_select %p48, %s49, %s50
    %p54 = pneg %p48
    %p55 = scmp.eq.s32.totalorder %s17, 3
    %p56 = por %p54, %p55
    %p57 = scmp.ne.s32.totalorder %s49, %s52
    %p58 = scmp.eq.s32.totalorder %s17, 0
    %p59 = por %p57, %p58
    %p60 = scmp.ne.s32.totalorder %s49, %s52
    %p61 = scmp.eq.s32.totalorder %s22, 3
    %p62 = por %p60, %p61
    %p63 = scmp.ne.s32.totalorder %s52, %s53
    %p64 = scmp.eq.s32.totalorder %s22, 0
    %p65 = por %p63, %p64
    %p66 = scmp.ne.s32.totalorder %s52, %s53
    %p67 = scmp.eq.s32.totalorder %s23, 3
    %p68 = por %p66, %p67
    %p70 = scmp.ne.s32.totalorder %s53, %s69
    %p71 = scmp.eq.s32.totalorder %s23, 0
    %p72 = por %p70, %p71
    %s73 = ssub.s32 %s24, %s36
    %s74 = ssub.s32 %s25, %s32
    %s75 = sor.u32 %s73, %s74
    %p76 = scmp.eq.s32.totalorder %s75, 0
    %s78 = sadd.s32 %s77, 1
    %s79 = scalar_select %p76, %s77, %s78
    %p82 = pneg %p76
    %p83 = scmp.eq.s32.totalorder %s17, 3
    %p84 = por %p82, %p83
    %p85 = scmp.ne.s32.totalorder %s77, %s80
    %p86 = scmp.eq.s32.totalorder %s17, 0
    %p87 = por %p85, %p86
    %p88 = scmp.ne.s32.totalorder %s77, %s80
    %p89 = scmp.eq.s32.totalorder %s22, 3
    %p90 = por %p88, %p89
    %p91 = scmp.ne.s32.totalorder %s80, %s81
    %p92 = scmp.eq.s32.totalorder %s22, 0
    %p93 = por %p91, %p92
    %p94 = scmp.ne.s32.totalorder %s80, %s81
    %p95 = scmp.eq.s32.totalorder %s23, 3
    %p96 = por %p94, %p95
    %p98 = scmp.ne.s32.totalorder %s81, %s97
    %p99 = scmp.eq.s32.totalorder %s23, 0
    %p100 = por %p98, %p99
    %s101 = sadd.s32 %s25, 1
    %s102 = smul.u32 %s101, 2
    %p103 = scmp.lt.s32.totalorder %s102, 3
    %s104 = scalar_select %p103, %s102, 3
    %s105 = sadd.s32 %s32, 1
    %s106 = smul.u32 %s105, 2
    %p107 = scmp.lt.s32.totalorder %s106, 3
    %s108 = scalar_select %p107, %s106, 3
    %s109 = ssub.s32 %s24, %s36
    %s110 = ssub.s32 %s104, %s108
    %s111 = sor.u32 %s109, %s110
    %p112 = scmp.eq.s32.totalorder %s111, 0
    %s114 = sadd.s32 %s113, 1
    %s115 = scalar_select %p112, %s113, %s114
    %p118 = pneg %p112
    %p119 = scmp.eq.s32.totalorder %s17, 3
    %p120 = por %p118, %p119
    %p121 = scmp.ne.s32.totalorder %s113, %s116
    %p122 = scmp.eq.s32.totalorder %s17, 0
    %p123 = por %p121, %p122
    %p124 = scmp.ne.s32.totalorder %s113, %s116
    %p125 = scmp.eq.s32.totalorder %s22, 3
    %p126 = por %p124, %p125
    %p127 = scmp.ne.s32.totalorder %s116, %s117
    %p128 = scmp.eq.s32.totalorder %s22, 0
    %p129 = por %p127, %p128
    %p130 = scmp.ne.s32.totalorder %s116, %s117
    %p131 = scmp.eq.s32.totalorder %s23, 3
    %p132 = por %p130, %p131
    %p134 = scmp.ne.s32.totalorder %s117, %s133
    %p135 = scmp.eq.s32.totalorder %s23, 0
    %p136 = por %p134, %p135
    %s138 = sadd.s32 %s137, 1
    %p141 = scmp.eq.s32.totalorder %s17, 3
    %p142 = scmp.ne.s32.totalorder %s137, %s139
    %p143 = scmp.eq.s32.totalorder %s17, 0
    %p144 = por %p142, %p143
    %p145 = scmp.ne.s32.totalorder %s137, %s139
    %p146 = scmp.eq.s32.totalorder %s22, 3
    %p147 = por %p145, %p146
    %p148 = scmp.ne.s32.totalorder %s139, %s140
    %p149 = scmp.eq.s32.totalorder %s22, 0
    %p150 = por %p148, %p149
    %p151 = scmp.ne.s32.totalorder %s139, %s140
    %p152 = scmp.eq.s32.totalorder %s23, 3
    %p153 = por %p151, %p152
    %p155 = scmp.ne.s32.totalorder %s140, %s154
    %p156 = scmp.eq.s32.totalorder %s23, 0
    %p157 = por %p155, %p156
    %s159 = sadd.s32 %s158, 1
    %p162 = scmp.eq.s32.totalorder %s17, 3
    %p163 = scmp.ne.s32.totalorder %s158, %s160
    %p164 = scmp.eq.s32.totalorder %s17, 0
    %p165 = por %p163, %p164
    %p166 = scmp.ne.s32.totalorder %s158, %s160
    %p167 = scmp.eq.s32.totalorder %s22, 3
    %p168 = por %p166, %p167
    %p169 = scmp.ne.s32.totalorder %s160, %s161
    %p170 = scmp.eq.s32.totalorder %s22, 0
    %p171 = por %p169, %p170
    %p172 = scmp.ne.s32.totalorder %s160, %s161
    %p173 = scmp.eq.s32.totalorder %s23, 3
    %p174 = por %p172, %p173
    %p176 = scmp.ne.s32.totalorder %s161, %s175
    %p177 = scmp.eq.s32.totalorder %s23, 0
    %p178 = por %p176, %p177
    %s180 = sadd.s32 %s179, 1
    %p183 = scmp.eq.s32.totalorder %s17, 3
    %p184 = scmp.ne.s32.totalorder %s179, %s181
    %p185 = scmp.eq.s32.totalorder %s17, 0
    %p186 = por %p184, %p185
    %p187 = scmp.ne.s32.totalorder %s179, %s181
    %p188 = scmp.eq.s32.totalorder %s22, 3
    %p189 = por %p187, %p188
    %p190 = scmp.ne.s32.totalorder %s181, %s182
    %p191 = scmp.eq.s32.totalorder %s22, 0
    %p192 = por %p190, %p191
    %p193 = scmp.ne.s32.totalorder %s181, %s182
    %p194 = scmp.eq.s32.totalorder %s23, 3
    %p195 = por %p193, %p194
    %p197 = scmp.ne.s32.totalorder %s182, %s196
    %p198 = scmp.eq.s32.totalorder %s23, 0
    %p199 = por %p197, %p198
    %s201 = sadd.s32 %s200, 1
    %p204 = scmp.eq.s32.totalorder %s17, 3
    %p205 = scmp.ne.s32.totalorder %s200, %s202
    %p206 = scmp.eq.s32.totalorder %s17, 0
    %p207 = por %p205, %p206
    %p208 = scmp.ne.s32.totalorder %s200, %s202
    %p209 = scmp.eq.s32.totalorder %s22, 3
    %p210 = por %p208, %p209
    %p211 = scmp.ne.s32.totalorder %s202, %s203
    %p212 = scmp.eq.s32.totalorder %s22, 0
    %p213 = por %p211, %p212
    %p214 = scmp.ne.s32.totalorder %s202, %s203
    %p215 = scmp.eq.s32.totalorder %s23, 3
    %p216 = por %p214, %p215
    %p218 = scmp.ne.s32.totalorder %s203, %s217
    %p219 = scmp.eq.s32.totalorder %s23, 0
    %p220 = por %p218, %p219
    %s222 = sadd.s32 %s221, 1
    %p225 = scmp.eq.s32.totalorder %s17, 3
    %p226 = scmp.ne.s32.totalorder %s221, %s223
    %p227 = scmp.eq.s32.totalorder %s17, 0
    %p228 = por %p226, %p227
    %p229 = scmp.ne.s32.totalorder %s221, %s223
    %p230 = scmp.eq.s32.totalorder %s22, 3
    %p231 = por %p229, %p230
    %p232 = scmp.ne.s32.totalorder %s223, %s224
    %p233 = scmp.eq.s32.totalorder %s22, 0
    %p234 = por %p232, %p233
    %p235 = scmp.ne.s32.totalorder %s223, %s224
    %p236 = scmp.eq.s32.totalorder %s23, 3
    %p237 = por %p235, %p236
    %p239 = scmp.ne.s32.totalorder %s224, %s238
    %p240 = scmp.eq.s32.totalorder %s23, 0
    %p241 = por %p239, %p240
    %s243 = sadd.s32 %s242, 1
    %p246 = scmp.eq.s32.totalorder %s17, 3
    %p247 = scmp.ne.s32.totalorder %s242, %s244
    %p248 = scmp.eq.s32.totalorder %s17, 0
    %p249 = por %p247, %p248
    %p250 = scmp.ne.s32.totalorder %s242, %s244
    %p251 = scmp.eq.s32.totalorder %s22, 3
    %p252 = por %p250, %p251
    %p253 = scmp.ne.s32.totalorder %s244, %s245
    %p254 = scmp.eq.s32.totalorder %s22, 0
    %p255 = por %p253, %p254
    %p256 = scmp.ne.s32.totalorder %s244, %s245
    %p257 = scmp.eq.s32.totalorder %s23, 3
    %p258 = por %p256, %p257
    %p260 = scmp.ne.s32.totalorder %s245, %s259
    %p261 = scmp.eq.s32.totalorder %s23, 0
    %p262 = por %p260, %p261
    %s264 = sadd.s32 %s263, 1
    %p267 = scmp.eq.s32.totalorder %s17, 3
    %p268 = scmp.ne.s32.totalorder %s263, %s265
    %p269 = scmp.eq.s32.totalorder %s17, 0
    %p270 = por %p268, %p269
    %p271 = scmp.ne.s32.totalorder %s263, %s265
    %p272 = scmp.eq.s32.totalorder %s22, 3
    %p273 = por %p271, %p272
    %p274 = scmp.ne.s32.totalorder %s265, %s266
    %p275 = scmp.eq.s32.totalorder %s22, 0
    %p276 = por %p274, %p275
    %p277 = scmp.ne.s32.totalorder %s265, %s266
    %p278 = scmp.eq.s32.totalorder %s23, 3
    %p279 = por %p277, %p278
    %p281 = scmp.ne.s32.totalorder %s266, %s280
    %p282 = scmp.eq.s32.totalorder %s23, 0
    %p283 = por %p281, %p282
    %s285 = sadd.s32 %s284, 1
    %p288 = scmp.eq.s32.totalorder %s17, 3
    %p289 = scmp.ne.s32.totalorder %s284, %s286
    %p290 = scmp.eq.s32.totalorder %s17, 0
    %p291 = por %p289, %p290
    %p292 = scmp.ne.s32.totalorder %s284, %s286
    %p293 = scmp.eq.s32.totalorder %s22, 3
    %p294 = por %p292, %p293
    %p295 = scmp.ne.s32.totalorder %s286, %s287
    %p296 = scmp.eq.s32.totalorder %s22, 0
    %p297 = por %p295, %p296
    %p298 = scmp.ne.s32.totalorder %s286, %s287
    %p299 = scmp.eq.s32.totalorder %s23, 3
    %p300 = por %p298, %p299
    %p302 = scmp.ne.s32.totalorder %s287, %s301
    %p303 = scmp.eq.s32.totalorder %s23, 0
    %p304 = por %p302, %p303
    %s305 = ssub.s32 %s24, %s36
    %s306 = ssub.s32 %s25, %s32
    %s307 = sor.u32 %s305, %s306
    %p308 = scmp.eq.s32.totalorder %s307, 0
    %s310 = sadd.s32 %s309, 1
    %s311 = scalar_select %p308, %s309, %s310
    %p314 = pneg %p308
    %p315 = scmp.eq.s32.totalorder %s17, 3
    %p316 = por %p314, %p315
    %p317 = scmp.ne.s32.totalorder %s309, %s312
    %p318 = scmp.eq.s32.totalorder %s17, 0
    %p319 = por %p317, %p318
    %p320 = scmp.ne.s32.totalorder %s309, %s312
    %p321 = scmp.eq.s32.totalorder %s22, 3
    %p322 = por %p320, %p321
    %p323 = scmp.ne.s32.totalorder %s312, %s313
    %p324 = scmp.eq.s32.totalorder %s22, 0
    %p325 = por %p323, %p324
    %p326 = scmp.ne.s32.totalorder %s312, %s313
    %p327 = scmp.eq.s32.totalorder %s23, 3
    %p328 = por %p326, %p327
    %p330 = scmp.ne.s32.totalorder %s313, %s329
    %p331 = scmp.eq.s32.totalorder %s23, 0
    %p332 = por %p330, %p331
    %p333 = scmp.le.s32.totalorder 1, %s17
    %p334 = scmp.lt.s32.totalorder %s17, 5
    %p335 = pnand %p333, %p334
    %p336 = pneg %p335
    // Predicated region
    $region9: #{denoise_rdb_forward_nchw.1} parent=5 // pred_check
      _
    $region10: #{denoise_rdb_forward_nchw.1} parent=5 // pred_check_branch
      %338 = sbr.rel (%p335) target = $region12
    $region11: #{denoise_rdb_forward_nchw.1} parent=5 // pred_region
      %s339 = ssub.s32 %s17, 1
      // Predicated region
      $region13: #{denoise_rdb_forward_nchw.1} parent=11 // pred_check
        %p340 = pneg %p150
      $region14: #{denoise_rdb_forward_nchw.1} parent=11 // pred_check_branch
        %342 = sbr.rel (%p340) target = $region16
      $region15: #{denoise_rdb_forward_nchw.1} parent=11 // pred_region
        _
      $region16: #{denoise_rdb_forward_nchw.1} parent=11 // pred_fallthru
        _
      // Predicated region
      $region17: #{denoise_rdb_forward_nchw.1} parent=11 // pred_check
        %p343 = pneg %p171
      $region18: #{denoise_rdb_forward_nchw.1} parent=11 // pred_check_branch
        %345 = sbr.rel (%p343) target = $region20
      $region19: #{denoise_rdb_forward_nchw.1} parent=11 // pred_region
        _
      $region20: #{denoise_rdb_forward_nchw.1} parent=11 // pred_fallthru
        _
      // Predicated region
      $region21: #{denoise_rdb_forward_nchw.1} parent=11 // pred_check
        %p346 = pneg %p192
      $region22: #{denoise_rdb_forward_nchw.1} parent=11 // pred_check_branch
        %348 = sbr.rel (%p346) target = $region24
      $region23: #{denoise_rdb_forward_nchw.1} parent=11 // pred_region
        _
      $region24: #{denoise_rdb_forward_nchw.1} parent=11 // pred_fallthru
        _
      // Predicated region
      $region25: #{denoise_rdb_forward_nchw.1} parent=11 // pred_check
        %p349 = pneg %p213
      $region26: #{denoise_rdb_forward_nchw.1} parent=11 // pred_check_branch
        %351 = sbr.rel (%p349) target = $region28
      $region27: #{denoise_rdb_forward_nchw.1} parent=11 // pred_region
        _
      $region28: #{denoise_rdb_forward_nchw.1} parent=11 // pred_fallthru
        _
      // Predicated region
      $region29: #{denoise_rdb_forward_nchw.1} parent=11 // pred_check
        %p352 = pneg %p234
      $region30: #{denoise_rdb_forward_nchw.1} parent=11 // pred_check_branch
        %354 = sbr.rel (%p352) target = $region32
      $region31: #{denoise_rdb_forward_nchw.1} parent=11 // pred_region
        _
      $region32: #{denoise_rdb_forward_nchw.1} parent=11 // pred_fallthru
        _
      // Predicated region
      $region33: #{denoise_rdb_forward_nchw.1} parent=11 // pred_check
        %p355 = pneg %p255
      $region34: #{denoise_rdb_forward_nchw.1} parent=11 // pred_check_branch
        %357 = sbr.rel (%p355) target = $region36
      $region35: #{denoise_rdb_forward_nchw.1} parent=11 // pred_region
        _
      $region36: #{denoise_rdb_forward_nchw.1} parent=11 // pred_fallthru
        _
      // Predicated region
      $region37: #{denoise_rdb_forward_nchw.1} parent=11 // pred_check
        %p358 = pneg %p276
      $region38: #{denoise_rdb_forward_nchw.1} parent=11 // pred_check_branch
        %360 = sbr.rel (%p358) target = $region40
      $region39: #{denoise_rdb_forward_nchw.1} parent=11 // pred_region
        _
      $region40: #{denoise_rdb_forward_nchw.1} parent=11 // pred_fallthru
        _
      // Predicated region
      $region41: #{denoise_rdb_forward_nchw.1} parent=11 // pred_check
        %p361 = pneg %p297
      $region42: #{denoise_rdb_forward_nchw.1} parent=11 // pred_check_branch
        %363 = sbr.rel (%p361) target = $region44
      $region43: #{denoise_rdb_forward_nchw.1} parent=11 // pred_region
        _
      $region44: #{denoise_rdb_forward_nchw.1} parent=11 // pred_fallthru
        _
    $region12: #{denoise_rdb_forward_nchw.1} parent=5 // pred_fallthru
      _
    %p364 = scmp.lt.s32.totalorder %s17, 4
    // Predicated region
    $region45: #{denoise_rdb_forward_nchw.1} parent=5 // pred_check
      %p365 = pneg %p364
    $region46: #{denoise_rdb_forward_nchw.1} parent=5 // pred_check_branch
      %367 = sbr.rel (%p365) target = $region48
    $region47: #{denoise_rdb_forward_nchw.1} parent=5 // pred_region
      // Predicated region
      $region49: #{denoise_rdb_forward_nchw.1} parent=47 // pred_check
        %p368 = pneg %p59
      $region50: #{denoise_rdb_forward_nchw.1} parent=47 // pred_check_branch
        %370 = sbr.rel (%p368) target = $region52
      $region51: #{denoise_rdb_forward_nchw.1} parent=47 // pred_region
        %s371 = smul.u32 %s25, 2
        %s372 = ssub.s32 %s371, 1
        %p373 = scmp.gt.s32.totalorder %s372, 0
        %s374 = scalar_select %p373, %s372, 0
        %s375 = smul.u32 4, %s374
        %p376 = scmp.lt.s32.totalorder %s24, 1
        %s377 = scalar_select %p376, %s24, 1
        %p378 = scmp.lt.s32.totalorder %s375, 15
        %s379 = scalar_select %p378, %s375, 15
        %s380 = smul.addr %s379, 2
        %s381 = smul.addr %s377, 32
        %s382 = sadd.s32 %s380, %s381
        %s383 = smul.addr %s382, 8
        %s384 = scalar_lea.vmem %s0, %s383
        %s385 = smul.u32 %s25, 2
        %s386 = ssub.s32 %s385, 1
        %p387 = scmp.gt.s32.totalorder %s386, 0
        %s388 = scalar_select %p387, %s386, 0
        %s389 = smul.u32 4, %s388
      $region52: #{denoise_rdb_forward_nchw.1} parent=47 // pred_fallthru
        _
      // Predicated region
      $region53: #{denoise_rdb_forward_nchw.1} parent=47 // pred_check
        %p390 = pneg %p87
      $region54: #{denoise_rdb_forward_nchw.1} parent=47 // pred_check_branch
        %392 = sbr.rel (%p390) target = $region56
      $region55: #{denoise_rdb_forward_nchw.1} parent=47 // pred_region
        %s393 = smul.u32 8, %s25
        %p394 = scmp.lt.s32.totalorder %s24, 1
        %s395 = scalar_select %p394, %s24, 1
        %p396 = scmp.lt.s32.totalorder %s393, 15
        %s397 = scalar_select %p396, %s393, 15
        %s398 = smul.addr %s397, 2
        %s399 = smul.addr %s395, 32
        %s400 = sadd.s32 %s398, %s399
        %s401 = smul.addr %s400, 8
        %s402 = scalar_lea.vmem %s1, %s401
        %s403 = smul.u32 8, %s25
      $region56: #{denoise_rdb_forward_nchw.1} parent=47 // pred_fallthru
        _
      // Predicated region
      $region57: #{denoise_rdb_forward_nchw.1} parent=47 // pred_check
        %p404 = pneg %p123
      $region58: #{denoise_rdb_forward_nchw.1} parent=47 // pred_check_branch
        %406 = sbr.rel (%p404) target = $region60
      $region59: #{denoise_rdb_forward_nchw.1} parent=47 // pred_region
        %s407 = sadd.s32 %s25, 1
        %s408 = smul.u32 %s407, 2
        %p409 = scmp.lt.s32.totalorder %s408, 3
        %s410 = scalar_select %p409, %s408, 3
        %s411 = smul.u32 4, %s410
        %p412 = scmp.lt.s32.totalorder %s24, 1
        %s413 = scalar_select %p412, %s24, 1
        %p414 = scmp.lt.s32.totalorder %s411, 15
        %s415 = scalar_select %p414, %s411, 15
        %s416 = smul.addr %s415, 2
        %s417 = smul.addr %s413, 32
        %s418 = sadd.s32 %s416, %s417
        %s419 = smul.addr %s418, 8
        %s420 = scalar_lea.vmem %s2, %s419
        %s421 = sadd.s32 %s25, 1
        %s422 = smul.u32 %s421, 2
        %p423 = scmp.lt.s32.totalorder %s422, 3
        %s424 = scalar_select %p423, %s422, 3
        %s425 = smul.u32 4, %s424
      $region60: #{denoise_rdb_forward_nchw.1} parent=47 // pred_fallthru
        _
    $region48: #{denoise_rdb_forward_nchw.1} parent=5 // pred_fallthru
      _
    %p426 = scmp.le.s32.totalorder 1, %s17
    %p427 = scmp.lt.s32.totalorder %s17, 5
    %p428 = pnand %p426, %p427
    %p429 = pneg %p428
    // Predicated region
    $region61: #{denoise_rdb_forward_nchw.1} parent=5 // pred_check
      _
    $region62: #{denoise_rdb_forward_nchw.1} parent=5 // pred_check_branch
      %431 = sbr.rel (%p428) target = $region64
    $region63: #{denoise_rdb_forward_nchw.1} parent=5 // pred_region
      %s432 = ssub.s32 %s17, 1
      %s433 = smul.u32 %s27, 2
      %s434 = ssub.s32 %s433, 1
      %p435 = scmp.gt.s32.totalorder %s434, 0
      %s436 = scalar_select %p435, %s434, 0
      %s437 = smul.u32 4, %s436
      %p438 = scmp.lt.s32.totalorder %s26, 1
      %s439 = scalar_select %p438, %s26, 1
      %p440 = scmp.lt.s32.totalorder %s437, 15
      %s441 = scalar_select %p440, %s437, 15
      %s442 = smul.addr %s441, 2
      %s443 = smul.addr %s439, 32
      %s444 = sadd.s32 %s442, %s443
      %s445 = smul.addr %s444, 8
      %s446 = scalar_lea.vmem %s0, %s445
      %p447 = pneg %p65
      %p448 = pneg %p62
      %s449 = smul.u32 8, %s27
      %p450 = scmp.lt.s32.totalorder %s26, 1
      %s451 = scalar_select %p450, %s26, 1
      %p452 = scmp.lt.s32.totalorder %s449, 15
      %s453 = scalar_select %p452, %s449, 15
      %s454 = smul.addr %s453, 2
      %s455 = smul.addr %s451, 32
      %s456 = sadd.s32 %s454, %s455
      %s457 = smul.addr %s456, 8
      %s458 = scalar_lea.vmem %s1, %s457
      %p459 = pneg %p93
      %p460 = pneg %p90
      %s461 = sadd.s32 %s27, 1
      %s462 = smul.u32 %s461, 2
      %p463 = scmp.lt.s32.totalorder %s462, 3
      %s464 = scalar_select %p463, %s462, 3
      %s465 = smul.u32 4, %s464
      %p466 = scmp.lt.s32.totalorder %s26, 1
      %s467 = scalar_select %p466, %s26, 1
      %p468 = scmp.lt.s32.totalorder %s465, 15
      %s469 = scalar_select %p468, %s465, 15
      %s470 = smul.addr %s469, 2
      %s471 = smul.addr %s467, 32
      %s472 = sadd.s32 %s470, %s471
      %s473 = smul.addr %s472, 8
      %s474 = scalar_lea.vmem %s2, %s473
      %p475 = pneg %p129
      %p476 = pneg %p126
      %p477 = pneg %p150
      %p478 = pneg %p147
      %p479 = pneg %p171
      %p480 = pneg %p168
      %p481 = pneg %p192
      %p482 = pneg %p189
      %p483 = pneg %p213
      %p484 = pneg %p210
      %p485 = pneg %p234
      %p486 = pneg %p231
      %p487 = pneg %p255
      %p488 = pneg %p252
      %p489 = pneg %p276
      %p490 = pneg %p273
      %p491 = pneg %p297
      %p492 = pneg %p294
      %p493 = pneg %p325
      %p494 = pneg %p322
      %s495 = smul.u32 8, %s27
      %p496 = scmp.lt.s32.totalorder %s26, 1
      %s497 = scalar_select %p496, %s26, 1
      %p498 = scmp.lt.s32.totalorder %s495, 15
      %s499 = scalar_select %p498, %s495, 15
      %s500 = smul.addr %s499, 2
      %s501 = smul.addr %s497, 32
      %s502 = sadd.s32 %s500, %s501
      %s503 = smul.addr %s502, 8
      %s504 = scalar_lea.vmem %s11, %s503
      %s505 = smul.u32 %s27, 2
      %s506 = ssub.s32 %s505, 1
      %p507 = scmp.gt.s32.totalorder %s506, 0
      %s508 = scalar_select %p507, %s506, 0
      %s509 = smul.u32 4, %s508
      %p510 = scmp.lt.s32.totalorder %s26, 1
      %s511 = scalar_select %p510, %s26, 1
      %p512 = scmp.lt.s32.totalorder %s509, 15
      %s513 = scalar_select %p512, %s509, 15
      %s514 = smul.addr %s513, 2
      %s515 = smul.addr %s511, 32
      %s516 = sadd.s32 %s514, %s515
      %s517 = smul.addr %s516, 8
      %s518 = scalar_lea.vmem %s0, %s517
      %s519 = smul.u32 %s27, 2
      %s520 = ssub.s32 %s519, 1
      %p521 = scmp.gt.s32.totalorder %s520, 0
      %s522 = scalar_select %p521, %s520, 0
      %s523 = smul.u32 4, %s522
      %s524 = smul.u32 8, %s27
      %p525 = scmp.lt.s32.totalorder %s26, 1
      %s526 = scalar_select %p525, %s26, 1
      %p527 = scmp.lt.s32.totalorder %s524, 15
      %s528 = scalar_select %p527, %s524, 15
      %s529 = smul.addr %s528, 2
      %s530 = smul.addr %s526, 32
      %s531 = sadd.s32 %s529, %s530
      %s532 = smul.addr %s531, 8
      %s533 = scalar_lea.vmem %s1, %s532
      %s534 = smul.u32 8, %s27
      %s535 = sadd.s32 %s27, 1
      %s536 = smul.u32 %s535, 2
      %p537 = scmp.lt.s32.totalorder %s536, 3
      %s538 = scalar_select %p537, %s536, 3
      %s539 = smul.u32 4, %s538
      %p540 = scmp.lt.s32.totalorder %s26, 1
      %s541 = scalar_select %p540, %s26, 1
      %p542 = scmp.lt.s32.totalorder %s539, 15
      %s543 = scalar_select %p542, %s539, 15
      %s544 = smul.addr %s543, 2
      %s545 = smul.addr %s541, 32
      %s546 = sadd.s32 %s544, %s545
      %s547 = smul.addr %s546, 8
      %s548 = scalar_lea.vmem %s2, %s547
      %s549 = sadd.s32 %s27, 1
      %s550 = smul.u32 %s549, 2
      %p551 = scmp.lt.s32.totalorder %s550, 3
      %s552 = scalar_select %p551, %s550, 3
      %s553 = smul.u32 4, %s552
      %s554 = smul.u32 8, %s27
      %p555 = scmp.lt.s32.totalorder %s26, 1
      %s556 = scalar_select %p555, %s26, 1
      %p557 = scmp.lt.s32.totalorder %s554, 15
      %s558 = scalar_select %p557, %s554, 15
      %s559 = smul.addr %s558, 2
      %s560 = smul.addr %s556, 32
      %s561 = sadd.s32 %s559, %s560
      %s562 = smul.addr %s561, 8
      %s563 = scalar_lea.vmem %s11, %s562
      %s564 = smul.u32 8, %s27
      %vm566 = vcmask 122880
      %vm567 = vsmask.f32 256
      %vm568 = vmand %vm566, %vm567
      %v569 = vld [vmem:[#allocation2] sm:$0x1]
      %v570 = vsel %vm568, 0, %v569
      %571 = vst [vmem:[#allocation2] sm:$0x1] %v570
      %v572 = vld [vmem:[#allocation2 + $0xc] sm:$0x1]
      %v573 = vsel %vm568, 0, %v572
      %574 = vst [vmem:[#allocation2 + $0xc] sm:$0x1] %v573
      %v575 = vld [vmem:[#allocation2 + $0x18] sm:$0x1]
      %v576 = vsel %vm568, 0, %v575
      %577 = vst [vmem:[#allocation2 + $0x18] sm:$0x1] %v576
      %v578 = vld [vmem:[#allocation2 + $0x24] sm:$0x1]
      %v579 = vsel %vm568, 0, %v578
      %580 = vst [vmem:[#allocation2 + $0x24] sm:$0x1] %v579
      %v581 = vld [vmem:[#allocation2 + $0x30] sm:$0x1]
      %v582 = vsel %vm568, 0, %v581
      %583 = vst [vmem:[#allocation2 + $0x30] sm:$0x1] %v582
      %v584 = vld [vmem:[#allocation2 + $0x3c] sm:$0x1]
      %v585 = vsel %vm568, 0, %v584
      %586 = vst [vmem:[#allocation2 + $0x3c] sm:$0x1] %v585
      %v587 = vld [vmem:[#allocation2 + $0x48] sm:$0x1]
      %v588 = vsel %vm568, 0, %v587
      %589 = vst [vmem:[#allocation2 + $0x48] sm:$0x1] %v588
      %v590 = vld [vmem:[#allocation2 + $0x54] sm:$0x1]
      %v591 = vsel %vm568, 0, %v590
      %592 = vst [vmem:[#allocation2 + $0x54] sm:$0x1] %v591
      %v593 = vld [vmem:[#allocation2 + $0x60] sm:$0x1]
      %v594 = vsel %vm568, 0, %v593
      %595 = vst [vmem:[#allocation2 + $0x60] sm:$0x1] %v594
      %v596 = vld [vmem:[#allocation2 + $0x6c] sm:$0x1]
      %v597 = vsel %vm568, 0, %v596
      %598 = vst [vmem:[#allocation2 + $0x6c] sm:$0x1] %v597
      %v599 = vld [vmem:[#allocation2 + $0x78] sm:$0x1]
      %v600 = vsel %vm568, 0, %v599
      %601 = vst [vmem:[#allocation2 + $0x78] sm:$0x1] %v600
      %v602 = vld [vmem:[#allocation2 + $0x84] sm:$0x1]
      %v603 = vsel %vm568, 0, %v602
      %604 = vst [vmem:[#allocation2 + $0x84] sm:$0x1] %v603
      %v605 = vld [vmem:[#allocation2 + $0x90] sm:$0x1]
      %v606 = vsel %vm568, 0, %v605
      %607 = vst [vmem:[#allocation2 + $0x90] sm:$0x1] %v606
      %v608 = vld [vmem:[#allocation2 + $0x9c] sm:$0x1]
      %v609 = vsel %vm568, 0, %v608
      %610 = vst [vmem:[#allocation2 + $0x9c] sm:$0x1] %v609
      %vm611 = vsmask.f32 7938
      %vm612 = vmand %vm566, %vm611
      %v613 = vld [vmem:[#allocation2 + $0x8] sm:$0x1]
      %v614 = vsel %vm612, 0, %v613
      %615 = vst [vmem:[#allocation2 + $0x8] sm:$0x1] %v614
      %v616 = vld [vmem:[#allocation2 + $0x14] sm:$0x1]
      %v617 = vsel %vm612, 0, %v616
      %618 = vst [vmem:[#allocation2 + $0x14] sm:$0x1] %v617
      %v619 = vld [vmem:[#allocation2 + $0x20] sm:$0x1]
      %v620 = vsel %vm612, 0, %v619
      %621 = vst [vmem:[#allocation2 + $0x20] sm:$0x1] %v620
      %v622 = vld [vmem:[#allocation2 + $0x2c] sm:$0x1]
      %v623 = vsel %vm612, 0, %v622
      %624 = vst [vmem:[#allocation2 + $0x2c] sm:$0x1] %v623
      %v625 = vld [vmem:[#allocation2 + $0x38] sm:$0x1]
      %v626 = vsel %vm612, 0, %v625
      %627 = vst [vmem:[#allocation2 + $0x38] sm:$0x1] %v626
      %v628 = vld [vmem:[#allocation2 + $0x44] sm:$0x1]
      %v629 = vsel %vm612, 0, %v628
      %630 = vst [vmem:[#allocation2 + $0x44] sm:$0x1] %v629
      %v631 = vld [vmem:[#allocation2 + $0x50] sm:$0x1]
      %v632 = vsel %vm612, 0, %v631
      %633 = vst [vmem:[#allocation2 + $0x50] sm:$0x1] %v632
      %v634 = vld [vmem:[#allocation2 + $0x5c] sm:$0x1]
      %v635 = vsel %vm612, 0, %v634
      %636 = vst [vmem:[#allocation2 + $0x5c] sm:$0x1] %v635
      %v637 = vld [vmem:[#allocation2 + $0x68] sm:$0x1]
      %v638 = vsel %vm612, 0, %v637
      %639 = vst [vmem:[#allocation2 + $0x68] sm:$0x1] %v638
      %v640 = vld [vmem:[#allocation2 + $0x74] sm:$0x1]
      %v641 = vsel %vm612, 0, %v640
      %642 = vst [vmem:[#allocation2 + $0x74] sm:$0x1] %v641
      %v643 = vld [vmem:[#allocation2 + $0x80] sm:$0x1]
      %v644 = vsel %vm612, 0, %v643
      %645 = vst [vmem:[#allocation2 + $0x80] sm:$0x1] %v644
      %v646 = vld [vmem:[#allocation2 + $0x8c] sm:$0x1]
      %v647 = vsel %vm612, 0, %v646
      %648 = vst [vmem:[#allocation2 + $0x8c] sm:$0x1] %v647
      %v649 = vld [vmem:[#allocation2 + $0x98] sm:$0x1]
      %v650 = vsel %vm612, 0, %v649
      %651 = vst [vmem:[#allocation2 + $0x98] sm:$0x1] %v650
      %v652 = vld [vmem:[#allocation2 + $0xa4] sm:$0x1]
      %v653 = vsel %vm612, 0, %v652
      %654 = vst [vmem:[#allocation2 + $0xa4] sm:$0x1] %v653
      %v655 = vld [vmem:[%s533] sm:$0xff]
      %v656 = vld [vmem:[%s533 + $0x8] sm:$0xff]
      %v657 = vld [vmem:[%s533 + $0x10] sm:$0xff]
      %v658 = vld [vmem:[%s533 + $0x18] sm:$0xff]
      %v659 = vld [vmem:[%s533 + $0x20] sm:$0xff]
      %v660 = vld [vmem:[%s533 + $0x28] sm:$0xff]
      %v661 = vld [vmem:[%s533 + $0x30] sm:$0xff]
      %v662 = vld [vmem:[%s533 + $0x38] sm:$0xff]
      %v663 = vld [vmem:[%s533 + $0x40] sm:$0xff]
      %v664 = vld [vmem:[%s533 + $0x48] sm:$0xff]
      %v665 = vld [vmem:[%s533 + $0x50] sm:$0xff]
      %v666 = vld [vmem:[%s533 + $0x58] sm:$0xff]
      %v667 = vld [vmem:[%s533 + $0x60] sm:$0xff]
      %v668 = vld [vmem:[%s533 + $0x68] sm:$0xff]
      %v669 = vld [vmem:[%s533 + $0x70] sm:$0xff]
      %v670 = vld [vmem:[%s533 + $0x78] sm:$0xff]
      %v671 = vpack.c.bf16 %v656, %v655
      %v672 = vpack.c.bf16 %v658, %v657
      %v673 = vpack.c.bf16 %v660, %v659
      %v674 = vpack.c.bf16 %v662, %v661
      %v675 = vpack.c.bf16 %v664, %v663
      %v676 = vpack.c.bf16 %v666, %v665
      %v677 = vpack.c.bf16 %v668, %v667
      %v678 = vpack.c.bf16 %v670, %v669
      %v687 = vunpack.c.l.b16 %v671
      %v688 = vunpack.c.h.b16 %v671
      %v689 = vunpack.c.l.b16 %v672
      %v690 = vunpack.c.h.b16 %v672
      %v691 = vunpack.c.l.b16 %v673
      %v692 = vunpack.c.h.b16 %v673
      %v693 = vunpack.c.l.b16 %v674
      %v694 = vunpack.c.h.b16 %v674
      %v695 = vunpack.c.l.b16 %v675
      %v696 = vunpack.c.h.b16 %v675
      %v697 = vunpack.c.l.b16 %v676
      %v698 = vunpack.c.h.b16 %v676
      %v699 = vunpack.c.l.b16 %v677
      %v700 = vunpack.c.h.b16 %v677
      %v701 = vunpack.c.l.b16 %v678
      %v702 = vunpack.c.h.b16 %v678
      %v703 = vpack.c.b16 %v687, %v687
      %v704 = vpack.c.b16 %v688, %v688
      %v705 = vpack.c.b16 %v689, %v689
      %v706 = vpack.c.b16 %v690, %v690
      %v707 = vpack.c.b16 %v691, %v691
      %v708 = vpack.c.b16 %v692, %v692
      %v709 = vpack.c.b16 %v693, %v693
      %v710 = vpack.c.b16 %v694, %v694
      %v711 = vpack.c.b16 %v695, %v695
      %v712 = vpack.c.b16 %v696, %v696
      %v713 = vpack.c.b16 %v697, %v697
      %v714 = vpack.c.b16 %v698, %v698
      %v715 = vpack.c.b16 %v699, %v699
      %v716 = vpack.c.b16 %v700, %v700
      %v717 = vpack.c.b16 %v701, %v701
      %v718 = vpack.c.b16 %v702, %v702
      %vm719 = vsmask.f32 4368
      %vm720 = vmor %vm567, %vm719
      %v722 = vshrl.u32 %v703, 16
      %v724 = vrot.slane %v722, 7
      %v725 = vshll.u32 %v703, 16
      %v727 = vor.u32 %v724, %v725
      %v728 = vrot.slane %v724, 4
      %v730 = vshrl.u32 %v704, 16
      %v732 = vrot.slane %v730, 7
      %v733 = vshll.u32 %v704, 16
      %v735 = vor.u32 %v732, %v733
      %v736 = vsel %vm720, %v728, %v735
      %v737 = vrot.slane %v732, 4
      %v739 = vshrl.u32 %v705, 16
      %v741 = vrot.slane %v739, 7
      %v742 = vshll.u32 %v705, 16
      %v744 = vor.u32 %v741, %v742
      %v745 = vrot.slane %v741, 4
      %v747 = vshrl.u32 %v706, 16
      %v749 = vrot.slane %v747, 7
      %v750 = vshll.u32 %v706, 16
      %v752 = vor.u32 %v749, %v750
      %v753 = vsel %vm720, %v745, %v752
      %v754 = vrot.slane %v749, 4
      %v756 = vshrl.u32 %v707, 16
      %v758 = vrot.slane %v756, 7
      %v759 = vshll.u32 %v707, 16
      %v761 = vor.u32 %v758, %v759
      %v762 = vrot.slane %v758, 4
      %v764 = vshrl.u32 %v708, 16
      %v766 = vrot.slane %v764, 7
      %v767 = vshll.u32 %v708, 16
      %v769 = vor.u32 %v766, %v767
      %v770 = vsel %vm720, %v762, %v769
      %v771 = vrot.slane %v766, 4
      %v773 = vshrl.u32 %v709, 16
      %v775 = vrot.slane %v773, 7
      %v776 = vshll.u32 %v709, 16
      %v778 = vor.u32 %v775, %v776
      %v779 = vrot.slane %v775, 4
      %v781 = vshrl.u32 %v710, 16
      %v783 = vrot.slane %v781, 7
      %v784 = vshll.u32 %v710, 16
      %v786 = vor.u32 %v783, %v784
      %v787 = vsel %vm720, %v779, %v786
      %v788 = vrot.slane %v783, 4
      %v790 = vshrl.u32 %v711, 16
      %v792 = vrot.slane %v790, 7
      %v793 = vshll.u32 %v711, 16
      %v795 = vor.u32 %v792, %v793
      %v796 = vrot.slane %v792, 4
      %v798 = vshrl.u32 %v712, 16
      %v800 = vrot.slane %v798, 7
      %v801 = vshll.u32 %v712, 16
      %v803 = vor.u32 %v800, %v801
      %v804 = vsel %vm720, %v796, %v803
      %v805 = vrot.slane %v800, 4
      %v807 = vshrl.u32 %v713, 16
      %v809 = vrot.slane %v807, 7
      %v810 = vshll.u32 %v713, 16
      %v812 = vor.u32 %v809, %v810
      %v813 = vrot.slane %v809, 4
      %v815 = vshrl.u32 %v714, 16
      %v817 = vrot.slane %v815, 7
      %v818 = vshll.u32 %v714, 16
      %v820 = vor.u32 %v817, %v818
      %v821 = vsel %vm720, %v813, %v820
      %v822 = vrot.slane %v817, 4
      %v824 = vshrl.u32 %v715, 16
      %v826 = vrot.slane %v824, 7
      %v827 = vshll.u32 %v715, 16
      %v829 = vor.u32 %v826, %v827
      %v830 = vrot.slane %v826, 4
      %v832 = vshrl.u32 %v716, 16
      %v834 = vrot.slane %v832, 7
      %v835 = vshll.u32 %v716, 16
      %v837 = vor.u32 %v834, %v835
      %v838 = vsel %vm720, %v830, %v837
      %v839 = vrot.slane %v834, 4
      %v841 = vshrl.u32 %v717, 16
      %v843 = vrot.slane %v841, 7
      %v844 = vshll.u32 %v717, 16
      %v846 = vor.u32 %v843, %v844
      %v847 = vrot.slane %v843, 4
      %v849 = vshrl.u32 %v718, 16
      %v851 = vrot.slane %v849, 7
      %v852 = vshll.u32 %v718, 16
      %v854 = vor.u32 %v851, %v852
      %v855 = vsel %vm720, %v847, %v854
      %v856 = vrot.slane %v851, 4
      %s881 = scalar_lea.vmem [#allocation2], 36
      %vm882 = vcmask 27648
      %vm883 = vmand %vm882, %vm611
      %v884 = vld [vmem:[%s881] sm:$0xf]
      %v885 = vsel %vm883, %v727, %v884
      %886 = vst [vmem:[%s881] sm:$0xf] %v885
      %vm887 = vcmask 27648
      %888 = vst.msk [vmem:[%s881 + $0x4] sm:$0xf] %vm887, %v736
      %vm889 = vcmask 24576
      %vm890 = vmand %vm889, %vm567
      %v891 = vld [vmem:[%s881 + $0x8] sm:$0x1]
      %v892 = vsel %vm890, %v737, %v891
      %893 = vst [vmem:[%s881 + $0x8] sm:$0x1] %v892
      %v894 = vld [vmem:[%s881 + $0xc] sm:$0xf]
      %v895 = vsel %vm883, %v744, %v894
      %896 = vst [vmem:[%s881 + $0xc] sm:$0xf] %v895
      %897 = vst.msk [vmem:[%s881 + $0x10] sm:$0xf] %vm887, %v753
      %v898 = vld [vmem:[%s881 + $0x14] sm:$0x1]
      %v899 = vsel %vm890, %v754, %v898
      %900 = vst [vmem:[%s881 + $0x14] sm:$0x1] %v899
      %v901 = vld [vmem:[%s881 + $0x18] sm:$0xf]
      %v902 = vsel %vm883, %v761, %v901
      %903 = vst [vmem:[%s881 + $0x18] sm:$0xf] %v902
      %904 = vst.msk [vmem:[%s881 + $0x1c] sm:$0xf] %vm887, %v770
      %v905 = vld [vmem:[%s881 + $0x20] sm:$0x1]
      %v906 = vsel %vm890, %v771, %v905
      %907 = vst [vmem:[%s881 + $0x20] sm:$0x1] %v906
      %v908 = vld [vmem:[%s881 + $0x24] sm:$0xf]
      %v909 = vsel %vm883, %v778, %v908
      %910 = vst [vmem:[%s881 + $0x24] sm:$0xf] %v909
      %911 = vst.msk [vmem:[%s881 + $0x28] sm:$0xf] %vm887, %v787
      %v912 = vld [vmem:[%s881 + $0x2c] sm:$0x1]
      %v913 = vsel %vm890, %v788, %v912
      %914 = vst [vmem:[%s881 + $0x2c] sm:$0x1] %v913
      %v915 = vld [vmem:[%s881 + $0x30] sm:$0xf]
      %v916 = vsel %vm883, %v795, %v915
      %917 = vst [vmem:[%s881 + $0x30] sm:$0xf] %v916
      %918 = vst.msk [vmem:[%s881 + $0x34] sm:$0xf] %vm887, %v804
      %v919 = vld [vmem:[%s881 + $0x38] sm:$0x1]
      %v920 = vsel %vm890, %v805, %v919
      %921 = vst [vmem:[%s881 + $0x38] sm:$0x1] %v920
      %v922 = vld [vmem:[%s881 + $0x3c] sm:$0xf]
      %v923 = vsel %vm883, %v812, %v922
      %924 = vst [vmem:[%s881 + $0x3c] sm:$0xf] %v923
      %925 = vst.msk [vmem:[%s881 + $0x40] sm:$0xf] %vm887, %v821
      %v926 = vld [vmem:[%s881 + $0x44] sm:$0x1]
      %v927 = vsel %vm890, %v822, %v926
      %928 = vst [vmem:[%s881 + $0x44] sm:$0x1] %v927
      %v929 = vld [vmem:[%s881 + $0x48] sm:$0xf]
      %v930 = vsel %vm883, %v829, %v929
      %931 = vst [vmem:[%s881 + $0x48] sm:$0xf] %v930
      %932 = vst.msk [vmem:[%s881 + $0x4c] sm:$0xf] %vm887, %v838
      %v933 = vld [vmem:[%s881 + $0x50] sm:$0x1]
      %v934 = vsel %vm890, %v839, %v933
      %935 = vst [vmem:[%s881 + $0x50] sm:$0x1] %v934
      %v936 = vld [vmem:[%s881 + $0x54] sm:$0xf]
      %v937 = vsel %vm883, %v846, %v936
      %938 = vst [vmem:[%s881 + $0x54] sm:$0xf] %v937
      %939 = vst.msk [vmem:[%s881 + $0x58] sm:$0xf] %vm887, %v855
      %v940 = vld [vmem:[%s881 + $0x5c] sm:$0x1]
      %v941 = vsel %vm890, %v856, %v940
      %942 = vst [vmem:[%s881 + $0x5c] sm:$0x1] %v941
      %p943 = scmp.gt.s32.totalorder %s27, 0
      %s944 = scalar_select %p943, 1, 0
      %s945 = scvt.s32.f32 %s944
      %s946 = scalar_lea.vmem %s518, 16
      %v947 = vld [vmem:[%s946] sm:$0xff]
      %v948 = vld [vmem:[%s946 + $0x8] sm:$0xff]
      %v949 = vld [vmem:[%s946 + $0x10] sm:$0xff]
      %v950 = vld [vmem:[%s946 + $0x18] sm:$0xff]
      %v951 = vld [vmem:[%s946 + $0x20] sm:$0xff]
      %v952 = vld [vmem:[%s946 + $0x28] sm:$0xff]
      %v953 = vstv %s945
      %v954 = vmul.f32 %v947, %v953
      %v955 = vmul.f32 %v948, %v953
      %v956 = vmul.f32 %v949, %v953
      %v957 = vmul.f32 %v950, %v953
      %v958 = vmul.f32 %v951, %v953
      %v959 = vmul.f32 %v952, %v953
      %v960 = vpack.c.bf16 %v955, %v954
      %v961 = vpack.c.bf16 %v957, %v956
      %v962 = vpack.c.bf16 %v959, %v958
      %v966 = vunpack.c.l.b16 %v960
      %v967 = vunpack.c.h.b16 %v960
      %v968 = vunpack.c.l.b16 %v961
      %v969 = vunpack.c.h.b16 %v961
      %v970 = vunpack.c.l.b16 %v962
      %v971 = vunpack.c.h.b16 %v962
      %v972 = vpack.c.b16 %v966, %v966
      %v973 = vpack.c.b16 %v967, %v967
      %v974 = vpack.c.b16 %v968, %v968
      %v975 = vpack.c.b16 %v969, %v969
      %v976 = vpack.c.b16 %v970, %v970
      %v977 = vpack.c.b16 %v971, %v971
      %v979 = vshrl.u32 %v972, 16
      %v981 = vrot.slane %v979, 7
      %v982 = vshll.u32 %v972, 16
      %v984 = vor.u32 %v981, %v982
      %v985 = vrot.slane %v981, 4
      %v987 = vshrl.u32 %v973, 16
      %v989 = vrot.slane %v987, 7
      %v990 = vshll.u32 %v973, 16
      %v992 = vor.u32 %v989, %v990
      %v993 = vsel %vm720, %v985, %v992
      %v994 = vrot.slane %v989, 4
      %v996 = vshrl.u32 %v974, 16
      %v998 = vrot.slane %v996, 7
      %v999 = vshll.u32 %v974, 16
      %v1001 = vor.u32 %v998, %v999
      %v1002 = vrot.slane %v998, 4
      %v1004 = vshrl.u32 %v975, 16
      %v1006 = vrot.slane %v1004, 7
      %v1007 = vshll.u32 %v975, 16
      %v1009 = vor.u32 %v1006, %v1007
      %v1010 = vsel %vm720, %v1002, %v1009
      %v1011 = vrot.slane %v1006, 4
      %v1013 = vshrl.u32 %v976, 16
      %v1015 = vrot.slane %v1013, 7
      %v1016 = vshll.u32 %v976, 16
      %v1018 = vor.u32 %v1015, %v1016
      %v1019 = vrot.slane %v1015, 4
      %v1021 = vshrl.u32 %v977, 16
      %v1023 = vrot.slane %v1021, 7
      %v1024 = vshll.u32 %v977, 16
      %v1026 = vor.u32 %v1023, %v1024
      %v1027 = vsel %vm720, %v1019, %v1026
      %v1028 = vrot.slane %v1023, 4
      %v1038 = vld [vmem:[#allocation2] sm:$0xf]
      %v1039 = vsel %vm883, %v984, %v1038
      %1040 = vst [vmem:[#allocation2] sm:$0xf] %v1039
      %1041 = vst.msk [vmem:[#allocation2 + $0x4] sm:$0xf] %vm887, %v993
      %v1042 = vld [vmem:[#allocation2 + $0x8] sm:$0x1]
      %v1043 = vsel %vm890, %v994, %v1042
      %1044 = vst [vmem:[#allocation2 + $0x8] sm:$0x1] %v1043
      %v1045 = vld [vmem:[#allocation2 + $0xc] sm:$0xf]
      %v1046 = vsel %vm883, %v1001, %v1045
      %1047 = vst [vmem:[#allocation2 + $0xc] sm:$0xf] %v1046
      %1048 = vst.msk [vmem:[#allocation2 + $0x10] sm:$0xf] %vm887, %v1010
      %v1049 = vld [vmem:[#allocation2 + $0x14] sm:$0x1]
      %v1050 = vsel %vm890, %v1011, %v1049
      %1051 = vst [vmem:[#allocation2 + $0x14] sm:$0x1] %v1050
      %v1052 = vld [vmem:[#allocation2 + $0x18] sm:$0xf]
      %v1053 = vsel %vm883, %v1018, %v1052
      %1054 = vst [vmem:[#allocation2 + $0x18] sm:$0xf] %v1053
      %1055 = vst.msk [vmem:[#allocation2 + $0x1c] sm:$0xf] %vm887, %v1027
      %v1056 = vld [vmem:[#allocation2 + $0x20] sm:$0x1]
      %v1057 = vsel %vm890, %v1028, %v1056
      %1058 = vst [vmem:[#allocation2 + $0x20] sm:$0x1] %v1057
      %p1059 = scmp.lt.s32.totalorder %s27, 1
      %s1060 = scalar_select %p1059, 1, 0
      %s1061 = scvt.s32.f32 %s1060
      %v1062 = vld [vmem:[%s548] sm:$0xff]
      %v1063 = vld [vmem:[%s548 + $0x8] sm:$0xff]
      %v1064 = vld [vmem:[%s548 + $0x10] sm:$0xff]
      %v1065 = vld [vmem:[%s548 + $0x18] sm:$0xff]
      %v1066 = vld [vmem:[%s548 + $0x20] sm:$0xff]
      %v1067 = vld [vmem:[%s548 + $0x28] sm:$0xff]
      %v1068 = vstv %s1061
      %v1069 = vmul.f32 %v1062, %v1068
      %v1070 = vmul.f32 %v1063, %v1068
      %v1071 = vmul.f32 %v1064, %v1068
      %v1072 = vmul.f32 %v1065, %v1068
      %v1073 = vmul.f32 %v1066, %v1068
      %v1074 = vmul.f32 %v1067, %v1068
      %v1075 = vpack.c.bf16 %v1070, %v1069
      %v1076 = vpack.c.bf16 %v1072, %v1071
      %v1077 = vpack.c.bf16 %v1074, %v1073
      %v1081 = vunpack.c.l.b16 %v1075
      %v1082 = vunpack.c.h.b16 %v1075
      %v1083 = vunpack.c.l.b16 %v1076
      %v1084 = vunpack.c.h.b16 %v1076
      %v1085 = vunpack.c.l.b16 %v1077
      %v1086 = vunpack.c.h.b16 %v1077
      %v1087 = vpack.c.b16 %v1081, %v1081
      %v1088 = vpack.c.b16 %v1082, %v1082
      %v1089 = vpack.c.b16 %v1083, %v1083
      %v1090 = vpack.c.b16 %v1084, %v1084
      %v1091 = vpack.c.b16 %v1085, %v1085
      %v1092 = vpack.c.b16 %v1086, %v1086
      %v1094 = vshrl.u32 %v1087, 16
      %v1096 = vrot.slane %v1094, 7
      %v1097 = vshll.u32 %v1087, 16
      %v1099 = vor.u32 %v1096, %v1097
      %v1100 = vrot.slane %v1096, 4
      %v1102 = vshrl.u32 %v1088, 16
      %v1104 = vrot.slane %v1102, 7
      %v1105 = vshll.u32 %v1088, 16
      %v1107 = vor.u32 %v1104, %v1105
      %v1108 = vsel %vm720, %v1100, %v1107
      %v1109 = vrot.slane %v1104, 4
      %v1111 = vshrl.u32 %v1089, 16
      %v1113 = vrot.slane %v1111, 7
      %v1114 = vshll.u32 %v1089, 16
      %v1116 = vor.u32 %v1113, %v1114
      %v1117 = vrot.slane %v1113, 4
      %v1119 = vshrl.u32 %v1090, 16
      %v1121 = vrot.slane %v1119, 7
      %v1122 = vshll.u32 %v1090, 16
      %v1124 = vor.u32 %v1121, %v1122
      %v1125 = vsel %vm720, %v1117, %v1124
      %v1126 = vrot.slane %v1121, 4
      %v1128 = vshrl.u32 %v1091, 16
      %v1130 = vrot.slane %v1128, 7
      %v1131 = vshll.u32 %v1091, 16
      %v1133 = vor.u32 %v1130, %v1131
      %v1134 = vrot.slane %v1130, 4
      %v1136 = vshrl.u32 %v1092, 16
      %v1138 = vrot.slane %v1136, 7
      %v1139 = vshll.u32 %v1092, 16
      %v1141 = vor.u32 %v1138, %v1139
      %v1142 = vsel %vm720, %v1134, %v1141
      %v1143 = vrot.slane %v1138, 4
      %s1153 = scalar_lea.vmem [#allocation2], 132
      %v1154 = vld [vmem:[%s1153] sm:$0xf]
      %v1155 = vsel %vm883, %v1099, %v1154
      %1156 = vst [vmem:[%s1153] sm:$0xf] %v1155
      %1157 = vst.msk [vmem:[%s1153 + $0x4] sm:$0xf] %vm887, %v1108
      %v1158 = vld [vmem:[%s1153 + $0x8] sm:$0x1]
      %v1159 = vsel %vm890, %v1109, %v1158
      %1160 = vst [vmem:[%s1153 + $0x8] sm:$0x1] %v1159
      %v1161 = vld [vmem:[%s1153 + $0xc] sm:$0xf]
      %v1162 = vsel %vm883, %v1116, %v1161
      %1163 = vst [vmem:[%s1153 + $0xc] sm:$0xf] %v1162
      %1164 = vst.msk [vmem:[%s1153 + $0x10] sm:$0xf] %vm887, %v1125
      %v1165 = vld [vmem:[%s1153 + $0x14] sm:$0x1]
      %v1166 = vsel %vm890, %v1126, %v1165
      %1167 = vst [vmem:[%s1153 + $0x14] sm:$0x1] %v1166
      %v1168 = vld [vmem:[%s1153 + $0x18] sm:$0xf]
      %v1169 = vsel %vm883, %v1133, %v1168
      %1170 = vst [vmem:[%s1153 + $0x18] sm:$0xf] %v1169
      %1171 = vst.msk [vmem:[%s1153 + $0x1c] sm:$0xf] %vm887, %v1142
      %v1172 = vld [vmem:[%s1153 + $0x20] sm:$0x1]
      %v1173 = vsel %vm890, %v1143, %v1172
      %1174 = vst [vmem:[%s1153 + $0x20] sm:$0x1] %v1173
      %v1175 = vld [vmem:[#allocation2] sm:$0xf]
      %v1176 = vld [vmem:[#allocation2 + $0x4] sm:$0xf]
      %v1177 = vld [vmem:[#allocation2 + $0xc] sm:$0xf]
      %v1178 = vld [vmem:[#allocation2 + $0x10] sm:$0xf]
      %v1179 = vld [vmem:[#allocation2 + $0x18] sm:$0xf]
      %v1180 = vld [vmem:[#allocation2 + $0x1c] sm:$0xf]
      %v1181 = vld [vmem:[#allocation2 + $0x24] sm:$0xf]
      %v1182 = vld [vmem:[#allocation2 + $0x28] sm:$0xf]
      %v1183 = vld [vmem:[#allocation2 + $0x30] sm:$0xf]
      %v1184 = vld [vmem:[#allocation2 + $0x34] sm:$0xf]
      %v1185 = vld [vmem:[#allocation2 + $0x3c] sm:$0xf]
      %v1186 = vld [vmem:[#allocation2 + $0x40] sm:$0xf]
      %v1187 = vld [vmem:[#allocation2 + $0x48] sm:$0xf]
      %v1188 = vld [vmem:[#allocation2 + $0x4c] sm:$0xf]
      %v1189 = vld [vmem:[#allocation2 + $0x54] sm:$0xf]
      %v1190 = vld [vmem:[#allocation2 + $0x58] sm:$0xf]
      %v1191 = vld [vmem:[#allocation2 + $0x60] sm:$0xf]
      %v1192 = vld [vmem:[#allocation2 + $0x64] sm:$0xf]
      %v1193 = vld [vmem:[#allocation2 + $0x6c] sm:$0xf]
      %v1194 = vld [vmem:[#allocation2 + $0x70] sm:$0xf]
      %v1195 = vld [vmem:[#allocation2 + $0x78] sm:$0xf]
      %v1196 = vld [vmem:[#allocation2 + $0x7c] sm:$0xf]
      %v1197 = vld [vmem:[#allocation2 + $0x84] sm:$0xf]
      %v1198 = vld [vmem:[#allocation2 + $0x88] sm:$0xf]
      %v1199 = vld [vmem:[%s3] sm:$0x3]
      %v1200 = vld [vmem:[#allocation2 + $0x8] sm:$0x1]
      %v1201 = vld [vmem:[#allocation2 + $0x14] sm:$0x1]
      %v1202 = vld [vmem:[#allocation2 + $0x20] sm:$0x1]
      %v1203 = vld [vmem:[#allocation2 + $0x2c] sm:$0x1]
      %v1204 = vld [vmem:[#allocation2 + $0x38] sm:$0x1]
      %v1205 = vld [vmem:[#allocation2 + $0x44] sm:$0x1]
      %v1206 = vld [vmem:[#allocation2 + $0x50] sm:$0x1]
      %v1207 = vld [vmem:[#allocation2 + $0x5c] sm:$0x1]
      %v1208 = vld [vmem:[#allocation2 + $0x68] sm:$0x1]
      %v1209 = vld [vmem:[#allocation2 + $0x74] sm:$0x1]
      %v1210 = vld [vmem:[#allocation2 + $0x80] sm:$0x1]
      %v1211 = vld [vmem:[#allocation2 + $0x8c] sm:$0x1]
      %v1212 = vld [vmem:[%s3] sm:$0xc]
      %vm1213 = vsmask.f32 3328
      %vm1214 = vsmask.f32 7440
      %vm1215 = vmor %vm1213, %vm1214
      %v1217 = vshrl.u32 %v1175, 16
      %v1219 = vrot.slane %v1217, 4
      %v1220 = vshll.u32 %v1175, 16
      %v1222 = vrot.slane %v1220, 5
      %v1223 = vor.u32 %v1219, %v1222
      %v1224 = vrot.slane %v1223, 4
      %v1226 = vshll.u32 %v1176, 16
      %v1228 = vrot.slane %v1226, 5
      %v1229 = vsel %vm1215, %v1224, %v1228
      %v1230 = vshrl.u32 %v1176, 16
      %v1232 = vrot.slane %v1230, 4
      %v1233 = vor.u32 %v1232, %v1228
      %v1234 = vrot.slane %v1233, 4
      %v1236 = vshll.u32 %v1200, 16
      %v1238 = vrot.slane %v1236, 5
      %v1239 = vsel %vm1215, %v1234, %v1238
      %v1241 = vshrl.u32 %v1177, 16
      %v1243 = vrot.slane %v1241, 4
      %v1244 = vshll.u32 %v1177, 16
      %v1246 = vrot.slane %v1244, 5
      %v1247 = vor.u32 %v1243, %v1246
      %v1248 = vrot.slane %v1247, 4
      %v1250 = vshll.u32 %v1178, 16
      %v1252 = vrot.slane %v1250, 5
      %v1253 = vsel %vm1215, %v1248, %v1252
      %v1254 = vshrl.u32 %v1178, 16
      %v1256 = vrot.slane %v1254, 4
      %v1257 = vor.u32 %v1256, %v1252
      %v1258 = vrot.slane %v1257, 4
      %v1260 = vshll.u32 %v1201, 16
      %v1262 = vrot.slane %v1260, 5
      %v1263 = vsel %vm1215, %v1258, %v1262
      %v1265 = vshrl.u32 %v1179, 16
      %v1267 = vrot.slane %v1265, 4
      %v1268 = vshll.u32 %v1179, 16
      %v1270 = vrot.slane %v1268, 5
      %v1271 = vor.u32 %v1267, %v1270
      %v1272 = vrot.slane %v1271, 4
      %v1274 = vshll.u32 %v1180, 16
      %v1276 = vrot.slane %v1274, 5
      %v1277 = vsel %vm1215, %v1272, %v1276
      %v1278 = vshrl.u32 %v1180, 16
      %v1280 = vrot.slane %v1278, 4
      %v1281 = vor.u32 %v1280, %v1276
      %v1282 = vrot.slane %v1281, 4
      %v1284 = vshll.u32 %v1202, 16
      %v1286 = vrot.slane %v1284, 5
      %v1287 = vsel %vm1215, %v1282, %v1286
      %v1289 = vshrl.u32 %v1181, 16
      %v1291 = vrot.slane %v1289, 4
      %v1292 = vshll.u32 %v1181, 16
      %v1294 = vrot.slane %v1292, 5
      %v1295 = vor.u32 %v1291, %v1294
      %v1296 = vrot.slane %v1295, 4
      %v1298 = vshll.u32 %v1182, 16
      %v1300 = vrot.slane %v1298, 5
      %v1301 = vsel %vm1215, %v1296, %v1300
      %v1302 = vshrl.u32 %v1182, 16
      %v1304 = vrot.slane %v1302, 4
      %v1305 = vor.u32 %v1304, %v1300
      %v1306 = vrot.slane %v1305, 4
      %v1308 = vshll.u32 %v1203, 16
      %v1310 = vrot.slane %v1308, 5
      %v1311 = vsel %vm1215, %v1306, %v1310
      %v1313 = vshrl.u32 %v1183, 16
      %v1315 = vrot.slane %v1313, 4
      %v1316 = vshll.u32 %v1183, 16
      %v1318 = vrot.slane %v1316, 5
      %v1319 = vor.u32 %v1315, %v1318
      %v1320 = vrot.slane %v1319, 4
      %v1322 = vshll.u32 %v1184, 16
      %v1324 = vrot.slane %v1322, 5
      %v1325 = vsel %vm1215, %v1320, %v1324
      %v1326 = vshrl.u32 %v1184, 16
      %v1328 = vrot.slane %v1326, 4
      %v1329 = vor.u32 %v1328, %v1324
      %v1330 = vrot.slane %v1329, 4
      %v1332 = vshll.u32 %v1204, 16
      %v1334 = vrot.slane %v1332, 5
      %v1335 = vsel %vm1215, %v1330, %v1334
      %v1337 = vshrl.u32 %v1185, 16
      %v1339 = vrot.slane %v1337, 4
      %v1340 = vshll.u32 %v1185, 16
      %v1342 = vrot.slane %v1340, 5
      %v1343 = vor.u32 %v1339, %v1342
      %v1344 = vrot.slane %v1343, 4
      %v1346 = vshll.u32 %v1186, 16
      %v1348 = vrot.slane %v1346, 5
      %v1349 = vsel %vm1215, %v1344, %v1348
      %v1350 = vshrl.u32 %v1186, 16
      %v1352 = vrot.slane %v1350, 4
      %v1353 = vor.u32 %v1352, %v1348
      %v1354 = vrot.slane %v1353, 4
      %v1356 = vshll.u32 %v1205, 16
      %v1358 = vrot.slane %v1356, 5
      %v1359 = vsel %vm1215, %v1354, %v1358
      %v1361 = vshrl.u32 %v1187, 16
      %v1363 = vrot.slane %v1361, 4
      %v1364 = vshll.u32 %v1187, 16
      %v1366 = vrot.slane %v1364, 5
      %v1367 = vor.u32 %v1363, %v1366
      %v1368 = vrot.slane %v1367, 4
      %v1370 = vshll.u32 %v1188, 16
      %v1372 = vrot.slane %v1370, 5
      %v1373 = vsel %vm1215, %v1368, %v1372
      %v1374 = vshrl.u32 %v1188, 16
      %v1376 = vrot.slane %v1374, 4
      %v1377 = vor.u32 %v1376, %v1372
      %v1378 = vrot.slane %v1377, 4
      %v1380 = vshll.u32 %v1206, 16
      %v1382 = vrot.slane %v1380, 5
      %v1383 = vsel %vm1215, %v1378, %v1382
      %v1385 = vshrl.u32 %v1189, 16
      %v1387 = vrot.slane %v1385, 4
      %v1388 = vshll.u32 %v1189, 16
      %v1390 = vrot.slane %v1388, 5
      %v1391 = vor.u32 %v1387, %v1390
      %v1392 = vrot.slane %v1391, 4
      %v1394 = vshll.u32 %v1190, 16
      %v1396 = vrot.slane %v1394, 5
      %v1397 = vsel %vm1215, %v1392, %v1396
      %v1398 = vshrl.u32 %v1190, 16
      %v1400 = vrot.slane %v1398, 4
      %v1401 = vor.u32 %v1400, %v1396
      %v1402 = vrot.slane %v1401, 4
      %v1404 = vshll.u32 %v1207, 16
      %v1406 = vrot.slane %v1404, 5
      %v1407 = vsel %vm1215, %v1402, %v1406
      %v1409 = vshrl.u32 %v1191, 16
      %v1411 = vrot.slane %v1409, 4
      %v1412 = vshll.u32 %v1191, 16
      %v1414 = vrot.slane %v1412, 5
      %v1415 = vor.u32 %v1411, %v1414
      %v1416 = vrot.slane %v1415, 4
      %v1418 = vshll.u32 %v1192, 16
      %v1420 = vrot.slane %v1418, 5
      %v1421 = vsel %vm1215, %v1416, %v1420
      %v1422 = vshrl.u32 %v1192, 16
      %v1424 = vrot.slane %v1422, 4
      %v1425 = vor.u32 %v1424, %v1420
      %v1426 = vrot.slane %v1425, 4
      %v1428 = vshll.u32 %v1208, 16
      %v1430 = vrot.slane %v1428, 5
      %v1431 = vsel %vm1215, %v1426, %v1430
      %v1433 = vshrl.u32 %v1193, 16
      %v1435 = vrot.slane %v1433, 4
      %v1436 = vshll.u32 %v1193, 16
      %v1438 = vrot.slane %v1436, 5
      %v1439 = vor.u32 %v1435, %v1438
      %v1440 = vrot.slane %v1439, 4
      %v1442 = vshll.u32 %v1194, 16
      %v1444 = vrot.slane %v1442, 5
      %v1445 = vsel %vm1215, %v1440, %v1444
      %v1446 = vshrl.u32 %v1194, 16
      %v1448 = vrot.slane %v1446, 4
      %v1449 = vor.u32 %v1448, %v1444
      %v1450 = vrot.slane %v1449, 4
      %v1452 = vshll.u32 %v1209, 16
      %v1454 = vrot.slane %v1452, 5
      %v1455 = vsel %vm1215, %v1450, %v1454
      %v1457 = vshrl.u32 %v1195, 16
      %v1459 = vrot.slane %v1457, 4
      %v1460 = vshll.u32 %v1195, 16
      %v1462 = vrot.slane %v1460, 5
      %v1463 = vor.u32 %v1459, %v1462
      %v1464 = vrot.slane %v1463, 4
      %v1466 = vshll.u32 %v1196, 16
      %v1468 = vrot.slane %v1466, 5
      %v1469 = vsel %vm1215, %v1464, %v1468
      %v1470 = vshrl.u32 %v1196, 16
      %v1472 = vrot.slane %v1470, 4
      %v1473 = vor.u32 %v1472, %v1468
      %v1474 = vrot.slane %v1473, 4
      %v1476 = vshll.u32 %v1210, 16
      %v1478 = vrot.slane %v1476, 5
      %v1479 = vsel %vm1215, %v1474, %v1478
      %v1481 = vshrl.u32 %v1197, 16
      %v1483 = vrot.slane %v1481, 4
      %v1484 = vshll.u32 %v1197, 16
      %v1486 = vrot.slane %v1484, 5
      %v1487 = vor.u32 %v1483, %v1486
      %v1488 = vrot.slane %v1487, 4
      %v1490 = vshll.u32 %v1198, 16
      %v1492 = vrot.slane %v1490, 5
      %v1493 = vsel %vm1215, %v1488, %v1492
      %v1494 = vshrl.u32 %v1198, 16
      %v1496 = vrot.slane %v1494, 4
      %v1497 = vor.u32 %v1496, %v1492
      %v1498 = vrot.slane %v1497, 4
      %v1500 = vshll.u32 %v1211, 16
      %v1502 = vrot.slane %v1500, 5
      %v1503 = vsel %vm1215, %v1498, %v1502
      %v1504 = vunpack.c.l.b16 %v1229
      %v1505 = vunpack.c.l.b16 %v1239
      %v1506 = vunpack.c.l.b16 %v1253
      %v1507 = vunpack.c.l.b16 %v1263
      %v1508 = vunpack.c.l.b16 %v1277
      %v1509 = vunpack.c.l.b16 %v1287
      %v1510 = vunpack.c.l.b16 %v1301
      %v1511 = vunpack.c.l.b16 %v1311
      %v1512 = vunpack.c.l.b16 %v1325
      %v1513 = vunpack.c.l.b16 %v1335
      %v1514 = vunpack.c.l.b16 %v1349
      %v1515 = vunpack.c.l.b16 %v1359
      %v1516 = vunpack.c.l.b16 %v1373
      %v1517 = vunpack.c.l.b16 %v1383
      %v1518 = vunpack.c.l.b16 %v1397
      %v1519 = vunpack.c.l.b16 %v1407
      %v1520 = vunpack.c.l.b16 %v1421
      %v1521 = vunpack.c.l.b16 %v1431
      %v1522 = vunpack.c.l.b16 %v1445
      %v1523 = vunpack.c.l.b16 %v1455
      %v1524 = vunpack.c.l.b16 %v1469
      %v1525 = vunpack.c.l.b16 %v1479
      %v1526 = vunpack.c.l.b16 %v1493
      %v1527 = vunpack.c.l.b16 %v1503
      %v1528 = vpack.c.b16 %v1505, %v1504
      %v1529 = vpack.c.b16 %v1507, %v1506
      %v1530 = vpack.c.b16 %v1509, %v1508
      %v1531 = vpack.c.b16 %v1511, %v1510
      %v1532 = vpack.c.b16 %v1513, %v1512
      %v1533 = vpack.c.b16 %v1515, %v1514
      %v1534 = vpack.c.b16 %v1517, %v1516
      %v1535 = vpack.c.b16 %v1519, %v1518
      %v1536 = vpack.c.b16 %v1521, %v1520
      %v1537 = vpack.c.b16 %v1523, %v1522
      %v1538 = vpack.c.b16 %v1525, %v1524
      %v1539 = vpack.c.b16 %v1527, %v1526
      %v1541 = vunpack.c.l.b16 %v1212
      %v1542 = vpack.c.b16 %v1541, %v1541
      %v1543 = vrot.slane %v1542, 2
      %vm1544 = vcmask 31744
      %v1546 = vsel %vm1544, %v1528, 0
      %v1549 = vsel %vm1544, %v1529, 0
      %v1552 = vsel %vm1544, %v1530, 0
      %v1555 = vsel %vm1544, %v1531, 0
      %v1558 = vsel %vm1544, %v1532, 0
      %v1561 = vsel %vm1544, %v1533, 0
      %v1564 = vsel %vm1544, %v1534, 0
      %v1567 = vsel %vm1544, %v1535, 0
      %v1570 = vsel %vm1544, %v1536, 0
      %v1573 = vsel %vm1544, %v1537, 0
      %v1576 = vsel %vm1544, %v1538, 0
      %v1579 = vsel %vm1544, %v1539, 0
      %vm1581 = vcmask 1041408
      %v1583 = vsel %vm1581, %v1543, 0
      %1585 = vmatprep.subr.bf16.mxu0 0
      %1586 = vmatpush1.bf16.msra.mxu0 %v1583
      %1587 = vmatprep.subr.bf16.mxu0 0
      %1588 = vmatpush1.bf16.msra.mxu0 0
      %1589 = vmatprep.subr.bf16.mxu0 0
      %1590 = vmatpush1.bf16.msra.mxu0 0
      %1591 = vmatprep.subr.bf16.mxu0 0
      %1592 = vmatpush1.bf16.msra.mxu0 0
      %1593 = vmatprep.subr.bf16.mxu0 0
      %1594 = vmatpush1.bf16.msra.mxu0 0
      %1595 = vmatprep.subr.bf16.mxu0 0
      %1596 = vmatpush1.bf16.msra.mxu0 0
      %1597 = vmatprep.subr.bf16.mxu0 0
      %1598 = vmatpush1.bf16.msra.mxu0 0
      %1599 = vmatprep.subr.bf16.mxu0 0
      %1600 = vmatpush1.bf16.msra.mxu0 0
      %1601 = vmatprep.subr.bf16.mxu0 0
      %1602 = vmatpush1.bf16.msra.mxu0 0
      %1603 = vmatprep.subr.bf16.mxu0 0
      %1604 = vmatpush1.bf16.msra.mxu0 0
      %1605 = vmatprep.subr.bf16.mxu0 0
      %1606 = vmatpush1.bf16.msra.mxu0 0
      %1607 = vmatprep.subr.bf16.mxu0 0
      %1608 = vmatpush1.bf16.msra.mxu0 0
      %1609 = vmatprep.subr.bf16.mxu0 0
      %1610 = vmatpush1.bf16.msra.mxu0 0
      %1611 = vmatprep.subr.bf16.mxu0 0
      %1612 = vmatpush1.bf16.msra.mxu0 0
      %1613 = vmatprep.subr.bf16.mxu0 0
      %1614 = vmatpush1.bf16.msra.mxu0 0
      %1615 = vmatprep.subr.bf16.mxu0 0
      %1616 = vmatpush1.bf16.msra.mxu0 0
      %1617 = vmatprep.mubr.bf16.mxu0 0
      %1618 = vmatmul.mubr.bf16.gmra.mrb[0].mxu0 %v1546
      %v1619 = vpop.f32.mrb[0].mxu0
      %v1620 = vadd.f32 0.0, %v1619
      %v1621 = vpop.f32.mrb[0].mxu0
      %v1622 = vpop.f32.mrb[0].mxu0
      %v1623 = vadd.f32 0.0, %v1622
      %v1624 = vpop.f32.mrb[0].mxu0
      %1625 = vmatprep.mubr.bf16.mxu0 0
      %1626 = vmatmul.mubr.bf16.gmra.mrb[0].mxu0 %v1549
      %v1627 = vpop.f32.mrb[0].mxu0
      %v1628 = vadd.f32 0.0, %v1627
      %v1629 = vpop.f32.mrb[0].mxu0
      %v1630 = vpop.f32.mrb[0].mxu0
      %v1631 = vadd.f32 0.0, %v1630
      %v1632 = vpop.f32.mrb[0].mxu0
      %1633 = vmatprep.mubr.bf16.mxu0 0
      %1634 = vmatmul.mubr.bf16.gmra.mrb[0].mxu0 %v1552
      %v1635 = vpop.f32.mrb[0].mxu0
      %v1636 = vadd.f32 0.0, %v1635
      %v1637 = vpop.f32.mrb[0].mxu0
      %v1638 = vpop.f32.mrb[0].mxu0
      %v1639 = vadd.f32 0.0, %v1638
      %v1640 = vpop.f32.mrb[0].mxu0
      %1641 = vmatprep.mubr.bf16.mxu0 0
      %1642 = vmatmul.mubr.bf16.gmra.mrb[0].mxu0 %v1555
      %v1643 = vpop.f32.mrb[0].mxu0
      %v1644 = vadd.f32 0.0, %v1643
      %v1645 = vpop.f32.mrb[0].mxu0
      %v1646 = vpop.f32.mrb[0].mxu0
      %v1647 = vadd.f32 0.0, %v1646
      %v1648 = vpop.f32.mrb[0].mxu0
      %1649 = vmatprep.mubr.bf16.mxu0 0
      %1650 = vmatmul.mubr.bf16.gmra.mrb[0].mxu0 %v1558
      %v1651 = vpop.f32.mrb[0].mxu0
      %v1652 = vadd.f32 0.0, %v1651
      %v1653 = vpop.f32.mrb[0].mxu0
      %v1654 = vpop.f32.mrb[0].mxu0
      %v1655 = vadd.f32 0.0, %v1654
      %v1656 = vpop.f32.mrb[0].mxu0
      %1657 = vmatprep.mubr.bf16.mxu0 0
      %1658 = vmatmul.mubr.bf16.gmra.mrb[0].mxu0 %v1561
      %v1659 = vpop.f32.mrb[0].mxu0
      %v1660 = vadd.f32 0.0, %v1659
      %v1661 = vpop.f32.mrb[0].mxu0
      %v1662 = vpop.f32.mrb[0].mxu0
      %v1663 = vadd.f32 0.0, %v1662
      %v1664 = vpop.f32.mrb[0].mxu0
      %1665 = vmatprep.mubr.bf16.mxu0 0
      %1666 = vmatmul.mubr.bf16.gmra.mrb[0].mxu0 %v1564
      %v1667 = vpop.f32.mrb[0].mxu0
      %v1668 = vadd.f32 0.0, %v1667
      %v1669 = vpop.f32.mrb[0].mxu0
      %v1670 = vpop.f32.mrb[0].mxu0
      %v1671 = vadd.f32 0.0, %v1670
      %v1672 = vpop.f32.mrb[0].mxu0
      %1673 = vmatprep.mubr.bf16.mxu0 0
      %1674 = vmatmul.mubr.bf16.gmra.mrb[0].mxu0 %v1567
      %v1675 = vpop.f32.mrb[0].mxu0
      %v1676 = vadd.f32 0.0, %v1675
      %v1677 = vpop.f32.mrb[0].mxu0
      %v1678 = vpop.f32.mrb[0].mxu0
      %v1679 = vadd.f32 0.0, %v1678
      %v1680 = vpop.f32.mrb[0].mxu0
      %1681 = vmatprep.mubr.bf16.mxu0 0
      %1682 = vmatmul.mubr.bf16.gmra.mrb[0].mxu0 %v1570
      %v1683 = vpop.f32.mrb[0].mxu0
      %v1684 = vadd.f32 0.0, %v1683
      %v1685 = vpop.f32.mrb[0].mxu0
      %v1686 = vpop.f32.mrb[0].mxu0
      %v1687 = vadd.f32 0.0, %v1686
      %v1688 = vpop.f32.mrb[0].mxu0
      %1689 = vmatprep.mubr.bf16.mxu0 0
      %1690 = vmatmul.mubr.bf16.gmra.mrb[0].mxu0 %v1573
      %v1691 = vpop.f32.mrb[0].mxu0
      %v1692 = vadd.f32 0.0, %v1691
      %v1693 = vpop.f32.mrb[0].mxu0
      %v1694 = vpop.f32.mrb[0].mxu0
      %v1695 = vadd.f32 0.0, %v1694
      %v1696 = vpop.f32.mrb[0].mxu0
      %1697 = vmatprep.mubr.bf16.mxu0 0
      %1698 = vmatmul.mubr.bf16.gmra.mrb[0].mxu0 %v1576
      %v1699 = vpop.f32.mrb[0].mxu0
      %v1700 = vadd.f32 0.0, %v1699
      %v1701 = vpop.f32.mrb[0].mxu0
      %v1702 = vpop.f32.mrb[0].mxu0
      %v1703 = vadd.f32 0.0, %v1702
      %v1704 = vpop.f32.mrb[0].mxu0
      %1705 = vmatprep.mubr.bf16.mxu0 0
      %1706 = vmatmul.mubr.bf16.gmra.mrb[0].mxu0 %v1579
      %v1707 = vpop.f32.mrb[0].mxu0
      %v1708 = vadd.f32 0.0, %v1707
      %v1709 = vpop.f32.mrb[0].mxu0
      %v1710 = vpop.f32.mrb[0].mxu0
      %v1711 = vadd.f32 0.0, %v1710
      %v1712 = vpop.f32.mrb[0].mxu0
      %1713 = vdwg.mxu0
      %v1738 = vunpack.c.l.b16 %v1175
      %v1739 = vunpack.c.l.b16 %v1176
      %v1740 = vunpack.c.l.b16 %v1177
      %v1741 = vunpack.c.l.b16 %v1178
      %v1742 = vunpack.c.l.b16 %v1179
      %v1743 = vunpack.c.l.b16 %v1180
      %v1744 = vunpack.c.l.b16 %v1181
      %v1745 = vunpack.c.l.b16 %v1182
      %v1746 = vunpack.c.l.b16 %v1183
      %v1747 = vunpack.c.l.b16 %v1184
      %v1748 = vunpack.c.l.b16 %v1185
      %v1749 = vunpack.c.l.b16 %v1186
      %v1750 = vunpack.c.l.b16 %v1187
      %v1751 = vunpack.c.l.b16 %v1188
      %v1752 = vunpack.c.l.b16 %v1189
      %v1753 = vunpack.c.l.b16 %v1190
      %v1754 = vunpack.c.l.b16 %v1191
      %v1755 = vunpack.c.l.b16 %v1192
      %v1756 = vunpack.c.l.b16 %v1193
      %v1757 = vunpack.c.l.b16 %v1194
      %v1758 = vunpack.c.l.b16 %v1195
      %v1759 = vunpack.c.l.b16 %v1196
      %v1760 = vunpack.c.l.b16 %v1197
      %v1761 = vunpack.c.l.b16 %v1198
      %v1762 = vpack.c.b16 %v1739, %v1738
      %v1763 = vpack.c.b16 %v1741, %v1740
      %v1764 = vpack.c.b16 %v1743, %v1742
      %v1765 = vpack.c.b16 %v1745, %v1744
      %v1766 = vpack.c.b16 %v1747, %v1746
      %v1767 = vpack.c.b16 %v1749, %v1748
      %v1768 = vpack.c.b16 %v1751, %v1750
      %v1769 = vpack.c.b16 %v1753, %v1752
      %v1770 = vpack.c.b16 %v1755, %v1754
      %v1771 = vpack.c.b16 %v1757, %v1756
      %v1772 = vpack.c.b16 %v1759, %v1758
      %v1773 = vpack.c.b16 %v1761, %v1760
      %v1775 = vsel %vm1544, %v1762, 0
      %v1778 = vsel %vm1544, %v1763, 0
      %v1781 = vsel %vm1544, %v1764, 0
      %v1784 = vsel %vm1544, %v1765, 0
      %v1787 = vsel %vm1544, %v1766, 0
      %v1790 = vsel %vm1544, %v1767, 0
      %v1793 = vsel %vm1544, %v1768, 0
      %v1796 = vsel %vm1544, %v1769, 0
      %v1799 = vsel %vm1544, %v1770, 0
      %v1802 = vsel %vm1544, %v1771, 0
      %v1805 = vsel %vm1544, %v1772, 0
      %v1808 = vsel %vm1544, %v1773, 0
      %v1811 = vsel %vm1581, %v1199, 0
      %1813 = vmatprep.subr.bf16.mxu0 0
      %1814 = vmatpush1.bf16.msra.mxu0 %v1811
      %1815 = vmatprep.subr.bf16.mxu0 0
      %1816 = vmatpush1.bf16.msra.mxu0 0
      %1817 = vmatprep.subr.bf16.mxu0 0
      %1818 = vmatpush1.bf16.msra.mxu0 0
      %1819 = vmatprep.subr.bf16.mxu0 0
      %1820 = vmatpush1.bf16.msra.mxu0 0
      %1821 = vmatprep.subr.bf16.mxu0 0
      %1822 = vmatpush1.bf16.msra.mxu0 0
      %1823 = vmatprep.subr.bf16.mxu0 0
      %1824 = vmatpush1.bf16.msra.mxu0 0
      %1825 = vmatprep.subr.bf16.mxu0 0
      %1826 = vmatpush1.bf16.msra.mxu0 0
      %1827 = vmatprep.subr.bf16.mxu0 0
      %1828 = vmatpush1.bf16.msra.mxu0 0
      %1829 = vmatprep.subr.bf16.mxu0 0
      %1830 = vmatpush1.bf16.msra.mxu0 0
      %1831 = vmatprep.subr.bf16.mxu0 0
      %1832 = vmatpush1.bf16.msra.mxu0 0
      %1833 = vmatprep.subr.bf16.mxu0 0
      %1834 = vmatpush1.bf16.msra.mxu0 0
      %1835 = vmatprep.subr.bf16.mxu0 0
      %1836 = vmatpush1.bf16.msra.mxu0 0
      %1837 = vmatprep.subr.bf16.mxu0 0
      %1838 = vmatpush1.bf16.msra.mxu0 0
      %1839 = vmatprep.subr.bf16.mxu0 0
      %1840 = vmatpush1.bf16.msra.mxu0 0
      %1841 = vmatprep.subr.bf16.mxu0 0
      %1842 = vmatpush1.bf16.msra.mxu0 0
      %1843 = vmatprep.subr.bf16.mxu0 0
      %1844 = vmatpush1.bf16.msra.mxu0 0
      %1845 = vmatprep.mubr.bf16.mxu0 0
      %1846 = vmatmul.mubr.bf16.gmra.mrb[0].mxu0 %v1775
      %v1847 = vpop.f32.mrb[0].mxu0
      %v1848 = vadd.f32 %v1620, %v1847
      %v1849 = vpop.f32.mrb[0].mxu0
      %v1850 = vpop.f32.mrb[0].mxu0
      %v1851 = vadd.f32 %v1623, %v1850
      %v1852 = vpop.f32.mrb[0].mxu0
      %1853 = vmatprep.mubr.bf16.mxu0 0
      %1854 = vmatmul.mubr.bf16.gmra.mrb[0].mxu0 %v1778
      %v1855 = vpop.f32.mrb[0].mxu0
      %v1856 = vadd.f32 %v1628, %v1855
      %v1857 = vpop.f32.mrb[0].mxu0
      %v1858 = vpop.f32.mrb[0].mxu0
      %v1859 = vadd.f32 %v1631, %v1858
      %v1860 = vpop.f32.mrb[0].mxu0
      %1861 = vmatprep.mubr.bf16.mxu0 0
      %1862 = vmatmul.mubr.bf16.gmra.mrb[0].mxu0 %v1781
      %v1863 = vpop.f32.mrb[0].mxu0
      %v1864 = vadd.f32 %v1636, %v1863
      %v1865 = vpop.f32.mrb[0].mxu0
      %v1866 = vpop.f32.mrb[0].mxu0
      %v1867 = vadd.f32 %v1639, %v1866
      %v1868 = vpop.f32.mrb[0].mxu0
      %1869 = vmatprep.mubr.bf16.mxu0 0
      %1870 = vmatmul.mubr.bf16.gmra.mrb[0].mxu0 %v1784
      %v1871 = vpop.f32.mrb[0].mxu0
      %v1872 = vadd.f32 %v1644, %v1871
      %v1873 = vpop.f32.mrb[0].mxu0
      %v1874 = vpop.f32.mrb[0].mxu0
      %v1875 = vadd.f32 %v1647, %v1874
      %v1876 = vpop.f32.mrb[0].mxu0
      %1877 = vmatprep.mubr.bf16.mxu0 0
      %1878 = vmatmul.mubr.bf16.gmra.mrb[0].mxu0 %v1787
      %v1879 = vpop.f32.mrb[0].mxu0
      %v1880 = vadd.f32 %v1652, %v1879
      %v1881 = vpop.f32.mrb[0].mxu0
      %v1882 = vpop.f32.mrb[0].mxu0
      %v1883 = vadd.f32 %v1655, %v1882
      %v1884 = vpop.f32.mrb[0].mxu0
      %1885 = vmatprep.mubr.bf16.mxu0 0
      %1886 = vmatmul.mubr.bf16.gmra.mrb[0].mxu0 %v1790
      %v1887 = vpop.f32.mrb[0].mxu0
      %v1888 = vadd.f32 %v1660, %v1887
      %v1889 = vpop.f32.mrb[0].mxu0
      %v1890 = vpop.f32.mrb[0].mxu0
      %v1891 = vadd.f32 %v1663, %v1890
      %v1892 = vpop.f32.mrb[0].mxu0
      %1893 = vmatprep.mubr.bf16.mxu0 0
      %1894 = vmatmul.mubr.bf16.gmra.mrb[0].mxu0 %v1793
      %v1895 = vpop.f32.mrb[0].mxu0
      %v1896 = vadd.f32 %v1668, %v1895
      %v1897 = vpop.f32.mrb[0].mxu0
      %v1898 = vpop.f32.mrb[0].mxu0
      %v1899 = vadd.f32 %v1671, %v1898
      %v1900 = vpop.f32.mrb[0].mxu0
      %1901 = vmatprep.mubr.bf16.mxu0 0
      %1902 = vmatmul.mubr.bf16.gmra.mrb[0].mxu0 %v1796
      %v1903 = vpop.f32.mrb[0].mxu0
      %v1904 = vadd.f32 %v1676, %v1903
      %v1905 = vpop.f32.mrb[0].mxu0
      %v1906 = vpop.f32.mrb[0].mxu0
      %v1907 = vadd.f32 %v1679, %v1906
      %v1908 = vpop.f32.mrb[0].mxu0
      %1909 = vmatprep.mubr.bf16.mxu0 0
      %1910 = vmatmul.mubr.bf16.gmra.mrb[0].mxu0 %v1799
      %v1911 = vpop.f32.mrb[0].mxu0
      %v1912 = vadd.f32 %v1684, %v1911
      %v1913 = vpop.f32.mrb[0].mxu0
      %v1914 = vpop.f32.mrb[0].mxu0
      %v1915 = vadd.f32 %v1687, %v1914
      %v1916 = vpop.f32.mrb[0].mxu0
      %1917 = vmatprep.mubr.bf16.mxu0 0
      %1918 = vmatmul.mubr.bf16.gmra.mrb[0].mxu0 %v1802
      %v1919 = vpop.f32.mrb[0].mxu0
      %v1920 = vadd.f32 %v1692, %v1919
      %v1921 = vpop.f32.mrb[0].mxu0
      %v1922 = vpop.f32.mrb[0].mxu0
      %v1923 = vadd.f32 %v1695, %v1922
      %v1924 = vpop.f32.mrb[0].mxu0
      %1925 = vmatprep.mubr.bf16.mxu0 0
      %1926 = vmatmul.mubr.bf16.gmra.mrb[0].mxu0 %v1805
      %v1927 = vpop.f32.mrb[0].mxu0
      %v1928 = vadd.f32 %v1700, %v1927
      %v1929 = vpop.f32.mrb[0].mxu0
      %v1930 = vpop.f32.mrb[0].mxu0
      %v1931 = vadd.f32 %v1703, %v1930
      %v1932 = vpop.f32.mrb[0].mxu0
      %1933 = vmatprep.mubr.bf16.mxu0 0
      %1934 = vmatmul.mubr.bf16.gmra.mrb[0].mxu0 %v1808
      %v1935 = vpop.f32.mrb[0].mxu0
      %v1936 = vadd.f32 %v1708, %v1935
      %v1937 = vpop.f32.mrb[0].mxu0
      %v1938 = vpop.f32.mrb[0].mxu0
      %v1939 = vadd.f32 %v1711, %v1938
      %v1940 = vpop.f32.mrb[0].mxu0
      %1941 = vdwg.mxu0
      %v1942 = vld [vmem:[#allocation2] sm:$0xe]
      %v1943 = vld [vmem:[#allocation2 + $0xc] sm:$0xe]
      %v1944 = vld [vmem:[#allocation2 + $0x18] sm:$0xe]
      %v1945 = vld [vmem:[#allocation2 + $0x24] sm:$0xe]
      %v1946 = vld [vmem:[#allocation2 + $0x30] sm:$0xe]
      %v1947 = vld [vmem:[#allocation2 + $0x3c] sm:$0xe]
      %v1948 = vld [vmem:[#allocation2 + $0x48] sm:$0xe]
      %v1949 = vld [vmem:[#allocation2 + $0x54] sm:$0xe]
      %v1950 = vld [vmem:[#allocation2 + $0x60] sm:$0xe]
      %v1951 = vld [vmem:[#allocation2 + $0x6c] sm:$0xe]
      %v1952 = vld [vmem:[#allocation2 + $0x78] sm:$0xe]
      %v1953 = vld [vmem:[#allocation2 + $0x84] sm:$0xe]
      %v1954 = vld [vmem:[%s3 + $0x4] sm:$0x3]
      %vm1979 = vcmask 1042432
      %vm1980 = vcmask 1046532
      %vm1981 = vmor %vm1979, %vm1980
      %v1982 = vrot.slane %v1942, 5
      %v1983 = vrot.slane %v1982, 4
      %v1984 = vrot.slane %v1176, 5
      %v1985 = vsel %vm1981, %v1983, %v1984
      %v1986 = vrot.slane %v1984, 4
      %v1987 = vrot.slane %v1200, 5
      %v1988 = vsel %vm1981, %v1986, %v1987
      %v1989 = vrot.slane %v1943, 5
      %v1990 = vrot.slane %v1989, 4
      %v1991 = vrot.slane %v1178, 5
      %v1992 = vsel %vm1981, %v1990, %v1991
      %v1993 = vrot.slane %v1991, 4
      %v1994 = vrot.slane %v1201, 5
      %v1995 = vsel %vm1981, %v1993, %v1994
      %v1996 = vrot.slane %v1944, 5
      %v1997 = vrot.slane %v1996, 4
      %v1998 = vrot.slane %v1180, 5
      %v1999 = vsel %vm1981, %v1997, %v1998
      %v2000 = vrot.slane %v1998, 4
      %v2001 = vrot.slane %v1202, 5
      %v2002 = vsel %vm1981, %v2000, %v2001
      %v2003 = vrot.slane %v1945, 5
      %v2004 = vrot.slane %v2003, 4
      %v2005 = vrot.slane %v1182, 5
      %v2006 = vsel %vm1981, %v2004, %v2005
      %v2007 = vrot.slane %v2005, 4
      %v2008 = vrot.slane %v1203, 5
      %v2009 = vsel %vm1981, %v2007, %v2008
      %v2010 = vrot.slane %v1946, 5
      %v2011 = vrot.slane %v2010, 4
      %v2012 = vrot.slane %v1184, 5
      %v2013 = vsel %vm1981, %v2011, %v2012
      %v2014 = vrot.slane %v2012, 4
      %v2015 = vrot.slane %v1204, 5
      %v2016 = vsel %vm1981, %v2014, %v2015
      %v2017 = vrot.slane %v1947, 5
      %v2018 = vrot.slane %v2017, 4
      %v2019 = vrot.slane %v1186, 5
      %v2020 = vsel %vm1981, %v2018, %v2019
      %v2021 = vrot.slane %v2019, 4
      %v2022 = vrot.slane %v1205, 5
      %v2023 = vsel %vm1981, %v2021, %v2022
      %v2024 = vrot.slane %v1948, 5
      %v2025 = vrot.slane %v2024, 4
      %v2026 = vrot.slane %v1188, 5
      %v2027 = vsel %vm1981, %v2025, %v2026
      %v2028 = vrot.slane %v2026, 4
      %v2029 = vrot.slane %v1206, 5
      %v2030 = vsel %vm1981, %v2028, %v2029
      %v2031 = vrot.slane %v1949, 5
      %v2032 = vrot.slane %v2031, 4
      %v2033 = vrot.slane %v1190, 5
      %v2034 = vsel %vm1981, %v2032, %v2033
      %v2035 = vrot.slane %v2033, 4
      %v2036 = vrot.slane %v1207, 5
      %v2037 = vsel %vm1981, %v2035, %v2036
      %v2038 = vrot.slane %v1950, 5
      %v2039 = vrot.slane %v2038, 4
      %v2040 = vrot.slane %v1192, 5
      %v2041 = vsel %vm1981, %v2039, %v2040
      %v2042 = vrot.slane %v2040, 4
      %v2043 = vrot.slane %v1208, 5
      %v2044 = vsel %vm1981, %v2042, %v2043
      %v2045 = vrot.slane %v1951, 5
      %v2046 = vrot.slane %v2045, 4
      %v2047 = vrot.slane %v1194, 5
      %v2048 = vsel %vm1981, %v2046, %v2047
      %v2049 = vrot.slane %v2047, 4
      %v2050 = vrot.slane %v1209, 5
      %v2051 = vsel %vm1981, %v2049, %v2050
      %v2052 = vrot.slane %v1952, 5
      %v2053 = vrot.slane %v2052, 4
      %v2054 = vrot.slane %v1196, 5
      %v2055 = vsel %vm1981, %v2053, %v2054
      %v2056 = vrot.slane %v2054, 4
      %v2057 = vrot.slane %v1210, 5
      %v2058 = vsel %vm1981, %v2056, %v2057
      %v2059 = vrot.slane %v1953, 5
      %v2060 = vrot.slane %v2059, 4
      %v2061 = vrot.slane %v1198, 5
      %v2062 = vsel %vm1981, %v2060, %v2061
      %v2063 = vrot.slane %v2061, 4
      %v2064 = vrot.slane %v1211, 5
      %v2065 = vsel %vm1981, %v2063, %v2064
      %v2066 = vunpack.c.l.b16 %v1985
      %v2067 = vunpack.c.l.b16 %v1988
      %v2068 = vunpack.c.l.b16 %v1992
      %v2069 = vunpack.c.l.b16 %v1995
      %v2070 = vunpack.c.l.b16 %v1999
      %v2071 = vunpack.c.l.b16 %v2002
      %v2072 = vunpack.c.l.b16 %v2006
      %v2073 = vunpack.c.l.b16 %v2009
      %v2074 = vunpack.c.l.b16 %v2013
      %v2075 = vunpack.c.l.b16 %v2016
      %v2076 = vunpack.c.l.b16 %v2020
      %v2077 = vunpack.c.l.b16 %v2023
      %v2078 = vunpack.c.l.b16 %v2027
      %v2079 = vunpack.c.l.b16 %v2030
      %v2080 = vunpack.c.l.b16 %v2034
      %v2081 = vunpack.c.l.b16 %v2037
      %v2082 = vunpack.c.l.b16 %v2041
      %v2083 = vunpack.c.l.b16 %v2044
      %v2084 = vunpack.c.l.b16 %v2048
      %v2085 = vunpack.c.l.b16 %v2051
      %v2086 = vunpack.c.l.b16 %v2055
      %v2087 = vunpack.c.l.b16 %v2058
      %v2088 = vunpack.c.l.b16 %v2062
      %v2089 = vunpack.c.l.b16 %v2065
      %v2090 = vpack.c.b16 %v2067, %v2066
      %v2091 = vpack.c.b16 %v2069, %v2068
      %v2092 = vpack.c.b16 %v2071, %v2070
      %v2093 = vpack.c.b16 %v2073, %v2072
      %v2094 = vpack.c.b16 %v2075, %v2074
      %v2095 = vpack.c.b16 %v2077, %v2076
      %v2096 = vpack.c.b16 %v2079, %v2078
      %v2097 = vpack.c.b16 %v2081, %v2080
      %v2098 = vpack.c.b16 %v2083, %v2082
      %v2099 = vpack.c.b16 %v2085, %v2084
      %v2100 = vpack.c.b16 %v2087, %v2086
      %v2101 = vpack.c.b16 %v2089, %v2088
      %v2103 = vsel %vm1544, %v2090, 0
      %v2106 = vsel %vm1544, %v2091, 0
      %v2109 = vsel %vm1544, %v2092, 0
      %v2112 = vsel %vm1544, %v2093, 0
      %v2115 = vsel %vm1544, %v2094, 0
      %v2118 = vsel %vm1544, %v2095, 0
      %v2121 = vsel %vm1544, %v2096, 0
      %v2124 = vsel %vm1544, %v2097, 0
      %v2127 = vsel %vm1544, %v2098, 0
      %v2130 = vsel %vm1544, %v2099, 0
      %v2133 = vsel %vm1544, %v2100, 0
      %v2136 = vsel %vm1544, %v2101, 0
      %v2139 = vsel %vm1581, %v1954, 0
      %2141 = vmatprep.subr.bf16.mxu0 0
      %2142 = vmatpush1.bf16.msra.mxu0 %v2139
      %2143 = vmatprep.subr.bf16.mxu0 0
      %2144 = vmatpush1.bf16.msra.mxu0 0
      %2145 = vmatprep.subr.bf16.mxu0 0
      %2146 = vmatpush1.bf16.msra.mxu0 0
      %2147 = vmatprep.subr.bf16.mxu0 0
      %2148 = vmatpush1.bf16.msra.mxu0 0
      %2149 = vmatprep.subr.bf16.mxu0 0
      %2150 = vmatpush1.bf16.msra.mxu0 0
      %2151 = vmatprep.subr.bf16.mxu0 0
      %2152 = vmatpush1.bf16.msra.mxu0 0
      %2153 = vmatprep.subr.bf16.mxu0 0
      %2154 = vmatpush1.bf16.msra.mxu0 0
      %2155 = vmatprep.subr.bf16.mxu0 0
      %2156 = vmatpush1.bf16.msra.mxu0 0
      %2157 = vmatprep.subr.bf16.mxu0 0
      %2158 = vmatpush1.bf16.msra.mxu0 0
      %2159 = vmatprep.subr.bf16.mxu0 0
      %2160 = vmatpush1.bf16.msra.mxu0 0
      %2161 = vmatprep.subr.bf16.mxu0 0
      %2162 = vmatpush1.bf16.msra.mxu0 0
      %2163 = vmatprep.subr.bf16.mxu0 0
      %2164 = vmatpush1.bf16.msra.mxu0 0
      %2165 = vmatprep.subr.bf16.mxu0 0
      %2166 = vmatpush1.bf16.msra.mxu0 0
      %2167 = vmatprep.subr.bf16.mxu0 0
      %2168 = vmatpush1.bf16.msra.mxu0 0
      %2169 = vmatprep.subr.bf16.mxu0 0
      %2170 = vmatpush1.bf16.msra.mxu0 0
      %2171 = vmatprep.subr.bf16.mxu0 0
      %2172 = vmatpush1.bf16.msra.mxu0 0
      %2173 = vmatprep.mubr.bf16.mxu0 0
      %2174 = vmatmul.mubr.bf16.gmra.mrb[0].mxu0 %v2103
      %v2175 = vpop.f32.mrb[0].mxu0
      %v2176 = vadd.f32 0.0, %v2175
      %v2177 = vpop.f32.mrb[0].mxu0
      %v2178 = vpop.f32.mrb[0].mxu0
      %v2179 = vadd.f32 0.0, %v2178
      %v2180 = vpop.f32.mrb[0].mxu0
      %2181 = vmatprep.mubr.bf16.mxu0 0
      %2182 = vmatmul.mubr.bf16.gmra.mrb[0].mxu0 %v2106
      %v2183 = vpop.f32.mrb[0].mxu0
      %v2184 = vadd.f32 0.0, %v2183
      %v2185 = vpop.f32.mrb[0].mxu0
      %v2186 = vpop.f32.mrb[0].mxu0
      %v2187 = vadd.f32 0.0, %v2186
      %v2188 = vpop.f32.mrb[0].mxu0
      %2189 = vmatprep.mubr.bf16.mxu0 0
      %2190 = vmatmul.mubr.bf16.gmra.mrb[0].mxu0 %v2109
      %v2191 = vpop.f32.mrb[0].mxu0
      %v2192 = vadd.f32 0.0, %v2191
      %v2193 = vpop.f32.mrb[0].mxu0
      %v2194 = vpop.f32.mrb[0].mxu0
      %v2195 = vadd.f32 0.0, %v2194
      %v2196 = vpop.f32.mrb[0].mxu0
      %2197 = vmatprep.mubr.bf16.mxu0 0
      %2198 = vmatmul.mubr.bf16.gmra.mrb[0].mxu0 %v2112
      %v2199 = vpop.f32.mrb[0].mxu0
      %v2200 = vadd.f32 0.0, %v2199
      %v2201 = vpop.f32.mrb[0].mxu0
      %v2202 = vpop.f32.mrb[0].mxu0
      %v2203 = vadd.f32 0.0, %v2202
      %v2204 = vpop.f32.mrb[0].mxu0
      %2205 = vmatprep.mubr.bf16.mxu0 0
      %2206 = vmatmul.mubr.bf16.gmra.mrb[0].mxu0 %v2115
      %v2207 = vpop.f32.mrb[0].mxu0
      %v2208 = vadd.f32 0.0, %v2207
      %v2209 = vpop.f32.mrb[0].mxu0
      %v2210 = vpop.f32.mrb[0].mxu0
      %v2211 = vadd.f32 0.0, %v2210
      %v2212 = vpop.f32.mrb[0].mxu0
      %2213 = vmatprep.mubr.bf16.mxu0 0
      %2214 = vmatmul.mubr.bf16.gmra.mrb[0].mxu0 %v2118
      %v2215 = vpop.f32.mrb[0].mxu0
      %v2216 = vadd.f32 0.0, %v2215
      %v2217 = vpop.f32.mrb[0].mxu0
      %v2218 = vpop.f32.mrb[0].mxu0
      %v2219 = vadd.f32 0.0, %v2218
      %v2220 = vpop.f32.mrb[0].mxu0
      %2221 = vmatprep.mubr.bf16.mxu0 0
      %2222 = vmatmul.mubr.bf16.gmra.mrb[0].mxu0 %v2121
      %v2223 = vpop.f32.mrb[0].mxu0
      %v2224 = vadd.f32 0.0, %v2223
      %v2225 = vpop.f32.mrb[0].mxu0
      %v2226 = vpop.f32.mrb[0].mxu0
      %v2227 = vadd.f32 0.0, %v2226
      %v2228 = vpop.f32.mrb[0].mxu0
      %2229 = vmatprep.mubr.bf16.mxu0 0
      %2230 = vmatmul.mubr.bf16.gmra.mrb[0].mxu0 %v2124
      %v2231 = vpop.f32.mrb[0].mxu0
      %v2232 = vadd.f32 0.0, %v2231
      %v2233 = vpop.f32.mrb[0].mxu0
      %v2234 = vpop.f32.mrb[0].mxu0
      %v2235 = vadd.f32 0.0, %v2234
      %v2236 = vpop.f32.mrb[0].mxu0
      %2237 = vmatprep.mubr.bf16.mxu0 0
      %2238 = vmatmul.mubr.bf16.gmra.mrb[0].mxu0 %v2127
      %v2239 = vpop.f32.mrb[0].mxu0
      %v2240 = vadd.f32 0.0, %v2239
      %v2241 = vpop.f32.mrb[0].mxu0
      %v2242 = vpop.f32.mrb[0].mxu0
      %v2243 = vadd.f32 0.0, %v2242
      %v2244 = vpop.f32.mrb[0].mxu0
      %2245 = vmatprep.mubr.bf16.mxu0 0
      %2246 = vmatmul.mubr.bf16.gmra.mrb[0].mxu0 %v2130
      %v2247 = vpop.f32.mrb[0].mxu0
      %v2248 = vadd.f32 0.0, %v2247
      %v2249 = vpop.f32.mrb[0].mxu0
      %v2250 = vpop.f32.mrb[0].mxu0
      %v2251 = vadd.f32 0.0, %v2250
      %v2252 = vpop.f32.mrb[0].mxu0
      %2253 = vmatprep.mubr.bf16.mxu0 0
      %2254 = vmatmul.mubr.bf16.gmra.mrb[0].mxu0 %v2133
      %v2255 = vpop.f32.mrb[0].mxu0
      %v2256 = vadd.f32 0.0, %v2255
      %v2257 = vpop.f32.mrb[0].mxu0
      %v2258 = vpop.f32.mrb[0].mxu0
      %v2259 = vadd.f32 0.0, %v2258
      %v2260 = vpop.f32.mrb[0].mxu0
      %2261 = vmatprep.mubr.bf16.mxu0 0
      %2262 = vmatmul.mubr.bf16.gmra.mrb[0].mxu0 %v2136
      %v2263 = vpop.f32.mrb[0].mxu0
      %v2264 = vadd.f32 0.0, %v2263
      %v2265 = vpop.f32.mrb[0].mxu0
      %v2266 = vpop.f32.mrb[0].mxu0
      %v2267 = vadd.f32 0.0, %v2266
      %v2268 = vpop.f32.mrb[0].mxu0
      %2269 = vdwg.mxu0
      %v2270 = vadd.f32 %v1848, %v2176
      %v2271 = vadd.f32 %v1851, %v2179
      %v2272 = vadd.f32 %v1856, %v2184
      %v2273 = vadd.f32 %v1859, %v2187
      %v2274 = vadd.f32 %v1864, %v2192
      %v2275 = vadd.f32 %v1867, %v2195
      %v2276 = vadd.f32 %v1872, %v2200
      %v2277 = vadd.f32 %v1875, %v2203
      %v2278 = vadd.f32 %v1880, %v2208
      %v2279 = vadd.f32 %v1883, %v2211
      %v2280 = vadd.f32 %v1888, %v2216
      %v2281 = vadd.f32 %v1891, %v2219
      %v2282 = vadd.f32 %v1896, %v2224
      %v2283 = vadd.f32 %v1899, %v2227
      %v2284 = vadd.f32 %v1904, %v2232
      %v2285 = vadd.f32 %v1907, %v2235
      %v2286 = vadd.f32 %v1912, %v2240
      %v2287 = vadd.f32 %v1915, %v2243
      %v2288 = vadd.f32 %v1920, %v2248
      %v2289 = vadd.f32 %v1923, %v2251
      %v2290 = vadd.f32 %v1928, %v2256
      %v2291 = vadd.f32 %v1931, %v2259
      %v2292 = vadd.f32 %v1936, %v2264
      %v2293 = vadd.f32 %v1939, %v2267
      %s2294 = scalar_lea.vmem [#allocation2], 12
      %v2295 = vld [vmem:[%s2294] sm:$0xf]
      %v2296 = vld [vmem:[%s2294 + $0x4] sm:$0xf]
      %v2297 = vld [vmem:[%s2294 + $0xc] sm:$0xf]
      %v2298 = vld [vmem:[%s2294 + $0x10] sm:$0xf]
      %v2299 = vld [vmem:[%s2294 + $0x18] sm:$0xf]
      %v2300 = vld [vmem:[%s2294 + $0x1c] sm:$0xf]
      %v2301 = vld [vmem:[%s2294 + $0x24] sm:$0xf]
      %v2302 = vld [vmem:[%s2294 + $0x28] sm:$0xf]
      %v2303 = vld [vmem:[%s2294 + $0x30] sm:$0xf]
      %v2304 = vld [vmem:[%s2294 + $0x34] sm:$0xf]
      %v2305 = vld [vmem:[%s2294 + $0x3c] sm:$0xf]
      %v2306 = vld [vmem:[%s2294 + $0x40] sm:$0xf]
      %v2307 = vld [vmem:[%s2294 + $0x48] sm:$0xf]
      %v2308 = vld [vmem:[%s2294 + $0x4c] sm:$0xf]
      %v2309 = vld [vmem:[%s2294 + $0x54] sm:$0xf]
      %v2310 = vld [vmem:[%s2294 + $0x58] sm:$0xf]
      %v2311 = vld [vmem:[%s2294 + $0x60] sm:$0xf]
      %v2312 = vld [vmem:[%s2294 + $0x64] sm:$0xf]
      %v2313 = vld [vmem:[%s2294 + $0x6c] sm:$0xf]
      %v2314 = vld [vmem:[%s2294 + $0x70] sm:$0xf]
      %v2315 = vld [vmem:[%s2294 + $0x78] sm:$0xf]
      %v2316 = vld [vmem:[%s2294 + $0x7c] sm:$0xf]
      %v2317 = vld [vmem:[%s2294 + $0x84] sm:$0xf]
      %v2318 = vld [vmem:[%s2294 + $0x88] sm:$0xf]
      %v2319 = vld [vmem:[%s3 + $0x4] sm:$0xc]
      %v2344 = vunpack.c.l.b16 %v2295
      %v2345 = vunpack.c.l.b16 %v2296
      %v2346 = vunpack.c.l.b16 %v2297
      %v2347 = vunpack.c.l.b16 %v2298
      %v2348 = vunpack.c.l.b16 %v2299
      %v2349 = vunpack.c.l.b16 %v2300
      %v2350 = vunpack.c.l.b16 %v2301
      %v2351 = vunpack.c.l.b16 %v2302
      %v2352 = vunpack.c.l.b16 %v2303
      %v2353 = vunpack.c.l.b16 %v2304
      %v2354 = vunpack.c.l.b16 %v2305
      %v2355 = vunpack.c.l.b16 %v2306
      %v2356 = vunpack.c.l.b16 %v2307
      %v2357 = vunpack.c.l.b16 %v2308
      %v2358 = vunpack.c.l.b16 %v2309
      %v2359 = vunpack.c.l.b16 %v2310
      %v2360 = vunpack.c.l.b16 %v2311
      %v2361 = vunpack.c.l.b16 %v2312
      %v2362 = vunpack.c.l.b16 %v2313
      %v2363 = vunpack.c.l.b16 %v2314
      %v2364 = vunpack.c.l.b16 %v2315
      %v2365 = vunpack.c.l.b16 %v2316
      %v2366 = vunpack.c.l.b16 %v2317
      %v2367 = vunpack.c.l.b16 %v2318
      %v2368 = vpack.c.b16 %v2345, %v2344
      %v2369 = vpack.c.b16 %v2347, %v2346
      %v2370 = vpack.c.b16 %v2349, %v2348
      %v2371 = vpack.c.b16 %v2351, %v2350
      %v2372 = vpack.c.b16 %v2353, %v2352
      %v2373 = vpack.c.b16 %v2355, %v2354
      %v2374 = vpack.c.b16 %v2357, %v2356
      %v2375 = vpack.c.b16 %v2359, %v2358
      %v2376 = vpack.c.b16 %v2361, %v2360
      %v2377 = vpack.c.b16 %v2363, %v2362
      %v2378 = vpack.c.b16 %v2365, %v2364
      %v2379 = vpack.c.b16 %v2367, %v2366
      %v2381 = vunpack.c.l.b16 %v2319
      %v2382 = vpack.c.b16 %v2381, %v2381
      %v2383 = vrot.slane %v2382, 2
      %v2385 = vsel %vm1544, %v2368, 0
      %v2388 = vsel %vm1544, %v2369, 0
      %v2391 = vsel %vm1544, %v2370, 0
      %v2394 = vsel %vm1544, %v2371, 0
      %v2397 = vsel %vm1544, %v2372, 0
      %v2400 = vsel %vm1544, %v2373, 0
      %v2403 = vsel %vm1544, %v2374, 0
      %v2406 = vsel %vm1544, %v2375, 0
      %v2409 = vsel %vm1544, %v2376, 0
      %v2412 = vsel %vm1544, %v2377, 0
      %v2415 = vsel %vm1544, %v2378, 0
      %v2418 = vsel %vm1544, %v2379, 0
      %v2421 = vsel %vm1581, %v2383, 0
      %2423 = vmatprep.subr.bf16.mxu0 0
      %2424 = vmatpush1.bf16.msra.mxu0 %v2421
      %2425 = vmatprep.subr.bf16.mxu0 0
      %2426 = vmatpush1.bf16.msra.mxu0 0
      %2427 = vmatprep.subr.bf16.mxu0 0
      %2428 = vmatpush1.bf16.msra.mxu0 0
      %2429 = vmatprep.subr.bf16.mxu0 0
      %2430 = vmatpush1.bf16.msra.mxu0 0
      %2431 = vmatprep.subr.bf16.mxu0 0
      %2432 = vmatpush1.bf16.msra.mxu0 0
      %2433 = vmatprep.subr.bf16.mxu0 0
      %2434 = vmatpush1.bf16.msra.mxu0 0
      %2435 = vmatprep.subr.bf16.mxu0 0
      %2436 = vmatpush1.bf16.msra.mxu0 0
      %2437 = vmatprep.subr.bf16.mxu0 0
      %2438 = vmatpush1.bf16.msra.mxu0 0
      %2439 = vmatprep.subr.bf16.mxu0 0
      %2440 = vmatpush1.bf16.msra.mxu0 0
      %2441 = vmatprep.subr.bf16.mxu0 0
      %2442 = vmatpush1.bf16.msra.mxu0 0
      %2443 = vmatprep.subr.bf16.mxu0 0
      %2444 = vmatpush1.bf16.msra.mxu0 0
      %2445 = vmatprep.subr.bf16.mxu0 0
      %2446 = vmatpush1.bf16.msra.mxu0 0
      %2447 = vmatprep.subr.bf16.mxu0 0
      %2448 = vmatpush1.bf16.msra.mxu0 0
      %2449 = vmatprep.subr.bf16.mxu0 0
      %2450 = vmatpush1.bf16.msra.mxu0 0
      %2451 = vmatprep.subr.bf16.mxu0 0
      %2452 = vmatpush1.bf16.msra.mxu0 0
      %2453 = vmatprep.subr.bf16.mxu0 0
      %2454 = vmatpush1.bf16.msra.mxu0 0
      %2455 = vmatprep.mubr.bf16.mxu0 0
      %2456 = vmatmul.mubr.bf16.gmra.mrb[0].mxu0 %v2385
      %v2457 = vpop.f32.mrb[0].mxu0
      %v2458 = vadd.f32 0.0, %v2457
      %v2459 = vpop.f32.mrb[0].mxu0
      %v2460 = vpop.f32.mrb[0].mxu0
      %v2461 = vadd.f32 0.0, %v2460
      %v2462 = vpop.f32.mrb[0].mxu0
      %2463 = vmatprep.mubr.bf16.mxu0 0
      %2464 = vmatmul.mubr.bf16.gmra.mrb[0].mxu0 %v2388
      %v2465 = vpop.f32.mrb[0].mxu0
      %v2466 = vadd.f32 0.0, %v2465
      %v2467 = vpop.f32.mrb[0].mxu0
      %v2468 = vpop.f32.mrb[0].mxu0
      %v2469 = vadd.f32 0.0, %v2468
      %v2470 = vpop.f32.mrb[0].mxu0
      %2471 = vmatprep.mubr.bf16.mxu0 0
      %2472 = vmatmul.mubr.bf16.gmra.mrb[0].mxu0 %v2391
      %v2473 = vpop.f32.mrb[0].mxu0
      %v2474 = vadd.f32 0.0, %v2473
      %v2475 = vpop.f32.mrb[0].mxu0
      %v2476 = vpop.f32.mrb[0].mxu0
      %v2477 = vadd.f32 0.0, %v2476
      %v2478 = vpop.f32.mrb[0].mxu0
      %2479 = vmatprep.mubr.bf16.mxu0 0
      %2480 = vmatmul.mubr.bf16.gmra.mrb[0].mxu0 %v2394
      %v2481 = vpop.f32.mrb[0].mxu0
      %v2482 = vadd.f32 0.0, %v2481
      %v2483 = vpop.f32.mrb[0].mxu0
      %v2484 = vpop.f32.mrb[0].mxu0
      %v2485 = vadd.f32 0.0, %v2484
      %v2486 = vpop.f32.mrb[0].mxu0
      %2487 = vmatprep.mubr.bf16.mxu0 0
      %2488 = vmatmul.mubr.bf16.gmra.mrb[0].mxu0 %v2397
      %v2489 = vpop.f32.mrb[0].mxu0
      %v2490 = vadd.f32 0.0, %v2489
      %v2491 = vpop.f32.mrb[0].mxu0
      %v2492 = vpop.f32.mrb[0].mxu0
      %v2493 = vadd.f32 0.0, %v2492
      %v2494 = vpop.f32.mrb[0].mxu0
      %2495 = vmatprep.mubr.bf16.mxu0 0
      %2496 = vmatmul.mubr.bf16.gmra.mrb[0].mxu0 %v2400
      %v2497 = vpop.f32.mrb[0].mxu0
      %v2498 = vadd.f32 0.0, %v2497
      %v2499 = vpop.f32.mrb[0].mxu0
      %v2500 = vpop.f32.mrb[0].mxu0
      %v2501 = vadd.f32 0.0, %v2500
      %v2502 = vpop.f32.mrb[0].mxu0
      %2503 = vmatprep.mubr.bf16.mxu0 0
      %2504 = vmatmul.mubr.bf16.gmra.mrb[0].mxu0 %v2403
      %v2505 = vpop.f32.mrb[0].mxu0
      %v2506 = vadd.f32 0.0, %v2505
      %v2507 = vpop.f32.mrb[0].mxu0
      %v2508 = vpop.f32.mrb[0].mxu0
      %v2509 = vadd.f32 0.0, %v2508
      %v2510 = vpop.f32.mrb[0].mxu0
      %2511 = vmatprep.mubr.bf16.mxu0 0
      %2512 = vmatmul.mubr.bf16.gmra.mrb[0].mxu0 %v2406
      %v2513 = vpop.f32.mrb[0].mxu0
      %v2514 = vadd.f32 0.0, %v2513
      %v2515 = vpop.f32.mrb[0].mxu0
      %v2516 = vpop.f32.mrb[0].mxu0
      %v2517 = vadd.f32 0.0, %v2516
      %v2518 = vpop.f32.mrb[0].mxu0
      %2519 = vmatprep.mubr.bf16.mxu0 0
      %2520 = vmatmul.mubr.bf16.gmra.mrb[0].mxu0 %v2409
      %v2521 = vpop.f32.mrb[0].mxu0
      %v2522 = vadd.f32 0.0, %v2521
      %v2523 = vpop.f32.mrb[0].mxu0
      %v2524 = vpop.f32.mrb[0].mxu0
      %v2525 = vadd.f32 0.0, %v2524
      %v2526 = vpop.f32.mrb[0].mxu0
      %2527 = vmatprep.mubr.bf16.mxu0 0
      %2528 = vmatmul.mubr.bf16.gmra.mrb[0].mxu0 %v2412
      %v2529 = vpop.f32.mrb[0].mxu0
      %v2530 = vadd.f32 0.0, %v2529
      %v2531 = vpop.f32.mrb[0].mxu0
      %v2532 = vpop.f32.mrb[0].mxu0
      %v2533 = vadd.f32 0.0, %v2532
      %v2534 = vpop.f32.mrb[0].mxu0
      %2535 = vmatprep.mubr.bf16.mxu0 0
      %2536 = vmatmul.mubr.bf16.gmra.mrb[0].mxu0 %v2415
      %v2537 = vpop.f32.mrb[0].mxu0
      %v2538 = vadd.f32 0.0, %v2537
      %v2539 = vpop.f32.mrb[0].mxu0
      %v2540 = vpop.f32.mrb[0].mxu0
      %v2541 = vadd.f32 0.0, %v2540
      %v2542 = vpop.f32.mrb[0].mxu0
      %2543 = vmatprep.mubr.bf16.mxu0 0
      %2544 = vmatmul.mubr.bf16.gmra.mrb[0].mxu0 %v2418
      %v2545 = vpop.f32.mrb[0].mxu0
      %v2546 = vadd.f32 0.0, %v2545
      %v2547 = vpop.f32.mrb[0].mxu0
      %v2548 = vpop.f32.mrb[0].mxu0
      %v2549 = vadd.f32 0.0, %v2548
      %v2550 = vpop.f32.mrb[0].mxu0
      %2551 = vdwg.mxu0
      %v2552 = vadd.f32 %v2270, %v2458
      %v2553 = vadd.f32 %v2271, %v2461
      %v2554 = vadd.f32 %v2272, %v2466
      %v2555 = vadd.f32 %v2273, %v2469
      %v2556 = vadd.f32 %v2274, %v2474
      %v2557 = vadd.f32 %v2275, %v2477
      %v2558 = vadd.f32 %v2276, %v2482
      %v2559 = vadd.f32 %v2277, %v2485
      %v2560 = vadd.f32 %v2278, %v2490
      %v2561 = vadd.f32 %v2279, %v2493
      %v2562 = vadd.f32 %v2280, %v2498
      %v2563 = vadd.f32 %v2281, %v2501
      %v2564 = vadd.f32 %v2282, %v2506
      %v2565 = vadd.f32 %v2283, %v2509
      %v2566 = vadd.f32 %v2284, %v2514
      %v2567 = vadd.f32 %v2285, %v2517
      %v2568 = vadd.f32 %v2286, %v2522
      %v2569 = vadd.f32 %v2287, %v2525
      %v2570 = vadd.f32 %v2288, %v2530
      %v2571 = vadd.f32 %v2289, %v2533
      %v2572 = vadd.f32 %v2290, %v2538
      %v2573 = vadd.f32 %v2291, %v2541
      %v2574 = vadd.f32 %v2292, %v2546
      %v2575 = vadd.f32 %v2293, %v2549
      %v2576 = vld [vmem:[%s2294] sm:$0xf]
      %v2577 = vld [vmem:[%s2294 + $0x4] sm:$0xf]
      %v2578 = vld [vmem:[%s2294 + $0x8] sm:$0x1]
      %v2579 = vld [vmem:[%s2294 + $0xc] sm:$0xf]
      %v2580 = vld [vmem:[%s2294 + $0x10] sm:$0xf]
      %v2581 = vld [vmem:[%s2294 + $0x14] sm:$0x1]
      %v2582 = vld [vmem:[%s2294 + $0x18] sm:$0xf]
      %v2583 = vld [vmem:[%s2294 + $0x1c] sm:$0xf]
      %v2584 = vld [vmem:[%s2294 + $0x20] sm:$0x1]
      %v2585 = vld [vmem:[%s2294 + $0x24] sm:$0xf]
      %v2586 = vld [vmem:[%s2294 + $0x28] sm:$0xf]
      %v2587 = vld [vmem:[%s2294 + $0x2c] sm:$0x1]
      %v2588 = vld [vmem:[%s2294 + $0x30] sm:$0xf]
      %v2589 = vld [vmem:[%s2294 + $0x34] sm:$0xf]
      %v2590 = vld [vmem:[%s2294 + $0x38] sm:$0x1]
      %v2591 = vld [vmem:[%s2294 + $0x3c] sm:$0xf]
      %v2592 = vld [vmem:[%s2294 + $0x40] sm:$0xf]
      %v2593 = vld [vmem:[%s2294 + $0x44] sm:$0x1]
      %v2594 = vld [vmem:[%s2294 + $0x48] sm:$0xf]
      %v2595 = vld [vmem:[%s2294 + $0x4c] sm:$0xf]
      %v2596 = vld [vmem:[%s2294 + $0x50] sm:$0x1]
      %v2597 = vld [vmem:[%s2294 + $0x54] sm:$0xf]
      %v2598 = vld [vmem:[%s2294 + $0x58] sm:$0xf]
      %v2599 = vld [vmem:[%s2294 + $0x5c] sm:$0x1]
      %v2600 = vld [vmem:[%s2294 + $0x60] sm:$0xf]
      %v2601 = vld [vmem:[%s2294 + $0x64] sm:$0xf]
      %v2602 = vld [vmem:[%s2294 + $0x68] sm:$0x1]
      %v2603 = vld [vmem:[%s2294 + $0x6c] sm:$0xf]
      %v2604 = vld [vmem:[%s2294 + $0x70] sm:$0xf]
      %v2605 = vld [vmem:[%s2294 + $0x74] sm:$0x1]
      %v2606 = vld [vmem:[%s2294 + $0x78] sm:$0xf]
      %v2607 = vld [vmem:[%s2294 + $0x7c] sm:$0xf]
      %v2608 = vld [vmem:[%s2294 + $0x80] sm:$0x1]
      %v2609 = vld [vmem:[%s2294 + $0x84] sm:$0xf]
      %v2610 = vld [vmem:[%s2294 + $0x88] sm:$0xf]
      %v2611 = vld [vmem:[%s2294 + $0x8c] sm:$0x1]
      %v2612 = vld [vmem:[%s3 + $0x8] sm:$0x3]
      %v2614 = vshrl.u32 %v2576, 16
      %v2616 = vrot.slane %v2614, 4
      %v2617 = vshll.u32 %v2576, 16
      %v2619 = vrot.slane %v2617, 5
      %v2620 = vor.u32 %v2616, %v2619
      %v2621 = vrot.slane %v2620, 4
      %v2623 = vshll.u32 %v2577, 16
      %v2625 = vrot.slane %v2623, 5
      %v2626 = vsel %vm1215, %v2621, %v2625
      %v2627 = vshrl.u32 %v2577, 16
      %v2629 = vrot.slane %v2627, 4
      %v2630 = vor.u32 %v2629, %v2625
      %v2631 = vrot.slane %v2630, 4
      %v2633 = vshll.u32 %v2578, 16
      %v2635 = vrot.slane %v2633, 5
      %v2636 = vsel %vm1215, %v2631, %v2635
      %v2638 = vshrl.u32 %v2579, 16
      %v2640 = vrot.slane %v2638, 4
      %v2641 = vshll.u32 %v2579, 16
      %v2643 = vrot.slane %v2641, 5
      %v2644 = vor.u32 %v2640, %v2643
      %v2645 = vrot.slane %v2644, 4
      %v2647 = vshll.u32 %v2580, 16
      %v2649 = vrot.slane %v2647, 5
      %v2650 = vsel %vm1215, %v2645, %v2649
      %v2651 = vshrl.u32 %v2580, 16
      %v2653 = vrot.slane %v2651, 4
      %v2654 = vor.u32 %v2653, %v2649
      %v2655 = vrot.slane %v2654, 4
      %v2657 = vshll.u32 %v2581, 16
      %v2659 = vrot.slane %v2657, 5
      %v2660 = vsel %vm1215, %v2655, %v2659
      %v2662 = vshrl.u32 %v2582, 16
      %v2664 = vrot.slane %v2662, 4
      %v2665 = vshll.u32 %v2582, 16
      %v2667 = vrot.slane %v2665, 5
      %v2668 = vor.u32 %v2664, %v2667
      %v2669 = vrot.slane %v2668, 4
      %v2671 = vshll.u32 %v2583, 16
      %v2673 = vrot.slane %v2671, 5
      %v2674 = vsel %vm1215, %v2669, %v2673
      %v2675 = vshrl.u32 %v2583, 16
      %v2677 = vrot.slane %v2675, 4
      %v2678 = vor.u32 %v2677, %v2673
      %v2679 = vrot.slane %v2678, 4
      %v2681 = vshll.u32 %v2584, 16
      %v2683 = vrot.slane %v2681, 5
      %v2684 = vsel %vm1215, %v2679, %v2683
      %v2686 = vshrl.u32 %v2585, 16
      %v2688 = vrot.slane %v2686, 4
      %v2689 = vshll.u32 %v2585, 16
      %v2691 = vrot.slane %v2689, 5
      %v2692 = vor.u32 %v2688, %v2691
      %v2693 = vrot.slane %v2692, 4
      %v2695 = vshll.u32 %v2586, 16
      %v2697 = vrot.slane %v2695, 5
      %v2698 = vsel %vm1215, %v2693, %v2697
      %v2699 = vshrl.u32 %v2586, 16
      %v2701 = vrot.slane %v2699, 4
      %v2702 = vor.u32 %v2701, %v2697
      %v2703 = vrot.slane %v2702, 4
      %v2705 = vshll.u32 %v2587, 16
      %v2707 = vrot.slane %v2705, 5
      %v2708 = vsel %vm1215, %v2703, %v2707
      %v2710 = vshrl.u32 %v2588, 16
      %v2712 = vrot.slane %v2710, 4
      %v2713 = vshll.u32 %v2588, 16
      %v2715 = vrot.slane %v2713, 5
      %v2716 = vor.u32 %v2712, %v2715
      %v2717 = vrot.slane %v2716, 4
      %v2719 = vshll.u32 %v2589, 16
      %v2721 = vrot.slane %v2719, 5
      %v2722 = vsel %vm1215, %v2717, %v2721
      %v2723 = vshrl.u32 %v2589, 16
      %v2725 = vrot.slane %v2723, 4
      %v2726 = vor.u32 %v2725, %v2721
      %v2727 = vrot.slane %v2726, 4
      %v2729 = vshll.u32 %v2590, 16
      %v2731 = vrot.slane %v2729, 5
      %v2732 = vsel %vm1215, %v2727, %v2731
      %v2734 = vshrl.u32 %v2591, 16
      %v2736 = vrot.slane %v2734, 4
      %v2737 = vshll.u32 %v2591, 16
      %v2739 = vrot.slane %v2737, 5
      %v2740 = vor.u32 %v2736, %v2739
      %v2741 = vrot.slane %v2740, 4
      %v2743 = vshll.u32 %v2592, 16
      %v2745 = vrot.slane %v2743, 5
      %v2746 = vsel %vm1215, %v2741, %v2745
      %v2747 = vshrl.u32 %v2592, 16
      %v2749 = vrot.slane %v2747, 4
      %v2750 = vor.u32 %v2749, %v2745
      %v2751 = vrot.slane %v2750, 4
      %v2753 = vshll.u32 %v2593, 16
      %v2755 = vrot.slane %v2753, 5
      %v2756 = vsel %vm1215, %v2751, %v2755
      %v2758 = vshrl.u32 %v2594, 16
      %v2760 = vrot.slane %v2758, 4
      %v2761 = vshll.u32 %v2594, 16
      %v2763 = vrot.slane %v2761, 5
      %v2764 = vor.u32 %v2760, %v2763
      %v2765 = vrot.slane %v2764, 4
      %v2767 = vshll.u32 %v2595, 16
      %v2769 = vrot.slane %v2767, 5
      %v2770 = vsel %vm1215, %v2765, %v2769
      %v2771 = vshrl.u32 %v2595, 16
      %v2773 = vrot.slane %v2771, 4
      %v2774 = vor.u32 %v2773, %v2769
      %v2775 = vrot.slane %v2774, 4
      %v2777 = vshll.u32 %v2596, 16
      %v2779 = vrot.slane %v2777, 5
      %v2780 = vsel %vm1215, %v2775, %v2779
      %v2782 = vshrl.u32 %v2597, 16
      %v2784 = vrot.slane %v2782, 4
      %v2785 = vshll.u32 %v2597, 16
      %v2787 = vrot.slane %v2785, 5
      %v2788 = vor.u32 %v2784, %v2787
      %v2789 = vrot.slane %v2788, 4
      %v2791 = vshll.u32 %v2598, 16
      %v2793 = vrot.slane %v2791, 5
      %v2794 = vsel %vm1215, %v2789, %v2793
      %v2795 = vshrl.u32 %v2598, 16
      %v2797 = vrot.slane %v2795, 4
      %v2798 = vor.u32 %v2797, %v2793
      %v2799 = vrot.slane %v2798, 4
      %v2801 = vshll.u32 %v2599, 16
      %v2803 = vrot.slane %v2801, 5
      %v2804 = vsel %vm1215, %v2799, %v2803
      %v2806 = vshrl.u32 %v2600, 16
      %v2808 = vrot.slane %v2806, 4
      %v2809 = vshll.u32 %v2600, 16
      %v2811 = vrot.slane %v2809, 5
      %v2812 = vor.u32 %v2808, %v2811
      %v2813 = vrot.slane %v2812, 4
      %v2815 = vshll.u32 %v2601, 16
      %v2817 = vrot.slane %v2815, 5
      %v2818 = vsel %vm1215, %v2813, %v2817
      %v2819 = vshrl.u32 %v2601, 16
      %v2821 = vrot.slane %v2819, 4
      %v2822 = vor.u32 %v2821, %v2817
      %v2823 = vrot.slane %v2822, 4
      %v2825 = vshll.u32 %v2602, 16
      %v2827 = vrot.slane %v2825, 5
      %v2828 = vsel %vm1215, %v2823, %v2827
      %v2830 = vshrl.u32 %v2603, 16
      %v2832 = vrot.slane %v2830, 4
      %v2833 = vshll.u32 %v2603, 16
      %v2835 = vrot.slane %v2833, 5
      %v2836 = vor.u32 %v2832, %v2835
      %v2837 = vrot.slane %v2836, 4
      %v2839 = vshll.u32 %v2604, 16
      %v2841 = vrot.slane %v2839, 5
      %v2842 = vsel %vm1215, %v2837, %v2841
      %v2843 = vshrl.u32 %v2604, 16
      %v2845 = vrot.slane %v2843, 4
      %v2846 = vor.u32 %v2845, %v2841
      %v2847 = vrot.slane %v2846, 4
      %v2849 = vshll.u32 %v2605, 16
      %v2851 = vrot.slane %v2849, 5
      %v2852 = vsel %vm1215, %v2847, %v2851
      %v2854 = vshrl.u32 %v2606, 16
      %v2856 = vrot.slane %v2854, 4
      %v2857 = vshll.u32 %v2606, 16
      %v2859 = vrot.slane %v2857, 5
      %v2860 = vor.u32 %v2856, %v2859
      %v2861 = vrot.slane %v2860, 4
      %v2863 = vshll.u32 %v2607, 16
      %v2865 = vrot.slane %v2863, 5
      %v2866 = vsel %vm1215, %v2861, %v2865
      %v2867 = vshrl.u32 %v2607, 16
      %v2869 = vrot.slane %v2867, 4
      %v2870 = vor.u32 %v2869, %v2865
      %v2871 = vrot.slane %v2870, 4
      %v2873 = vshll.u32 %v2608, 16
      %v2875 = vrot.slane %v2873, 5
      %v2876 = vsel %vm1215, %v2871, %v2875
      %v2878 = vshrl.u32 %v2609, 16
      %v2880 = vrot.slane %v2878, 4
      %v2881 = vshll.u32 %v2609, 16
      %v2883 = vrot.slane %v2881, 5
      %v2884 = vor.u32 %v2880, %v2883
      %v2885 = vrot.slane %v2884, 4
      %v2887 = vshll.u32 %v2610, 16
      %v2889 = vrot.slane %v2887, 5
      %v2890 = vsel %vm1215, %v2885, %v2889
      %v2891 = vshrl.u32 %v2610, 16
      %v2893 = vrot.slane %v2891, 4
      %v2894 = vor.u32 %v2893, %v2889
      %v2895 = vrot.slane %v2894, 4
      %v2897 = vshll.u32 %v2611, 16
      %v2899 = vrot.slane %v2897, 5
      %v2900 = vsel %vm1215, %v2895, %v2899
      %v2901 = vunpack.c.l.b16 %v2626
      %v2902 = vunpack.c.l.b16 %v2636
      %v2903 = vunpack.c.l.b16 %v2650
      %v2904 = vunpack.c.l.b16 %v2660
      %v2905 = vunpack.c.l.b16 %v2674
      %v2906 = vunpack.c.l.b16 %v2684
      %v2907 = vunpack.c.l.b16 %v2698
      %v2908 = vunpack.c.l.b16 %v2708
      %v2909 = vunpack.c.l.b16 %v2722
      %v2910 = vunpack.c.l.b16 %v2732
      %v2911 = vunpack.c.l.b16 %v2746
      %v2912 = vunpack.c.l.b16 %v2756
      %v2913 = vunpack.c.l.b16 %v2770
      %v2914 = vunpack.c.l.b16 %v2780
      %v2915 = vunpack.c.l.b16 %v2794
      %v2916 = vunpack.c.l.b16 %v2804
      %v2917 = vunpack.c.l.b16 %v2818
      %v2918 = vunpack.c.l.b16 %v2828
      %v2919 = vunpack.c.l.b16 %v2842
      %v2920 = vunpack.c.l.b16 %v2852
      %v2921 = vunpack.c.l.b16 %v2866
      %v2922 = vunpack.c.l.b16 %v2876
      %v2923 = vunpack.c.l.b16 %v2890
      %v2924 = vunpack.c.l.b16 %v2900
      %v2925 = vpack.c.b16 %v2902, %v2901
      %v2926 = vpack.c.b16 %v2904, %v2903
      %v2927 = vpack.c.b16 %v2906, %v2905
      %v2928 = vpack.c.b16 %v2908, %v2907
      %v2929 = vpack.c.b16 %v2910, %v2909
      %v2930 = vpack.c.b16 %v2912, %v2911
      %v2931 = vpack.c.b16 %v2914, %v2913
      %v2932 = vpack.c.b16 %v2916, %v2915
      %v2933 = vpack.c.b16 %v2918, %v2917
      %v2934 = vpack.c.b16 %v2920, %v2919
      %v2935 = vpack.c.b16 %v2922, %v2921
      %v2936 = vpack.c.b16 %v2924, %v2923
      %v2938 = vsel %vm1544, %v2925, 0
      %v2941 = vsel %vm1544, %v2926, 0
      %v2944 = vsel %vm1544, %v2927, 0
      %v2947 = vsel %vm1544, %v2928, 0
      %v2950 = vsel %vm1544, %v2929, 0
      %v2953 = vsel %vm1544, %v2930, 0
      %v2956 = vsel %vm1544, %v2931, 0
      %v2959 = vsel %vm1544, %v2932, 0
      %v2962 = vsel %vm1544, %v2933, 0
      %v2965 = vsel %vm1544, %v2934, 0
      %v2968 = vsel %vm1544, %v2935, 0
      %v2971 = vsel %vm1544, %v2936, 0
      %v2974 = vsel %vm1581, %v2612, 0
      %2976 = vmatprep.subr.bf16.mxu0 0
      %2977 = vmatpush1.bf16.msra.mxu0 %v2974
      %2978 = vmatprep.subr.bf16.mxu0 0
      %2979 = vmatpush1.bf16.msra.mxu0 0
      %2980 = vmatprep.subr.bf16.mxu0 0
      %2981 = vmatpush1.bf16.msra.mxu0 0
      %2982 = vmatprep.subr.bf16.mxu0 0
      %2983 = vmatpush1.bf16.msra.mxu0 0
      %2984 = vmatprep.subr.bf16.mxu0 0
      %2985 = vmatpush1.bf16.msra.mxu0 0
      %2986 = vmatprep.subr.bf16.mxu0 0
      %2987 = vmatpush1.bf16.msra.mxu0 0
      %2988 = vmatprep.subr.bf16.mxu0 0
      %2989 = vmatpush1.bf16.msra.mxu0 0
      %2990 = vmatprep.subr.bf16.mxu0 0
      %2991 = vmatpush1.bf16.msra.mxu0 0
      %2992 = vmatprep.subr.bf16.mxu0 0
      %2993 = vmatpush1.bf16.msra.mxu0 0
      %2994 = vmatprep.subr.bf16.mxu0 0
      %2995 = vmatpush1.bf16.msra.mxu0 0
      %2996 = vmatprep.subr.bf16.mxu0 0
      %2997 = vmatpush1.bf16.msra.mxu0 0
      %2998 = vmatprep.subr.bf16.mxu0 0
      %2999 = vmatpush1.bf16.msra.mxu0 0
      %3000 = vmatprep.subr.bf16.mxu0 0
      %3001 = vmatpush1.bf16.msra.mxu0 0
      %3002 = vmatprep.subr.bf16.mxu0 0
      %3003 = vmatpush1.bf16.msra.mxu0 0
      %3004 = vmatprep.subr.bf16.mxu0 0
      %3005 = vmatpush1.bf16.msra.mxu0 0
      %3006 = vmatprep.subr.bf16.mxu0 0
      %3007 = vmatpush1.bf16.msra.mxu0 0
      %3008 = vmatprep.mubr.bf16.mxu0 0
      %3009 = vmatmul.mubr.bf16.gmra.mrb[0].mxu0 %v2938
      %v3010 = vpop.f32.mrb[0].mxu0
      %v3011 = vadd.f32 0.0, %v3010
      %v3012 = vpop.f32.mrb[0].mxu0
      %v3013 = vpop.f32.mrb[0].mxu0
      %v3014 = vadd.f32 0.0, %v3013
      %v3015 = vpop.f32.mrb[0].mxu0
      %3016 = vmatprep.mubr.bf16.mxu0 0
      %3017 = vmatmul.mubr.bf16.gmra.mrb[0].mxu0 %v2941
      %v3018 = vpop.f32.mrb[0].mxu0
      %v3019 = vadd.f32 0.0, %v3018
      %v3020 = vpop.f32.mrb[0].mxu0
      %v3021 = vpop.f32.mrb[0].mxu0
      %v3022 = vadd.f32 0.0, %v3021
      %v3023 = vpop.f32.mrb[0].mxu0
      %3024 = vmatprep.mubr.bf16.mxu0 0
      %3025 = vmatmul.mubr.bf16.gmra.mrb[0].mxu0 %v2944
      %v3026 = vpop.f32.mrb[0].mxu0
      %v3027 = vadd.f32 0.0, %v3026
      %v3028 = vpop.f32.mrb[0].mxu0
      %v3029 = vpop.f32.mrb[0].mxu0
      %v3030 = vadd.f32 0.0, %v3029
      %v3031 = vpop.f32.mrb[0].mxu0
      %3032 = vmatprep.mubr.bf16.mxu0 0
      %3033 = vmatmul.mubr.bf16.gmra.mrb[0].mxu0 %v2947
      %v3034 = vpop.f32.mrb[0].mxu0
      %v3035 = vadd.f32 0.0, %v3034
      %v3036 = vpop.f32.mrb[0].mxu0
      %v3037 = vpop.f32.mrb[0].mxu0
      %v3038 = vadd.f32 0.0, %v3037
      %v3039 = vpop.f32.mrb[0].mxu0
      %3040 = vmatprep.mubr.bf16.mxu0 0
      %3041 = vmatmul.mubr.bf16.gmra.mrb[0].mxu0 %v2950
      %v3042 = vpop.f32.mrb[0].mxu0
      %v3043 = vadd.f32 0.0, %v3042
      %v3044 = vpop.f32.mrb[0].mxu0
      %v3045 = vpop.f32.mrb[0].mxu0
      %v3046 = vadd.f32 0.0, %v3045
      %v3047 = vpop.f32.mrb[0].mxu0
      %3048 = vmatprep.mubr.bf16.mxu0 0
      %3049 = vmatmul.mubr.bf16.gmra.mrb[0].mxu0 %v2953
      %v3050 = vpop.f32.mrb[0].mxu0
      %v3051 = vadd.f32 0.0, %v3050
      %v3052 = vpop.f32.mrb[0].mxu0
      %v3053 = vpop.f32.mrb[0].mxu0
      %v3054 = vadd.f32 0.0, %v3053
      %v3055 = vpop.f32.mrb[0].mxu0
      %3056 = vmatprep.mubr.bf16.mxu0 0
      %3057 = vmatmul.mubr.bf16.gmra.mrb[0].mxu0 %v2956
      %v3058 = vpop.f32.mrb[0].mxu0
      %v3059 = vadd.f32 0.0, %v3058
      %v3060 = vpop.f32.mrb[0].mxu0
      %v3061 = vpop.f32.mrb[0].mxu0
      %v3062 = vadd.f32 0.0, %v3061
      %v3063 = vpop.f32.mrb[0].mxu0
      %3064 = vmatprep.mubr.bf16.mxu0 0
      %3065 = vmatmul.mubr.bf16.gmra.mrb[0].mxu0 %v2959
      %v3066 = vpop.f32.mrb[0].mxu0
      %v3067 = vadd.f32 0.0, %v3066
      %v3068 = vpop.f32.mrb[0].mxu0
      %v3069 = vpop.f32.mrb[0].mxu0
      %v3070 = vadd.f32 0.0, %v3069
      %v3071 = vpop.f32.mrb[0].mxu0
      %3072 = vmatprep.mubr.bf16.mxu0 0
      %3073 = vmatmul.mubr.bf16.gmra.mrb[0].mxu0 %v2962
      %v3074 = vpop.f32.mrb[0].mxu0
      %v3075 = vadd.f32 0.0, %v3074
      %v3076 = vpop.f32.mrb[0].mxu0
      %v3077 = vpop.f32.mrb[0].mxu0
      %v3078 = vadd.f32 0.0, %v3077
      %v3079 = vpop.f32.mrb[0].mxu0
      %3080 = vmatprep.mubr.bf16.mxu0 0
      %3081 = vmatmul.mubr.bf16.gmra.mrb[0].mxu0 %v2965
      %v3082 = vpop.f32.mrb[0].mxu0
      %v3083 = vadd.f32 0.0, %v3082
      %v3084 = vpop.f32.mrb[0].mxu0
      %v3085 = vpop.f32.mrb[0].mxu0
      %v3086 = vadd.f32 0.0, %v3085
      %v3087 = vpop.f32.mrb[0].mxu0
      %3088 = vmatprep.mubr.bf16.mxu0 0
      %3089 = vmatmul.mubr.bf16.gmra.mrb[0].mxu0 %v2968
      %v3090 = vpop.f32.mrb[0].mxu0
      %v3091 = vadd.f32 0.0, %v3090
      %v3092 = vpop.f32.mrb[0].mxu0
      %v3093 = vpop.f32.mrb[0].mxu0
      %v3094 = vadd.f32 0.0, %v3093
      %v3095 = vpop.f32.mrb[0].mxu0
      %3096 = vmatprep.mubr.bf16.mxu0 0
      %3097 = vmatmul.mubr.bf16.gmra.mrb[0].mxu0 %v2971
      %v3098 = vpop.f32.mrb[0].mxu0
      %v3099 = vadd.f32 0.0, %v3098
      %v3100 = vpop.f32.mrb[0].mxu0
      %v3101 = vpop.f32.mrb[0].mxu0
      %v3102 = vadd.f32 0.0, %v3101
      %v3103 = vpop.f32.mrb[0].mxu0
      %3104 = vdwg.mxu0
      %v3105 = vadd.f32 %v2552, %v3011
      %v3106 = vadd.f32 %v2553, %v3014
      %v3107 = vadd.f32 %v2554, %v3019
      %v3108 = vadd.f32 %v2555, %v3022
      %v3109 = vadd.f32 %v2556, %v3027
      %v3110 = vadd.f32 %v2557, %v3030
      %v3111 = vadd.f32 %v2558, %v3035
      %v3112 = vadd.f32 %v2559, %v3038
      %v3113 = vadd.f32 %v2560, %v3043
      %v3114 = vadd.f32 %v2561, %v3046
      %v3115 = vadd.f32 %v2562, %v3051
      %v3116 = vadd.f32 %v2563, %v3054
      %v3117 = vadd.f32 %v2564, %v3059
      %v3118 = vadd.f32 %v2565, %v3062
      %v3119 = vadd.f32 %v2566, %v3067
      %v3120 = vadd.f32 %v2567, %v3070
      %v3121 = vadd.f32 %v2568, %v3075
      %v3122 = vadd.f32 %v2569, %v3078
      %v3123 = vadd.f32 %v2570, %v3083
      %v3124 = vadd.f32 %v2571, %v3086
      %v3125 = vadd.f32 %v2572, %v3091
      %v3126 = vadd.f32 %v2573, %v3094
      %v3127 = vadd.f32 %v2574, %v3099
      %v3128 = vadd.f32 %v2575, %v3102
      %v3129 = vld [vmem:[%s2294] sm:$0xe]
      %v3130 = vld [vmem:[%s2294 + $0xc] sm:$0xe]
      %v3131 = vld [vmem:[%s2294 + $0x18] sm:$0xe]
      %v3132 = vld [vmem:[%s2294 + $0x24] sm:$0xe]
      %v3133 = vld [vmem:[%s2294 + $0x30] sm:$0xe]
      %v3134 = vld [vmem:[%s2294 + $0x3c] sm:$0xe]
      %v3135 = vld [vmem:[%s2294 + $0x48] sm:$0xe]
      %v3136 = vld [vmem:[%s2294 + $0x54] sm:$0xe]
      %v3137 = vld [vmem:[%s2294 + $0x60] sm:$0xe]
      %v3138 = vld [vmem:[%s2294 + $0x6c] sm:$0xe]
      %v3139 = vld [vmem:[%s2294 + $0x78] sm:$0xe]
      %v3140 = vld [vmem:[%s2294 + $0x84] sm:$0xe]
      %v3141 = vld [vmem:[%s3 + $0x8] sm:$0xc]
      %v3178 = vrot.slane %v3129, 5
      %v3179 = vrot.slane %v3178, 4
      %v3180 = vrot.slane %v2577, 5
      %v3181 = vsel %vm1981, %v3179, %v3180
      %v3182 = vrot.slane %v3180, 4
      %v3183 = vrot.slane %v2578, 5
      %v3184 = vsel %vm1981, %v3182, %v3183
      %v3185 = vrot.slane %v3130, 5
      %v3186 = vrot.slane %v3185, 4
      %v3187 = vrot.slane %v2580, 5
      %v3188 = vsel %vm1981, %v3186, %v3187
      %v3189 = vrot.slane %v3187, 4
      %v3190 = vrot.slane %v2581, 5
      %v3191 = vsel %vm1981, %v3189, %v3190
      %v3192 = vrot.slane %v3131, 5
      %v3193 = vrot.slane %v3192, 4
      %v3194 = vrot.slane %v2583, 5
      %v3195 = vsel %vm1981, %v3193, %v3194
      %v3196 = vrot.slane %v3194, 4
      %v3197 = vrot.slane %v2584, 5
      %v3198 = vsel %vm1981, %v3196, %v3197
      %v3199 = vrot.slane %v3132, 5
      %v3200 = vrot.slane %v3199, 4
      %v3201 = vrot.slane %v2586, 5
      %v3202 = vsel %vm1981, %v3200, %v3201
      %v3203 = vrot.slane %v3201, 4
      %v3204 = vrot.slane %v2587, 5
      %v3205 = vsel %vm1981, %v3203, %v3204
      %v3206 = vrot.slane %v3133, 5
      %v3207 = vrot.slane %v3206, 4
      %v3208 = vrot.slane %v2589, 5
      %v3209 = vsel %vm1981, %v3207, %v3208
      %v3210 = vrot.slane %v3208, 4
      %v3211 = vrot.slane %v2590, 5
      %v3212 = vsel %vm1981, %v3210, %v3211
      %v3213 = vrot.slane %v3134, 5
      %v3214 = vrot.slane %v3213, 4
      %v3215 = vrot.slane %v2592, 5
      %v3216 = vsel %vm1981, %v3214, %v3215
      %v3217 = vrot.slane %v3215, 4
      %v3218 = vrot.slane %v2593, 5
      %v3219 = vsel %vm1981, %v3217, %v3218
      %v3220 = vrot.slane %v3135, 5
      %v3221 = vrot.slane %v3220, 4
      %v3222 = vrot.slane %v2595, 5
      %v3223 = vsel %vm1981, %v3221, %v3222
      %v3224 = vrot.slane %v3222, 4
      %v3225 = vrot.slane %v2596, 5
      %v3226 = vsel %vm1981, %v3224, %v3225
      %v3227 = vrot.slane %v3136, 5
      %v3228 = vrot.slane %v3227, 4
      %v3229 = vrot.slane %v2598, 5
      %v3230 = vsel %vm1981, %v3228, %v3229
      %v3231 = vrot.slane %v3229, 4
      %v3232 = vrot.slane %v2599, 5
      %v3233 = vsel %vm1981, %v3231, %v3232
      %v3234 = vrot.slane %v3137, 5
      %v3235 = vrot.slane %v3234, 4
      %v3236 = vrot.slane %v2601, 5
      %v3237 = vsel %vm1981, %v3235, %v3236
      %v3238 = vrot.slane %v3236, 4
      %v3239 = vrot.slane %v2602, 5
      %v3240 = vsel %vm1981, %v3238, %v3239
      %v3241 = vrot.slane %v3138, 5
      %v3242 = vrot.slane %v3241, 4
      %v3243 = vrot.slane %v2604, 5
      %v3244 = vsel %vm1981, %v3242, %v3243
      %v3245 = vrot.slane %v3243, 4
      %v3246 = vrot.slane %v2605, 5
      %v3247 = vsel %vm1981, %v3245, %v3246
      %v3248 = vrot.slane %v3139, 5
      %v3249 = vrot.slane %v3248, 4
      %v3250 = vrot.slane %v2607, 5
      %v3251 = vsel %vm1981, %v3249, %v3250
      %v3252 = vrot.slane %v3250, 4
      %v3253 = vrot.slane %v2608, 5
      %v3254 = vsel %vm1981, %v3252, %v3253
      %v3255 = vrot.slane %v3140, 5
      %v3256 = vrot.slane %v3255, 4
      %v3257 = vrot.slane %v2610, 5
      %v3258 = vsel %vm1981, %v3256, %v3257
      %v3259 = vrot.slane %v3257, 4
      %v3260 = vrot.slane %v2611, 5
      %v3261 = vsel %vm1981, %v3259, %v3260
      %v3262 = vunpack.c.l.b16 %v3181
      %v3263 = vunpack.c.l.b16 %v3184
      %v3264 = vunpack.c.l.b16 %v3188
      %v3265 = vunpack.c.l.b16 %v3191
      %v3266 = vunpack.c.l.b16 %v3195
      %v3267 = vunpack.c.l.b16 %v3198
      %v3268 = vunpack.c.l.b16 %v3202
      %v3269 = vunpack.c.l.b16 %v3205
      %v3270 = vunpack.c.l.b16 %v3209
      %v3271 = vunpack.c.l.b16 %v3212
      %v3272 = vunpack.c.l.b16 %v3216
      %v3273 = vunpack.c.l.b16 %v3219
      %v3274 = vunpack.c.l.b16 %v3223
      %v3275 = vunpack.c.l.b16 %v3226
      %v3276 = vunpack.c.l.b16 %v3230
      %v3277 = vunpack.c.l.b16 %v3233
      %v3278 = vunpack.c.l.b16 %v3237
      %v3279 = vunpack.c.l.b16 %v3240
      %v3280 = vunpack.c.l.b16 %v3244
      %v3281 = vunpack.c.l.b16 %v3247
      %v3282 = vunpack.c.l.b16 %v3251
      %v3283 = vunpack.c.l.b16 %v3254
      %v3284 = vunpack.c.l.b16 %v3258
      %v3285 = vunpack.c.l.b16 %v3261
      %v3286 = vpack.c.b16 %v3263, %v3262
      %v3287 = vpack.c.b16 %v3265, %v3264
      %v3288 = vpack.c.b16 %v3267, %v3266
      %v3289 = vpack.c.b16 %v3269, %v3268
      %v3290 = vpack.c.b16 %v3271, %v3270
      %v3291 = vpack.c.b16 %v3273, %v3272
      %v3292 = vpack.c.b16 %v3275, %v3274
      %v3293 = vpack.c.b16 %v3277, %v3276
      %v3294 = vpack.c.b16 %v3279, %v3278
      %v3295 = vpack.c.b16 %v3281, %v3280
      %v3296 = vpack.c.b16 %v3283, %v3282
      %v3297 = vpack.c.b16 %v3285, %v3284
      %v3299 = vunpack.c.l.b16 %v3141
      %v3300 = vpack.c.b16 %v3299, %v3299
      %v3301 = vrot.slane %v3300, 2
      %v3303 = vsel %vm1544, %v3286, 0
      %v3306 = vsel %vm1544, %v3287, 0
      %v3309 = vsel %vm1544, %v3288, 0
      %v3312 = vsel %vm1544, %v3289, 0
      %v3315 = vsel %vm1544, %v3290, 0
      %v3318 = vsel %vm1544, %v3291, 0
      %v3321 = vsel %vm1544, %v3292, 0
      %v3324 = vsel %vm1544, %v3293, 0
      %v3327 = vsel %vm1544, %v3294, 0
      %v3330 = vsel %vm1544, %v3295, 0
      %v3333 = vsel %vm1544, %v3296, 0
      %v3336 = vsel %vm1544, %v3297, 0
      %v3339 = vsel %vm1581, %v3301, 0
      %3341 = vmatprep.subr.bf16.mxu0 0
      %3342 = vmatpush1.bf16.msra.mxu0 %v3339
      %3343 = vmatprep.subr.bf16.mxu0 0
      %3344 = vmatpush1.bf16.msra.mxu0 0
      %3345 = vmatprep.subr.bf16.mxu0 0
      %3346 = vmatpush1.bf16.msra.mxu0 0
      %3347 = vmatprep.subr.bf16.mxu0 0
      %3348 = vmatpush1.bf16.msra.mxu0 0
      %3349 = vmatprep.subr.bf16.mxu0 0
      %3350 = vmatpush1.bf16.msra.mxu0 0
      %3351 = vmatprep.subr.bf16.mxu0 0
      %3352 = vmatpush1.bf16.msra.mxu0 0
      %3353 = vmatprep.subr.bf16.mxu0 0
      %3354 = vmatpush1.bf16.msra.mxu0 0
      %3355 = vmatprep.subr.bf16.mxu0 0
      %3356 = vmatpush1.bf16.msra.mxu0 0
      %3357 = vmatprep.subr.bf16.mxu0 0
      %3358 = vmatpush1.bf16.msra.mxu0 0
      %3359 = vmatprep.subr.bf16.mxu0 0
      %3360 = vmatpush1.bf16.msra.mxu0 0
      %3361 = vmatprep.subr.bf16.mxu0 0
      %3362 = vmatpush1.bf16.msra.mxu0 0
      %3363 = vmatprep.subr.bf16.mxu0 0
      %3364 = vmatpush1.bf16.msra.mxu0 0
      %3365 = vmatprep.subr.bf16.mxu0 0
      %3366 = vmatpush1.bf16.msra.mxu0 0
      %3367 = vmatprep.subr.bf16.mxu0 0
      %3368 = vmatpush1.bf16.msra.mxu0 0
      %3369 = vmatprep.subr.bf16.mxu0 0
      %3370 = vmatpush1.bf16.msra.mxu0 0
      %3371 = vmatprep.subr.bf16.mxu0 0
      %3372 = vmatpush1.bf16.msra.mxu0 0
      %3373 = vmatprep.mubr.bf16.mxu0 0
      %3374 = vmatmul.mubr.bf16.gmra.mrb[0].mxu0 %v3303
      %v3375 = vpop.f32.mrb[0].mxu0
      %v3376 = vadd.f32 0.0, %v3375
      %v3377 = vpop.f32.mrb[0].mxu0
      %v3378 = vpop.f32.mrb[0].mxu0
      %v3379 = vadd.f32 0.0, %v3378
      %v3380 = vpop.f32.mrb[0].mxu0
      %3381 = vmatprep.mubr.bf16.mxu0 0
      %3382 = vmatmul.mubr.bf16.gmra.mrb[0].mxu0 %v3306
      %v3383 = vpop.f32.mrb[0].mxu0
      %v3384 = vadd.f32 0.0, %v3383
      %v3385 = vpop.f32.mrb[0].mxu0
      %v3386 = vpop.f32.mrb[0].mxu0
      %v3387 = vadd.f32 0.0, %v3386
      %v3388 = vpop.f32.mrb[0].mxu0
      %3389 = vmatprep.mubr.bf16.mxu0 0
      %3390 = vmatmul.mubr.bf16.gmra.mrb[0].mxu0 %v3309
      %v3391 = vpop.f32.mrb[0].mxu0
      %v3392 = vadd.f32 0.0, %v3391
      %v3393 = vpop.f32.mrb[0].mxu0
      %v3394 = vpop.f32.mrb[0].mxu0
      %v3395 = vadd.f32 0.0, %v3394
      %v3396 = vpop.f32.mrb[0].mxu0
      %3397 = vmatprep.mubr.bf16.mxu0 0
      %3398 = vmatmul.mubr.bf16.gmra.mrb[0].mxu0 %v3312
      %v3399 = vpop.f32.mrb[0].mxu0
      %v3400 = vadd.f32 0.0, %v3399
      %v3401 = vpop.f32.mrb[0].mxu0
      %v3402 = vpop.f32.mrb[0].mxu0
      %v3403 = vadd.f32 0.0, %v3402
      %v3404 = vpop.f32.mrb[0].mxu0
      %3405 = vmatprep.mubr.bf16.mxu0 0
      %3406 = vmatmul.mubr.bf16.gmra.mrb[0].mxu0 %v3315
      %v3407 = vpop.f32.mrb[0].mxu0
      %v3408 = vadd.f32 0.0, %v3407
      %v3409 = vpop.f32.mrb[0].mxu0
      %v3410 = vpop.f32.mrb[0].mxu0
      %v3411 = vadd.f32 0.0, %v3410
      %v3412 = vpop.f32.mrb[0].mxu0
      %3413 = vmatprep.mubr.bf16.mxu0 0
      %3414 = vmatmul.mubr.bf16.gmra.mrb[0].mxu0 %v3318
      %v3415 = vpop.f32.mrb[0].mxu0
      %v3416 = vadd.f32 0.0, %v3415
      %v3417 = vpop.f32.mrb[0].mxu0
      %v3418 = vpop.f32.mrb[0].mxu0
      %v3419 = vadd.f32 0.0, %v3418
      %v3420 = vpop.f32.mrb[0].mxu0
      %3421 = vmatprep.mubr.bf16.mxu0 0
      %3422 = vmatmul.mubr.bf16.gmra.mrb[0].mxu0 %v3321
      %v3423 = vpop.f32.mrb[0].mxu0
      %v3424 = vadd.f32 0.0, %v3423
      %v3425 = vpop.f32.mrb[0].mxu0
      %v3426 = vpop.f32.mrb[0].mxu0
      %v3427 = vadd.f32 0.0, %v3426
      %v3428 = vpop.f32.mrb[0].mxu0
      %3429 = vmatprep.mubr.bf16.mxu0 0
      %3430 = vmatmul.mubr.bf16.gmra.mrb[0].mxu0 %v3324
      %v3431 = vpop.f32.mrb[0].mxu0
      %v3432 = vadd.f32 0.0, %v3431
      %v3433 = vpop.f32.mrb[0].mxu0
      %v3434 = vpop.f32.mrb[0].mxu0
      %v3435 = vadd.f32 0.0, %v3434
      %v3436 = vpop.f32.mrb[0].mxu0
      %3437 = vmatprep.mubr.bf16.mxu0 0
      %3438 = vmatmul.mubr.bf16.gmra.mrb[0].mxu0 %v3327
      %v3439 = vpop.f32.mrb[0].mxu0
      %v3440 = vadd.f32 0.0, %v3439
      %v3441 = vpop.f32.mrb[0].mxu0
      %v3442 = vpop.f32.mrb[0].mxu0
      %v3443 = vadd.f32 0.0, %v3442
      %v3444 = vpop.f32.mrb[0].mxu0
      %3445 = vmatprep.mubr.bf16.mxu0 0
      %3446 = vmatmul.mubr.bf16.gmra.mrb[0].mxu0 %v3330
      %v3447 = vpop.f32.mrb[0].mxu0
      %v3448 = vadd.f32 0.0, %v3447
      %v3449 = vpop.f32.mrb[0].mxu0
      %v3450 = vpop.f32.mrb[0].mxu0
      %v3451 = vadd.f32 0.0, %v3450
      %v3452 = vpop.f32.mrb[0].mxu0
      %3453 = vmatprep.mubr.bf16.mxu0 0
      %3454 = vmatmul.mubr.bf16.gmra.mrb[0].mxu0 %v3333
      %v3455 = vpop.f32.mrb[0].mxu0
      %v3456 = vadd.f32 0.0, %v3455
      %v3457 = vpop.f32.mrb[0].mxu0
      %v3458 = vpop.f32.mrb[0].mxu0
      %v3459 = vadd.f32 0.0, %v3458
      %v3460 = vpop.f32.mrb[0].mxu0
      %3461 = vmatprep.mubr.bf16.mxu0 0
      %3462 = vmatmul.mubr.bf16.gmra.mrb[0].mxu0 %v3336
      %v3463 = vpop.f32.mrb[0].mxu0
      %v3464 = vadd.f32 0.0, %v3463
      %v3465 = vpop.f32.mrb[0].mxu0
      %v3466 = vpop.f32.mrb[0].mxu0
      %v3467 = vadd.f32 0.0, %v3466
      %v3468 = vpop.f32.mrb[0].mxu0
      %3469 = vdwg.mxu0
      %v3470 = vadd.f32 %v3105, %v3376
      %v3471 = vadd.f32 %v3106, %v3379
      %v3472 = vadd.f32 %v3107, %v3384
      %v3473 = vadd.f32 %v3108, %v3387
      %v3474 = vadd.f32 %v3109, %v3392
      %v3475 = vadd.f32 %v3110, %v3395
      %v3476 = vadd.f32 %v3111, %v3400
      %v3477 = vadd.f32 %v3112, %v3403
      %v3478 = vadd.f32 %v3113, %v3408
      %v3479 = vadd.f32 %v3114, %v3411
      %v3480 = vadd.f32 %v3115, %v3416
      %v3481 = vadd.f32 %v3116, %v3419
      %v3482 = vadd.f32 %v3117, %v3424
      %v3483 = vadd.f32 %v3118, %v3427
      %v3484 = vadd.f32 %v3119, %v3432
      %v3485 = vadd.f32 %v3120, %v3435
      %v3486 = vadd.f32 %v3121, %v3440
      %v3487 = vadd.f32 %v3122, %v3443
      %v3488 = vadd.f32 %v3123, %v3448
      %v3489 = vadd.f32 %v3124, %v3451
      %v3490 = vadd.f32 %v3125, %v3456
      %v3491 = vadd.f32 %v3126, %v3459
      %v3492 = vadd.f32 %v3127, %v3464
      %v3493 = vadd.f32 %v3128, %v3467
      %s3494 = scalar_lea.vmem [#allocation2], 24
      %v3495 = vld [vmem:[%s3494] sm:$0xf]
      %v3496 = vld [vmem:[%s3494 + $0x4] sm:$0xf]
      %v3497 = vld [vmem:[%s3494 + $0xc] sm:$0xf]
      %v3498 = vld [vmem:[%s3494 + $0x10] sm:$0xf]
      %v3499 = vld [vmem:[%s3494 + $0x18] sm:$0xf]
      %v3500 = vld [vmem:[%s3494 + $0x1c] sm:$0xf]
      %v3501 = vld [vmem:[%s3494 + $0x24] sm:$0xf]
      %v3502 = vld [vmem:[%s3494 + $0x28] sm:$0xf]
      %v3503 = vld [vmem:[%s3494 + $0x30] sm:$0xf]
      %v3504 = vld [vmem:[%s3494 + $0x34] sm:$0xf]
      %v3505 = vld [vmem:[%s3494 + $0x3c] sm:$0xf]
      %v3506 = vld [vmem:[%s3494 + $0x40] sm:$0xf]
      %v3507 = vld [vmem:[%s3494 + $0x48] sm:$0xf]
      %v3508 = vld [vmem:[%s3494 + $0x4c] sm:$0xf]
      %v3509 = vld [vmem:[%s3494 + $0x54] sm:$0xf]
      %v3510 = vld [vmem:[%s3494 + $0x58] sm:$0xf]
      %v3511 = vld [vmem:[%s3494 + $0x60] sm:$0xf]
      %v3512 = vld [vmem:[%s3494 + $0x64] sm:$0xf]
      %v3513 = vld [vmem:[%s3494 + $0x6c] sm:$0xf]
      %v3514 = vld [vmem:[%s3494 + $0x70] sm:$0xf]
      %v3515 = vld [vmem:[%s3494 + $0x78] sm:$0xf]
      %v3516 = vld [vmem:[%s3494 + $0x7c] sm:$0xf]
      %v3517 = vld [vmem:[%s3494 + $0x84] sm:$0xf]
      %v3518 = vld [vmem:[%s3494 + $0x88] sm:$0xf]
      %v3519 = vld [vmem:[%s3 + $0xc] sm:$0x3]
      %v3544 = vunpack.c.l.b16 %v3495
      %v3545 = vunpack.c.l.b16 %v3496
      %v3546 = vunpack.c.l.b16 %v3497
      %v3547 = vunpack.c.l.b16 %v3498
      %v3548 = vunpack.c.l.b16 %v3499
      %v3549 = vunpack.c.l.b16 %v3500
      %v3550 = vunpack.c.l.b16 %v3501
      %v3551 = vunpack.c.l.b16 %v3502
      %v3552 = vunpack.c.l.b16 %v3503
      %v3553 = vunpack.c.l.b16 %v3504
      %v3554 = vunpack.c.l.b16 %v3505
      %v3555 = vunpack.c.l.b16 %v3506
      %v3556 = vunpack.c.l.b16 %v3507
      %v3557 = vunpack.c.l.b16 %v3508
      %v3558 = vunpack.c.l.b16 %v3509
      %v3559 = vunpack.c.l.b16 %v3510
      %v3560 = vunpack.c.l.b16 %v3511
      %v3561 = vunpack.c.l.b16 %v3512
      %v3562 = vunpack.c.l.b16 %v3513
      %v3563 = vunpack.c.l.b16 %v3514
      %v3564 = vunpack.c.l.b16 %v3515
      %v3565 = vunpack.c.l.b16 %v3516
      %v3566 = vunpack.c.l.b16 %v3517
      %v3567 = vunpack.c.l.b16 %v3518
      %v3568 = vpack.c.b16 %v3545, %v3544
      %v3569 = vpack.c.b16 %v3547, %v3546
      %v3570 = vpack.c.b16 %v3549, %v3548
      %v3571 = vpack.c.b16 %v3551, %v3550
      %v3572 = vpack.c.b16 %v3553, %v3552
      %v3573 = vpack.c.b16 %v3555, %v3554
      %v3574 = vpack.c.b16 %v3557, %v3556
      %v3575 = vpack.c.b16 %v3559, %v3558
      %v3576 = vpack.c.b16 %v3561, %v3560
      %v3577 = vpack.c.b16 %v3563, %v3562
      %v3578 = vpack.c.b16 %v3565, %v3564
      %v3579 = vpack.c.b16 %v3567, %v3566
      %v3581 = vsel %vm1544, %v3568, 0
      %v3584 = vsel %vm1544, %v3569, 0
      %v3587 = vsel %vm1544, %v3570, 0
      %v3590 = vsel %vm1544, %v3571, 0
      %v3593 = vsel %vm1544, %v3572, 0
      %v3596 = vsel %vm1544, %v3573, 0
      %v3599 = vsel %vm1544, %v3574, 0
      %v3602 = vsel %vm1544, %v3575, 0
      %v3605 = vsel %vm1544, %v3576, 0
      %v3608 = vsel %vm1544, %v3577, 0
      %v3611 = vsel %vm1544, %v3578, 0
      %v3614 = vsel %vm1544, %v3579, 0
      %v3617 = vsel %vm1581, %v3519, 0
      %3619 = vmatprep.subr.bf16.mxu0 0
      %3620 = vmatpush1.bf16.msra.mxu0 %v3617
      %3621 = vmatprep.subr.bf16.mxu0 0
      %3622 = vmatpush1.bf16.msra.mxu0 0
      %3623 = vmatprep.subr.bf16.mxu0 0
      %3624 = vmatpush1.bf16.msra.mxu0 0
      %3625 = vmatprep.subr.bf16.mxu0 0
      %3626 = vmatpush1.bf16.msra.mxu0 0
      %3627 = vmatprep.subr.bf16.mxu0 0
      %3628 = vmatpush1.bf16.msra.mxu0 0
      %3629 = vmatprep.subr.bf16.mxu0 0
      %3630 = vmatpush1.bf16.msra.mxu0 0
      %3631 = vmatprep.subr.bf16.mxu0 0
      %3632 = vmatpush1.bf16.msra.mxu0 0
      %3633 = vmatprep.subr.bf16.mxu0 0
      %3634 = vmatpush1.bf16.msra.mxu0 0
      %3635 = vmatprep.subr.bf16.mxu0 0
      %3636 = vmatpush1.bf16.msra.mxu0 0
      %3637 = vmatprep.subr.bf16.mxu0 0
      %3638 = vmatpush1.bf16.msra.mxu0 0
      %3639 = vmatprep.subr.bf16.mxu0 0
      %3640 = vmatpush1.bf16.msra.mxu0 0
      %3641 = vmatprep.subr.bf16.mxu0 0
      %3642 = vmatpush1.bf16.msra.mxu0 0
      %3643 = vmatprep.subr.bf16.mxu0 0
      %3644 = vmatpush1.bf16.msra.mxu0 0
      %3645 = vmatprep.subr.bf16.mxu0 0
      %3646 = vmatpush1.bf16.msra.mxu0 0
      %3647 = vmatprep.subr.bf16.mxu0 0
      %3648 = vmatpush1.bf16.msra.mxu0 0
      %3649 = vmatprep.subr.bf16.mxu0 0
      %3650 = vmatpush1.bf16.msra.mxu0 0
      %3651 = vmatprep.mubr.bf16.mxu0 0
      %3652 = vmatmul.mubr.bf16.gmra.mrb[0].mxu0 %v3581
      %v3653 = vpop.f32.mrb[0].mxu0
      %v3654 = vadd.f32 0.0, %v3653
      %v3655 = vpop.f32.mrb[0].mxu0
      %v3656 = vpop.f32.mrb[0].mxu0
      %v3657 = vadd.f32 0.0, %v3656
      %v3658 = vpop.f32.mrb[0].mxu0
      %3659 = vmatprep.mubr.bf16.mxu0 0
      %3660 = vmatmul.mubr.bf16.gmra.mrb[0].mxu0 %v3584
      %v3661 = vpop.f32.mrb[0].mxu0
      %v3662 = vadd.f32 0.0, %v3661
      %v3663 = vpop.f32.mrb[0].mxu0
      %v3664 = vpop.f32.mrb[0].mxu0
      %v3665 = vadd.f32 0.0, %v3664
      %v3666 = vpop.f32.mrb[0].mxu0
      %3667 = vmatprep.mubr.bf16.mxu0 0
      %3668 = vmatmul.mubr.bf16.gmra.mrb[0].mxu0 %v3587
      %v3669 = vpop.f32.mrb[0].mxu0
      %v3670 = vadd.f32 0.0, %v3669
      %v3671 = vpop.f32.mrb[0].mxu0
      %v3672 = vpop.f32.mrb[0].mxu0
      %v3673 = vadd.f32 0.0, %v3672
      %v3674 = vpop.f32.mrb[0].mxu0
      %3675 = vmatprep.mubr.bf16.mxu0 0
      %3676 = vmatmul.mubr.bf16.gmra.mrb[0].mxu0 %v3590
      %v3677 = vpop.f32.mrb[0].mxu0
      %v3678 = vadd.f32 0.0, %v3677
      %v3679 = vpop.f32.mrb[0].mxu0
      %v3680 = vpop.f32.mrb[0].mxu0
      %v3681 = vadd.f32 0.0, %v3680
      %v3682 = vpop.f32.mrb[0].mxu0
      %3683 = vmatprep.mubr.bf16.mxu0 0
      %3684 = vmatmul.mubr.bf16.gmra.mrb[0].mxu0 %v3593
      %v3685 = vpop.f32.mrb[0].mxu0
      %v3686 = vadd.f32 0.0, %v3685
      %v3687 = vpop.f32.mrb[0].mxu0
      %v3688 = vpop.f32.mrb[0].mxu0
      %v3689 = vadd.f32 0.0, %v3688
      %v3690 = vpop.f32.mrb[0].mxu0
      %3691 = vmatprep.mubr.bf16.mxu0 0
      %3692 = vmatmul.mubr.bf16.gmra.mrb[0].mxu0 %v3596
      %v3693 = vpop.f32.mrb[0].mxu0
      %v3694 = vadd.f32 0.0, %v3693
      %v3695 = vpop.f32.mrb[0].mxu0
      %v3696 = vpop.f32.mrb[0].mxu0
      %v3697 = vadd.f32 0.0, %v3696
      %v3698 = vpop.f32.mrb[0].mxu0
      %3699 = vmatprep.mubr.bf16.mxu0 0
      %3700 = vmatmul.mubr.bf16.gmra.mrb[0].mxu0 %v3599
      %v3701 = vpop.f32.mrb[0].mxu0
      %v3702 = vadd.f32 0.0, %v3701
      %v3703 = vpop.f32.mrb[0].mxu0
      %v3704 = vpop.f32.mrb[0].mxu0
      %v3705 = vadd.f32 0.0, %v3704
      %v3706 = vpop.f32.mrb[0].mxu0
      %3707 = vmatprep.mubr.bf16.mxu0 0
      %3708 = vmatmul.mubr.bf16.gmra.mrb[0].mxu0 %v3602
      %v3709 = vpop.f32.mrb[0].mxu0
      %v3710 = vadd.f32 0.0, %v3709
      %v3711 = vpop.f32.mrb[0].mxu0
      %v3712 = vpop.f32.mrb[0].mxu0
      %v3713 = vadd.f32 0.0, %v3712
      %v3714 = vpop.f32.mrb[0].mxu0
      %3715 = vmatprep.mubr.bf16.mxu0 0
      %3716 = vmatmul.mubr.bf16.gmra.mrb[0].mxu0 %v3605
      %v3717 = vpop.f32.mrb[0].mxu0
      %v3718 = vadd.f32 0.0, %v3717
      %v3719 = vpop.f32.mrb[0].mxu0
      %v3720 = vpop.f32.mrb[0].mxu0
      %v3721 = vadd.f32 0.0, %v3720
      %v3722 = vpop.f32.mrb[0].mxu0
      %3723 = vmatprep.mubr.bf16.mxu0 0
      %3724 = vmatmul.mubr.bf16.gmra.mrb[0].mxu0 %v3608
      %v3725 = vpop.f32.mrb[0].mxu0
      %v3726 = vadd.f32 0.0, %v3725
      %v3727 = vpop.f32.mrb[0].mxu0
      %v3728 = vpop.f32.mrb[0].mxu0
      %v3729 = vadd.f32 0.0, %v3728
      %v3730 = vpop.f32.mrb[0].mxu0
      %3731 = vmatprep.mubr.bf16.mxu0 0
      %3732 = vmatmul.mubr.bf16.gmra.mrb[0].mxu0 %v3611
      %v3733 = vpop.f32.mrb[0].mxu0
      %v3734 = vadd.f32 0.0, %v3733
      %v3735 = vpop.f32.mrb[0].mxu0
      %v3736 = vpop.f32.mrb[0].mxu0
      %v3737 = vadd.f32 0.0, %v3736
      %v3738 = vpop.f32.mrb[0].mxu0
      %3739 = vmatprep.mubr.bf16.mxu0 0
      %3740 = vmatmul.mubr.bf16.gmra.mrb[0].mxu0 %v3614
      %v3741 = vpop.f32.mrb[0].mxu0
      %v3742 = vadd.f32 0.0, %v3741
      %v3743 = vpop.f32.mrb[0].mxu0
      %v3744 = vpop.f32.mrb[0].mxu0
      %v3745 = vadd.f32 0.0, %v3744
      %v3746 = vpop.f32.mrb[0].mxu0
      %3747 = vdwg.mxu0
      %v3748 = vadd.f32 %v3470, %v3654
      %v3749 = vadd.f32 %v3471, %v3657
      %v3750 = vadd.f32 %v3472, %v3662
      %v3751 = vadd.f32 %v3473, %v3665
      %v3752 = vadd.f32 %v3474, %v3670
      %v3753 = vadd.f32 %v3475, %v3673
      %v3754 = vadd.f32 %v3476, %v3678
      %v3755 = vadd.f32 %v3477, %v3681
      %v3756 = vadd.f32 %v3478, %v3686
      %v3757 = vadd.f32 %v3479, %v3689
      %v3758 = vadd.f32 %v3480, %v3694
      %v3759 = vadd.f32 %v3481, %v3697
      %v3760 = vadd.f32 %v3482, %v3702
      %v3761 = vadd.f32 %v3483, %v3705
      %v3762 = vadd.f32 %v3484, %v3710
      %v3763 = vadd.f32 %v3485, %v3713
      %v3764 = vadd.f32 %v3486, %v3718
      %v3765 = vadd.f32 %v3487, %v3721
      %v3766 = vadd.f32 %v3488, %v3726
      %v3767 = vadd.f32 %v3489, %v3729
      %v3768 = vadd.f32 %v3490, %v3734
      %v3769 = vadd.f32 %v3491, %v3737
      %v3770 = vadd.f32 %v3492, %v3742
      %v3771 = vadd.f32 %v3493, %v3745
      %v3772 = vld [vmem:[%s3494] sm:$0xf]
      %v3773 = vld [vmem:[%s3494 + $0x4] sm:$0xf]
      %v3774 = vld [vmem:[%s3494 + $0x8] sm:$0x1]
      %v3775 = vld [vmem:[%s3494 + $0xc] sm:$0xf]
      %v3776 = vld [vmem:[%s3494 + $0x10] sm:$0xf]
      %v3777 = vld [vmem:[%s3494 + $0x14] sm:$0x1]
      %v3778 = vld [vmem:[%s3494 + $0x18] sm:$0xf]
      %v3779 = vld [vmem:[%s3494 + $0x1c] sm:$0xf]
      %v3780 = vld [vmem:[%s3494 + $0x20] sm:$0x1]
      %v3781 = vld [vmem:[%s3494 + $0x24] sm:$0xf]
      %v3782 = vld [vmem:[%s3494 + $0x28] sm:$0xf]
      %v3783 = vld [vmem:[%s3494 + $0x2c] sm:$0x1]
      %v3784 = vld [vmem:[%s3494 + $0x30] sm:$0xf]
      %v3785 = vld [vmem:[%s3494 + $0x34] sm:$0xf]
      %v3786 = vld [vmem:[%s3494 + $0x38] sm:$0x1]
      %v3787 = vld [vmem:[%s3494 + $0x3c] sm:$0xf]
      %v3788 = vld [vmem:[%s3494 + $0x40] sm:$0xf]
      %v3789 = vld [vmem:[%s3494 + $0x44] sm:$0x1]
      %v3790 = vld [vmem:[%s3494 + $0x48] sm:$0xf]
      %v3791 = vld [vmem:[%s3494 + $0x4c] sm:$0xf]
      %v3792 = vld [vmem:[%s3494 + $0x50] sm:$0x1]
      %v3793 = vld [vmem:[%s3494 + $0x54] sm:$0xf]
      %v3794 = vld [vmem:[%s3494 + $0x58] sm:$0xf]
      %v3795 = vld [vmem:[%s3494 + $0x5c] sm:$0x1]
      %v3796 = vld [vmem:[%s3494 + $0x60] sm:$0xf]
      %v3797 = vld [vmem:[%s3494 + $0x64] sm:$0xf]
      %v3798 = vld [vmem:[%s3494 + $0x68] sm:$0x1]
      %v3799 = vld [vmem:[%s3494 + $0x6c] sm:$0xf]
      %v3800 = vld [vmem:[%s3494 + $0x70] sm:$0xf]
      %v3801 = vld [vmem:[%s3494 + $0x74] sm:$0x1]
      %v3802 = vld [vmem:[%s3494 + $0x78] sm:$0xf]
      %v3803 = vld [vmem:[%s3494 + $0x7c] sm:$0xf]
      %v3804 = vld [vmem:[%s3494 + $0x80] sm:$0x1]
      %v3805 = vld [vmem:[%s3494 + $0x84] sm:$0xf]
      %v3806 = vld [vmem:[%s3494 + $0x88] sm:$0xf]
      %v3807 = vld [vmem:[%s3494 + $0x8c] sm:$0x1]
      %v3808 = vld [vmem:[%s3 + $0xc] sm:$0xc]
      %v3810 = vshrl.u32 %v3772, 16
      %v3812 = vrot.slane %v3810, 4
      %v3813 = vshll.u32 %v3772, 16
      %v3815 = vrot.slane %v3813, 5
      %v3816 = vor.u32 %v3812, %v3815
      %v3817 = vrot.slane %v3816, 4
      %v3819 = vshll.u32 %v3773, 16
      %v3821 = vrot.slane %v3819, 5
      %v3822 = vsel %vm1215, %v3817, %v3821
      %v3823 = vshrl.u32 %v3773, 16
      %v3825 = vrot.slane %v3823, 4
      %v3826 = vor.u32 %v3825, %v3821
      %v3827 = vrot.slane %v3826, 4
      %v3829 = vshll.u32 %v3774, 16
      %v3831 = vrot.slane %v3829, 5
      %v3832 = vsel %vm1215, %v3827, %v3831
      %v3834 = vshrl.u32 %v3775, 16
      %v3836 = vrot.slane %v3834, 4
      %v3837 = vshll.u32 %v3775, 16
      %v3839 = vrot.slane %v3837, 5
      %v3840 = vor.u32 %v3836, %v3839
      %v3841 = vrot.slane %v3840, 4
      %v3843 = vshll.u32 %v3776, 16
      %v3845 = vrot.slane %v3843, 5
      %v3846 = vsel %vm1215, %v3841, %v3845
      %v3847 = vshrl.u32 %v3776, 16
      %v3849 = vrot.slane %v3847, 4
      %v3850 = vor.u32 %v3849, %v3845
      %v3851 = vrot.slane %v3850, 4
      %v3853 = vshll.u32 %v3777, 16
      %v3855 = vrot.slane %v3853, 5
      %v3856 = vsel %vm1215, %v3851, %v3855
      %v3858 = vshrl.u32 %v3778, 16
      %v3860 = vrot.slane %v3858, 4
      %v3861 = vshll.u32 %v3778, 16
      %v3863 = vrot.slane %v3861, 5
      %v3864 = vor.u32 %v3860, %v3863
      %v3865 = vrot.slane %v3864, 4
      %v3867 = vshll.u32 %v3779, 16
      %v3869 = vrot.slane %v3867, 5
      %v3870 = vsel %vm1215, %v3865, %v3869
      %v3871 = vshrl.u32 %v3779, 16
      %v3873 = vrot.slane %v3871, 4
      %v3874 = vor.u32 %v3873, %v3869
      %v3875 = vrot.slane %v3874, 4
      %v3877 = vshll.u32 %v3780, 16
      %v3879 = vrot.slane %v3877, 5
      %v3880 = vsel %vm1215, %v3875, %v3879
      %v3882 = vshrl.u32 %v3781, 16
      %v3884 = vrot.slane %v3882, 4
      %v3885 = vshll.u32 %v3781, 16
      %v3887 = vrot.slane %v3885, 5
      %v3888 = vor.u32 %v3884, %v3887
      %v3889 = vrot.slane %v3888, 4
      %v3891 = vshll.u32 %v3782, 16
      %v3893 = vrot.slane %v3891, 5
      %v3894 = vsel %vm1215, %v3889, %v3893
      %v3895 = vshrl.u32 %v3782, 16
      %v3897 = vrot.slane %v3895, 4
      %v3898 = vor.u32 %v3897, %v3893
      %v3899 = vrot.slane %v3898, 4
      %v3901 = vshll.u32 %v3783, 16
      %v3903 = vrot.slane %v3901, 5
      %v3904 = vsel %vm1215, %v3899, %v3903
      %v3906 = vshrl.u32 %v3784, 16
      %v3908 = vrot.slane %v3906, 4
      %v3909 = vshll.u32 %v3784, 16
      %v3911 = vrot.slane %v3909, 5
      %v3912 = vor.u32 %v3908, %v3911
      %v3913 = vrot.slane %v3912, 4
      %v3915 = vshll.u32 %v3785, 16
      %v3917 = vrot.slane %v3915, 5
      %v3918 = vsel %vm1215, %v3913, %v3917
      %v3919 = vshrl.u32 %v3785, 16
      %v3921 = vrot.slane %v3919, 4
      %v3922 = vor.u32 %v3921, %v3917
      %v3923 = vrot.slane %v3922, 4
      %v3925 = vshll.u32 %v3786, 16
      %v3927 = vrot.slane %v3925, 5
      %v3928 = vsel %vm1215, %v3923, %v3927
      %v3930 = vshrl.u32 %v3787, 16
      %v3932 = vrot.slane %v3930, 4
      %v3933 = vshll.u32 %v3787, 16
      %v3935 = vrot.slane %v3933, 5
      %v3936 = vor.u32 %v3932, %v3935
      %v3937 = vrot.slane %v3936, 4
      %v3939 = vshll.u32 %v3788, 16
      %v3941 = vrot.slane %v3939, 5
      %v3942 = vsel %vm1215, %v3937, %v3941
      %v3943 = vshrl.u32 %v3788, 16
      %v3945 = vrot.slane %v3943, 4
      %v3946 = vor.u32 %v3945, %v3941
      %v3947 = vrot.slane %v3946, 4
      %v3949 = vshll.u32 %v3789, 16
      %v3951 = vrot.slane %v3949, 5
      %v3952 = vsel %vm1215, %v3947, %v3951
      %v3954 = vshrl.u32 %v3790, 16
      %v3956 = vrot.slane %v3954, 4
      %v3957 = vshll.u32 %v3790, 16
      %v3959 = vrot.slane %v3957, 5
      %v3960 = vor.u32 %v3956, %v3959
      %v3961 = vrot.slane %v3960, 4
      %v3963 = vshll.u32 %v3791, 16
      %v3965 = vrot.slane %v3963, 5
      %v3966 = vsel %vm1215, %v3961, %v3965
      %v3967 = vshrl.u32 %v3791, 16
      %v3969 = vrot.slane %v3967, 4
      %v3970 = vor.u32 %v3969, %v3965
      %v3971 = vrot.slane %v3970, 4
      %v3973 = vshll.u32 %v3792, 16
      %v3975 = vrot.slane %v3973, 5
      %v3976 = vsel %vm1215, %v3971, %v3975
      %v3978 = vshrl.u32 %v3793, 16
      %v3980 = vrot.slane %v3978, 4
      %v3981 = vshll.u32 %v3793, 16
      %v3983 = vrot.slane %v3981, 5
      %v3984 = vor.u32 %v3980, %v3983
      %v3985 = vrot.slane %v3984, 4
      %v3987 = vshll.u32 %v3794, 16
      %v3989 = vrot.slane %v3987, 5
      %v3990 = vsel %vm1215, %v3985, %v3989
      %v3991 = vshrl.u32 %v3794, 16
      %v3993 = vrot.slane %v3991, 4
      %v3994 = vor.u32 %v3993, %v3989
      %v3995 = vrot.slane %v3994, 4
      %v3997 = vshll.u32 %v3795, 16
      %v3999 = vrot.slane %v3997, 5
      %v4000 = vsel %vm1215, %v3995, %v3999
      %v4002 = vshrl.u32 %v3796, 16
      %v4004 = vrot.slane %v4002, 4
      %v4005 = vshll.u32 %v3796, 16
      %v4007 = vrot.slane %v4005, 5
      %v4008 = vor.u32 %v4004, %v4007
      %v4009 = vrot.slane %v4008, 4
      %v4011 = vshll.u32 %v3797, 16
      %v4013 = vrot.slane %v4011, 5
      %v4014 = vsel %vm1215, %v4009, %v4013
      %v4015 = vshrl.u32 %v3797, 16
      %v4017 = vrot.slane %v4015, 4
      %v4018 = vor.u32 %v4017, %v4013
      %v4019 = vrot.slane %v4018, 4
      %v4021 = vshll.u32 %v3798, 16
      %v4023 = vrot.slane %v4021, 5
      %v4024 = vsel %vm1215, %v4019, %v4023
      %v4026 = vshrl.u32 %v3799, 16
      %v4028 = vrot.slane %v4026, 4
      %v4029 = vshll.u32 %v3799, 16
      %v4031 = vrot.slane %v4029, 5
      %v4032 = vor.u32 %v4028, %v4031
      %v4033 = vrot.slane %v4032, 4
      %v4035 = vshll.u32 %v3800, 16
      %v4037 = vrot.slane %v4035, 5
      %v4038 = vsel %vm1215, %v4033, %v4037
      %v4039 = vshrl.u32 %v3800, 16
      %v4041 = vrot.slane %v4039, 4
      %v4042 = vor.u32 %v4041, %v4037
      %v4043 = vrot.slane %v4042, 4
      %v4045 = vshll.u32 %v3801, 16
      %v4047 = vrot.slane %v4045, 5
      %v4048 = vsel %vm1215, %v4043, %v4047
      %v4050 = vshrl.u32 %v3802, 16
      %v4052 = vrot.slane %v4050, 4
      %v4053 = vshll.u32 %v3802, 16
      %v4055 = vrot.slane %v4053, 5
      %v4056 = vor.u32 %v4052, %v4055
      %v4057 = vrot.slane %v4056, 4
      %v4059 = vshll.u32 %v3803, 16
      %v4061 = vrot.slane %v4059, 5
      %v4062 = vsel %vm1215, %v4057, %v4061
      %v4063 = vshrl.u32 %v3803, 16
      %v4065 = vrot.slane %v4063, 4
      %v4066 = vor.u32 %v4065, %v4061
      %v4067 = vrot.slane %v4066, 4
      %v4069 = vshll.u32 %v3804, 16
      %v4071 = vrot.slane %v4069, 5
      %v4072 = vsel %vm1215, %v4067, %v4071
      %v4074 = vshrl.u32 %v3805, 16
      %v4076 = vrot.slane %v4074, 4
      %v4077 = vshll.u32 %v3805, 16
      %v4079 = vrot.slane %v4077, 5
      %v4080 = vor.u32 %v4076, %v4079
      %v4081 = vrot.slane %v4080, 4
      %v4083 = vshll.u32 %v3806, 16
      %v4085 = vrot.slane %v4083, 5
      %v4086 = vsel %vm1215, %v4081, %v4085
      %v4087 = vshrl.u32 %v3806, 16
      %v4089 = vrot.slane %v4087, 4
      %v4090 = vor.u32 %v4089, %v4085
      %v4091 = vrot.slane %v4090, 4
      %v4093 = vshll.u32 %v3807, 16
      %v4095 = vrot.slane %v4093, 5
      %v4096 = vsel %vm1215, %v4091, %v4095
      %v4097 = vunpack.c.l.b16 %v3822
      %v4098 = vunpack.c.l.b16 %v3832
      %v4099 = vunpack.c.l.b16 %v3846
      %v4100 = vunpack.c.l.b16 %v3856
      %v4101 = vunpack.c.l.b16 %v3870
      %v4102 = vunpack.c.l.b16 %v3880
      %v4103 = vunpack.c.l.b16 %v3894
      %v4104 = vunpack.c.l.b16 %v3904
      %v4105 = vunpack.c.l.b16 %v3918
      %v4106 = vunpack.c.l.b16 %v3928
      %v4107 = vunpack.c.l.b16 %v3942
      %v4108 = vunpack.c.l.b16 %v3952
      %v4109 = vunpack.c.l.b16 %v3966
      %v4110 = vunpack.c.l.b16 %v3976
      %v4111 = vunpack.c.l.b16 %v3990
      %v4112 = vunpack.c.l.b16 %v4000
      %v4113 = vunpack.c.l.b16 %v4014
      %v4114 = vunpack.c.l.b16 %v4024
      %v4115 = vunpack.c.l.b16 %v4038
      %v4116 = vunpack.c.l.b16 %v4048
      %v4117 = vunpack.c.l.b16 %v4062
      %v4118 = vunpack.c.l.b16 %v4072
      %v4119 = vunpack.c.l.b16 %v4086
      %v4120 = vunpack.c.l.b16 %v4096
      %v4121 = vpack.c.b16 %v4098, %v4097
      %v4122 = vpack.c.b16 %v4100, %v4099
      %v4123 = vpack.c.b16 %v4102, %v4101
      %v4124 = vpack.c.b16 %v4104, %v4103
      %v4125 = vpack.c.b16 %v4106, %v4105
      %v4126 = vpack.c.b16 %v4108, %v4107
      %v4127 = vpack.c.b16 %v4110, %v4109
      %v4128 = vpack.c.b16 %v4112, %v4111
      %v4129 = vpack.c.b16 %v4114, %v4113
      %v4130 = vpack.c.b16 %v4116, %v4115
      %v4131 = vpack.c.b16 %v4118, %v4117
      %v4132 = vpack.c.b16 %v4120, %v4119
      %v4134 = vunpack.c.l.b16 %v3808
      %v4135 = vpack.c.b16 %v4134, %v4134
      %v4136 = vrot.slane %v4135, 2
      %v4138 = vsel %vm1544, %v4121, 0
      %v4141 = vsel %vm1544, %v4122, 0
      %v4144 = vsel %vm1544, %v4123, 0
      %v4147 = vsel %vm1544, %v4124, 0
      %v4150 = vsel %vm1544, %v4125, 0
      %v4153 = vsel %vm1544, %v4126, 0
      %v4156 = vsel %vm1544, %v4127, 0
      %v4159 = vsel %vm1544, %v4128, 0
      %v4162 = vsel %vm1544, %v4129, 0
      %v4165 = vsel %vm1544, %v4130, 0
      %v4168 = vsel %vm1544, %v4131, 0
      %v4171 = vsel %vm1544, %v4132, 0
      %v4174 = vsel %vm1581, %v4136, 0
      %4176 = vmatprep.subr.bf16.mxu0 0
      %4177 = vmatpush1.bf16.msra.mxu0 %v4174
      %4178 = vmatprep.subr.bf16.mxu0 0
      %4179 = vmatpush1.bf16.msra.mxu0 0
      %4180 = vmatprep.subr.bf16.mxu0 0
      %4181 = vmatpush1.bf16.msra.mxu0 0
      %4182 = vmatprep.subr.bf16.mxu0 0
      %4183 = vmatpush1.bf16.msra.mxu0 0
      %4184 = vmatprep.subr.bf16.mxu0 0
      %4185 = vmatpush1.bf16.msra.mxu0 0
      %4186 = vmatprep.subr.bf16.mxu0 0
      %4187 = vmatpush1.bf16.msra.mxu0 0
      %4188 = vmatprep.subr.bf16.mxu0 0
      %4189 = vmatpush1.bf16.msra.mxu0 0
      %4190 = vmatprep.subr.bf16.mxu0 0
      %4191 = vmatpush1.bf16.msra.mxu0 0
      %4192 = vmatprep.subr.bf16.mxu0 0
      %4193 = vmatpush1.bf16.msra.mxu0 0
      %4194 = vmatprep.subr.bf16.mxu0 0
      %4195 = vmatpush1.bf16.msra.mxu0 0
      %4196 = vmatprep.subr.bf16.mxu0 0
      %4197 = vmatpush1.bf16.msra.mxu0 0
      %4198 = vmatprep.subr.bf16.mxu0 0
      %4199 = vmatpush1.bf16.msra.mxu0 0
      %4200 = vmatprep.subr.bf16.mxu0 0
      %4201 = vmatpush1.bf16.msra.mxu0 0
      %4202 = vmatprep.subr.bf16.mxu0 0
      %4203 = vmatpush1.bf16.msra.mxu0 0
      %4204 = vmatprep.subr.bf16.mxu0 0
      %4205 = vmatpush1.bf16.msra.mxu0 0
      %4206 = vmatprep.subr.bf16.mxu0 0
      %4207 = vmatpush1.bf16.msra.mxu0 0
      %4208 = vmatprep.mubr.bf16.mxu0 0
      %4209 = vmatmul.mubr.bf16.gmra.mrb[0].mxu0 %v4138
      %v4210 = vpop.f32.mrb[0].mxu0
      %v4211 = vadd.f32 0.0, %v4210
      %v4212 = vpop.f32.mrb[0].mxu0
      %v4213 = vpop.f32.mrb[0].mxu0
      %v4214 = vadd.f32 0.0, %v4213
      %v4215 = vpop.f32.mrb[0].mxu0
      %4216 = vmatprep.mubr.bf16.mxu0 0
      %4217 = vmatmul.mubr.bf16.gmra.mrb[0].mxu0 %v4141
      %v4218 = vpop.f32.mrb[0].mxu0
      %v4219 = vadd.f32 0.0, %v4218
      %v4220 = vpop.f32.mrb[0].mxu0
      %v4221 = vpop.f32.mrb[0].mxu0
      %v4222 = vadd.f32 0.0, %v4221
      %v4223 = vpop.f32.mrb[0].mxu0
      %4224 = vmatprep.mubr.bf16.mxu0 0
      %4225 = vmatmul.mubr.bf16.gmra.mrb[0].mxu0 %v4144
      %v4226 = vpop.f32.mrb[0].mxu0
      %v4227 = vadd.f32 0.0, %v4226
      %v4228 = vpop.f32.mrb[0].mxu0
      %v4229 = vpop.f32.mrb[0].mxu0
      %v4230 = vadd.f32 0.0, %v4229
      %v4231 = vpop.f32.mrb[0].mxu0
      %4232 = vmatprep.mubr.bf16.mxu0 0
      %4233 = vmatmul.mubr.bf16.gmra.mrb[0].mxu0 %v4147
      %v4234 = vpop.f32.mrb[0].mxu0
      %v4235 = vadd.f32 0.0, %v4234
      %v4236 = vpop.f32.mrb[0].mxu0
      %v4237 = vpop.f32.mrb[0].mxu0
      %v4238 = vadd.f32 0.0, %v4237
      %v4239 = vpop.f32.mrb[0].mxu0
      %4240 = vmatprep.mubr.bf16.mxu0 0
      %4241 = vmatmul.mubr.bf16.gmra.mrb[0].mxu0 %v4150
      %v4242 = vpop.f32.mrb[0].mxu0
      %v4243 = vadd.f32 0.0, %v4242
      %v4244 = vpop.f32.mrb[0].mxu0
      %v4245 = vpop.f32.mrb[0].mxu0
      %v4246 = vadd.f32 0.0, %v4245
      %v4247 = vpop.f32.mrb[0].mxu0
      %4248 = vmatprep.mubr.bf16.mxu0 0
      %4249 = vmatmul.mubr.bf16.gmra.mrb[0].mxu0 %v4153
      %v4250 = vpop.f32.mrb[0].mxu0
      %v4251 = vadd.f32 0.0, %v4250
      %v4252 = vpop.f32.mrb[0].mxu0
      %v4253 = vpop.f32.mrb[0].mxu0
      %v4254 = vadd.f32 0.0, %v4253
      %v4255 = vpop.f32.mrb[0].mxu0
      %4256 = vmatprep.mubr.bf16.mxu0 0
      %4257 = vmatmul.mubr.bf16.gmra.mrb[0].mxu0 %v4156
      %v4258 = vpop.f32.mrb[0].mxu0
      %v4259 = vadd.f32 0.0, %v4258
      %v4260 = vpop.f32.mrb[0].mxu0
      %v4261 = vpop.f32.mrb[0].mxu0
      %v4262 = vadd.f32 0.0, %v4261
      %v4263 = vpop.f32.mrb[0].mxu0
      %4264 = vmatprep.mubr.bf16.mxu0 0
      %4265 = vmatmul.mubr.bf16.gmra.mrb[0].mxu0 %v4159
      %v4266 = vpop.f32.mrb[0].mxu0
      %v4267 = vadd.f32 0.0, %v4266
      %v4268 = vpop.f32.mrb[0].mxu0
      %v4269 = vpop.f32.mrb[0].mxu0
      %v4270 = vadd.f32 0.0, %v4269
      %v4271 = vpop.f32.mrb[0].mxu0
      %4272 = vmatprep.mubr.bf16.mxu0 0
      %4273 = vmatmul.mubr.bf16.gmra.mrb[0].mxu0 %v4162
      %v4274 = vpop.f32.mrb[0].mxu0
      %v4275 = vadd.f32 0.0, %v4274
      %v4276 = vpop.f32.mrb[0].mxu0
      %v4277 = vpop.f32.mrb[0].mxu0
      %v4278 = vadd.f32 0.0, %v4277
      %v4279 = vpop.f32.mrb[0].mxu0
      %4280 = vmatprep.mubr.bf16.mxu0 0
      %4281 = vmatmul.mubr.bf16.gmra.mrb[0].mxu0 %v4165
      %v4282 = vpop.f32.mrb[0].mxu0
      %v4283 = vadd.f32 0.0, %v4282
      %v4284 = vpop.f32.mrb[0].mxu0
      %v4285 = vpop.f32.mrb[0].mxu0
      %v4286 = vadd.f32 0.0, %v4285
      %v4287 = vpop.f32.mrb[0].mxu0
      %4288 = vmatprep.mubr.bf16.mxu0 0
      %4289 = vmatmul.mubr.bf16.gmra.mrb[0].mxu0 %v4168
      %v4290 = vpop.f32.mrb[0].mxu0
      %v4291 = vadd.f32 0.0, %v4290
      %v4292 = vpop.f32.mrb[0].mxu0
      %v4293 = vpop.f32.mrb[0].mxu0
      %v4294 = vadd.f32 0.0, %v4293
      %v4295 = vpop.f32.mrb[0].mxu0
      %4296 = vmatprep.mubr.bf16.mxu0 0
      %4297 = vmatmul.mubr.bf16.gmra.mrb[0].mxu0 %v4171
      %v4298 = vpop.f32.mrb[0].mxu0
      %v4299 = vadd.f32 0.0, %v4298
      %v4300 = vpop.f32.mrb[0].mxu0
      %v4301 = vpop.f32.mrb[0].mxu0
      %v4302 = vadd.f32 0.0, %v4301
      %v4303 = vpop.f32.mrb[0].mxu0
      %4304 = vdwg.mxu0
      %v4305 = vadd.f32 %v3748, %v4211
      %v4306 = vadd.f32 %v3749, %v4214
      %v4307 = vadd.f32 %v3750, %v4219
      %v4308 = vadd.f32 %v3751, %v4222
      %v4309 = vadd.f32 %v3752, %v4227
      %v4310 = vadd.f32 %v3753, %v4230
      %v4311 = vadd.f32 %v3754, %v4235
      %v4312 = vadd.f32 %v3755, %v4238
      %v4313 = vadd.f32 %v3756, %v4243
      %v4314 = vadd.f32 %v3757, %v4246
      %v4315 = vadd.f32 %v3758, %v4251
      %v4316 = vadd.f32 %v3759, %v4254
      %v4317 = vadd.f32 %v3760, %v4259
      %v4318 = vadd.f32 %v3761, %v4262
      %v4319 = vadd.f32 %v3762, %v4267
      %v4320 = vadd.f32 %v3763, %v4270
      %v4321 = vadd.f32 %v3764, %v4275
      %v4322 = vadd.f32 %v3765, %v4278
      %v4323 = vadd.f32 %v3766, %v4283
      %v4324 = vadd.f32 %v3767, %v4286
      %v4325 = vadd.f32 %v3768, %v4291
      %v4326 = vadd.f32 %v3769, %v4294
      %v4327 = vadd.f32 %v3770, %v4299
      %v4328 = vadd.f32 %v3771, %v4302
      %v4329 = vld [vmem:[%s3494] sm:$0xe]
      %v4330 = vld [vmem:[%s3494 + $0xc] sm:$0xe]
      %v4331 = vld [vmem:[%s3494 + $0x18] sm:$0xe]
      %v4332 = vld [vmem:[%s3494 + $0x24] sm:$0xe]
      %v4333 = vld [vmem:[%s3494 + $0x30] sm:$0xe]
      %v4334 = vld [vmem:[%s3494 + $0x3c] sm:$0xe]
      %v4335 = vld [vmem:[%s3494 + $0x48] sm:$0xe]
      %v4336 = vld [vmem:[%s3494 + $0x54] sm:$0xe]
      %v4337 = vld [vmem:[%s3494 + $0x60] sm:$0xe]
      %v4338 = vld [vmem:[%s3494 + $0x6c] sm:$0xe]
      %v4339 = vld [vmem:[%s3494 + $0x78] sm:$0xe]
      %v4340 = vld [vmem:[%s3494 + $0x84] sm:$0xe]
      %v4341 = vld [vmem:[%s3 + $0x10] sm:$0x3]
      %v4378 = vrot.slane %v4329, 5
      %v4379 = vrot.slane %v4378, 4
      %v4380 = vrot.slane %v3773, 5
      %v4381 = vsel %vm1981, %v4379, %v4380
      %v4382 = vrot.slane %v4380, 4
      %v4383 = vrot.slane %v3774, 5
      %v4384 = vsel %vm1981, %v4382, %v4383
      %v4385 = vrot.slane %v4330, 5
      %v4386 = vrot.slane %v4385, 4
      %v4387 = vrot.slane %v3776, 5
      %v4388 = vsel %vm1981, %v4386, %v4387
      %v4389 = vrot.slane %v4387, 4
      %v4390 = vrot.slane %v3777, 5
      %v4391 = vsel %vm1981, %v4389, %v4390
      %v4392 = vrot.slane %v4331, 5
      %v4393 = vrot.slane %v4392, 4
      %v4394 = vrot.slane %v3779, 5
      %v4395 = vsel %vm1981, %v4393, %v4394
      %v4396 = vrot.slane %v4394, 4
      %v4397 = vrot.slane %v3780, 5
      %v4398 = vsel %vm1981, %v4396, %v4397
      %v4399 = vrot.slane %v4332, 5
      %v4400 = vrot.slane %v4399, 4
      %v4401 = vrot.slane %v3782, 5
      %v4402 = vsel %vm1981, %v4400, %v4401
      %v4403 = vrot.slane %v4401, 4
      %v4404 = vrot.slane %v3783, 5
      %v4405 = vsel %vm1981, %v4403, %v4404
      %v4406 = vrot.slane %v4333, 5
      %v4407 = vrot.slane %v4406, 4
      %v4408 = vrot.slane %v3785, 5
      %v4409 = vsel %vm1981, %v4407, %v4408
      %v4410 = vrot.slane %v4408, 4
      %v4411 = vrot.slane %v3786, 5
      %v4412 = vsel %vm1981, %v4410, %v4411
      %v4413 = vrot.slane %v4334, 5
      %v4414 = vrot.slane %v4413, 4
      %v4415 = vrot.slane %v3788, 5
      %v4416 = vsel %vm1981, %v4414, %v4415
      %v4417 = vrot.slane %v4415, 4
      %v4418 = vrot.slane %v3789, 5
      %v4419 = vsel %vm1981, %v4417, %v4418
      %v4420 = vrot.slane %v4335, 5
      %v4421 = vrot.slane %v4420, 4
      %v4422 = vrot.slane %v3791, 5
      %v4423 = vsel %vm1981, %v4421, %v4422
      %v4424 = vrot.slane %v4422, 4
      %v4425 = vrot.slane %v3792, 5
      %v4426 = vsel %vm1981, %v4424, %v4425
      %v4427 = vrot.slane %v4336, 5
      %v4428 = vrot.slane %v4427, 4
      %v4429 = vrot.slane %v3794, 5
      %v4430 = vsel %vm1981, %v4428, %v4429
      %v4431 = vrot.slane %v4429, 4
      %v4432 = vrot.slane %v3795, 5
      %v4433 = vsel %vm1981, %v4431, %v4432
      %v4434 = vrot.slane %v4337, 5
      %v4435 = vrot.slane %v4434, 4
      %v4436 = vrot.slane %v3797, 5
      %v4437 = vsel %vm1981, %v4435, %v4436
      %v4438 = vrot.slane %v4436, 4
      %v4439 = vrot.slane %v3798, 5
      %v4440 = vsel %vm1981, %v4438, %v4439
      %v4441 = vrot.slane %v4338, 5
      %v4442 = vrot.slane %v4441, 4
      %v4443 = vrot.slane %v3800, 5
      %v4444 = vsel %vm1981, %v4442, %v4443
      %v4445 = vrot.slane %v4443, 4
      %v4446 = vrot.slane %v3801, 5
      %v4447 = vsel %vm1981, %v4445, %v4446
      %v4448 = vrot.slane %v4339, 5
      %v4449 = vrot.slane %v4448, 4
      %v4450 = vrot.slane %v3803, 5
      %v4451 = vsel %vm1981, %v4449, %v4450
      %v4452 = vrot.slane %v4450, 4
      %v4453 = vrot.slane %v3804, 5
      %v4454 = vsel %vm1981, %v4452, %v4453
      %v4455 = vrot.slane %v4340, 5
      %v4456 = vrot.slane %v4455, 4
      %v4457 = vrot.slane %v3806, 5
      %v4458 = vsel %vm1981, %v4456, %v4457
      %v4459 = vrot.slane %v4457, 4
      %v4460 = vrot.slane %v3807, 5
      %v4461 = vsel %vm1981, %v4459, %v4460
      %v4462 = vunpack.c.l.b16 %v4381
      %v4463 = vunpack.c.l.b16 %v4384
      %v4464 = vunpack.c.l.b16 %v4388
      %v4465 = vunpack.c.l.b16 %v4391
      %v4466 = vunpack.c.l.b16 %v4395
      %v4467 = vunpack.c.l.b16 %v4398
      %v4468 = vunpack.c.l.b16 %v4402
      %v4469 = vunpack.c.l.b16 %v4405
      %v4470 = vunpack.c.l.b16 %v4409
      %v4471 = vunpack.c.l.b16 %v4412
      %v4472 = vunpack.c.l.b16 %v4416
      %v4473 = vunpack.c.l.b16 %v4419
      %v4474 = vunpack.c.l.b16 %v4423
      %v4475 = vunpack.c.l.b16 %v4426
      %v4476 = vunpack.c.l.b16 %v4430
      %v4477 = vunpack.c.l.b16 %v4433
      %v4478 = vunpack.c.l.b16 %v4437
      %v4479 = vunpack.c.l.b16 %v4440
      %v4480 = vunpack.c.l.b16 %v4444
      %v4481 = vunpack.c.l.b16 %v4447
      %v4482 = vunpack.c.l.b16 %v4451
      %v4483 = vunpack.c.l.b16 %v4454
      %v4484 = vunpack.c.l.b16 %v4458
      %v4485 = vunpack.c.l.b16 %v4461
      %v4486 = vpack.c.b16 %v4463, %v4462
      %v4487 = vpack.c.b16 %v4465, %v4464
      %v4488 = vpack.c.b16 %v4467, %v4466
      %v4489 = vpack.c.b16 %v4469, %v4468
      %v4490 = vpack.c.b16 %v4471, %v4470
      %v4491 = vpack.c.b16 %v4473, %v4472
      %v4492 = vpack.c.b16 %v4475, %v4474
      %v4493 = vpack.c.b16 %v4477, %v4476
      %v4494 = vpack.c.b16 %v4479, %v4478
      %v4495 = vpack.c.b16 %v4481, %v4480
      %v4496 = vpack.c.b16 %v4483, %v4482
      %v4497 = vpack.c.b16 %v4485, %v4484
      %v4499 = vsel %vm1544, %v4486, 0
      %v4502 = vsel %vm1544, %v4487, 0
      %v4505 = vsel %vm1544, %v4488, 0
      %v4508 = vsel %vm1544, %v4489, 0
      %v4511 = vsel %vm1544, %v4490, 0
      %v4514 = vsel %vm1544, %v4491, 0
      %v4517 = vsel %vm1544, %v4492, 0
      %v4520 = vsel %vm1544, %v4493, 0
      %v4523 = vsel %vm1544, %v4494, 0
      %v4526 = vsel %vm1544, %v4495, 0
      %v4529 = vsel %vm1544, %v4496, 0
      %v4532 = vsel %vm1544, %v4497, 0
      %v4535 = vsel %vm1581, %v4341, 0
      %4537 = vmatprep.subr.bf16.mxu0 0
      %4538 = vmatpush1.bf16.msra.mxu0 %v4535
      %4539 = vmatprep.subr.bf16.mxu0 0
      %4540 = vmatpush1.bf16.msra.mxu0 0
      %4541 = vmatprep.subr.bf16.mxu0 0
      %4542 = vmatpush1.bf16.msra.mxu0 0
      %4543 = vmatprep.subr.bf16.mxu0 0
      %4544 = vmatpush1.bf16.msra.mxu0 0
      %4545 = vmatprep.subr.bf16.mxu0 0
      %4546 = vmatpush1.bf16.msra.mxu0 0
      %4547 = vmatprep.subr.bf16.mxu0 0
      %4548 = vmatpush1.bf16.msra.mxu0 0
      %4549 = vmatprep.subr.bf16.mxu0 0
      %4550 = vmatpush1.bf16.msra.mxu0 0
      %4551 = vmatprep.subr.bf16.mxu0 0
      %4552 = vmatpush1.bf16.msra.mxu0 0
      %4553 = vmatprep.subr.bf16.mxu0 0
      %4554 = vmatpush1.bf16.msra.mxu0 0
      %4555 = vmatprep.subr.bf16.mxu0 0
      %4556 = vmatpush1.bf16.msra.mxu0 0
      %4557 = vmatprep.subr.bf16.mxu0 0
      %4558 = vmatpush1.bf16.msra.mxu0 0
      %4559 = vmatprep.subr.bf16.mxu0 0
      %4560 = vmatpush1.bf16.msra.mxu0 0
      %4561 = vmatprep.subr.bf16.mxu0 0
      %4562 = vmatpush1.bf16.msra.mxu0 0
      %4563 = vmatprep.subr.bf16.mxu0 0
      %4564 = vmatpush1.bf16.msra.mxu0 0
      %4565 = vmatprep.subr.bf16.mxu0 0
      %4566 = vmatpush1.bf16.msra.mxu0 0
      %4567 = vmatprep.subr.bf16.mxu0 0
      %4568 = vmatpush1.bf16.msra.mxu0 0
      %4569 = vmatprep.mubr.bf16.mxu0 0
      %4570 = vmatmul.mubr.bf16.gmra.mrb[0].mxu0 %v4499
      %v4571 = vpop.f32.mrb[0].mxu0
      %v4572 = vadd.f32 0.0, %v4571
      %v4573 = vpop.f32.mrb[0].mxu0
      %v4574 = vpop.f32.mrb[0].mxu0
      %v4575 = vadd.f32 0.0, %v4574
      %v4576 = vpop.f32.mrb[0].mxu0
      %4577 = vmatprep.mubr.bf16.mxu0 0
      %4578 = vmatmul.mubr.bf16.gmra.mrb[0].mxu0 %v4502
      %v4579 = vpop.f32.mrb[0].mxu0
      %v4580 = vadd.f32 0.0, %v4579
      %v4581 = vpop.f32.mrb[0].mxu0
      %v4582 = vpop.f32.mrb[0].mxu0
      %v4583 = vadd.f32 0.0, %v4582
      %v4584 = vpop.f32.mrb[0].mxu0
      %4585 = vmatprep.mubr.bf16.mxu0 0
      %4586 = vmatmul.mubr.bf16.gmra.mrb[0].mxu0 %v4505
      %v4587 = vpop.f32.mrb[0].mxu0
      %v4588 = vadd.f32 0.0, %v4587
      %v4589 = vpop.f32.mrb[0].mxu0
      %v4590 = vpop.f32.mrb[0].mxu0
      %v4591 = vadd.f32 0.0, %v4590
      %v4592 = vpop.f32.mrb[0].mxu0
      %4593 = vmatprep.mubr.bf16.mxu0 0
      %4594 = vmatmul.mubr.bf16.gmra.mrb[0].mxu0 %v4508
      %v4595 = vpop.f32.mrb[0].mxu0
      %v4596 = vadd.f32 0.0, %v4595
      %v4597 = vpop.f32.mrb[0].mxu0
      %v4598 = vpop.f32.mrb[0].mxu0
      %v4599 = vadd.f32 0.0, %v4598
      %v4600 = vpop.f32.mrb[0].mxu0
      %4601 = vmatprep.mubr.bf16.mxu0 0
      %4602 = vmatmul.mubr.bf16.gmra.mrb[0].mxu0 %v4511
      %v4603 = vpop.f32.mrb[0].mxu0
      %v4604 = vadd.f32 0.0, %v4603
      %v4605 = vpop.f32.mrb[0].mxu0
      %v4606 = vpop.f32.mrb[0].mxu0
      %v4607 = vadd.f32 0.0, %v4606
      %v4608 = vpop.f32.mrb[0].mxu0
      %4609 = vmatprep.mubr.bf16.mxu0 0
      %4610 = vmatmul.mubr.bf16.gmra.mrb[0].mxu0 %v4514
      %v4611 = vpop.f32.mrb[0].mxu0
      %v4612 = vadd.f32 0.0, %v4611
      %v4613 = vpop.f32.mrb[0].mxu0
      %v4614 = vpop.f32.mrb[0].mxu0
      %v4615 = vadd.f32 0.0, %v4614
      %v4616 = vpop.f32.mrb[0].mxu0
      %4617 = vmatprep.mubr.bf16.mxu0 0
      %4618 = vmatmul.mubr.bf16.gmra.mrb[0].mxu0 %v4517
      %v4619 = vpop.f32.mrb[0].mxu0
      %v4620 = vadd.f32 0.0, %v4619
      %v4621 = vpop.f32.mrb[0].mxu0
      %v4622 = vpop.f32.mrb[0].mxu0
      %v4623 = vadd.f32 0.0, %v4622
      %v4624 = vpop.f32.mrb[0].mxu0
      %4625 = vmatprep.mubr.bf16.mxu0 0
      %4626 = vmatmul.mubr.bf16.gmra.mrb[0].mxu0 %v4520
      %v4627 = vpop.f32.mrb[0].mxu0
      %v4628 = vadd.f32 0.0, %v4627
      %v4629 = vpop.f32.mrb[0].mxu0
      %v4630 = vpop.f32.mrb[0].mxu0
      %v4631 = vadd.f32 0.0, %v4630
      %v4632 = vpop.f32.mrb[0].mxu0
      %4633 = vmatprep.mubr.bf16.mxu0 0
      %4634 = vmatmul.mubr.bf16.gmra.mrb[0].mxu0 %v4523
      %v4635 = vpop.f32.mrb[0].mxu0
      %v4636 = vadd.f32 0.0, %v4635
      %v4637 = vpop.f32.mrb[0].mxu0
      %v4638 = vpop.f32.mrb[0].mxu0
      %v4639 = vadd.f32 0.0, %v4638
      %v4640 = vpop.f32.mrb[0].mxu0
      %4641 = vmatprep.mubr.bf16.mxu0 0
      %4642 = vmatmul.mubr.bf16.gmra.mrb[0].mxu0 %v4526
      %v4643 = vpop.f32.mrb[0].mxu0
      %v4644 = vadd.f32 0.0, %v4643
      %v4645 = vpop.f32.mrb[0].mxu0
      %v4646 = vpop.f32.mrb[0].mxu0
      %v4647 = vadd.f32 0.0, %v4646
      %v4648 = vpop.f32.mrb[0].mxu0
      %4649 = vmatprep.mubr.bf16.mxu0 0
      %4650 = vmatmul.mubr.bf16.gmra.mrb[0].mxu0 %v4529
      %v4651 = vpop.f32.mrb[0].mxu0
      %v4652 = vadd.f32 0.0, %v4651
      %v4653 = vpop.f32.mrb[0].mxu0
      %v4654 = vpop.f32.mrb[0].mxu0
      %v4655 = vadd.f32 0.0, %v4654
      %v4656 = vpop.f32.mrb[0].mxu0
      %4657 = vmatprep.mubr.bf16.mxu0 0
      %4658 = vmatmul.mubr.bf16.gmra.mrb[0].mxu0 %v4532
      %v4659 = vpop.f32.mrb[0].mxu0
      %v4660 = vadd.f32 0.0, %v4659
      %v4661 = vpop.f32.mrb[0].mxu0
      %v4662 = vpop.f32.mrb[0].mxu0
      %v4663 = vadd.f32 0.0, %v4662
      %v4664 = vpop.f32.mrb[0].mxu0
      %4665 = vdwg.mxu0
      %v4666 = vadd.f32 %v4305, %v4572
      %v4667 = vadd.f32 %v4306, %v4575
      %v4668 = vadd.f32 %v4307, %v4580
      %v4669 = vadd.f32 %v4308, %v4583
      %v4670 = vadd.f32 %v4309, %v4588
      %v4671 = vadd.f32 %v4310, %v4591
      %v4672 = vadd.f32 %v4311, %v4596
      %v4673 = vadd.f32 %v4312, %v4599
      %v4674 = vadd.f32 %v4313, %v4604
      %v4675 = vadd.f32 %v4314, %v4607
      %v4676 = vadd.f32 %v4315, %v4612
      %v4677 = vadd.f32 %v4316, %v4615
      %v4678 = vadd.f32 %v4317, %v4620
      %v4679 = vadd.f32 %v4318, %v4623
      %v4680 = vadd.f32 %v4319, %v4628
      %v4681 = vadd.f32 %v4320, %v4631
      %v4682 = vadd.f32 %v4321, %v4636
      %v4683 = vadd.f32 %v4322, %v4639
      %v4684 = vadd.f32 %v4323, %v4644
      %v4685 = vadd.f32 %v4324, %v4647
      %v4686 = vadd.f32 %v4325, %v4652
      %v4687 = vadd.f32 %v4326, %v4655
      %v4688 = vadd.f32 %v4327, %v4660
      %v4689 = vadd.f32 %v4328, %v4663
      %v4690 = vld [vmem:[%s4] sm:$0x1]
      %v4692 = vlaneseq
      %v4693 = vshrl.u32 %v4692, 7
      %v4694 = vsub.s32 0, %v4693
      %v4695 = vrot.slane %v4690, %v4694
      %v4697 = vadd.f32 %v4666, %v4695
      %v4698 = vadd.f32 %v4667, %v4695
      %v4699 = vadd.f32 %v4668, %v4695
      %v4700 = vadd.f32 %v4669, %v4695
      %v4701 = vadd.f32 %v4670, %v4695
      %v4702 = vadd.f32 %v4671, %v4695
      %v4703 = vadd.f32 %v4672, %v4695
      %v4704 = vadd.f32 %v4673, %v4695
      %v4705 = vadd.f32 %v4674, %v4695
      %v4706 = vadd.f32 %v4675, %v4695
      %v4707 = vadd.f32 %v4676, %v4695
      %v4708 = vadd.f32 %v4677, %v4695
      %v4709 = vadd.f32 %v4678, %v4695
      %v4710 = vadd.f32 %v4679, %v4695
      %v4711 = vadd.f32 %v4680, %v4695
      %v4712 = vadd.f32 %v4681, %v4695
      %v4713 = vadd.f32 %v4682, %v4695
      %v4714 = vadd.f32 %v4683, %v4695
      %v4715 = vadd.f32 %v4684, %v4695
      %v4716 = vadd.f32 %v4685, %v4695
      %v4717 = vadd.f32 %v4686, %v4695
      %v4718 = vadd.f32 %v4687, %v4695
      %v4719 = vadd.f32 %v4688, %v4695
      %v4720 = vadd.f32 %v4689, %v4695
      %v4721 = vmax.f32 %v4697, 0.0
      %v4722 = vmax.f32 %v4698, 0.0
      %v4723 = vmax.f32 %v4699, 0.0
      %v4724 = vmax.f32 %v4700, 0.0
      %v4725 = vmax.f32 %v4701, 0.0
      %v4726 = vmax.f32 %v4702, 0.0
      %v4727 = vmax.f32 %v4703, 0.0
      %v4728 = vmax.f32 %v4704, 0.0
      %v4729 = vmax.f32 %v4705, 0.0
      %v4730 = vmax.f32 %v4706, 0.0
      %v4731 = vmax.f32 %v4707, 0.0
      %v4732 = vmax.f32 %v4708, 0.0
      %v4733 = vmax.f32 %v4709, 0.0
      %v4734 = vmax.f32 %v4710, 0.0
      %v4735 = vmax.f32 %v4711, 0.0
      %v4736 = vmax.f32 %v4712, 0.0
      %v4737 = vmax.f32 %v4713, 0.0
      %v4738 = vmax.f32 %v4714, 0.0
      %v4739 = vmax.f32 %v4715, 0.0
      %v4740 = vmax.f32 %v4716, 0.0
      %v4741 = vmax.f32 %v4717, 0.0
      %v4742 = vmax.f32 %v4718, 0.0
      %v4743 = vmax.f32 %v4719, 0.0
      %v4744 = vmax.f32 %v4720, 0.0
      %s4745 = smul.u32 %s27, 8
      %s4746 = sadd.s32 %s4745, 4294967294
      %v4747 = vstv %s4746
      %v4748 = vadd.s32 %v4747, 1
      %v4749 = vadd.s32 %v4747, 2
      %v4750 = vadd.s32 %v4747, 3
      %v4751 = vadd.s32 %v4747, 4
      %v4752 = vadd.s32 %v4747, 5
      %v4753 = vadd.s32 %v4747, 6
      %v4754 = vadd.s32 %v4747, 7
      %v4755 = vadd.s32 %v4747, 8
      %v4756 = vadd.s32 %v4747, 9
      %v4757 = vadd.s32 %v4747, 10
      %v4758 = vadd.s32 %v4747, 11
      %vm4759 = vcmp.ge.s32.totalorder %v4747, 0
      %vm4760 = vcmp.ge.s32.totalorder %v4748, 0
      %vm4761 = vcmp.ge.s32.totalorder %v4749, 0
      %vm4762 = vcmp.ge.s32.totalorder %v4750, 0
      %vm4763 = vcmp.ge.s32.totalorder %v4751, 0
      %vm4764 = vcmp.ge.s32.totalorder %v4752, 0
      %vm4765 = vcmp.ge.s32.totalorder %v4753, 0
      %vm4766 = vcmp.ge.s32.totalorder %v4754, 0
      %vm4767 = vcmp.ge.s32.totalorder %v4755, 0
      %vm4768 = vcmp.ge.s32.totalorder %v4756, 0
      %vm4769 = vcmp.ge.s32.totalorder %v4757, 0
      %vm4770 = vcmp.ge.s32.totalorder %v4758, 0
      %vm4771 = vcmp.lt.s32.totalorder %v4747, 16
      %vm4772 = vcmp.lt.s32.totalorder %v4748, 16
      %vm4773 = vcmp.lt.s32.totalorder %v4749, 16
      %vm4774 = vcmp.lt.s32.totalorder %v4750, 16
      %vm4775 = vcmp.lt.s32.totalorder %v4751, 16
      %vm4776 = vcmp.lt.s32.totalorder %v4752, 16
      %vm4777 = vcmp.lt.s32.totalorder %v4753, 16
      %vm4778 = vcmp.lt.s32.totalorder %v4754, 16
      %vm4779 = vcmp.lt.s32.totalorder %v4755, 16
      %vm4780 = vcmp.lt.s32.totalorder %v4756, 16
      %vm4781 = vcmp.lt.s32.totalorder %v4757, 16
      %vm4782 = vcmp.lt.s32.totalorder %v4758, 16
      %vm4783 = vmand %vm4759, %vm4771
      %vm4784 = vmand %vm4760, %vm4772
      %vm4785 = vmand %vm4761, %vm4773
      %vm4786 = vmand %vm4762, %vm4774
      %vm4787 = vmand %vm4763, %vm4775
      %vm4788 = vmand %vm4764, %vm4776
      %vm4789 = vmand %vm4765, %vm4777
      %vm4790 = vmand %vm4766, %vm4778
      %vm4791 = vmand %vm4767, %vm4779
      %vm4792 = vmand %vm4768, %vm4780
      %vm4793 = vmand %vm4769, %vm4781
      %vm4794 = vmand %vm4770, %vm4782
      %v4795 = vsel %vm4783, 1, 0
      %v4796 = vsel %vm4784, 1, 0
      %v4797 = vsel %vm4785, 1, 0
      %v4798 = vsel %vm4786, 1, 0
      %v4799 = vsel %vm4787, 1, 0
      %v4800 = vsel %vm4788, 1, 0
      %v4801 = vsel %vm4789, 1, 0
      %v4802 = vsel %vm4790, 1, 0
      %v4803 = vsel %vm4791, 1, 0
      %v4804 = vsel %vm4792, 1, 0
      %v4805 = vsel %vm4793, 1, 0
      %v4806 = vsel %vm4794, 1, 0
      %v4807 = vcvt.s32.f32 %v4795
      %v4808 = vcvt.s32.f32 %v4796
      %v4809 = vcvt.s32.f32 %v4797
      %v4810 = vcvt.s32.f32 %v4798
      %v4811 = vcvt.s32.f32 %v4799
      %v4812 = vcvt.s32.f32 %v4800
      %v4813 = vcvt.s32.f32 %v4801
      %v4814 = vcvt.s32.f32 %v4802
      %v4815 = vcvt.s32.f32 %v4803
      %v4816 = vcvt.s32.f32 %v4804
      %v4817 = vcvt.s32.f32 %v4805
      %v4818 = vcvt.s32.f32 %v4806
      %v4819 = vmul.f32 %v4721, %v4807
      %v4820 = vmul.f32 %v4722, %v4807
      %v4821 = vmul.f32 %v4723, %v4808
      %v4822 = vmul.f32 %v4724, %v4808
      %v4823 = vmul.f32 %v4725, %v4809
      %v4824 = vmul.f32 %v4726, %v4809
      %v4825 = vmul.f32 %v4727, %v4810
      %v4826 = vmul.f32 %v4728, %v4810
      %v4827 = vmul.f32 %v4729, %v4811
      %v4828 = vmul.f32 %v4730, %v4811
      %v4829 = vmul.f32 %v4731, %v4812
      %v4830 = vmul.f32 %v4732, %v4812
      %v4831 = vmul.f32 %v4733, %v4813
      %v4832 = vmul.f32 %v4734, %v4813
      %v4833 = vmul.f32 %v4735, %v4814
      %v4834 = vmul.f32 %v4736, %v4814
      %v4835 = vmul.f32 %v4737, %v4815
      %v4836 = vmul.f32 %v4738, %v4815
      %v4837 = vmul.f32 %v4739, %v4816
      %v4838 = vmul.f32 %v4740, %v4816
      %v4839 = vmul.f32 %v4741, %v4817
      %v4840 = vmul.f32 %v4742, %v4817
      %v4841 = vmul.f32 %v4743, %v4818
      %v4842 = vmul.f32 %v4744, %v4818
      %v4843 = vpack.c.bf16 %v4820, %v4819
      %v4844 = vpack.c.bf16 %v4822, %v4821
      %v4845 = vpack.c.bf16 %v4824, %v4823
      %v4846 = vpack.c.bf16 %v4826, %v4825
      %v4847 = vpack.c.bf16 %v4828, %v4827
      %v4848 = vpack.c.bf16 %v4830, %v4829
      %v4849 = vpack.c.bf16 %v4832, %v4831
      %v4850 = vpack.c.bf16 %v4834, %v4833
      %v4851 = vpack.c.bf16 %v4836, %v4835
      %v4852 = vpack.c.bf16 %v4838, %v4837
      %v4853 = vpack.c.bf16 %v4840, %v4839
      %v4854 = vpack.c.bf16 %v4842, %v4841
      %v4867 = vunpack.c.l.b16 %v4843
      %v4868 = vunpack.c.h.b16 %v4843
      %v4869 = vunpack.c.l.b16 %v4844
      %v4870 = vunpack.c.h.b16 %v4844
      %v4871 = vunpack.c.l.b16 %v4845
      %v4872 = vunpack.c.h.b16 %v4845
      %v4873 = vunpack.c.l.b16 %v4846
      %v4874 = vunpack.c.h.b16 %v4846
      %v4875 = vunpack.c.l.b16 %v4847
      %v4876 = vunpack.c.h.b16 %v4847
      %v4877 = vunpack.c.l.b16 %v4848
      %v4878 = vunpack.c.h.b16 %v4848
      %v4879 = vunpack.c.l.b16 %v4849
      %v4880 = vunpack.c.h.b16 %v4849
      %v4881 = vunpack.c.l.b16 %v4850
      %v4882 = vunpack.c.h.b16 %v4850
      %v4883 = vunpack.c.l.b16 %v4851
      %v4884 = vunpack.c.h.b16 %v4851
      %v4885 = vunpack.c.l.b16 %v4852
      %v4886 = vunpack.c.h.b16 %v4852
      %v4887 = vunpack.c.l.b16 %v4853
      %v4888 = vunpack.c.h.b16 %v4853
      %v4889 = vunpack.c.l.b16 %v4854
      %v4890 = vunpack.c.h.b16 %v4854
      %v4891 = vpack.c.b16 %v4867, %v4867
      %v4892 = vpack.c.b16 %v4868, %v4868
      %v4893 = vpack.c.b16 %v4869, %v4869
      %v4894 = vpack.c.b16 %v4870, %v4870
      %v4895 = vpack.c.b16 %v4871, %v4871
      %v4896 = vpack.c.b16 %v4872, %v4872
      %v4897 = vpack.c.b16 %v4873, %v4873
      %v4898 = vpack.c.b16 %v4874, %v4874
      %v4899 = vpack.c.b16 %v4875, %v4875
      %v4900 = vpack.c.b16 %v4876, %v4876
      %v4901 = vpack.c.b16 %v4877, %v4877
      %v4902 = vpack.c.b16 %v4878, %v4878
      %v4903 = vpack.c.b16 %v4879, %v4879
      %v4904 = vpack.c.b16 %v4880, %v4880
      %v4905 = vpack.c.b16 %v4881, %v4881
      %v4906 = vpack.c.b16 %v4882, %v4882
      %v4907 = vpack.c.b16 %v4883, %v4883
      %v4908 = vpack.c.b16 %v4884, %v4884
      %v4909 = vpack.c.b16 %v4885, %v4885
      %v4910 = vpack.c.b16 %v4886, %v4886
      %v4911 = vpack.c.b16 %v4887, %v4887
      %v4912 = vpack.c.b16 %v4888, %v4888
      %v4913 = vpack.c.b16 %v4889, %v4889
      %v4914 = vpack.c.b16 %v4890, %v4890
      %v4916 = vshrl.u32 %v4891, 16
      %v4918 = vrot.slane %v4916, 7
      %v4919 = vshll.u32 %v4891, 16
      %v4921 = vor.u32 %v4918, %v4919
      %v4922 = vrot.slane %v4918, 4
      %v4924 = vshrl.u32 %v4892, 16
      %v4926 = vrot.slane %v4924, 7
      %v4927 = vshll.u32 %v4892, 16
      %v4929 = vor.u32 %v4926, %v4927
      %v4930 = vsel %vm720, %v4922, %v4929
      %v4931 = vrot.slane %v4926, 4
      %v4933 = vshrl.u32 %v4893, 16
      %v4935 = vrot.slane %v4933, 7
      %v4936 = vshll.u32 %v4893, 16
      %v4938 = vor.u32 %v4935, %v4936
      %v4939 = vrot.slane %v4935, 4
      %v4941 = vshrl.u32 %v4894, 16
      %v4943 = vrot.slane %v4941, 7
      %v4944 = vshll.u32 %v4894, 16
      %v4946 = vor.u32 %v4943, %v4944
      %v4947 = vsel %vm720, %v4939, %v4946
      %v4948 = vrot.slane %v4943, 4
      %v4950 = vshrl.u32 %v4895, 16
      %v4952 = vrot.slane %v4950, 7
      %v4953 = vshll.u32 %v4895, 16
      %v4955 = vor.u32 %v4952, %v4953
      %v4956 = vrot.slane %v4952, 4
      %v4958 = vshrl.u32 %v4896, 16
      %v4960 = vrot.slane %v4958, 7
      %v4961 = vshll.u32 %v4896, 16
      %v4963 = vor.u32 %v4960, %v4961
      %v4964 = vsel %vm720, %v4956, %v4963
      %v4965 = vrot.slane %v4960, 4
      %v4967 = vshrl.u32 %v4897, 16
      %v4969 = vrot.slane %v4967, 7
      %v4970 = vshll.u32 %v4897, 16
      %v4972 = vor.u32 %v4969, %v4970
      %v4973 = vrot.slane %v4969, 4
      %v4975 = vshrl.u32 %v4898, 16
      %v4977 = vrot.slane %v4975, 7
      %v4978 = vshll.u32 %v4898, 16
      %v4980 = vor.u32 %v4977, %v4978
      %v4981 = vsel %vm720, %v4973, %v4980
      %v4982 = vrot.slane %v4977, 4
      %v4984 = vshrl.u32 %v4899, 16
      %v4986 = vrot.slane %v4984, 7
      %v4987 = vshll.u32 %v4899, 16
      %v4989 = vor.u32 %v4986, %v4987
      %v4990 = vrot.slane %v4986, 4
      %v4992 = vshrl.u32 %v4900, 16
      %v4994 = vrot.slane %v4992, 7
      %v4995 = vshll.u32 %v4900, 16
      %v4997 = vor.u32 %v4994, %v4995
      %v4998 = vsel %vm720, %v4990, %v4997
      %v4999 = vrot.slane %v4994, 4
      %v5001 = vshrl.u32 %v4901, 16
      %v5003 = vrot.slane %v5001, 7
      %v5004 = vshll.u32 %v4901, 16
      %v5006 = vor.u32 %v5003, %v5004
      %v5007 = vrot.slane %v5003, 4
      %v5009 = vshrl.u32 %v4902, 16
      %v5011 = vrot.slane %v5009, 7
      %v5012 = vshll.u32 %v4902, 16
      %v5014 = vor.u32 %v5011, %v5012
      %v5015 = vsel %vm720, %v5007, %v5014
      %v5016 = vrot.slane %v5011, 4
      %v5018 = vshrl.u32 %v4903, 16
      %v5020 = vrot.slane %v5018, 7
      %v5021 = vshll.u32 %v4903, 16
      %v5023 = vor.u32 %v5020, %v5021
      %v5024 = vrot.slane %v5020, 4
      %v5026 = vshrl.u32 %v4904, 16
      %v5028 = vrot.slane %v5026, 7
      %v5029 = vshll.u32 %v4904, 16
      %v5031 = vor.u32 %v5028, %v5029
      %v5032 = vsel %vm720, %v5024, %v5031
      %v5033 = vrot.slane %v5028, 4
      %v5035 = vshrl.u32 %v4905, 16
      %v5037 = vrot.slane %v5035, 7
      %v5038 = vshll.u32 %v4905, 16
      %v5040 = vor.u32 %v5037, %v5038
      %v5041 = vrot.slane %v5037, 4
      %v5043 = vshrl.u32 %v4906, 16
      %v5045 = vrot.slane %v5043, 7
      %v5046 = vshll.u32 %v4906, 16
      %v5048 = vor.u32 %v5045, %v5046
      %v5049 = vsel %vm720, %v5041, %v5048
      %v5050 = vrot.slane %v5045, 4
      %v5052 = vshrl.u32 %v4907, 16
      %v5054 = vrot.slane %v5052, 7
      %v5055 = vshll.u32 %v4907, 16
      %v5057 = vor.u32 %v5054, %v5055
      %v5058 = vrot.slane %v5054, 4
      %v5060 = vshrl.u32 %v4908, 16
      %v5062 = vrot.slane %v5060, 7
      %v5063 = vshll.u32 %v4908, 16
      %v5065 = vor.u32 %v5062, %v5063
      %v5066 = vsel %vm720, %v5058, %v5065
      %v5067 = vrot.slane %v5062, 4
      %v5069 = vshrl.u32 %v4909, 16
      %v5071 = vrot.slane %v5069, 7
      %v5072 = vshll.u32 %v4909, 16
      %v5074 = vor.u32 %v5071, %v5072
      %v5075 = vrot.slane %v5071, 4
      %v5077 = vshrl.u32 %v4910, 16
      %v5079 = vrot.slane %v5077, 7
      %v5080 = vshll.u32 %v4910, 16
      %v5082 = vor.u32 %v5079, %v5080
      %v5083 = vsel %vm720, %v5075, %v5082
      %v5084 = vrot.slane %v5079, 4
      %v5086 = vshrl.u32 %v4911, 16
      %v5088 = vrot.slane %v5086, 7
      %v5089 = vshll.u32 %v4911, 16
      %v5091 = vor.u32 %v5088, %v5089
      %v5092 = vrot.slane %v5088, 4
      %v5094 = vshrl.u32 %v4912, 16
      %v5096 = vrot.slane %v5094, 7
      %v5097 = vshll.u32 %v4912, 16
      %v5099 = vor.u32 %v5096, %v5097
      %v5100 = vsel %vm720, %v5092, %v5099
      %v5101 = vrot.slane %v5096, 4
      %v5103 = vshrl.u32 %v4913, 16
      %v5105 = vrot.slane %v5103, 7
      %v5106 = vshll.u32 %v4913, 16
      %v5108 = vor.u32 %v5105, %v5106
      %v5109 = vrot.slane %v5105, 4
      %v5111 = vshrl.u32 %v4914, 16
      %v5113 = vrot.slane %v5111, 7
      %v5114 = vshll.u32 %v4914, 16
      %v5116 = vor.u32 %v5113, %v5114
      %v5117 = vsel %vm720, %v5109, %v5116
      %v5118 = vrot.slane %v5113, 4
      %5119 = vrot.lane.b32.xlu0 %v4921, 4
      %v5120 = vpop.permute.xlu0 %5119
      %5121 = vrot.lane.b32.xlu0 %v4930, 4
      %v5122 = vpop.permute.xlu0 %5121
      %5123 = vrot.lane.b32.xlu0 %v4931, 4
      %v5124 = vpop.permute.xlu0 %5123
      %5125 = vrot.lane.b32.xlu0 %v4938, 4
      %v5126 = vpop.permute.xlu0 %5125
      %5127 = vrot.lane.b32.xlu0 %v4947, 4
      %v5128 = vpop.permute.xlu0 %5127
      %5129 = vrot.lane.b32.xlu0 %v4948, 4
      %v5130 = vpop.permute.xlu0 %5129
      %5131 = vrot.lane.b32.xlu0 %v4955, 4
      %v5132 = vpop.permute.xlu0 %5131
      %5133 = vrot.lane.b32.xlu0 %v4964, 4
      %v5134 = vpop.permute.xlu0 %5133
      %5135 = vrot.lane.b32.xlu0 %v4965, 4
      %v5136 = vpop.permute.xlu0 %5135
      %5137 = vrot.lane.b32.xlu0 %v4972, 4
      %v5138 = vpop.permute.xlu0 %5137
      %5139 = vrot.lane.b32.xlu0 %v4981, 4
      %v5140 = vpop.permute.xlu0 %5139
      %5141 = vrot.lane.b32.xlu0 %v4982, 4
      %v5142 = vpop.permute.xlu0 %5141
      %5143 = vrot.lane.b32.xlu0 %v4989, 4
      %v5144 = vpop.permute.xlu0 %5143
      %5145 = vrot.lane.b32.xlu0 %v4998, 4
      %v5146 = vpop.permute.xlu0 %5145
      %5147 = vrot.lane.b32.xlu0 %v4999, 4
      %v5148 = vpop.permute.xlu0 %5147
      %5149 = vrot.lane.b32.xlu0 %v5006, 4
      %v5150 = vpop.permute.xlu0 %5149
      %5151 = vrot.lane.b32.xlu0 %v5015, 4
      %v5152 = vpop.permute.xlu0 %5151
      %5153 = vrot.lane.b32.xlu0 %v5016, 4
      %v5154 = vpop.permute.xlu0 %5153
      %5155 = vrot.lane.b32.xlu0 %v5023, 4
      %v5156 = vpop.permute.xlu0 %5155
      %5157 = vrot.lane.b32.xlu0 %v5032, 4
      %v5158 = vpop.permute.xlu0 %5157
      %5159 = vrot.lane.b32.xlu0 %v5033, 4
      %v5160 = vpop.permute.xlu0 %5159
      %5161 = vrot.lane.b32.xlu0 %v5040, 4
      %v5162 = vpop.permute.xlu0 %5161
      %5163 = vrot.lane.b32.xlu0 %v5049, 4
      %v5164 = vpop.permute.xlu0 %5163
      %5165 = vrot.lane.b32.xlu0 %v5050, 4
      %v5166 = vpop.permute.xlu0 %5165
      %5167 = vrot.lane.b32.xlu0 %v5057, 4
      %v5168 = vpop.permute.xlu0 %5167
      %5169 = vrot.lane.b32.xlu0 %v5066, 4
      %v5170 = vpop.permute.xlu0 %5169
      %5171 = vrot.lane.b32.xlu0 %v5067, 4
      %v5172 = vpop.permute.xlu0 %5171
      %5173 = vrot.lane.b32.xlu0 %v5074, 4
      %v5174 = vpop.permute.xlu0 %5173
      %5175 = vrot.lane.b32.xlu0 %v5083, 4
      %v5176 = vpop.permute.xlu0 %5175
      %5177 = vrot.lane.b32.xlu0 %v5084, 4
      %v5178 = vpop.permute.xlu0 %5177
      %5179 = vrot.lane.b32.xlu0 %v5091, 4
      %v5180 = vpop.permute.xlu0 %5179
      %5181 = vrot.lane.b32.xlu0 %v5100, 4
      %v5182 = vpop.permute.xlu0 %5181
      %5183 = vrot.lane.b32.xlu0 %v5101, 4
      %v5184 = vpop.permute.xlu0 %5183
      %5185 = vrot.lane.b32.xlu0 %v5108, 4
      %v5186 = vpop.permute.xlu0 %5185
      %5187 = vrot.lane.b32.xlu0 %v5117, 4
      %v5188 = vpop.permute.xlu0 %5187
      %5189 = vrot.lane.b32.xlu0 %v5118, 4
      %v5190 = vpop.permute.xlu0 %5189
      %vm5227 = vcmask 60448
      %vm5228 = vmand %vm5227, %vm611
      %v5229 = vsel %vm5228, %v5120, %v2576
      %5230 = vst [vmem:[%s2294] sm:$0xf] %v5229
      %vm5231 = vcmask 60448
      %5232 = vst.msk [vmem:[%s2294 + $0x4] sm:$0xf] %vm5231, %v5122
      %vm5233 = vcmask 57376
      %vm5234 = vmand %vm5233, %vm567
      %v5235 = vld [vmem:[%s2294 + $0x8] sm:$0x1]
      %v5236 = vsel %vm5234, %v5124, %v5235
      %5237 = vst [vmem:[%s2294 + $0x8] sm:$0x1] %v5236
      %v5238 = vld [vmem:[%s2294 + $0xc] sm:$0xf]
      %v5239 = vsel %vm5228, %v5126, %v5238
      %5240 = vst [vmem:[%s2294 + $0xc] sm:$0xf] %v5239
      %5241 = vst.msk [vmem:[%s2294 + $0x10] sm:$0xf] %vm5231, %v5128
      %v5242 = vld [vmem:[%s2294 + $0x14] sm:$0x1]
      %v5243 = vsel %vm5234, %v5130, %v5242
      %5244 = vst [vmem:[%s2294 + $0x14] sm:$0x1] %v5243
      %v5245 = vld [vmem:[%s2294 + $0x18] sm:$0xf]
      %v5246 = vsel %vm5228, %v5132, %v5245
      %5247 = vst [vmem:[%s2294 + $0x18] sm:$0xf] %v5246
      %5248 = vst.msk [vmem:[%s2294 + $0x1c] sm:$0xf] %vm5231, %v5134
      %v5249 = vld [vmem:[%s2294 + $0x20] sm:$0x1]
      %v5250 = vsel %vm5234, %v5136, %v5249
      %5251 = vst [vmem:[%s2294 + $0x20] sm:$0x1] %v5250
      %v5252 = vld [vmem:[%s2294 + $0x24] sm:$0xf]
      %v5253 = vsel %vm5228, %v5138, %v5252
      %5254 = vst [vmem:[%s2294 + $0x24] sm:$0xf] %v5253
      %5255 = vst.msk [vmem:[%s2294 + $0x28] sm:$0xf] %vm5231, %v5140
      %v5256 = vld [vmem:[%s2294 + $0x2c] sm:$0x1]
      %v5257 = vsel %vm5234, %v5142, %v5256
      %5258 = vst [vmem:[%s2294 + $0x2c] sm:$0x1] %v5257
      %v5259 = vld [vmem:[%s2294 + $0x30] sm:$0xf]
      %v5260 = vsel %vm5228, %v5144, %v5259
      %5261 = vst [vmem:[%s2294 + $0x30] sm:$0xf] %v5260
      %5262 = vst.msk [vmem:[%s2294 + $0x34] sm:$0xf] %vm5231, %v5146
      %v5263 = vld [vmem:[%s2294 + $0x38] sm:$0x1]
      %v5264 = vsel %vm5234, %v5148, %v5263
      %5265 = vst [vmem:[%s2294 + $0x38] sm:$0x1] %v5264
      %v5266 = vld [vmem:[%s2294 + $0x3c] sm:$0xf]
      %v5267 = vsel %vm5228, %v5150, %v5266
      %5268 = vst [vmem:[%s2294 + $0x3c] sm:$0xf] %v5267
      %5269 = vst.msk [vmem:[%s2294 + $0x40] sm:$0xf] %vm5231, %v5152
      %v5270 = vld [vmem:[%s2294 + $0x44] sm:$0x1]
      %v5271 = vsel %vm5234, %v5154, %v5270
      %5272 = vst [vmem:[%s2294 + $0x44] sm:$0x1] %v5271
      %v5273 = vld [vmem:[%s2294 + $0x48] sm:$0xf]
      %v5274 = vsel %vm5228, %v5156, %v5273
      %5275 = vst [vmem:[%s2294 + $0x48] sm:$0xf] %v5274
      %5276 = vst.msk [vmem:[%s2294 + $0x4c] sm:$0xf] %vm5231, %v5158
      %v5277 = vld [vmem:[%s2294 + $0x50] sm:$0x1]
      %v5278 = vsel %vm5234, %v5160, %v5277
      %5279 = vst [vmem:[%s2294 + $0x50] sm:$0x1] %v5278
      %v5280 = vld [vmem:[%s2294 + $0x54] sm:$0xf]
      %v5281 = vsel %vm5228, %v5162, %v5280
      %5282 = vst [vmem:[%s2294 + $0x54] sm:$0xf] %v5281
      %5283 = vst.msk [vmem:[%s2294 + $0x58] sm:$0xf] %vm5231, %v5164
      %v5284 = vld [vmem:[%s2294 + $0x5c] sm:$0x1]
      %v5285 = vsel %vm5234, %v5166, %v5284
      %5286 = vst [vmem:[%s2294 + $0x5c] sm:$0x1] %v5285
      %v5287 = vld [vmem:[%s2294 + $0x60] sm:$0xf]
      %v5288 = vsel %vm5228, %v5168, %v5287
      %5289 = vst [vmem:[%s2294 + $0x60] sm:$0xf] %v5288
      %5290 = vst.msk [vmem:[%s2294 + $0x64] sm:$0xf] %vm5231, %v5170
      %v5291 = vld [vmem:[%s2294 + $0x68] sm:$0x1]
      %v5292 = vsel %vm5234, %v5172, %v5291
      %5293 = vst [vmem:[%s2294 + $0x68] sm:$0x1] %v5292
      %v5294 = vld [vmem:[%s2294 + $0x6c] sm:$0xf]
      %v5295 = vsel %vm5228, %v5174, %v5294
      %5296 = vst [vmem:[%s2294 + $0x6c] sm:$0xf] %v5295
      %5297 = vst.msk [vmem:[%s2294 + $0x70] sm:$0xf] %vm5231, %v5176
      %v5298 = vld [vmem:[%s2294 + $0x74] sm:$0x1]
      %v5299 = vsel %vm5234, %v5178, %v5298
      %5300 = vst [vmem:[%s2294 + $0x74] sm:$0x1] %v5299
      %v5301 = vld [vmem:[%s2294 + $0x78] sm:$0xf]
      %v5302 = vsel %vm5228, %v5180, %v5301
      %5303 = vst [vmem:[%s2294 + $0x78] sm:$0xf] %v5302
      %5304 = vst.msk [vmem:[%s2294 + $0x7c] sm:$0xf] %vm5231, %v5182
      %v5305 = vld [vmem:[%s2294 + $0x80] sm:$0x1]
      %v5306 = vsel %vm5234, %v5184, %v5305
      %5307 = vst [vmem:[%s2294 + $0x80] sm:$0x1] %v5306
      %v5308 = vld [vmem:[%s2294 + $0x84] sm:$0xf]
      %v5309 = vsel %vm5228, %v5186, %v5308
      %5310 = vst [vmem:[%s2294 + $0x84] sm:$0xf] %v5309
      %5311 = vst.msk [vmem:[%s2294 + $0x88] sm:$0xf] %vm5231, %v5188
      %v5312 = vld [vmem:[%s2294 + $0x8c] sm:$0x1]
      %v5313 = vsel %vm5234, %v5190, %v5312
      %5314 = vst [vmem:[%s2294 + $0x8c] sm:$0x1] %v5313
      %v5315 = vld [vmem:[%s2294] sm:$0xf]
      %v5316 = vld [vmem:[%s2294 + $0x4] sm:$0xf]
      %v5317 = vld [vmem:[%s2294 + $0xc] sm:$0xf]
      %v5318 = vld [vmem:[%s2294 + $0x10] sm:$0xf]
      %v5319 = vld [vmem:[%s2294 + $0x18] sm:$0xf]
      %v5320 = vld [vmem:[%s2294 + $0x1c] sm:$0xf]
      %v5321 = vld [vmem:[%s2294 + $0x24] sm:$0xf]
      %v5322 = vld [vmem:[%s2294 + $0x28] sm:$0xf]
      %v5323 = vld [vmem:[%s2294 + $0x30] sm:$0xf]
      %v5324 = vld [vmem:[%s2294 + $0x34] sm:$0xf]
      %v5325 = vld [vmem:[%s2294 + $0x3c] sm:$0xf]
      %v5326 = vld [vmem:[%s2294 + $0x40] sm:$0xf]
      %v5327 = vld [vmem:[%s2294 + $0x48] sm:$0xf]
      %v5328 = vld [vmem:[%s2294 + $0x4c] sm:$0xf]
      %v5329 = vld [vmem:[%s2294 + $0x54] sm:$0xf]
      %v5330 = vld [vmem:[%s2294 + $0x58] sm:$0xf]
      %v5331 = vld [vmem:[%s2294 + $0x60] sm:$0xf]
      %v5332 = vld [vmem:[%s2294 + $0x64] sm:$0xf]
      %v5333 = vld [vmem:[%s2294 + $0x6c] sm:$0xf]
      %v5334 = vld [vmem:[%s2294 + $0x70] sm:$0xf]
      %v5335 = vld [vmem:[%s5] sm:$0xf]
      %v5336 = vld [vmem:[%s2294 + $0x8] sm:$0x1]
      %v5337 = vld [vmem:[%s2294 + $0x14] sm:$0x1]
      %v5338 = vld [vmem:[%s2294 + $0x20] sm:$0x1]
      %v5339 = vld [vmem:[%s2294 + $0x2c] sm:$0x1]
      %v5340 = vld [vmem:[%s2294 + $0x38] sm:$0x1]
      %v5341 = vld [vmem:[%s2294 + $0x44] sm:$0x1]
      %v5342 = vld [vmem:[%s2294 + $0x50] sm:$0x1]
      %v5343 = vld [vmem:[%s2294 + $0x5c] sm:$0x1]
      %v5344 = vld [vmem:[%s2294 + $0x68] sm:$0x1]
      %v5345 = vld [vmem:[%s2294 + $0x74] sm:$0x1]
      %v5346 = vld [vmem:[%s5 + $0x4] sm:$0xf]
      %v5348 = vshrl.u32 %v5315, 16
      %v5350 = vrot.slane %v5348, 4
      %v5351 = vshll.u32 %v5315, 16
      %v5353 = vrot.slane %v5351, 5
      %v5354 = vor.u32 %v5350, %v5353
      %v5355 = vrot.slane %v5354, 4
      %v5357 = vshll.u32 %v5316, 16
      %v5359 = vrot.slane %v5357, 5
      %v5360 = vsel %vm1215, %v5355, %v5359
      %v5361 = vshrl.u32 %v5316, 16
      %v5363 = vrot.slane %v5361, 4
      %v5364 = vor.u32 %v5363, %v5359
      %v5365 = vrot.slane %v5364, 4
      %v5367 = vshll.u32 %v5336, 16
      %v5369 = vrot.slane %v5367, 5
      %v5370 = vsel %vm1215, %v5365, %v5369
      %v5372 = vshrl.u32 %v5317, 16
      %v5374 = vrot.slane %v5372, 4
      %v5375 = vshll.u32 %v5317, 16
      %v5377 = vrot.slane %v5375, 5
      %v5378 = vor.u32 %v5374, %v5377
      %v5379 = vrot.slane %v5378, 4
      %v5381 = vshll.u32 %v5318, 16
      %v5383 = vrot.slane %v5381, 5
      %v5384 = vsel %vm1215, %v5379, %v5383
      %v5385 = vshrl.u32 %v5318, 16
      %v5387 = vrot.slane %v5385, 4
      %v5388 = vor.u32 %v5387, %v5383
      %v5389 = vrot.slane %v5388, 4
      %v5391 = vshll.u32 %v5337, 16
      %v5393 = vrot.slane %v5391, 5
      %v5394 = vsel %vm1215, %v5389, %v5393
      %v5396 = vshrl.u32 %v5319, 16
      %v5398 = vrot.slane %v5396, 4
      %v5399 = vshll.u32 %v5319, 16
      %v5401 = vrot.slane %v5399, 5
      %v5402 = vor.u32 %v5398, %v5401
      %v5403 = vrot.slane %v5402, 4
      %v5405 = vshll.u32 %v5320, 16
      %v5407 = vrot.slane %v5405, 5
      %v5408 = vsel %vm1215, %v5403, %v5407
      %v5409 = vshrl.u32 %v5320, 16
      %v5411 = vrot.slane %v5409, 4
      %v5412 = vor.u32 %v5411, %v5407
      %v5413 = vrot.slane %v5412, 4
      %v5415 = vshll.u32 %v5338, 16
      %v5417 = vrot.slane %v5415, 5
      %v5418 = vsel %vm1215, %v5413, %v5417
      %v5420 = vshrl.u32 %v5321, 16
      %v5422 = vrot.slane %v5420, 4
      %v5423 = vshll.u32 %v5321, 16
      %v5425 = vrot.slane %v5423, 5
      %v5426 = vor.u32 %v5422, %v5425
      %v5427 = vrot.slane %v5426, 4
      %v5429 = vshll.u32 %v5322, 16
      %v5431 = vrot.slane %v5429, 5
      %v5432 = vsel %vm1215, %v5427, %v5431
      %v5433 = vshrl.u32 %v5322, 16
      %v5435 = vrot.slane %v5433, 4
      %v5436 = vor.u32 %v5435, %v5431
      %v5437 = vrot.slane %v5436, 4
      %v5439 = vshll.u32 %v5339, 16
      %v5441 = vrot.slane %v5439, 5
      %v5442 = vsel %vm1215, %v5437, %v5441
      %v5444 = vshrl.u32 %v5323, 16
      %v5446 = vrot.slane %v5444, 4
      %v5447 = vshll.u32 %v5323, 16
      %v5449 = vrot.slane %v5447, 5
      %v5450 = vor.u32 %v5446, %v5449
      %v5451 = vrot.slane %v5450, 4
      %v5453 = vshll.u32 %v5324, 16
      %v5455 = vrot.slane %v5453, 5
      %v5456 = vsel %vm1215, %v5451, %v5455
      %v5457 = vshrl.u32 %v5324, 16
      %v5459 = vrot.slane %v5457, 4
      %v5460 = vor.u32 %v5459, %v5455
      %v5461 = vrot.slane %v5460, 4
      %v5463 = vshll.u32 %v5340, 16
      %v5465 = vrot.slane %v5463, 5
      %v5466 = vsel %vm1215, %v5461, %v5465
      %v5468 = vshrl.u32 %v5325, 16
      %v5470 = vrot.slane %v5468, 4
      %v5471 = vshll.u32 %v5325, 16
      %v5473 = vrot.slane %v5471, 5
      %v5474 = vor.u32 %v5470, %v5473
      %v5475 = vrot.slane %v5474, 4
      %v5477 = vshll.u32 %v5326, 16
      %v5479 = vrot.slane %v5477, 5
      %v5480 = vsel %vm1215, %v5475, %v5479
      %v5481 = vshrl.u32 %v5326, 16
      %v5483 = vrot.slane %v5481, 4
      %v5484 = vor.u32 %v5483, %v5479
      %v5485 = vrot.slane %v5484, 4
      %v5487 = vshll.u32 %v5341, 16
      %v5489 = vrot.slane %v5487, 5
      %v5490 = vsel %vm1215, %v5485, %v5489
      %v5492 = vshrl.u32 %v5327, 16
      %v5494 = vrot.slane %v5492, 4
      %v5495 = vshll.u32 %v5327, 16
      %v5497 = vrot.slane %v5495, 5
      %v5498 = vor.u32 %v5494, %v5497
      %v5499 = vrot.slane %v5498, 4
      %v5501 = vshll.u32 %v5328, 16
      %v5503 = vrot.slane %v5501, 5
      %v5504 = vsel %vm1215, %v5499, %v5503
      %v5505 = vshrl.u32 %v5328, 16
      %v5507 = vrot.slane %v5505, 4
      %v5508 = vor.u32 %v5507, %v5503
      %v5509 = vrot.slane %v5508, 4
      %v5511 = vshll.u32 %v5342, 16
      %v5513 = vrot.slane %v5511, 5
      %v5514 = vsel %vm1215, %v5509, %v5513
      %v5516 = vshrl.u32 %v5329, 16
      %v5518 = vrot.slane %v5516, 4
      %v5519 = vshll.u32 %v5329, 16
      %v5521 = vrot.slane %v5519, 5
      %v5522 = vor.u32 %v5518, %v5521
      %v5523 = vrot.slane %v5522, 4
      %v5525 = vshll.u32 %v5330, 16
      %v5527 = vrot.slane %v5525, 5
      %v5528 = vsel %vm1215, %v5523, %v5527
      %v5529 = vshrl.u32 %v5330, 16
      %v5531 = vrot.slane %v5529, 4
      %v5532 = vor.u32 %v5531, %v5527
      %v5533 = vrot.slane %v5532, 4
      %v5535 = vshll.u32 %v5343, 16
      %v5537 = vrot.slane %v5535, 5
      %v5538 = vsel %vm1215, %v5533, %v5537
      %v5540 = vshrl.u32 %v5331, 16
      %v5542 = vrot.slane %v5540, 4
      %v5543 = vshll.u32 %v5331, 16
      %v5545 = vrot.slane %v5543, 5
      %v5546 = vor.u32 %v5542, %v5545
      %v5547 = vrot.slane %v5546, 4
      %v5549 = vshll.u32 %v5332, 16
      %v5551 = vrot.slane %v5549, 5
      %v5552 = vsel %vm1215, %v5547, %v5551
      %v5553 = vshrl.u32 %v5332, 16
      %v5555 = vrot.slane %v5553, 4
      %v5556 = vor.u32 %v5555, %v5551
      %v5557 = vrot.slane %v5556, 4
      %v5559 = vshll.u32 %v5344, 16
      %v5561 = vrot.slane %v5559, 5
      %v5562 = vsel %vm1215, %v5557, %v5561
      %v5564 = vshrl.u32 %v5333, 16
      %v5566 = vrot.slane %v5564, 4
      %v5567 = vshll.u32 %v5333, 16
      %v5569 = vrot.slane %v5567, 5
      %v5570 = vor.u32 %v5566, %v5569
      %v5571 = vrot.slane %v5570, 4
      %v5573 = vshll.u32 %v5334, 16
      %v5575 = vrot.slane %v5573, 5
      %v5576 = vsel %vm1215, %v5571, %v5575
      %v5577 = vshrl.u32 %v5334, 16
      %v5579 = vrot.slane %v5577, 4
      %v5580 = vor.u32 %v5579, %v5575
      %v5581 = vrot.slane %v5580, 4
      %v5583 = vshll.u32 %v5345, 16
      %v5585 = vrot.slane %v5583, 5
      %v5586 = vsel %vm1215, %v5581, %v5585
      %v5587 = vunpack.c.l.b16 %v5360
      %v5588 = vunpack.c.l.b16 %v5370
      %v5589 = vunpack.c.l.b16 %v5384
      %v5590 = vunpack.c.l.b16 %v5394
      %v5591 = vunpack.c.l.b16 %v5408
      %v5592 = vunpack.c.l.b16 %v5418
      %v5593 = vunpack.c.l.b16 %v5432
      %v5594 = vunpack.c.l.b16 %v5442
      %v5595 = vunpack.c.l.b16 %v5456
      %v5596 = vunpack.c.l.b16 %v5466
      %v5597 = vunpack.c.l.b16 %v5480
      %v5598 = vunpack.c.l.b16 %v5490
      %v5599 = vunpack.c.l.b16 %v5504
      %v5600 = vunpack.c.l.b16 %v5514
      %v5601 = vunpack.c.l.b16 %v5528
      %v5602 = vunpack.c.l.b16 %v5538
      %v5603 = vunpack.c.l.b16 %v5552
      %v5604 = vunpack.c.l.b16 %v5562
      %v5605 = vunpack.c.l.b16 %v5576
      %v5606 = vunpack.c.l.b16 %v5586
      %v5607 = vpack.c.b16 %v5588, %v5587
      %v5608 = vpack.c.b16 %v5590, %v5589
      %v5609 = vpack.c.b16 %v5592, %v5591
      %v5610 = vpack.c.b16 %v5594, %v5593
      %v5611 = vpack.c.b16 %v5596, %v5595
      %v5612 = vpack.c.b16 %v5598, %v5597
      %v5613 = vpack.c.b16 %v5600, %v5599
      %v5614 = vpack.c.b16 %v5602, %v5601
      %v5615 = vpack.c.b16 %v5604, %v5603
      %v5616 = vpack.c.b16 %v5606, %v5605
      %vm5617 = vcmask 64512
      %v5619 = vsel %vm5617, %v5607, 0
      %v5622 = vsel %vm5617, %v5608, 0
      %v5625 = vsel %vm5617, %v5609, 0
      %v5628 = vsel %vm5617, %v5610, 0
      %v5631 = vsel %vm5617, %v5611, 0
      %v5634 = vsel %vm5617, %v5612, 0
      %v5637 = vsel %vm5617, %v5613, 0
      %v5640 = vsel %vm5617, %v5614, 0
      %v5643 = vsel %vm5617, %v5615, 0
      %v5646 = vsel %vm5617, %v5616, 0
      %vm5648 = vcmask 1043456
      %v5650 = vsel %vm5648, %v5346, 0
      %5652 = vmatprep.subr.bf16.mxu0 0
      %5653 = vmatpush1.bf16.msra.mxu0 %v5650
      %5654 = vmatprep.subr.bf16.mxu0 0
      %5655 = vmatpush1.bf16.msra.mxu0 0
      %5656 = vmatprep.subr.bf16.mxu0 0
      %5657 = vmatpush1.bf16.msra.mxu0 0
      %5658 = vmatprep.subr.bf16.mxu0 0
      %5659 = vmatpush1.bf16.msra.mxu0 0
      %5660 = vmatprep.subr.bf16.mxu0 0
      %5661 = vmatpush1.bf16.msra.mxu0 0
      %5662 = vmatprep.subr.bf16.mxu0 0
      %5663 = vmatpush1.bf16.msra.mxu0 0
      %5664 = vmatprep.subr.bf16.mxu0 0
      %5665 = vmatpush1.bf16.msra.mxu0 0
      %5666 = vmatprep.subr.bf16.mxu0 0
      %5667 = vmatpush1.bf16.msra.mxu0 0
      %5668 = vmatprep.subr.bf16.mxu0 0
      %5669 = vmatpush1.bf16.msra.mxu0 0
      %5670 = vmatprep.subr.bf16.mxu0 0
      %5671 = vmatpush1.bf16.msra.mxu0 0
      %5672 = vmatprep.subr.bf16.mxu0 0
      %5673 = vmatpush1.bf16.msra.mxu0 0
      %5674 = vmatprep.subr.bf16.mxu0 0
      %5675 = vmatpush1.bf16.msra.mxu0 0
      %5676 = vmatprep.subr.bf16.mxu0 0
      %5677 = vmatpush1.bf16.msra.mxu0 0
      %5678 = vmatprep.subr.bf16.mxu0 0
      %5679 = vmatpush1.bf16.msra.mxu0 0
      %5680 = vmatprep.subr.bf16.mxu0 0
      %5681 = vmatpush1.bf16.msra.mxu0 0
      %5682 = vmatprep.subr.bf16.mxu0 0
      %5683 = vmatpush1.bf16.msra.mxu0 0
      %5684 = vmatprep.mubr.bf16.mxu0 0
      %5685 = vmatmul.mubr.bf16.gmra.mrb[0].mxu0 %v5619
      %v5686 = vpop.f32.mrb[0].mxu0
      %v5687 = vadd.f32 0.0, %v5686
      %v5688 = vpop.f32.mrb[0].mxu0
      %v5689 = vpop.f32.mrb[0].mxu0
      %v5690 = vadd.f32 0.0, %v5689
      %v5691 = vpop.f32.mrb[0].mxu0
      %5692 = vmatprep.mubr.bf16.mxu0 0
      %5693 = vmatmul.mubr.bf16.gmra.mrb[0].mxu0 %v5622
      %v5694 = vpop.f32.mrb[0].mxu0
      %v5695 = vadd.f32 0.0, %v5694
      %v5696 = vpop.f32.mrb[0].mxu0
      %v5697 = vpop.f32.mrb[0].mxu0
      %v5698 = vadd.f32 0.0, %v5697
      %v5699 = vpop.f32.mrb[0].mxu0
      %5700 = vmatprep.mubr.bf16.mxu0 0
      %5701 = vmatmul.mubr.bf16.gmra.mrb[0].mxu0 %v5625
      %v5702 = vpop.f32.mrb[0].mxu0
      %v5703 = vadd.f32 0.0, %v5702
      %v5704 = vpop.f32.mrb[0].mxu0
      %v5705 = vpop.f32.mrb[0].mxu0
      %v5706 = vadd.f32 0.0, %v5705
      %v5707 = vpop.f32.mrb[0].mxu0
      %5708 = vmatprep.mubr.bf16.mxu0 0
      %5709 = vmatmul.mubr.bf16.gmra.mrb[0].mxu0 %v5628
      %v5710 = vpop.f32.mrb[0].mxu0
      %v5711 = vadd.f32 0.0, %v5710
      %v5712 = vpop.f32.mrb[0].mxu0
      %v5713 = vpop.f32.mrb[0].mxu0
      %v5714 = vadd.f32 0.0, %v5713
      %v5715 = vpop.f32.mrb[0].mxu0
      %5716 = vmatprep.mubr.bf16.mxu0 0
      %5717 = vmatmul.mubr.bf16.gmra.mrb[0].mxu0 %v5631
      %v5718 = vpop.f32.mrb[0].mxu0
      %v5719 = vadd.f32 0.0, %v5718
      %v5720 = vpop.f32.mrb[0].mxu0
      %v5721 = vpop.f32.mrb[0].mxu0
      %v5722 = vadd.f32 0.0, %v5721
      %v5723 = vpop.f32.mrb[0].mxu0
      %5724 = vmatprep.mubr.bf16.mxu0 0
      %5725 = vmatmul.mubr.bf16.gmra.mrb[0].mxu0 %v5634
      %v5726 = vpop.f32.mrb[0].mxu0
      %v5727 = vadd.f32 0.0, %v5726
      %v5728 = vpop.f32.mrb[0].mxu0
      %v5729 = vpop.f32.mrb[0].mxu0
      %v5730 = vadd.f32 0.0, %v5729
      %v5731 = vpop.f32.mrb[0].mxu0
      %5732 = vmatprep.mubr.bf16.mxu0 0
      %5733 = vmatmul.mubr.bf16.gmra.mrb[0].mxu0 %v5637
      %v5734 = vpop.f32.mrb[0].mxu0
      %v5735 = vadd.f32 0.0, %v5734
      %v5736 = vpop.f32.mrb[0].mxu0
      %v5737 = vpop.f32.mrb[0].mxu0
      %v5738 = vadd.f32 0.0, %v5737
      %v5739 = vpop.f32.mrb[0].mxu0
      %5740 = vmatprep.mubr.bf16.mxu0 0
      %5741 = vmatmul.mubr.bf16.gmra.mrb[0].mxu0 %v5640
      %v5742 = vpop.f32.mrb[0].mxu0
      %v5743 = vadd.f32 0.0, %v5742
      %v5744 = vpop.f32.mrb[0].mxu0
      %v5745 = vpop.f32.mrb[0].mxu0
      %v5746 = vadd.f32 0.0, %v5745
      %v5747 = vpop.f32.mrb[0].mxu0
      %5748 = vmatprep.mubr.bf16.mxu0 0
      %5749 = vmatmul.mubr.bf16.gmra.mrb[0].mxu0 %v5643
      %v5750 = vpop.f32.mrb[0].mxu0
      %v5751 = vadd.f32 0.0, %v5750
      %v5752 = vpop.f32.mrb[0].mxu0
      %v5753 = vpop.f32.mrb[0].mxu0
      %v5754 = vadd.f32 0.0, %v5753
      %v5755 = vpop.f32.mrb[0].mxu0
      %5756 = vmatprep.mubr.bf16.mxu0 0
      %5757 = vmatmul.mubr.bf16.gmra.mrb[0].mxu0 %v5646
      %v5758 = vpop.f32.mrb[0].mxu0
      %v5759 = vadd.f32 0.0, %v5758
      %v5760 = vpop.f32.mrb[0].mxu0
      %v5761 = vpop.f32.mrb[0].mxu0
      %v5762 = vadd.f32 0.0, %v5761
      %v5763 = vpop.f32.mrb[0].mxu0
      %5764 = vdwg.mxu0
      %v5785 = vunpack.c.l.b16 %v5315
      %v5786 = vunpack.c.l.b16 %v5316
      %v5787 = vunpack.c.l.b16 %v5317
      %v5788 = vunpack.c.l.b16 %v5318
      %v5789 = vunpack.c.l.b16 %v5319
      %v5790 = vunpack.c.l.b16 %v5320
      %v5791 = vunpack.c.l.b16 %v5321
      %v5792 = vunpack.c.l.b16 %v5322
      %v5793 = vunpack.c.l.b16 %v5323
      %v5794 = vunpack.c.l.b16 %v5324
      %v5795 = vunpack.c.l.b16 %v5325
      %v5796 = vunpack.c.l.b16 %v5326
      %v5797 = vunpack.c.l.b16 %v5327
      %v5798 = vunpack.c.l.b16 %v5328
      %v5799 = vunpack.c.l.b16 %v5329
      %v5800 = vunpack.c.l.b16 %v5330
      %v5801 = vunpack.c.l.b16 %v5331
      %v5802 = vunpack.c.l.b16 %v5332
      %v5803 = vunpack.c.l.b16 %v5333
      %v5804 = vunpack.c.l.b16 %v5334
      %v5805 = vpack.c.b16 %v5786, %v5785
      %v5806 = vpack.c.b16 %v5788, %v5787
      %v5807 = vpack.c.b16 %v5790, %v5789
      %v5808 = vpack.c.b16 %v5792, %v5791
      %v5809 = vpack.c.b16 %v5794, %v5793
      %v5810 = vpack.c.b16 %v5796, %v5795
      %v5811 = vpack.c.b16 %v5798, %v5797
      %v5812 = vpack.c.b16 %v5800, %v5799
      %v5813 = vpack.c.b16 %v5802, %v5801
      %v5814 = vpack.c.b16 %v5804, %v5803
      %v5816 = vsel %vm5617, %v5805, 0
      %v5819 = vsel %vm5617, %v5806, 0
      %v5822 = vsel %vm5617, %v5807, 0
      %v5825 = vsel %vm5617, %v5808, 0
      %v5828 = vsel %vm5617, %v5809, 0
      %v5831 = vsel %vm5617, %v5810, 0
      %v5834 = vsel %vm5617, %v5811, 0
      %v5837 = vsel %vm5617, %v5812, 0
      %v5840 = vsel %vm5617, %v5813, 0
      %v5843 = vsel %vm5617, %v5814, 0
      %v5846 = vsel %vm5648, %v5335, 0
      %5848 = vmatprep.subr.bf16.mxu0 0
      %5849 = vmatpush1.bf16.msra.mxu0 %v5846
      %5850 = vmatprep.subr.bf16.mxu0 0
      %5851 = vmatpush1.bf16.msra.mxu0 0
      %5852 = vmatprep.subr.bf16.mxu0 0
      %5853 = vmatpush1.bf16.msra.mxu0 0
      %5854 = vmatprep.subr.bf16.mxu0 0
      %5855 = vmatpush1.bf16.msra.mxu0 0
      %5856 = vmatprep.subr.bf16.mxu0 0
      %5857 = vmatpush1.bf16.msra.mxu0 0
      %5858 = vmatprep.subr.bf16.mxu0 0
      %5859 = vmatpush1.bf16.msra.mxu0 0
      %5860 = vmatprep.subr.bf16.mxu0 0
      %5861 = vmatpush1.bf16.msra.mxu0 0
      %5862 = vmatprep.subr.bf16.mxu0 0
      %5863 = vmatpush1.bf16.msra.mxu0 0
      %5864 = vmatprep.subr.bf16.mxu0 0
      %5865 = vmatpush1.bf16.msra.mxu0 0
      %5866 = vmatprep.subr.bf16.mxu0 0
      %5867 = vmatpush1.bf16.msra.mxu0 0
      %5868 = vmatprep.subr.bf16.mxu0 0
      %5869 = vmatpush1.bf16.msra.mxu0 0
      %5870 = vmatprep.subr.bf16.mxu0 0
      %5871 = vmatpush1.bf16.msra.mxu0 0
      %5872 = vmatprep.subr.bf16.mxu0 0
      %5873 = vmatpush1.bf16.msra.mxu0 0
      %5874 = vmatprep.subr.bf16.mxu0 0
      %5875 = vmatpush1.bf16.msra.mxu0 0
      %5876 = vmatprep.subr.bf16.mxu0 0
      %5877 = vmatpush1.bf16.msra.mxu0 0
      %5878 = vmatprep.subr.bf16.mxu0 0
      %5879 = vmatpush1.bf16.msra.mxu0 0
      %5880 = vmatprep.mubr.bf16.mxu0 0
      %5881 = vmatmul.mubr.bf16.gmra.mrb[0].mxu0 %v5816
      %v5882 = vpop.f32.mrb[0].mxu0
      %v5883 = vadd.f32 %v5687, %v5882
      %v5884 = vpop.f32.mrb[0].mxu0
      %v5885 = vpop.f32.mrb[0].mxu0
      %v5886 = vadd.f32 %v5690, %v5885
      %v5887 = vpop.f32.mrb[0].mxu0
      %5888 = vmatprep.mubr.bf16.mxu0 0
      %5889 = vmatmul.mubr.bf16.gmra.mrb[0].mxu0 %v5819
      %v5890 = vpop.f32.mrb[0].mxu0
      %v5891 = vadd.f32 %v5695, %v5890
      %v5892 = vpop.f32.mrb[0].mxu0
      %v5893 = vpop.f32.mrb[0].mxu0
      %v5894 = vadd.f32 %v5698, %v5893
      %v5895 = vpop.f32.mrb[0].mxu0
      %5896 = vmatprep.mubr.bf16.mxu0 0
      %5897 = vmatmul.mubr.bf16.gmra.mrb[0].mxu0 %v5822
      %v5898 = vpop.f32.mrb[0].mxu0
      %v5899 = vadd.f32 %v5703, %v5898
      %v5900 = vpop.f32.mrb[0].mxu0
      %v5901 = vpop.f32.mrb[0].mxu0
      %v5902 = vadd.f32 %v5706, %v5901
      %v5903 = vpop.f32.mrb[0].mxu0
      %5904 = vmatprep.mubr.bf16.mxu0 0
      %5905 = vmatmul.mubr.bf16.gmra.mrb[0].mxu0 %v5825
      %v5906 = vpop.f32.mrb[0].mxu0
      %v5907 = vadd.f32 %v5711, %v5906
      %v5908 = vpop.f32.mrb[0].mxu0
      %v5909 = vpop.f32.mrb[0].mxu0
      %v5910 = vadd.f32 %v5714, %v5909
      %v5911 = vpop.f32.mrb[0].mxu0
      %5912 = vmatprep.mubr.bf16.mxu0 0
      %5913 = vmatmul.mubr.bf16.gmra.mrb[0].mxu0 %v5828
      %v5914 = vpop.f32.mrb[0].mxu0
      %v5915 = vadd.f32 %v5719, %v5914
      %v5916 = vpop.f32.mrb[0].mxu0
      %v5917 = vpop.f32.mrb[0].mxu0
      %v5918 = vadd.f32 %v5722, %v5917
      %v5919 = vpop.f32.mrb[0].mxu0
      %5920 = vmatprep.mubr.bf16.mxu0 0
      %5921 = vmatmul.mubr.bf16.gmra.mrb[0].mxu0 %v5831
      %v5922 = vpop.f32.mrb[0].mxu0
      %v5923 = vadd.f32 %v5727, %v5922
      %v5924 = vpop.f32.mrb[0].mxu0
      %v5925 = vpop.f32.mrb[0].mxu0
      %v5926 = vadd.f32 %v5730, %v5925
      %v5927 = vpop.f32.mrb[0].mxu0
      %5928 = vmatprep.mubr.bf16.mxu0 0
      %5929 = vmatmul.mubr.bf16.gmra.mrb[0].mxu0 %v5834
      %v5930 = vpop.f32.mrb[0].mxu0
      %v5931 = vadd.f32 %v5735, %v5930
      %v5932 = vpop.f32.mrb[0].mxu0
      %v5933 = vpop.f32.mrb[0].mxu0
      %v5934 = vadd.f32 %v5738, %v5933
      %v5935 = vpop.f32.mrb[0].mxu0
      %5936 = vmatprep.mubr.bf16.mxu0 0
      %5937 = vmatmul.mubr.bf16.gmra.mrb[0].mxu0 %v5837
      %v5938 = vpop.f32.mrb[0].mxu0
      %v5939 = vadd.f32 %v5743, %v5938
      %v5940 = vpop.f32.mrb[0].mxu0
      %v5941 = vpop.f32.mrb[0].mxu0
      %v5942 = vadd.f32 %v5746, %v5941
      %v5943 = vpop.f32.mrb[0].mxu0
      %5944 = vmatprep.mubr.bf16.mxu0 0
      %5945 = vmatmul.mubr.bf16.gmra.mrb[0].mxu0 %v5840
      %v5946 = vpop.f32.mrb[0].mxu0
      %v5947 = vadd.f32 %v5751, %v5946
      %v5948 = vpop.f32.mrb[0].mxu0
      %v5949 = vpop.f32.mrb[0].mxu0
      %v5950 = vadd.f32 %v5754, %v5949
      %v5951 = vpop.f32.mrb[0].mxu0
      %5952 = vmatprep.mubr.bf16.mxu0 0
      %5953 = vmatmul.mubr.bf16.gmra.mrb[0].mxu0 %v5843
      %v5954 = vpop.f32.mrb[0].mxu0
      %v5955 = vadd.f32 %v5759, %v5954
      %v5956 = vpop.f32.mrb[0].mxu0
      %v5957 = vpop.f32.mrb[0].mxu0
      %v5958 = vadd.f32 %v5762, %v5957
      %v5959 = vpop.f32.mrb[0].mxu0
      %5960 = vdwg.mxu0
      %v5961 = vld [vmem:[%s2294] sm:$0xe]
      %v5962 = vld [vmem:[%s2294 + $0xc] sm:$0xe]
      %v5963 = vld [vmem:[%s2294 + $0x18] sm:$0xe]
      %v5964 = vld [vmem:[%s2294 + $0x24] sm:$0xe]
      %v5965 = vld [vmem:[%s2294 + $0x30] sm:$0xe]
      %v5966 = vld [vmem:[%s2294 + $0x3c] sm:$0xe]
      %v5967 = vld [vmem:[%s2294 + $0x48] sm:$0xe]
      %v5968 = vld [vmem:[%s2294 + $0x54] sm:$0xe]
      %v5969 = vld [vmem:[%s2294 + $0x60] sm:$0xe]
      %v5970 = vld [vmem:[%s2294 + $0x6c] sm:$0xe]
      %v5971 = vld [vmem:[%s5 + $0x8] sm:$0xf]
      %v5992 = vrot.slane %v5961, 5
      %v5993 = vrot.slane %v5992, 4
      %v5994 = vrot.slane %v5316, 5
      %v5995 = vsel %vm1981, %v5993, %v5994
      %v5996 = vrot.slane %v5994, 4
      %v5997 = vrot.slane %v5336, 5
      %v5998 = vsel %vm1981, %v5996, %v5997
      %v5999 = vrot.slane %v5962, 5
      %v6000 = vrot.slane %v5999, 4
      %v6001 = vrot.slane %v5318, 5
      %v6002 = vsel %vm1981, %v6000, %v6001
      %v6003 = vrot.slane %v6001, 4
      %v6004 = vrot.slane %v5337, 5
      %v6005 = vsel %vm1981, %v6003, %v6004
      %v6006 = vrot.slane %v5963, 5
      %v6007 = vrot.slane %v6006, 4
      %v6008 = vrot.slane %v5320, 5
      %v6009 = vsel %vm1981, %v6007, %v6008
      %v6010 = vrot.slane %v6008, 4
      %v6011 = vrot.slane %v5338, 5
      %v6012 = vsel %vm1981, %v6010, %v6011
      %v6013 = vrot.slane %v5964, 5
      %v6014 = vrot.slane %v6013, 4
      %v6015 = vrot.slane %v5322, 5
      %v6016 = vsel %vm1981, %v6014, %v6015
      %v6017 = vrot.slane %v6015, 4
      %v6018 = vrot.slane %v5339, 5
      %v6019 = vsel %vm1981, %v6017, %v6018
      %v6020 = vrot.slane %v5965, 5
      %v6021 = vrot.slane %v6020, 4
      %v6022 = vrot.slane %v5324, 5
      %v6023 = vsel %vm1981, %v6021, %v6022
      %v6024 = vrot.slane %v6022, 4
      %v6025 = vrot.slane %v5340, 5
      %v6026 = vsel %vm1981, %v6024, %v6025
      %v6027 = vrot.slane %v5966, 5
      %v6028 = vrot.slane %v6027, 4
      %v6029 = vrot.slane %v5326, 5
      %v6030 = vsel %vm1981, %v6028, %v6029
      %v6031 = vrot.slane %v6029, 4
      %v6032 = vrot.slane %v5341, 5
      %v6033 = vsel %vm1981, %v6031, %v6032
      %v6034 = vrot.slane %v5967, 5
      %v6035 = vrot.slane %v6034, 4
      %v6036 = vrot.slane %v5328, 5
      %v6037 = vsel %vm1981, %v6035, %v6036
      %v6038 = vrot.slane %v6036, 4
      %v6039 = vrot.slane %v5342, 5
      %v6040 = vsel %vm1981, %v6038, %v6039
      %v6041 = vrot.slane %v5968, 5
      %v6042 = vrot.slane %v6041, 4
      %v6043 = vrot.slane %v5330, 5
      %v6044 = vsel %vm1981, %v6042, %v6043
      %v6045 = vrot.slane %v6043, 4
      %v6046 = vrot.slane %v5343, 5
      %v6047 = vsel %vm1981, %v6045, %v6046
      %v6048 = vrot.slane %v5969, 5
      %v6049 = vrot.slane %v6048, 4
      %v6050 = vrot.slane %v5332, 5
      %v6051 = vsel %vm1981, %v6049, %v6050
      %v6052 = vrot.slane %v6050, 4
      %v6053 = vrot.slane %v5344, 5
      %v6054 = vsel %vm1981, %v6052, %v6053
      %v6055 = vrot.slane %v5970, 5
      %v6056 = vrot.slane %v6055, 4
      %v6057 = vrot.slane %v5334, 5
      %v6058 = vsel %vm1981, %v6056, %v6057
      %v6059 = vrot.slane %v6057, 4
      %v6060 = vrot.slane %v5345, 5
      %v6061 = vsel %vm1981, %v6059, %v6060
      %v6062 = vunpack.c.l.b16 %v5995
      %v6063 = vunpack.c.l.b16 %v5998
      %v6064 = vunpack.c.l.b16 %v6002
      %v6065 = vunpack.c.l.b16 %v6005
      %v6066 = vunpack.c.l.b16 %v6009
      %v6067 = vunpack.c.l.b16 %v6012
      %v6068 = vunpack.c.l.b16 %v6016
      %v6069 = vunpack.c.l.b16 %v6019
      %v6070 = vunpack.c.l.b16 %v6023
      %v6071 = vunpack.c.l.b16 %v6026
      %v6072 = vunpack.c.l.b16 %v6030
      %v6073 = vunpack.c.l.b16 %v6033
      %v6074 = vunpack.c.l.b16 %v6037
      %v6075 = vunpack.c.l.b16 %v6040
      %v6076 = vunpack.c.l.b16 %v6044
      %v6077 = vunpack.c.l.b16 %v6047
      %v6078 = vunpack.c.l.b16 %v6051
      %v6079 = vunpack.c.l.b16 %v6054
      %v6080 = vunpack.c.l.b16 %v6058
      %v6081 = vunpack.c.l.b16 %v6061
      %v6082 = vpack.c.b16 %v6063, %v6062
      %v6083 = vpack.c.b16 %v6065, %v6064
      %v6084 = vpack.c.b16 %v6067, %v6066
      %v6085 = vpack.c.b16 %v6069, %v6068
      %v6086 = vpack.c.b16 %v6071, %v6070
      %v6087 = vpack.c.b16 %v6073, %v6072
      %v6088 = vpack.c.b16 %v6075, %v6074
      %v6089 = vpack.c.b16 %v6077, %v6076
      %v6090 = vpack.c.b16 %v6079, %v6078
      %v6091 = vpack.c.b16 %v6081, %v6080
      %v6093 = vsel %vm5617, %v6082, 0
      %v6096 = vsel %vm5617, %v6083, 0
      %v6099 = vsel %vm5617, %v6084, 0
      %v6102 = vsel %vm5617, %v6085, 0
      %v6105 = vsel %vm5617, %v6086, 0
      %v6108 = vsel %vm5617, %v6087, 0
      %v6111 = vsel %vm5617, %v6088, 0
      %v6114 = vsel %vm5617, %v6089, 0
      %v6117 = vsel %vm5617, %v6090, 0
      %v6120 = vsel %vm5617, %v6091, 0
      %v6123 = vsel %vm5648, %v5971, 0
      %6125 = vmatprep.subr.bf16.mxu0 0
      %6126 = vmatpush1.bf16.msra.mxu0 %v6123
      %6127 = vmatprep.subr.bf16.mxu0 0
      %6128 = vmatpush1.bf16.msra.mxu0 0
      %6129 = vmatprep.subr.bf16.mxu0 0
      %6130 = vmatpush1.bf16.msra.mxu0 0
      %6131 = vmatprep.subr.bf16.mxu0 0
      %6132 = vmatpush1.bf16.msra.mxu0 0
      %6133 = vmatprep.subr.bf16.mxu0 0
      %6134 = vmatpush1.bf16.msra.mxu0 0
      %6135 = vmatprep.subr.bf16.mxu0 0
      %6136 = vmatpush1.bf16.msra.mxu0 0
      %6137 = vmatprep.subr.bf16.mxu0 0
      %6138 = vmatpush1.bf16.msra.mxu0 0
      %6139 = vmatprep.subr.bf16.mxu0 0
      %6140 = vmatpush1.bf16.msra.mxu0 0
      %6141 = vmatprep.subr.bf16.mxu0 0
      %6142 = vmatpush1.bf16.msra.mxu0 0
      %6143 = vmatprep.subr.bf16.mxu0 0
      %6144 = vmatpush1.bf16.msra.mxu0 0
      %6145 = vmatprep.subr.bf16.mxu0 0
      %6146 = vmatpush1.bf16.msra.mxu0 0
      %6147 = vmatprep.subr.bf16.mxu0 0
      %6148 = vmatpush1.bf16.msra.mxu0 0
      %6149 = vmatprep.subr.bf16.mxu0 0
      %6150 = vmatpush1.bf16.msra.mxu0 0
      %6151 = vmatprep.subr.bf16.mxu0 0
      %6152 = vmatpush1.bf16.msra.mxu0 0
      %6153 = vmatprep.subr.bf16.mxu0 0
      %6154 = vmatpush1.bf16.msra.mxu0 0
      %6155 = vmatprep.subr.bf16.mxu0 0
      %6156 = vmatpush1.bf16.msra.mxu0 0
      %6157 = vmatprep.mubr.bf16.mxu0 0
      %6158 = vmatmul.mubr.bf16.gmra.mrb[0].mxu0 %v6093
      %v6159 = vpop.f32.mrb[0].mxu0
      %v6160 = vadd.f32 0.0, %v6159
      %v6161 = vpop.f32.mrb[0].mxu0
      %v6162 = vpop.f32.mrb[0].mxu0
      %v6163 = vadd.f32 0.0, %v6162
      %v6164 = vpop.f32.mrb[0].mxu0
      %6165 = vmatprep.mubr.bf16.mxu0 0
      %6166 = vmatmul.mubr.bf16.gmra.mrb[0].mxu0 %v6096
      %v6167 = vpop.f32.mrb[0].mxu0
      %v6168 = vadd.f32 0.0, %v6167
      %v6169 = vpop.f32.mrb[0].mxu0
      %v6170 = vpop.f32.mrb[0].mxu0
      %v6171 = vadd.f32 0.0, %v6170
      %v6172 = vpop.f32.mrb[0].mxu0
      %6173 = vmatprep.mubr.bf16.mxu0 0
      %6174 = vmatmul.mubr.bf16.gmra.mrb[0].mxu0 %v6099
      %v6175 = vpop.f32.mrb[0].mxu0
      %v6176 = vadd.f32 0.0, %v6175
      %v6177 = vpop.f32.mrb[0].mxu0
      %v6178 = vpop.f32.mrb[0].mxu0
      %v6179 = vadd.f32 0.0, %v6178
      %v6180 = vpop.f32.mrb[0].mxu0
      %6181 = vmatprep.mubr.bf16.mxu0 0
      %6182 = vmatmul.mubr.bf16.gmra.mrb[0].mxu0 %v6102
      %v6183 = vpop.f32.mrb[0].mxu0
      %v6184 = vadd.f32 0.0, %v6183
      %v6185 = vpop.f32.mrb[0].mxu0
      %v6186 = vpop.f32.mrb[0].mxu0
      %v6187 = vadd.f32 0.0, %v6186
      %v6188 = vpop.f32.mrb[0].mxu0
      %6189 = vmatprep.mubr.bf16.mxu0 0
      %6190 = vmatmul.mubr.bf16.gmra.mrb[0].mxu0 %v6105
      %v6191 = vpop.f32.mrb[0].mxu0
      %v6192 = vadd.f32 0.0, %v6191
      %v6193 = vpop.f32.mrb[0].mxu0
      %v6194 = vpop.f32.mrb[0].mxu0
      %v6195 = vadd.f32 0.0, %v6194
      %v6196 = vpop.f32.mrb[0].mxu0
      %6197 = vmatprep.mubr.bf16.mxu0 0
      %6198 = vmatmul.mubr.bf16.gmra.mrb[0].mxu0 %v6108
      %v6199 = vpop.f32.mrb[0].mxu0
      %v6200 = vadd.f32 0.0, %v6199
      %v6201 = vpop.f32.mrb[0].mxu0
      %v6202 = vpop.f32.mrb[0].mxu0
      %v6203 = vadd.f32 0.0, %v6202
      %v6204 = vpop.f32.mrb[0].mxu0
      %6205 = vmatprep.mubr.bf16.mxu0 0
      %6206 = vmatmul.mubr.bf16.gmra.mrb[0].mxu0 %v6111
      %v6207 = vpop.f32.mrb[0].mxu0
      %v6208 = vadd.f32 0.0, %v6207
      %v6209 = vpop.f32.mrb[0].mxu0
      %v6210 = vpop.f32.mrb[0].mxu0
      %v6211 = vadd.f32 0.0, %v6210
      %v6212 = vpop.f32.mrb[0].mxu0
      %6213 = vmatprep.mubr.bf16.mxu0 0
      %6214 = vmatmul.mubr.bf16.gmra.mrb[0].mxu0 %v6114
      %v6215 = vpop.f32.mrb[0].mxu0
      %v6216 = vadd.f32 0.0, %v6215
      %v6217 = vpop.f32.mrb[0].mxu0
      %v6218 = vpop.f32.mrb[0].mxu0
      %v6219 = vadd.f32 0.0, %v6218
      %v6220 = vpop.f32.mrb[0].mxu0
      %6221 = vmatprep.mubr.bf16.mxu0 0
      %6222 = vmatmul.mubr.bf16.gmra.mrb[0].mxu0 %v6117
      %v6223 = vpop.f32.mrb[0].mxu0
      %v6224 = vadd.f32 0.0, %v6223
      %v6225 = vpop.f32.mrb[0].mxu0
      %v6226 = vpop.f32.mrb[0].mxu0
      %v6227 = vadd.f32 0.0, %v6226
      %v6228 = vpop.f32.mrb[0].mxu0
      %6229 = vmatprep.mubr.bf16.mxu0 0
      %6230 = vmatmul.mubr.bf16.gmra.mrb[0].mxu0 %v6120
      %v6231 = vpop.f32.mrb[0].mxu0
      %v6232 = vadd.f32 0.0, %v6231
      %v6233 = vpop.f32.mrb[0].mxu0
      %v6234 = vpop.f32.mrb[0].mxu0
      %v6235 = vadd.f32 0.0, %v6234
      %v6236 = vpop.f32.mrb[0].mxu0
      %6237 = vdwg.mxu0
      %v6238 = vadd.f32 %v5883, %v6160
      %v6239 = vadd.f32 %v5886, %v6163
      %v6240 = vadd.f32 %v5891, %v6168
      %v6241 = vadd.f32 %v5894, %v6171
      %v6242 = vadd.f32 %v5899, %v6176
      %v6243 = vadd.f32 %v5902, %v6179
      %v6244 = vadd.f32 %v5907, %v6184
      %v6245 = vadd.f32 %v5910, %v6187
      %v6246 = vadd.f32 %v5915, %v6192
      %v6247 = vadd.f32 %v5918, %v6195
      %v6248 = vadd.f32 %v5923, %v6200
      %v6249 = vadd.f32 %v5926, %v6203
      %v6250 = vadd.f32 %v5931, %v6208
      %v6251 = vadd.f32 %v5934, %v6211
      %v6252 = vadd.f32 %v5939, %v6216
      %v6253 = vadd.f32 %v5942, %v6219
      %v6254 = vadd.f32 %v5947, %v6224
      %v6255 = vadd.f32 %v5950, %v6227
      %v6256 = vadd.f32 %v5955, %v6232
      %v6257 = vadd.f32 %v5958, %v6235
      %v6258 = vld [vmem:[%s3494] sm:$0xf]
      %v6259 = vld [vmem:[%s3494 + $0x4] sm:$0xf]
      %v6260 = vld [vmem:[%s3494 + $0xc] sm:$0xf]
      %v6261 = vld [vmem:[%s3494 + $0x10] sm:$0xf]
      %v6262 = vld [vmem:[%s3494 + $0x18] sm:$0xf]
      %v6263 = vld [vmem:[%s3494 + $0x1c] sm:$0xf]
      %v6264 = vld [vmem:[%s3494 + $0x24] sm:$0xf]
      %v6265 = vld [vmem:[%s3494 + $0x28] sm:$0xf]
      %v6266 = vld [vmem:[%s3494 + $0x30] sm:$0xf]
      %v6267 = vld [vmem:[%s3494 + $0x34] sm:$0xf]
      %v6268 = vld [vmem:[%s3494 + $0x3c] sm:$0xf]
      %v6269 = vld [vmem:[%s3494 + $0x40] sm:$0xf]
      %v6270 = vld [vmem:[%s3494 + $0x48] sm:$0xf]
      %v6271 = vld [vmem:[%s3494 + $0x4c] sm:$0xf]
      %v6272 = vld [vmem:[%s3494 + $0x54] sm:$0xf]
      %v6273 = vld [vmem:[%s3494 + $0x58] sm:$0xf]
      %v6274 = vld [vmem:[%s3494 + $0x60] sm:$0xf]
      %v6275 = vld [vmem:[%s3494 + $0x64] sm:$0xf]
      %v6276 = vld [vmem:[%s3494 + $0x6c] sm:$0xf]
      %v6277 = vld [vmem:[%s3494 + $0x70] sm:$0xf]
      %v6278 = vld [vmem:[%s5 + $0xc] sm:$0xf]
      %v6299 = vunpack.c.l.b16 %v6258
      %v6300 = vunpack.c.l.b16 %v6259
      %v6301 = vunpack.c.l.b16 %v6260
      %v6302 = vunpack.c.l.b16 %v6261
      %v6303 = vunpack.c.l.b16 %v6262
      %v6304 = vunpack.c.l.b16 %v6263
      %v6305 = vunpack.c.l.b16 %v6264
      %v6306 = vunpack.c.l.b16 %v6265
      %v6307 = vunpack.c.l.b16 %v6266
      %v6308 = vunpack.c.l.b16 %v6267
      %v6309 = vunpack.c.l.b16 %v6268
      %v6310 = vunpack.c.l.b16 %v6269
      %v6311 = vunpack.c.l.b16 %v6270
      %v6312 = vunpack.c.l.b16 %v6271
      %v6313 = vunpack.c.l.b16 %v6272
      %v6314 = vunpack.c.l.b16 %v6273
      %v6315 = vunpack.c.l.b16 %v6274
      %v6316 = vunpack.c.l.b16 %v6275
      %v6317 = vunpack.c.l.b16 %v6276
      %v6318 = vunpack.c.l.b16 %v6277
      %v6319 = vpack.c.b16 %v6300, %v6299
      %v6320 = vpack.c.b16 %v6302, %v6301
      %v6321 = vpack.c.b16 %v6304, %v6303
      %v6322 = vpack.c.b16 %v6306, %v6305
      %v6323 = vpack.c.b16 %v6308, %v6307
      %v6324 = vpack.c.b16 %v6310, %v6309
      %v6325 = vpack.c.b16 %v6312, %v6311
      %v6326 = vpack.c.b16 %v6314, %v6313
      %v6327 = vpack.c.b16 %v6316, %v6315
      %v6328 = vpack.c.b16 %v6318, %v6317
      %v6330 = vsel %vm5617, %v6319, 0
      %v6333 = vsel %vm5617, %v6320, 0
      %v6336 = vsel %vm5617, %v6321, 0
      %v6339 = vsel %vm5617, %v6322, 0
      %v6342 = vsel %vm5617, %v6323, 0
      %v6345 = vsel %vm5617, %v6324, 0
      %v6348 = vsel %vm5617, %v6325, 0
      %v6351 = vsel %vm5617, %v6326, 0
      %v6354 = vsel %vm5617, %v6327, 0
      %v6357 = vsel %vm5617, %v6328, 0
      %v6360 = vsel %vm5648, %v6278, 0
      %6362 = vmatprep.subr.bf16.mxu0 0
      %6363 = vmatpush1.bf16.msra.mxu0 %v6360
      %6364 = vmatprep.subr.bf16.mxu0 0
      %6365 = vmatpush1.bf16.msra.mxu0 0
      %6366 = vmatprep.subr.bf16.mxu0 0
      %6367 = vmatpush1.bf16.msra.mxu0 0
      %6368 = vmatprep.subr.bf16.mxu0 0
      %6369 = vmatpush1.bf16.msra.mxu0 0
      %6370 = vmatprep.subr.bf16.mxu0 0
      %6371 = vmatpush1.bf16.msra.mxu0 0
      %6372 = vmatprep.subr.bf16.mxu0 0
      %6373 = vmatpush1.bf16.msra.mxu0 0
      %6374 = vmatprep.subr.bf16.mxu0 0
      %6375 = vmatpush1.bf16.msra.mxu0 0
      %6376 = vmatprep.subr.bf16.mxu0 0
      %6377 = vmatpush1.bf16.msra.mxu0 0
      %6378 = vmatprep.subr.bf16.mxu0 0
      %6379 = vmatpush1.bf16.msra.mxu0 0
      %6380 = vmatprep.subr.bf16.mxu0 0
      %6381 = vmatpush1.bf16.msra.mxu0 0
      %6382 = vmatprep.subr.bf16.mxu0 0
      %6383 = vmatpush1.bf16.msra.mxu0 0
      %6384 = vmatprep.subr.bf16.mxu0 0
      %6385 = vmatpush1.bf16.msra.mxu0 0
      %6386 = vmatprep.subr.bf16.mxu0 0
      %6387 = vmatpush1.bf16.msra.mxu0 0
      %6388 = vmatprep.subr.bf16.mxu0 0
      %6389 = vmatpush1.bf16.msra.mxu0 0
      %6390 = vmatprep.subr.bf16.mxu0 0
      %6391 = vmatpush1.bf16.msra.mxu0 0
      %6392 = vmatprep.subr.bf16.mxu0 0
      %6393 = vmatpush1.bf16.msra.mxu0 0
      %6394 = vmatprep.mubr.bf16.mxu0 0
      %6395 = vmatmul.mubr.bf16.gmra.mrb[0].mxu0 %v6330
      %v6396 = vpop.f32.mrb[0].mxu0
      %v6397 = vadd.f32 0.0, %v6396
      %v6398 = vpop.f32.mrb[0].mxu0
      %v6399 = vpop.f32.mrb[0].mxu0
      %v6400 = vadd.f32 0.0, %v6399
      %v6401 = vpop.f32.mrb[0].mxu0
      %6402 = vmatprep.mubr.bf16.mxu0 0
      %6403 = vmatmul.mubr.bf16.gmra.mrb[0].mxu0 %v6333
      %v6404 = vpop.f32.mrb[0].mxu0
      %v6405 = vadd.f32 0.0, %v6404
      %v6406 = vpop.f32.mrb[0].mxu0
      %v6407 = vpop.f32.mrb[0].mxu0
      %v6408 = vadd.f32 0.0, %v6407
      %v6409 = vpop.f32.mrb[0].mxu0
      %6410 = vmatprep.mubr.bf16.mxu0 0
      %6411 = vmatmul.mubr.bf16.gmra.mrb[0].mxu0 %v6336
      %v6412 = vpop.f32.mrb[0].mxu0
      %v6413 = vadd.f32 0.0, %v6412
      %v6414 = vpop.f32.mrb[0].mxu0
      %v6415 = vpop.f32.mrb[0].mxu0
      %v6416 = vadd.f32 0.0, %v6415
      %v6417 = vpop.f32.mrb[0].mxu0
      %6418 = vmatprep.mubr.bf16.mxu0 0
      %6419 = vmatmul.mubr.bf16.gmra.mrb[0].mxu0 %v6339
      %v6420 = vpop.f32.mrb[0].mxu0
      %v6421 = vadd.f32 0.0, %v6420
      %v6422 = vpop.f32.mrb[0].mxu0
      %v6423 = vpop.f32.mrb[0].mxu0
      %v6424 = vadd.f32 0.0, %v6423
      %v6425 = vpop.f32.mrb[0].mxu0
      %6426 = vmatprep.mubr.bf16.mxu0 0
      %6427 = vmatmul.mubr.bf16.gmra.mrb[0].mxu0 %v6342
      %v6428 = vpop.f32.mrb[0].mxu0
      %v6429 = vadd.f32 0.0, %v6428
      %v6430 = vpop.f32.mrb[0].mxu0
      %v6431 = vpop.f32.mrb[0].mxu0
      %v6432 = vadd.f32 0.0, %v6431
      %v6433 = vpop.f32.mrb[0].mxu0
      %6434 = vmatprep.mubr.bf16.mxu0 0
      %6435 = vmatmul.mubr.bf16.gmra.mrb[0].mxu0 %v6345
      %v6436 = vpop.f32.mrb[0].mxu0
      %v6437 = vadd.f32 0.0, %v6436
      %v6438 = vpop.f32.mrb[0].mxu0
      %v6439 = vpop.f32.mrb[0].mxu0
      %v6440 = vadd.f32 0.0, %v6439
      %v6441 = vpop.f32.mrb[0].mxu0
      %6442 = vmatprep.mubr.bf16.mxu0 0
      %6443 = vmatmul.mubr.bf16.gmra.mrb[0].mxu0 %v6348
      %v6444 = vpop.f32.mrb[0].mxu0
      %v6445 = vadd.f32 0.0, %v6444
      %v6446 = vpop.f32.mrb[0].mxu0
      %v6447 = vpop.f32.mrb[0].mxu0
      %v6448 = vadd.f32 0.0, %v6447
      %v6449 = vpop.f32.mrb[0].mxu0
      %6450 = vmatprep.mubr.bf16.mxu0 0
      %6451 = vmatmul.mubr.bf16.gmra.mrb[0].mxu0 %v6351
      %v6452 = vpop.f32.mrb[0].mxu0
      %v6453 = vadd.f32 0.0, %v6452
      %v6454 = vpop.f32.mrb[0].mxu0
      %v6455 = vpop.f32.mrb[0].mxu0
      %v6456 = vadd.f32 0.0, %v6455
      %v6457 = vpop.f32.mrb[0].mxu0
      %6458 = vmatprep.mubr.bf16.mxu0 0
      %6459 = vmatmul.mubr.bf16.gmra.mrb[0].mxu0 %v6354
      %v6460 = vpop.f32.mrb[0].mxu0
      %v6461 = vadd.f32 0.0, %v6460
      %v6462 = vpop.f32.mrb[0].mxu0
      %v6463 = vpop.f32.mrb[0].mxu0
      %v6464 = vadd.f32 0.0, %v6463
      %v6465 = vpop.f32.mrb[0].mxu0
      %6466 = vmatprep.mubr.bf16.mxu0 0
      %6467 = vmatmul.mubr.bf16.gmra.mrb[0].mxu0 %v6357
      %v6468 = vpop.f32.mrb[0].mxu0
      %v6469 = vadd.f32 0.0, %v6468
      %v6470 = vpop.f32.mrb[0].mxu0
      %v6471 = vpop.f32.mrb[0].mxu0
      %v6472 = vadd.f32 0.0, %v6471
      %v6473 = vpop.f32.mrb[0].mxu0
      %6474 = vdwg.mxu0
      %v6475 = vadd.f32 %v6238, %v6397
      %v6476 = vadd.f32 %v6239, %v6400
      %v6477 = vadd.f32 %v6240, %v6405
      %v6478 = vadd.f32 %v6241, %v6408
      %v6479 = vadd.f32 %v6242, %v6413
      %v6480 = vadd.f32 %v6243, %v6416
      %v6481 = vadd.f32 %v6244, %v6421
      %v6482 = vadd.f32 %v6245, %v6424
      %v6483 = vadd.f32 %v6246, %v6429
      %v6484 = vadd.f32 %v6247, %v6432
      %v6485 = vadd.f32 %v6248, %v6437
      %v6486 = vadd.f32 %v6249, %v6440
      %v6487 = vadd.f32 %v6250, %v6445
      %v6488 = vadd.f32 %v6251, %v6448
      %v6489 = vadd.f32 %v6252, %v6453
      %v6490 = vadd.f32 %v6253, %v6456
      %v6491 = vadd.f32 %v6254, %v6461
      %v6492 = vadd.f32 %v6255, %v6464
      %v6493 = vadd.f32 %v6256, %v6469
      %v6494 = vadd.f32 %v6257, %v6472
      %v6495 = vld [vmem:[%s3494] sm:$0xf]
      %v6496 = vld [vmem:[%s3494 + $0x4] sm:$0xf]
      %v6497 = vld [vmem:[%s3494 + $0x8] sm:$0x1]
      %v6498 = vld [vmem:[%s3494 + $0xc] sm:$0xf]
      %v6499 = vld [vmem:[%s3494 + $0x10] sm:$0xf]
      %v6500 = vld [vmem:[%s3494 + $0x14] sm:$0x1]
      %v6501 = vld [vmem:[%s3494 + $0x18] sm:$0xf]
      %v6502 = vld [vmem:[%s3494 + $0x1c] sm:$0xf]
      %v6503 = vld [vmem:[%s3494 + $0x20] sm:$0x1]
      %v6504 = vld [vmem:[%s3494 + $0x24] sm:$0xf]
      %v6505 = vld [vmem:[%s3494 + $0x28] sm:$0xf]
      %v6506 = vld [vmem:[%s3494 + $0x2c] sm:$0x1]
      %v6507 = vld [vmem:[%s3494 + $0x30] sm:$0xf]
      %v6508 = vld [vmem:[%s3494 + $0x34] sm:$0xf]
      %v6509 = vld [vmem:[%s3494 + $0x38] sm:$0x1]
      %v6510 = vld [vmem:[%s3494 + $0x3c] sm:$0xf]
      %v6511 = vld [vmem:[%s3494 + $0x40] sm:$0xf]
      %v6512 = vld [vmem:[%s3494 + $0x44] sm:$0x1]
      %v6513 = vld [vmem:[%s3494 + $0x48] sm:$0xf]
      %v6514 = vld [vmem:[%s3494 + $0x4c] sm:$0xf]
      %v6515 = vld [vmem:[%s3494 + $0x50] sm:$0x1]
      %v6516 = vld [vmem:[%s3494 + $0x54] sm:$0xf]
      %v6517 = vld [vmem:[%s3494 + $0x58] sm:$0xf]
      %v6518 = vld [vmem:[%s3494 + $0x5c] sm:$0x1]
      %v6519 = vld [vmem:[%s3494 + $0x60] sm:$0xf]
      %v6520 = vld [vmem:[%s3494 + $0x64] sm:$0xf]
      %v6521 = vld [vmem:[%s3494 + $0x68] sm:$0x1]
      %v6522 = vld [vmem:[%s3494 + $0x6c] sm:$0xf]
      %v6523 = vld [vmem:[%s3494 + $0x70] sm:$0xf]
      %v6524 = vld [vmem:[%s3494 + $0x74] sm:$0x1]
      %v6525 = vld [vmem:[%s5 + $0x10] sm:$0xf]
      %v6527 = vshrl.u32 %v6495, 16
      %v6529 = vrot.slane %v6527, 4
      %v6530 = vshll.u32 %v6495, 16
      %v6532 = vrot.slane %v6530, 5
      %v6533 = vor.u32 %v6529, %v6532
      %v6534 = vrot.slane %v6533, 4
      %v6536 = vshll.u32 %v6496, 16
      %v6538 = vrot.slane %v6536, 5
      %v6539 = vsel %vm1215, %v6534, %v6538
      %v6540 = vshrl.u32 %v6496, 16
      %v6542 = vrot.slane %v6540, 4
      %v6543 = vor.u32 %v6542, %v6538
      %v6544 = vrot.slane %v6543, 4
      %v6546 = vshll.u32 %v6497, 16
      %v6548 = vrot.slane %v6546, 5
      %v6549 = vsel %vm1215, %v6544, %v6548
      %v6551 = vshrl.u32 %v6498, 16
      %v6553 = vrot.slane %v6551, 4
      %v6554 = vshll.u32 %v6498, 16
      %v6556 = vrot.slane %v6554, 5
      %v6557 = vor.u32 %v6553, %v6556
      %v6558 = vrot.slane %v6557, 4
      %v6560 = vshll.u32 %v6499, 16
      %v6562 = vrot.slane %v6560, 5
      %v6563 = vsel %vm1215, %v6558, %v6562
      %v6564 = vshrl.u32 %v6499, 16
      %v6566 = vrot.slane %v6564, 4
      %v6567 = vor.u32 %v6566, %v6562
      %v6568 = vrot.slane %v6567, 4
      %v6570 = vshll.u32 %v6500, 16
      %v6572 = vrot.slane %v6570, 5
      %v6573 = vsel %vm1215, %v6568, %v6572
      %v6575 = vshrl.u32 %v6501, 16
      %v6577 = vrot.slane %v6575, 4
      %v6578 = vshll.u32 %v6501, 16
      %v6580 = vrot.slane %v6578, 5
      %v6581 = vor.u32 %v6577, %v6580
      %v6582 = vrot.slane %v6581, 4
      %v6584 = vshll.u32 %v6502, 16
      %v6586 = vrot.slane %v6584, 5
      %v6587 = vsel %vm1215, %v6582, %v6586
      %v6588 = vshrl.u32 %v6502, 16
      %v6590 = vrot.slane %v6588, 4
      %v6591 = vor.u32 %v6590, %v6586
      %v6592 = vrot.slane %v6591, 4
      %v6594 = vshll.u32 %v6503, 16
      %v6596 = vrot.slane %v6594, 5
      %v6597 = vsel %vm1215, %v6592, %v6596
      %v6599 = vshrl.u32 %v6504, 16
      %v6601 = vrot.slane %v6599, 4
      %v6602 = vshll.u32 %v6504, 16
      %v6604 = vrot.slane %v6602, 5
      %v6605 = vor.u32 %v6601, %v6604
      %v6606 = vrot.slane %v6605, 4
      %v6608 = vshll.u32 %v6505, 16
      %v6610 = vrot.slane %v6608, 5
      %v6611 = vsel %vm1215, %v6606, %v6610
      %v6612 = vshrl.u32 %v6505, 16
      %v6614 = vrot.slane %v6612, 4
      %v6615 = vor.u32 %v6614, %v6610
      %v6616 = vrot.slane %v6615, 4
      %v6618 = vshll.u32 %v6506, 16
      %v6620 = vrot.slane %v6618, 5
      %v6621 = vsel %vm1215, %v6616, %v6620
      %v6623 = vshrl.u32 %v6507, 16
      %v6625 = vrot.slane %v6623, 4
      %v6626 = vshll.u32 %v6507, 16
      %v6628 = vrot.slane %v6626, 5
      %v6629 = vor.u32 %v6625, %v6628
      %v6630 = vrot.slane %v6629, 4
      %v6632 = vshll.u32 %v6508, 16
      %v6634 = vrot.slane %v6632, 5
      %v6635 = vsel %vm1215, %v6630, %v6634
      %v6636 = vshrl.u32 %v6508, 16
      %v6638 = vrot.slane %v6636, 4
      %v6639 = vor.u32 %v6638, %v6634
      %v6640 = vrot.slane %v6639, 4
      %v6642 = vshll.u32 %v6509, 16
      %v6644 = vrot.slane %v6642, 5
      %v6645 = vsel %vm1215, %v6640, %v6644
      %v6647 = vshrl.u32 %v6510, 16
      %v6649 = vrot.slane %v6647, 4
      %v6650 = vshll.u32 %v6510, 16
      %v6652 = vrot.slane %v6650, 5
      %v6653 = vor.u32 %v6649, %v6652
      %v6654 = vrot.slane %v6653, 4
      %v6656 = vshll.u32 %v6511, 16
      %v6658 = vrot.slane %v6656, 5
      %v6659 = vsel %vm1215, %v6654, %v6658
      %v6660 = vshrl.u32 %v6511, 16
      %v6662 = vrot.slane %v6660, 4
      %v6663 = vor.u32 %v6662, %v6658
      %v6664 = vrot.slane %v6663, 4
      %v6666 = vshll.u32 %v6512, 16
      %v6668 = vrot.slane %v6666, 5
      %v6669 = vsel %vm1215, %v6664, %v6668
      %v6671 = vshrl.u32 %v6513, 16
      %v6673 = vrot.slane %v6671, 4
      %v6674 = vshll.u32 %v6513, 16
      %v6676 = vrot.slane %v6674, 5
      %v6677 = vor.u32 %v6673, %v6676
      %v6678 = vrot.slane %v6677, 4
      %v6680 = vshll.u32 %v6514, 16
      %v6682 = vrot.slane %v6680, 5
      %v6683 = vsel %vm1215, %v6678, %v6682
      %v6684 = vshrl.u32 %v6514, 16
      %v6686 = vrot.slane %v6684, 4
      %v6687 = vor.u32 %v6686, %v6682
      %v6688 = vrot.slane %v6687, 4
      %v6690 = vshll.u32 %v6515, 16
      %v6692 = vrot.slane %v6690, 5
      %v6693 = vsel %vm1215, %v6688, %v6692
      %v6695 = vshrl.u32 %v6516, 16
      %v6697 = vrot.slane %v6695, 4
      %v6698 = vshll.u32 %v6516, 16
      %v6700 = vrot.slane %v6698, 5
      %v6701 = vor.u32 %v6697, %v6700
      %v6702 = vrot.slane %v6701, 4
      %v6704 = vshll.u32 %v6517, 16
      %v6706 = vrot.slane %v6704, 5
      %v6707 = vsel %vm1215, %v6702, %v6706
      %v6708 = vshrl.u32 %v6517, 16
      %v6710 = vrot.slane %v6708, 4
      %v6711 = vor.u32 %v6710, %v6706
      %v6712 = vrot.slane %v6711, 4
      %v6714 = vshll.u32 %v6518, 16
      %v6716 = vrot.slane %v6714, 5
      %v6717 = vsel %vm1215, %v6712, %v6716
      %v6719 = vshrl.u32 %v6519, 16
      %v6721 = vrot.slane %v6719, 4
      %v6722 = vshll.u32 %v6519, 16
      %v6724 = vrot.slane %v6722, 5
      %v6725 = vor.u32 %v6721, %v6724
      %v6726 = vrot.slane %v6725, 4
      %v6728 = vshll.u32 %v6520, 16
      %v6730 = vrot.slane %v6728, 5
      %v6731 = vsel %vm1215, %v6726, %v6730
      %v6732 = vshrl.u32 %v6520, 16
      %v6734 = vrot.slane %v6732, 4
      %v6735 = vor.u32 %v6734, %v6730
      %v6736 = vrot.slane %v6735, 4
      %v6738 = vshll.u32 %v6521, 16
      %v6740 = vrot.slane %v6738, 5
      %v6741 = vsel %vm1215, %v6736, %v6740
      %v6743 = vshrl.u32 %v6522, 16
      %v6745 = vrot.slane %v6743, 4
      %v6746 = vshll.u32 %v6522, 16
      %v6748 = vrot.slane %v6746, 5
      %v6749 = vor.u32 %v6745, %v6748
      %v6750 = vrot.slane %v6749, 4
      %v6752 = vshll.u32 %v6523, 16
      %v6754 = vrot.slane %v6752, 5
      %v6755 = vsel %vm1215, %v6750, %v6754
      %v6756 = vshrl.u32 %v6523, 16
      %v6758 = vrot.slane %v6756, 4
      %v6759 = vor.u32 %v6758, %v6754
      %v6760 = vrot.slane %v6759, 4
      %v6762 = vshll.u32 %v6524, 16
      %v6764 = vrot.slane %v6762, 5
      %v6765 = vsel %vm1215, %v6760, %v6764
      %v6766 = vunpack.c.l.b16 %v6539
      %v6767 = vunpack.c.l.b16 %v6549
      %v6768 = vunpack.c.l.b16 %v6563
      %v6769 = vunpack.c.l.b16 %v6573
      %v6770 = vunpack.c.l.b16 %v6587
      %v6771 = vunpack.c.l.b16 %v6597
      %v6772 = vunpack.c.l.b16 %v6611
      %v6773 = vunpack.c.l.b16 %v6621
      %v6774 = vunpack.c.l.b16 %v6635
      %v6775 = vunpack.c.l.b16 %v6645
      %v6776 = vunpack.c.l.b16 %v6659
      %v6777 = vunpack.c.l.b16 %v6669
      %v6778 = vunpack.c.l.b16 %v6683
      %v6779 = vunpack.c.l.b16 %v6693
      %v6780 = vunpack.c.l.b16 %v6707
      %v6781 = vunpack.c.l.b16 %v6717
      %v6782 = vunpack.c.l.b16 %v6731
      %v6783 = vunpack.c.l.b16 %v6741
      %v6784 = vunpack.c.l.b16 %v6755
      %v6785 = vunpack.c.l.b16 %v6765
      %v6786 = vpack.c.b16 %v6767, %v6766
      %v6787 = vpack.c.b16 %v6769, %v6768
      %v6788 = vpack.c.b16 %v6771, %v6770
      %v6789 = vpack.c.b16 %v6773, %v6772
      %v6790 = vpack.c.b16 %v6775, %v6774
      %v6791 = vpack.c.b16 %v6777, %v6776
      %v6792 = vpack.c.b16 %v6779, %v6778
      %v6793 = vpack.c.b16 %v6781, %v6780
      %v6794 = vpack.c.b16 %v6783, %v6782
      %v6795 = vpack.c.b16 %v6785, %v6784
      %v6797 = vsel %vm5617, %v6786, 0
      %v6800 = vsel %vm5617, %v6787, 0
      %v6803 = vsel %vm5617, %v6788, 0
      %v6806 = vsel %vm5617, %v6789, 0
      %v6809 = vsel %vm5617, %v6790, 0
      %v6812 = vsel %vm5617, %v6791, 0
      %v6815 = vsel %vm5617, %v6792, 0
      %v6818 = vsel %vm5617, %v6793, 0
      %v6821 = vsel %vm5617, %v6794, 0
      %v6824 = vsel %vm5617, %v6795, 0
      %v6827 = vsel %vm5648, %v6525, 0
      %6829 = vmatprep.subr.bf16.mxu0 0
      %6830 = vmatpush1.bf16.msra.mxu0 %v6827
      %6831 = vmatprep.subr.bf16.mxu0 0
      %6832 = vmatpush1.bf16.msra.mxu0 0
      %6833 = vmatprep.subr.bf16.mxu0 0
      %6834 = vmatpush1.bf16.msra.mxu0 0
      %6835 = vmatprep.subr.bf16.mxu0 0
      %6836 = vmatpush1.bf16.msra.mxu0 0
      %6837 = vmatprep.subr.bf16.mxu0 0
      %6838 = vmatpush1.bf16.msra.mxu0 0
      %6839 = vmatprep.subr.bf16.mxu0 0
      %6840 = vmatpush1.bf16.msra.mxu0 0
      %6841 = vmatprep.subr.bf16.mxu0 0
      %6842 = vmatpush1.bf16.msra.mxu0 0
      %6843 = vmatprep.subr.bf16.mxu0 0
      %6844 = vmatpush1.bf16.msra.mxu0 0
      %6845 = vmatprep.subr.bf16.mxu0 0
      %6846 = vmatpush1.bf16.msra.mxu0 0
      %6847 = vmatprep.subr.bf16.mxu0 0
      %6848 = vmatpush1.bf16.msra.mxu0 0
      %6849 = vmatprep.subr.bf16.mxu0 0
      %6850 = vmatpush1.bf16.msra.mxu0 0
      %6851 = vmatprep.subr.bf16.mxu0 0
      %6852 = vmatpush1.bf16.msra.mxu0 0
      %6853 = vmatprep.subr.bf16.mxu0 0
      %6854 = vmatpush1.bf16.msra.mxu0 0
      %6855 = vmatprep.subr.bf16.mxu0 0
      %6856 = vmatpush1.bf16.msra.mxu0 0
      %6857 = vmatprep.subr.bf16.mxu0 0
      %6858 = vmatpush1.bf16.msra.mxu0 0
      %6859 = vmatprep.subr.bf16.mxu0 0
      %6860 = vmatpush1.bf16.msra.mxu0 0
      %6861 = vmatprep.mubr.bf16.mxu0 0
      %6862 = vmatmul.mubr.bf16.gmra.mrb[0].mxu0 %v6797
      %v6863 = vpop.f32.mrb[0].mxu0
      %v6864 = vadd.f32 0.0, %v6863
      %v6865 = vpop.f32.mrb[0].mxu0
      %v6866 = vpop.f32.mrb[0].mxu0
      %v6867 = vadd.f32 0.0, %v6866
      %v6868 = vpop.f32.mrb[0].mxu0
      %6869 = vmatprep.mubr.bf16.mxu0 0
      %6870 = vmatmul.mubr.bf16.gmra.mrb[0].mxu0 %v6800
      %v6871 = vpop.f32.mrb[0].mxu0
      %v6872 = vadd.f32 0.0, %v6871
      %v6873 = vpop.f32.mrb[0].mxu0
      %v6874 = vpop.f32.mrb[0].mxu0
      %v6875 = vadd.f32 0.0, %v6874
      %v6876 = vpop.f32.mrb[0].mxu0
      %6877 = vmatprep.mubr.bf16.mxu0 0
      %6878 = vmatmul.mubr.bf16.gmra.mrb[0].mxu0 %v6803
      %v6879 = vpop.f32.mrb[0].mxu0
      %v6880 = vadd.f32 0.0, %v6879
      %v6881 = vpop.f32.mrb[0].mxu0
      %v6882 = vpop.f32.mrb[0].mxu0
      %v6883 = vadd.f32 0.0, %v6882
      %v6884 = vpop.f32.mrb[0].mxu0
      %6885 = vmatprep.mubr.bf16.mxu0 0
      %6886 = vmatmul.mubr.bf16.gmra.mrb[0].mxu0 %v6806
      %v6887 = vpop.f32.mrb[0].mxu0
      %v6888 = vadd.f32 0.0, %v6887
      %v6889 = vpop.f32.mrb[0].mxu0
      %v6890 = vpop.f32.mrb[0].mxu0
      %v6891 = vadd.f32 0.0, %v6890
      %v6892 = vpop.f32.mrb[0].mxu0
      %6893 = vmatprep.mubr.bf16.mxu0 0
      %6894 = vmatmul.mubr.bf16.gmra.mrb[0].mxu0 %v6809
      %v6895 = vpop.f32.mrb[0].mxu0
      %v6896 = vadd.f32 0.0, %v6895
      %v6897 = vpop.f32.mrb[0].mxu0
      %v6898 = vpop.f32.mrb[0].mxu0
      %v6899 = vadd.f32 0.0, %v6898
      %v6900 = vpop.f32.mrb[0].mxu0
      %6901 = vmatprep.mubr.bf16.mxu0 0
      %6902 = vmatmul.mubr.bf16.gmra.mrb[0].mxu0 %v6812
      %v6903 = vpop.f32.mrb[0].mxu0
      %v6904 = vadd.f32 0.0, %v6903
      %v6905 = vpop.f32.mrb[0].mxu0
      %v6906 = vpop.f32.mrb[0].mxu0
      %v6907 = vadd.f32 0.0, %v6906
      %v6908 = vpop.f32.mrb[0].mxu0
      %6909 = vmatprep.mubr.bf16.mxu0 0
      %6910 = vmatmul.mubr.bf16.gmra.mrb[0].mxu0 %v6815
      %v6911 = vpop.f32.mrb[0].mxu0
      %v6912 = vadd.f32 0.0, %v6911
      %v6913 = vpop.f32.mrb[0].mxu0
      %v6914 = vpop.f32.mrb[0].mxu0
      %v6915 = vadd.f32 0.0, %v6914
      %v6916 = vpop.f32.mrb[0].mxu0
      %6917 = vmatprep.mubr.bf16.mxu0 0
      %6918 = vmatmul.mubr.bf16.gmra.mrb[0].mxu0 %v6818
      %v6919 = vpop.f32.mrb[0].mxu0
      %v6920 = vadd.f32 0.0, %v6919
      %v6921 = vpop.f32.mrb[0].mxu0
      %v6922 = vpop.f32.mrb[0].mxu0
      %v6923 = vadd.f32 0.0, %v6922
      %v6924 = vpop.f32.mrb[0].mxu0
      %6925 = vmatprep.mubr.bf16.mxu0 0
      %6926 = vmatmul.mubr.bf16.gmra.mrb[0].mxu0 %v6821
      %v6927 = vpop.f32.mrb[0].mxu0
      %v6928 = vadd.f32 0.0, %v6927
      %v6929 = vpop.f32.mrb[0].mxu0
      %v6930 = vpop.f32.mrb[0].mxu0
      %v6931 = vadd.f32 0.0, %v6930
      %v6932 = vpop.f32.mrb[0].mxu0
      %6933 = vmatprep.mubr.bf16.mxu0 0
      %6934 = vmatmul.mubr.bf16.gmra.mrb[0].mxu0 %v6824
      %v6935 = vpop.f32.mrb[0].mxu0
      %v6936 = vadd.f32 0.0, %v6935
      %v6937 = vpop.f32.mrb[0].mxu0
      %v6938 = vpop.f32.mrb[0].mxu0
      %v6939 = vadd.f32 0.0, %v6938
      %v6940 = vpop.f32.mrb[0].mxu0
      %6941 = vdwg.mxu0
      %v6942 = vadd.f32 %v6475, %v6864
      %v6943 = vadd.f32 %v6476, %v6867
      %v6944 = vadd.f32 %v6477, %v6872
      %v6945 = vadd.f32 %v6478, %v6875
      %v6946 = vadd.f32 %v6479, %v6880
      %v6947 = vadd.f32 %v6480, %v6883
      %v6948 = vadd.f32 %v6481, %v6888
      %v6949 = vadd.f32 %v6482, %v6891
      %v6950 = vadd.f32 %v6483, %v6896
      %v6951 = vadd.f32 %v6484, %v6899
      %v6952 = vadd.f32 %v6485, %v6904
      %v6953 = vadd.f32 %v6486, %v6907
      %v6954 = vadd.f32 %v6487, %v6912
      %v6955 = vadd.f32 %v6488, %v6915
      %v6956 = vadd.f32 %v6489, %v6920
      %v6957 = vadd.f32 %v6490, %v6923
      %v6958 = vadd.f32 %v6491, %v6928
      %v6959 = vadd.f32 %v6492, %v6931
      %v6960 = vadd.f32 %v6493, %v6936
      %v6961 = vadd.f32 %v6494, %v6939
      %v6962 = vld [vmem:[%s3494] sm:$0xe]
      %v6963 = vld [vmem:[%s3494 + $0xc] sm:$0xe]
      %v6964 = vld [vmem:[%s3494 + $0x18] sm:$0xe]
      %v6965 = vld [vmem:[%s3494 + $0x24] sm:$0xe]
      %v6966 = vld [vmem:[%s3494 + $0x30] sm:$0xe]
      %v6967 = vld [vmem:[%s3494 + $0x3c] sm:$0xe]
      %v6968 = vld [vmem:[%s3494 + $0x48] sm:$0xe]
      %v6969 = vld [vmem:[%s3494 + $0x54] sm:$0xe]
      %v6970 = vld [vmem:[%s3494 + $0x60] sm:$0xe]
      %v6971 = vld [vmem:[%s3494 + $0x6c] sm:$0xe]
      %v6972 = vld [vmem:[%s5 + $0x14] sm:$0xf]
      %v7003 = vrot.slane %v6962, 5
      %v7004 = vrot.slane %v7003, 4
      %v7005 = vrot.slane %v6496, 5
      %v7006 = vsel %vm1981, %v7004, %v7005
      %v7007 = vrot.slane %v7005, 4
      %v7008 = vrot.slane %v6497, 5
      %v7009 = vsel %vm1981, %v7007, %v7008
      %v7010 = vrot.slane %v6963, 5
      %v7011 = vrot.slane %v7010, 4
      %v7012 = vrot.slane %v6499, 5
      %v7013 = vsel %vm1981, %v7011, %v7012
      %v7014 = vrot.slane %v7012, 4
      %v7015 = vrot.slane %v6500, 5
      %v7016 = vsel %vm1981, %v7014, %v7015
      %v7017 = vrot.slane %v6964, 5
      %v7018 = vrot.slane %v7017, 4
      %v7019 = vrot.slane %v6502, 5
      %v7020 = vsel %vm1981, %v7018, %v7019
      %v7021 = vrot.slane %v7019, 4
      %v7022 = vrot.slane %v6503, 5
      %v7023 = vsel %vm1981, %v7021, %v7022
      %v7024 = vrot.slane %v6965, 5
      %v7025 = vrot.slane %v7024, 4
      %v7026 = vrot.slane %v6505, 5
      %v7027 = vsel %vm1981, %v7025, %v7026
      %v7028 = vrot.slane %v7026, 4
      %v7029 = vrot.slane %v6506, 5
      %v7030 = vsel %vm1981, %v7028, %v7029
      %v7031 = vrot.slane %v6966, 5
      %v7032 = vrot.slane %v7031, 4
      %v7033 = vrot.slane %v6508, 5
      %v7034 = vsel %vm1981, %v7032, %v7033
      %v7035 = vrot.slane %v7033, 4
      %v7036 = vrot.slane %v6509, 5
      %v7037 = vsel %vm1981, %v7035, %v7036
      %v7038 = vrot.slane %v6967, 5
      %v7039 = vrot.slane %v7038, 4
      %v7040 = vrot.slane %v6511, 5
      %v7041 = vsel %vm1981, %v7039, %v7040
      %v7042 = vrot.slane %v7040, 4
      %v7043 = vrot.slane %v6512, 5
      %v7044 = vsel %vm1981, %v7042, %v7043
      %v7045 = vrot.slane %v6968, 5
      %v7046 = vrot.slane %v7045, 4
      %v7047 = vrot.slane %v6514, 5
      %v7048 = vsel %vm1981, %v7046, %v7047
      %v7049 = vrot.slane %v7047, 4
      %v7050 = vrot.slane %v6515, 5
      %v7051 = vsel %vm1981, %v7049, %v7050
      %v7052 = vrot.slane %v6969, 5
      %v7053 = vrot.slane %v7052, 4
      %v7054 = vrot.slane %v6517, 5
      %v7055 = vsel %vm1981, %v7053, %v7054
      %v7056 = vrot.slane %v7054, 4
      %v7057 = vrot.slane %v6518, 5
      %v7058 = vsel %vm1981, %v7056, %v7057
      %v7059 = vrot.slane %v6970, 5
      %v7060 = vrot.slane %v7059, 4
      %v7061 = vrot.slane %v6520, 5
      %v7062 = vsel %vm1981, %v7060, %v7061
      %v7063 = vrot.slane %v7061, 4
      %v7064 = vrot.slane %v6521, 5
      %v7065 = vsel %vm1981, %v7063, %v7064
      %v7066 = vrot.slane %v6971, 5
      %v7067 = vrot.slane %v7066, 4
      %v7068 = vrot.slane %v6523, 5
      %v7069 = vsel %vm1981, %v7067, %v7068
      %v7070 = vrot.slane %v7068, 4
      %v7071 = vrot.slane %v6524, 5
      %v7072 = vsel %vm1981, %v7070, %v7071
      %v7073 = vunpack.c.l.b16 %v7006
      %v7074 = vunpack.c.l.b16 %v7009
      %v7075 = vunpack.c.l.b16 %v7013
      %v7076 = vunpack.c.l.b16 %v7016
      %v7077 = vunpack.c.l.b16 %v7020
      %v7078 = vunpack.c.l.b16 %v7023
      %v7079 = vunpack.c.l.b16 %v7027
      %v7080 = vunpack.c.l.b16 %v7030
      %v7081 = vunpack.c.l.b16 %v7034
      %v7082 = vunpack.c.l.b16 %v7037
      %v7083 = vunpack.c.l.b16 %v7041
      %v7084 = vunpack.c.l.b16 %v7044
      %v7085 = vunpack.c.l.b16 %v7048
      %v7086 = vunpack.c.l.b16 %v7051
      %v7087 = vunpack.c.l.b16 %v7055
      %v7088 = vunpack.c.l.b16 %v7058
      %v7089 = vunpack.c.l.b16 %v7062
      %v7090 = vunpack.c.l.b16 %v7065
      %v7091 = vunpack.c.l.b16 %v7069
      %v7092 = vunpack.c.l.b16 %v7072
      %v7093 = vpack.c.b16 %v7074, %v7073
      %v7094 = vpack.c.b16 %v7076, %v7075
      %v7095 = vpack.c.b16 %v7078, %v7077
      %v7096 = vpack.c.b16 %v7080, %v7079
      %v7097 = vpack.c.b16 %v7082, %v7081
      %v7098 = vpack.c.b16 %v7084, %v7083
      %v7099 = vpack.c.b16 %v7086, %v7085
      %v7100 = vpack.c.b16 %v7088, %v7087
      %v7101 = vpack.c.b16 %v7090, %v7089
      %v7102 = vpack.c.b16 %v7092, %v7091
      %v7104 = vsel %vm5617, %v7093, 0
      %v7107 = vsel %vm5617, %v7094, 0
      %v7110 = vsel %vm5617, %v7095, 0
      %v7113 = vsel %vm5617, %v7096, 0
      %v7116 = vsel %vm5617, %v7097, 0
      %v7119 = vsel %vm5617, %v7098, 0
      %v7122 = vsel %vm5617, %v7099, 0
      %v7125 = vsel %vm5617, %v7100, 0
      %v7128 = vsel %vm5617, %v7101, 0
      %v7131 = vsel %vm5617, %v7102, 0
      %v7134 = vsel %vm5648, %v6972, 0
      %7136 = vmatprep.subr.bf16.mxu0 0
      %7137 = vmatpush1.bf16.msra.mxu0 %v7134
      %7138 = vmatprep.subr.bf16.mxu0 0
      %7139 = vmatpush1.bf16.msra.mxu0 0
      %7140 = vmatprep.subr.bf16.mxu0 0
      %7141 = vmatpush1.bf16.msra.mxu0 0
      %7142 = vmatprep.subr.bf16.mxu0 0
      %7143 = vmatpush1.bf16.msra.mxu0 0
      %7144 = vmatprep.subr.bf16.mxu0 0
      %7145 = vmatpush1.bf16.msra.mxu0 0
      %7146 = vmatprep.subr.bf16.mxu0 0
      %7147 = vmatpush1.bf16.msra.mxu0 0
      %7148 = vmatprep.subr.bf16.mxu0 0
      %7149 = vmatpush1.bf16.msra.mxu0 0
      %7150 = vmatprep.subr.bf16.mxu0 0
      %7151 = vmatpush1.bf16.msra.mxu0 0
      %7152 = vmatprep.subr.bf16.mxu0 0
      %7153 = vmatpush1.bf16.msra.mxu0 0
      %7154 = vmatprep.subr.bf16.mxu0 0
      %7155 = vmatpush1.bf16.msra.mxu0 0
      %7156 = vmatprep.subr.bf16.mxu0 0
      %7157 = vmatpush1.bf16.msra.mxu0 0
      %7158 = vmatprep.subr.bf16.mxu0 0
      %7159 = vmatpush1.bf16.msra.mxu0 0
      %7160 = vmatprep.subr.bf16.mxu0 0
      %7161 = vmatpush1.bf16.msra.mxu0 0
      %7162 = vmatprep.subr.bf16.mxu0 0
      %7163 = vmatpush1.bf16.msra.mxu0 0
      %7164 = vmatprep.subr.bf16.mxu0 0
      %7165 = vmatpush1.bf16.msra.mxu0 0
      %7166 = vmatprep.subr.bf16.mxu0 0
      %7167 = vmatpush1.bf16.msra.mxu0 0
      %7168 = vmatprep.mubr.bf16.mxu0 0
      %7169 = vmatmul.mubr.bf16.gmra.mrb[0].mxu0 %v7104
      %v7170 = vpop.f32.mrb[0].mxu0
      %v7171 = vadd.f32 0.0, %v7170
      %v7172 = vpop.f32.mrb[0].mxu0
      %v7173 = vpop.f32.mrb[0].mxu0
      %v7174 = vadd.f32 0.0, %v7173
      %v7175 = vpop.f32.mrb[0].mxu0
      %7176 = vmatprep.mubr.bf16.mxu0 0
      %7177 = vmatmul.mubr.bf16.gmra.mrb[0].mxu0 %v7107
      %v7178 = vpop.f32.mrb[0].mxu0
      %v7179 = vadd.f32 0.0, %v7178
      %v7180 = vpop.f32.mrb[0].mxu0
      %v7181 = vpop.f32.mrb[0].mxu0
      %v7182 = vadd.f32 0.0, %v7181
      %v7183 = vpop.f32.mrb[0].mxu0
      %7184 = vmatprep.mubr.bf16.mxu0 0
      %7185 = vmatmul.mubr.bf16.gmra.mrb[0].mxu0 %v7110
      %v7186 = vpop.f32.mrb[0].mxu0
      %v7187 = vadd.f32 0.0, %v7186
      %v7188 = vpop.f32.mrb[0].mxu0
      %v7189 = vpop.f32.mrb[0].mxu0
      %v7190 = vadd.f32 0.0, %v7189
      %v7191 = vpop.f32.mrb[0].mxu0
      %7192 = vmatprep.mubr.bf16.mxu0 0
      %7193 = vmatmul.mubr.bf16.gmra.mrb[0].mxu0 %v7113
      %v7194 = vpop.f32.mrb[0].mxu0
      %v7195 = vadd.f32 0.0, %v7194
      %v7196 = vpop.f32.mrb[0].mxu0
      %v7197 = vpop.f32.mrb[0].mxu0
      %v7198 = vadd.f32 0.0, %v7197
      %v7199 = vpop.f32.mrb[0].mxu0
      %7200 = vmatprep.mubr.bf16.mxu0 0
      %7201 = vmatmul.mubr.bf16.gmra.mrb[0].mxu0 %v7116
      %v7202 = vpop.f32.mrb[0].mxu0
      %v7203 = vadd.f32 0.0, %v7202
      %v7204 = vpop.f32.mrb[0].mxu0
      %v7205 = vpop.f32.mrb[0].mxu0
      %v7206 = vadd.f32 0.0, %v7205
      %v7207 = vpop.f32.mrb[0].mxu0
      %7208 = vmatprep.mubr.bf16.mxu0 0
      %7209 = vmatmul.mubr.bf16.gmra.mrb[0].mxu0 %v7119
      %v7210 = vpop.f32.mrb[0].mxu0
      %v7211 = vadd.f32 0.0, %v7210
      %v7212 = vpop.f32.mrb[0].mxu0
      %v7213 = vpop.f32.mrb[0].mxu0
      %v7214 = vadd.f32 0.0, %v7213
      %v7215 = vpop.f32.mrb[0].mxu0
      %7216 = vmatprep.mubr.bf16.mxu0 0
      %7217 = vmatmul.mubr.bf16.gmra.mrb[0].mxu0 %v7122
      %v7218 = vpop.f32.mrb[0].mxu0
      %v7219 = vadd.f32 0.0, %v7218
      %v7220 = vpop.f32.mrb[0].mxu0
      %v7221 = vpop.f32.mrb[0].mxu0
      %v7222 = vadd.f32 0.0, %v7221
      %v7223 = vpop.f32.mrb[0].mxu0
      %7224 = vmatprep.mubr.bf16.mxu0 0
      %7225 = vmatmul.mubr.bf16.gmra.mrb[0].mxu0 %v7125
      %v7226 = vpop.f32.mrb[0].mxu0
      %v7227 = vadd.f32 0.0, %v7226
      %v7228 = vpop.f32.mrb[0].mxu0
      %v7229 = vpop.f32.mrb[0].mxu0
      %v7230 = vadd.f32 0.0, %v7229
      %v7231 = vpop.f32.mrb[0].mxu0
      %7232 = vmatprep.mubr.bf16.mxu0 0
      %7233 = vmatmul.mubr.bf16.gmra.mrb[0].mxu0 %v7128
      %v7234 = vpop.f32.mrb[0].mxu0
      %v7235 = vadd.f32 0.0, %v7234
      %v7236 = vpop.f32.mrb[0].mxu0
      %v7237 = vpop.f32.mrb[0].mxu0
      %v7238 = vadd.f32 0.0, %v7237
      %v7239 = vpop.f32.mrb[0].mxu0
      %7240 = vmatprep.mubr.bf16.mxu0 0
      %7241 = vmatmul.mubr.bf16.gmra.mrb[0].mxu0 %v7131
      %v7242 = vpop.f32.mrb[0].mxu0
      %v7243 = vadd.f32 0.0, %v7242
      %v7244 = vpop.f32.mrb[0].mxu0
      %v7245 = vpop.f32.mrb[0].mxu0
      %v7246 = vadd.f32 0.0, %v7245
      %v7247 = vpop.f32.mrb[0].mxu0
      %7248 = vdwg.mxu0
      %v7249 = vadd.f32 %v6942, %v7171
      %v7250 = vadd.f32 %v6943, %v7174
      %v7251 = vadd.f32 %v6944, %v7179
      %v7252 = vadd.f32 %v6945, %v7182
      %v7253 = vadd.f32 %v6946, %v7187
      %v7254 = vadd.f32 %v6947, %v7190
      %v7255 = vadd.f32 %v6948, %v7195
      %v7256 = vadd.f32 %v6949, %v7198
      %v7257 = vadd.f32 %v6950, %v7203
      %v7258 = vadd.f32 %v6951, %v7206
      %v7259 = vadd.f32 %v6952, %v7211
      %v7260 = vadd.f32 %v6953, %v7214
      %v7261 = vadd.f32 %v6954, %v7219
      %v7262 = vadd.f32 %v6955, %v7222
      %v7263 = vadd.f32 %v6956, %v7227
      %v7264 = vadd.f32 %v6957, %v7230
      %v7265 = vadd.f32 %v6958, %v7235
      %v7266 = vadd.f32 %v6959, %v7238
      %v7267 = vadd.f32 %v6960, %v7243
      %v7268 = vadd.f32 %v6961, %v7246
      %v7269 = vld [vmem:[%s881] sm:$0xf]
      %v7270 = vld [vmem:[%s881 + $0x4] sm:$0xf]
      %v7271 = vld [vmem:[%s881 + $0xc] sm:$0xf]
      %v7272 = vld [vmem:[%s881 + $0x10] sm:$0xf]
      %v7273 = vld [vmem:[%s881 + $0x18] sm:$0xf]
      %v7274 = vld [vmem:[%s881 + $0x1c] sm:$0xf]
      %v7275 = vld [vmem:[%s881 + $0x24] sm:$0xf]
      %v7276 = vld [vmem:[%s881 + $0x28] sm:$0xf]
      %v7277 = vld [vmem:[%s881 + $0x30] sm:$0xf]
      %v7278 = vld [vmem:[%s881 + $0x34] sm:$0xf]
      %v7279 = vld [vmem:[%s881 + $0x3c] sm:$0xf]
      %v7280 = vld [vmem:[%s881 + $0x40] sm:$0xf]
      %v7281 = vld [vmem:[%s881 + $0x48] sm:$0xf]
      %v7282 = vld [vmem:[%s881 + $0x4c] sm:$0xf]
      %v7283 = vld [vmem:[%s881 + $0x54] sm:$0xf]
      %v7284 = vld [vmem:[%s881 + $0x58] sm:$0xf]
      %v7285 = vld [vmem:[%s881 + $0x60] sm:$0xf]
      %v7286 = vld [vmem:[%s881 + $0x64] sm:$0xf]
      %v7287 = vld [vmem:[%s881 + $0x6c] sm:$0xf]
      %v7288 = vld [vmem:[%s881 + $0x70] sm:$0xf]
      %v7289 = vld [vmem:[%s5 + $0x18] sm:$0xf]
      %v7310 = vunpack.c.l.b16 %v7269
      %v7311 = vunpack.c.l.b16 %v7270
      %v7312 = vunpack.c.l.b16 %v7271
      %v7313 = vunpack.c.l.b16 %v7272
      %v7314 = vunpack.c.l.b16 %v7273
      %v7315 = vunpack.c.l.b16 %v7274
      %v7316 = vunpack.c.l.b16 %v7275
      %v7317 = vunpack.c.l.b16 %v7276
      %v7318 = vunpack.c.l.b16 %v7277
      %v7319 = vunpack.c.l.b16 %v7278
      %v7320 = vunpack.c.l.b16 %v7279
      %v7321 = vunpack.c.l.b16 %v7280
      %v7322 = vunpack.c.l.b16 %v7281
      %v7323 = vunpack.c.l.b16 %v7282
      %v7324 = vunpack.c.l.b16 %v7283
      %v7325 = vunpack.c.l.b16 %v7284
      %v7326 = vunpack.c.l.b16 %v7285
      %v7327 = vunpack.c.l.b16 %v7286
      %v7328 = vunpack.c.l.b16 %v7287
      %v7329 = vunpack.c.l.b16 %v7288
      %v7330 = vpack.c.b16 %v7311, %v7310
      %v7331 = vpack.c.b16 %v7313, %v7312
      %v7332 = vpack.c.b16 %v7315, %v7314
      %v7333 = vpack.c.b16 %v7317, %v7316
      %v7334 = vpack.c.b16 %v7319, %v7318
      %v7335 = vpack.c.b16 %v7321, %v7320
      %v7336 = vpack.c.b16 %v7323, %v7322
      %v7337 = vpack.c.b16 %v7325, %v7324
      %v7338 = vpack.c.b16 %v7327, %v7326
      %v7339 = vpack.c.b16 %v7329, %v7328
      %v7341 = vsel %vm5617, %v7330, 0
      %v7344 = vsel %vm5617, %v7331, 0
      %v7347 = vsel %vm5617, %v7332, 0
      %v7350 = vsel %vm5617, %v7333, 0
      %v7353 = vsel %vm5617, %v7334, 0
      %v7356 = vsel %vm5617, %v7335, 0
      %v7359 = vsel %vm5617, %v7336, 0
      %v7362 = vsel %vm5617, %v7337, 0
      %v7365 = vsel %vm5617, %v7338, 0
      %v7368 = vsel %vm5617, %v7339, 0
      %v7371 = vsel %vm5648, %v7289, 0
      %7373 = vmatprep.subr.bf16.mxu0 0
      %7374 = vmatpush1.bf16.msra.mxu0 %v7371
      %7375 = vmatprep.subr.bf16.mxu0 0
      %7376 = vmatpush1.bf16.msra.mxu0 0
      %7377 = vmatprep.subr.bf16.mxu0 0
      %7378 = vmatpush1.bf16.msra.mxu0 0
      %7379 = vmatprep.subr.bf16.mxu0 0
      %7380 = vmatpush1.bf16.msra.mxu0 0
      %7381 = vmatprep.subr.bf16.mxu0 0
      %7382 = vmatpush1.bf16.msra.mxu0 0
      %7383 = vmatprep.subr.bf16.mxu0 0
      %7384 = vmatpush1.bf16.msra.mxu0 0
      %7385 = vmatprep.subr.bf16.mxu0 0
      %7386 = vmatpush1.bf16.msra.mxu0 0
      %7387 = vmatprep.subr.bf16.mxu0 0
      %7388 = vmatpush1.bf16.msra.mxu0 0
      %7389 = vmatprep.subr.bf16.mxu0 0
      %7390 = vmatpush1.bf16.msra.mxu0 0
      %7391 = vmatprep.subr.bf16.mxu0 0
      %7392 = vmatpush1.bf16.msra.mxu0 0
      %7393 = vmatprep.subr.bf16.mxu0 0
      %7394 = vmatpush1.bf16.msra.mxu0 0
      %7395 = vmatprep.subr.bf16.mxu0 0
      %7396 = vmatpush1.bf16.msra.mxu0 0
      %7397 = vmatprep.subr.bf16.mxu0 0
      %7398 = vmatpush1.bf16.msra.mxu0 0
      %7399 = vmatprep.subr.bf16.mxu0 0
      %7400 = vmatpush1.bf16.msra.mxu0 0
      %7401 = vmatprep.subr.bf16.mxu0 0
      %7402 = vmatpush1.bf16.msra.mxu0 0
      %7403 = vmatprep.subr.bf16.mxu0 0
      %7404 = vmatpush1.bf16.msra.mxu0 0
      %7405 = vmatprep.mubr.bf16.mxu0 0
      %7406 = vmatmul.mubr.bf16.gmra.mrb[0].mxu0 %v7341
      %v7407 = vpop.f32.mrb[0].mxu0
      %v7408 = vadd.f32 0.0, %v7407
      %v7409 = vpop.f32.mrb[0].mxu0
      %v7410 = vpop.f32.mrb[0].mxu0
      %v7411 = vadd.f32 0.0, %v7410
      %v7412 = vpop.f32.mrb[0].mxu0
      %7413 = vmatprep.mubr.bf16.mxu0 0
      %7414 = vmatmul.mubr.bf16.gmra.mrb[0].mxu0 %v7344
      %v7415 = vpop.f32.mrb[0].mxu0
      %v7416 = vadd.f32 0.0, %v7415
      %v7417 = vpop.f32.mrb[0].mxu0
      %v7418 = vpop.f32.mrb[0].mxu0
      %v7419 = vadd.f32 0.0, %v7418
      %v7420 = vpop.f32.mrb[0].mxu0
      %7421 = vmatprep.mubr.bf16.mxu0 0
      %7422 = vmatmul.mubr.bf16.gmra.mrb[0].mxu0 %v7347
      %v7423 = vpop.f32.mrb[0].mxu0
      %v7424 = vadd.f32 0.0, %v7423
      %v7425 = vpop.f32.mrb[0].mxu0
      %v7426 = vpop.f32.mrb[0].mxu0
      %v7427 = vadd.f32 0.0, %v7426
      %v7428 = vpop.f32.mrb[0].mxu0
      %7429 = vmatprep.mubr.bf16.mxu0 0
      %7430 = vmatmul.mubr.bf16.gmra.mrb[0].mxu0 %v7350
      %v7431 = vpop.f32.mrb[0].mxu0
      %v7432 = vadd.f32 0.0, %v7431
      %v7433 = vpop.f32.mrb[0].mxu0
      %v7434 = vpop.f32.mrb[0].mxu0
      %v7435 = vadd.f32 0.0, %v7434
      %v7436 = vpop.f32.mrb[0].mxu0
      %7437 = vmatprep.mubr.bf16.mxu0 0
      %7438 = vmatmul.mubr.bf16.gmra.mrb[0].mxu0 %v7353
      %v7439 = vpop.f32.mrb[0].mxu0
      %v7440 = vadd.f32 0.0, %v7439
      %v7441 = vpop.f32.mrb[0].mxu0
      %v7442 = vpop.f32.mrb[0].mxu0
      %v7443 = vadd.f32 0.0, %v7442
      %v7444 = vpop.f32.mrb[0].mxu0
      %7445 = vmatprep.mubr.bf16.mxu0 0
      %7446 = vmatmul.mubr.bf16.gmra.mrb[0].mxu0 %v7356
      %v7447 = vpop.f32.mrb[0].mxu0
      %v7448 = vadd.f32 0.0, %v7447
      %v7449 = vpop.f32.mrb[0].mxu0
      %v7450 = vpop.f32.mrb[0].mxu0
      %v7451 = vadd.f32 0.0, %v7450
      %v7452 = vpop.f32.mrb[0].mxu0
      %7453 = vmatprep.mubr.bf16.mxu0 0
      %7454 = vmatmul.mubr.bf16.gmra.mrb[0].mxu0 %v7359
      %v7455 = vpop.f32.mrb[0].mxu0
      %v7456 = vadd.f32 0.0, %v7455
      %v7457 = vpop.f32.mrb[0].mxu0
      %v7458 = vpop.f32.mrb[0].mxu0
      %v7459 = vadd.f32 0.0, %v7458
      %v7460 = vpop.f32.mrb[0].mxu0
      %7461 = vmatprep.mubr.bf16.mxu0 0
      %7462 = vmatmul.mubr.bf16.gmra.mrb[0].mxu0 %v7362
      %v7463 = vpop.f32.mrb[0].mxu0
      %v7464 = vadd.f32 0.0, %v7463
      %v7465 = vpop.f32.mrb[0].mxu0
      %v7466 = vpop.f32.mrb[0].mxu0
      %v7467 = vadd.f32 0.0, %v7466
      %v7468 = vpop.f32.mrb[0].mxu0
      %7469 = vmatprep.mubr.bf16.mxu0 0
      %7470 = vmatmul.mubr.bf16.gmra.mrb[0].mxu0 %v7365
      %v7471 = vpop.f32.mrb[0].mxu0
      %v7472 = vadd.f32 0.0, %v7471
      %v7473 = vpop.f32.mrb[0].mxu0
      %v7474 = vpop.f32.mrb[0].mxu0
      %v7475 = vadd.f32 0.0, %v7474
      %v7476 = vpop.f32.mrb[0].mxu0
      %7477 = vmatprep.mubr.bf16.mxu0 0
      %7478 = vmatmul.mubr.bf16.gmra.mrb[0].mxu0 %v7368
      %v7479 = vpop.f32.mrb[0].mxu0
      %v7480 = vadd.f32 0.0, %v7479
      %v7481 = vpop.f32.mrb[0].mxu0
      %v7482 = vpop.f32.mrb[0].mxu0
      %v7483 = vadd.f32 0.0, %v7482
      %v7484 = vpop.f32.mrb[0].mxu0
      %7485 = vdwg.mxu0
      %v7486 = vadd.f32 %v7249, %v7408
      %v7487 = vadd.f32 %v7250, %v7411
      %v7488 = vadd.f32 %v7251, %v7416
      %v7489 = vadd.f32 %v7252, %v7419
      %v7490 = vadd.f32 %v7253, %v7424
      %v7491 = vadd.f32 %v7254, %v7427
      %v7492 = vadd.f32 %v7255, %v7432
      %v7493 = vadd.f32 %v7256, %v7435
      %v7494 = vadd.f32 %v7257, %v7440
      %v7495 = vadd.f32 %v7258, %v7443
      %v7496 = vadd.f32 %v7259, %v7448
      %v7497 = vadd.f32 %v7260, %v7451
      %v7498 = vadd.f32 %v7261, %v7456
      %v7499 = vadd.f32 %v7262, %v7459
      %v7500 = vadd.f32 %v7263, %v7464
      %v7501 = vadd.f32 %v7264, %v7467
      %v7502 = vadd.f32 %v7265, %v7472
      %v7503 = vadd.f32 %v7266, %v7475
      %v7504 = vadd.f32 %v7267, %v7480
      %v7505 = vadd.f32 %v7268, %v7483
      %v7506 = vld [vmem:[%s881] sm:$0xf]
      %v7507 = vld [vmem:[%s881 + $0x4] sm:$0xf]
      %v7508 = vld [vmem:[%s881 + $0x8] sm:$0x1]
      %v7509 = vld [vmem:[%s881 + $0xc] sm:$0xf]
      %v7510 = vld [vmem:[%s881 + $0x10] sm:$0xf]
      %v7511 = vld [vmem:[%s881 + $0x14] sm:$0x1]
      %v7512 = vld [vmem:[%s881 + $0x18] sm:$0xf]
      %v7513 = vld [vmem:[%s881 + $0x1c] sm:$0xf]
      %v7514 = vld [vmem:[%s881 + $0x20] sm:$0x1]
      %v7515 = vld [vmem:[%s881 + $0x24] sm:$0xf]
      %v7516 = vld [vmem:[%s881 + $0x28] sm:$0xf]
      %v7517 = vld [vmem:[%s881 + $0x2c] sm:$0x1]
      %v7518 = vld [vmem:[%s881 + $0x30] sm:$0xf]
      %v7519 = vld [vmem:[%s881 + $0x34] sm:$0xf]
      %v7520 = vld [vmem:[%s881 + $0x38] sm:$0x1]
      %v7521 = vld [vmem:[%s881 + $0x3c] sm:$0xf]
      %v7522 = vld [vmem:[%s881 + $0x40] sm:$0xf]
      %v7523 = vld [vmem:[%s881 + $0x44] sm:$0x1]
      %v7524 = vld [vmem:[%s881 + $0x48] sm:$0xf]
      %v7525 = vld [vmem:[%s881 + $0x4c] sm:$0xf]
      %v7526 = vld [vmem:[%s881 + $0x50] sm:$0x1]
      %v7527 = vld [vmem:[%s881 + $0x54] sm:$0xf]
      %v7528 = vld [vmem:[%s881 + $0x58] sm:$0xf]
      %v7529 = vld [vmem:[%s881 + $0x5c] sm:$0x1]
      %v7530 = vld [vmem:[%s881 + $0x60] sm:$0xf]
      %v7531 = vld [vmem:[%s881 + $0x64] sm:$0xf]
      %v7532 = vld [vmem:[%s881 + $0x68] sm:$0x1]
      %v7533 = vld [vmem:[%s881 + $0x6c] sm:$0xf]
      %v7534 = vld [vmem:[%s881 + $0x70] sm:$0xf]
      %v7535 = vld [vmem:[%s881 + $0x74] sm:$0x1]
      %v7536 = vld [vmem:[%s5 + $0x1c] sm:$0xf]
      %v7538 = vshrl.u32 %v7506, 16
      %v7540 = vrot.slane %v7538, 4
      %v7541 = vshll.u32 %v7506, 16
      %v7543 = vrot.slane %v7541, 5
      %v7544 = vor.u32 %v7540, %v7543
      %v7545 = vrot.slane %v7544, 4
      %v7547 = vshll.u32 %v7507, 16
      %v7549 = vrot.slane %v7547, 5
      %v7550 = vsel %vm1215, %v7545, %v7549
      %v7551 = vshrl.u32 %v7507, 16
      %v7553 = vrot.slane %v7551, 4
      %v7554 = vor.u32 %v7553, %v7549
      %v7555 = vrot.slane %v7554, 4
      %v7557 = vshll.u32 %v7508, 16
      %v7559 = vrot.slane %v7557, 5
      %v7560 = vsel %vm1215, %v7555, %v7559
      %v7562 = vshrl.u32 %v7509, 16
      %v7564 = vrot.slane %v7562, 4
      %v7565 = vshll.u32 %v7509, 16
      %v7567 = vrot.slane %v7565, 5
      %v7568 = vor.u32 %v7564, %v7567
      %v7569 = vrot.slane %v7568, 4
      %v7571 = vshll.u32 %v7510, 16
      %v7573 = vrot.slane %v7571, 5
      %v7574 = vsel %vm1215, %v7569, %v7573
      %v7575 = vshrl.u32 %v7510, 16
      %v7577 = vrot.slane %v7575, 4
      %v7578 = vor.u32 %v7577, %v7573
      %v7579 = vrot.slane %v7578, 4
      %v7581 = vshll.u32 %v7511, 16
      %v7583 = vrot.slane %v7581, 5
      %v7584 = vsel %vm1215, %v7579, %v7583
      %v7586 = vshrl.u32 %v7512, 16
      %v7588 = vrot.slane %v7586, 4
      %v7589 = vshll.u32 %v7512, 16
      %v7591 = vrot.slane %v7589, 5
      %v7592 = vor.u32 %v7588, %v7591
      %v7593 = vrot.slane %v7592, 4
      %v7595 = vshll.u32 %v7513, 16
      %v7597 = vrot.slane %v7595, 5
      %v7598 = vsel %vm1215, %v7593, %v7597
      %v7599 = vshrl.u32 %v7513, 16
      %v7601 = vrot.slane %v7599, 4
      %v7602 = vor.u32 %v7601, %v7597
      %v7603 = vrot.slane %v7602, 4
      %v7605 = vshll.u32 %v7514, 16
      %v7607 = vrot.slane %v7605, 5
      %v7608 = vsel %vm1215, %v7603, %v7607
      %v7610 = vshrl.u32 %v7515, 16
      %v7612 = vrot.slane %v7610, 4
      %v7613 = vshll.u32 %v7515, 16
      %v7615 = vrot.slane %v7613, 5
      %v7616 = vor.u32 %v7612, %v7615
      %v7617 = vrot.slane %v7616, 4
      %v7619 = vshll.u32 %v7516, 16
      %v7621 = vrot.slane %v7619, 5
      %v7622 = vsel %vm1215, %v7617, %v7621
      %v7623 = vshrl.u32 %v7516, 16
      %v7625 = vrot.slane %v7623, 4
      %v7626 = vor.u32 %v7625, %v7621
      %v7627 = vrot.slane %v7626, 4
      %v7629 = vshll.u32 %v7517, 16
      %v7631 = vrot.slane %v7629, 5
      %v7632 = vsel %vm1215, %v7627, %v7631
      %v7634 = vshrl.u32 %v7518, 16
      %v7636 = vrot.slane %v7634, 4
      %v7637 = vshll.u32 %v7518, 16
      %v7639 = vrot.slane %v7637, 5
      %v7640 = vor.u32 %v7636, %v7639
      %v7641 = vrot.slane %v7640, 4
      %v7643 = vshll.u32 %v7519, 16
      %v7645 = vrot.slane %v7643, 5
      %v7646 = vsel %vm1215, %v7641, %v7645
      %v7647 = vshrl.u32 %v7519, 16
      %v7649 = vrot.slane %v7647, 4
      %v7650 = vor.u32 %v7649, %v7645
      %v7651 = vrot.slane %v7650, 4
      %v7653 = vshll.u32 %v7520, 16
      %v7655 = vrot.slane %v7653, 5
      %v7656 = vsel %vm1215, %v7651, %v7655
      %v7658 = vshrl.u32 %v7521, 16
      %v7660 = vrot.slane %v7658, 4
      %v7661 = vshll.u32 %v7521, 16
      %v7663 = vrot.slane %v7661, 5
      %v7664 = vor.u32 %v7660, %v7663
      %v7665 = vrot.slane %v7664, 4
      %v7667 = vshll.u32 %v7522, 16
      %v7669 = vrot.slane %v7667, 5
      %v7670 = vsel %vm1215, %v7665, %v7669
      %v7671 = vshrl.u32 %v7522, 16
      %v7673 = vrot.slane %v7671, 4
      %v7674 = vor.u32 %v7673, %v7669
      %v7675 = vrot.slane %v7674, 4
      %v7677 = vshll.u32 %v7523, 16
      %v7679 = vrot.slane %v7677, 5
      %v7680 = vsel %vm1215, %v7675, %v7679
      %v7682 = vshrl.u32 %v7524, 16
      %v7684 = vrot.slane %v7682, 4
      %v7685 = vshll.u32 %v7524, 16
      %v7687 = vrot.slane %v7685, 5
      %v7688 = vor.u32 %v7684, %v7687
      %v7689 = vrot.slane %v7688, 4
      %v7691 = vshll.u32 %v7525, 16
      %v7693 = vrot.slane %v7691, 5
      %v7694 = vsel %vm1215, %v7689, %v7693
      %v7695 = vshrl.u32 %v7525, 16
      %v7697 = vrot.slane %v7695, 4
      %v7698 = vor.u32 %v7697, %v7693
      %v7699 = vrot.slane %v7698, 4
      %v7701 = vshll.u32 %v7526, 16
      %v7703 = vrot.slane %v7701, 5
      %v7704 = vsel %vm1215, %v7699, %v7703
      %v7706 = vshrl.u32 %v7527, 16
      %v7708 = vrot.slane %v7706, 4
      %v7709 = vshll.u32 %v7527, 16
      %v7711 = vrot.slane %v7709, 5
      %v7712 = vor.u32 %v7708, %v7711
      %v7713 = vrot.slane %v7712, 4
      %v7715 = vshll.u32 %v7528, 16
      %v7717 = vrot.slane %v7715, 5
      %v7718 = vsel %vm1215, %v7713, %v7717
      %v7719 = vshrl.u32 %v7528, 16
      %v7721 = vrot.slane %v7719, 4
      %v7722 = vor.u32 %v7721, %v7717
      %v7723 = vrot.slane %v7722, 4
      %v7725 = vshll.u32 %v7529, 16
      %v7727 = vrot.slane %v7725, 5
      %v7728 = vsel %vm1215, %v7723, %v7727
      %v7730 = vshrl.u32 %v7530, 16
      %v7732 = vrot.slane %v7730, 4
      %v7733 = vshll.u32 %v7530, 16
      %v7735 = vrot.slane %v7733, 5
      %v7736 = vor.u32 %v7732, %v7735
      %v7737 = vrot.slane %v7736, 4
      %v7739 = vshll.u32 %v7531, 16
      %v7741 = vrot.slane %v7739, 5
      %v7742 = vsel %vm1215, %v7737, %v7741
      %v7743 = vshrl.u32 %v7531, 16
      %v7745 = vrot.slane %v7743, 4
      %v7746 = vor.u32 %v7745, %v7741
      %v7747 = vrot.slane %v7746, 4
      %v7749 = vshll.u32 %v7532, 16
      %v7751 = vrot.slane %v7749, 5
      %v7752 = vsel %vm1215, %v7747, %v7751
      %v7754 = vshrl.u32 %v7533, 16
      %v7756 = vrot.slane %v7754, 4
      %v7757 = vshll.u32 %v7533, 16
      %v7759 = vrot.slane %v7757, 5
      %v7760 = vor.u32 %v7756, %v7759
      %v7761 = vrot.slane %v7760, 4
      %v7763 = vshll.u32 %v7534, 16
      %v7765 = vrot.slane %v7763, 5
      %v7766 = vsel %vm1215, %v7761, %v7765
      %v7767 = vshrl.u32 %v7534, 16
      %v7769 = vrot.slane %v7767, 4
      %v7770 = vor.u32 %v7769, %v7765
      %v7771 = vrot.slane %v7770, 4
      %v7773 = vshll.u32 %v7535, 16
      %v7775 = vrot.slane %v7773, 5
      %v7776 = vsel %vm1215, %v7771, %v7775
      %v7777 = vunpack.c.l.b16 %v7550
      %v7778 = vunpack.c.l.b16 %v7560
      %v7779 = vunpack.c.l.b16 %v7574
      %v7780 = vunpack.c.l.b16 %v7584
      %v7781 = vunpack.c.l.b16 %v7598
      %v7782 = vunpack.c.l.b16 %v7608
      %v7783 = vunpack.c.l.b16 %v7622
      %v7784 = vunpack.c.l.b16 %v7632
      %v7785 = vunpack.c.l.b16 %v7646
      %v7786 = vunpack.c.l.b16 %v7656
      %v7787 = vunpack.c.l.b16 %v7670
      %v7788 = vunpack.c.l.b16 %v7680
      %v7789 = vunpack.c.l.b16 %v7694
      %v7790 = vunpack.c.l.b16 %v7704
      %v7791 = vunpack.c.l.b16 %v7718
      %v7792 = vunpack.c.l.b16 %v7728
      %v7793 = vunpack.c.l.b16 %v7742
      %v7794 = vunpack.c.l.b16 %v7752
      %v7795 = vunpack.c.l.b16 %v7766
      %v7796 = vunpack.c.l.b16 %v7776
      %v7797 = vpack.c.b16 %v7778, %v7777
      %v7798 = vpack.c.b16 %v7780, %v7779
      %v7799 = vpack.c.b16 %v7782, %v7781
      %v7800 = vpack.c.b16 %v7784, %v7783
      %v7801 = vpack.c.b16 %v7786, %v7785
      %v7802 = vpack.c.b16 %v7788, %v7787
      %v7803 = vpack.c.b16 %v7790, %v7789
      %v7804 = vpack.c.b16 %v7792, %v7791
      %v7805 = vpack.c.b16 %v7794, %v7793
      %v7806 = vpack.c.b16 %v7796, %v7795
      %v7808 = vsel %vm5617, %v7797, 0
      %v7811 = vsel %vm5617, %v7798, 0
      %v7814 = vsel %vm5617, %v7799, 0
      %v7817 = vsel %vm5617, %v7800, 0
      %v7820 = vsel %vm5617, %v7801, 0
      %v7823 = vsel %vm5617, %v7802, 0
      %v7826 = vsel %vm5617, %v7803, 0
      %v7829 = vsel %vm5617, %v7804, 0
      %v7832 = vsel %vm5617, %v7805, 0
      %v7835 = vsel %vm5617, %v7806, 0
      %v7838 = vsel %vm5648, %v7536, 0
      %7840 = vmatprep.subr.bf16.mxu0 0
      %7841 = vmatpush1.bf16.msra.mxu0 %v7838
      %7842 = vmatprep.subr.bf16.mxu0 0
      %7843 = vmatpush1.bf16.msra.mxu0 0
      %7844 = vmatprep.subr.bf16.mxu0 0
      %7845 = vmatpush1.bf16.msra.mxu0 0
      %7846 = vmatprep.subr.bf16.mxu0 0
      %7847 = vmatpush1.bf16.msra.mxu0 0
      %7848 = vmatprep.subr.bf16.mxu0 0
      %7849 = vmatpush1.bf16.msra.mxu0 0
      %7850 = vmatprep.subr.bf16.mxu0 0
      %7851 = vmatpush1.bf16.msra.mxu0 0
      %7852 = vmatprep.subr.bf16.mxu0 0
      %7853 = vmatpush1.bf16.msra.mxu0 0
      %7854 = vmatprep.subr.bf16.mxu0 0
      %7855 = vmatpush1.bf16.msra.mxu0 0
      %7856 = vmatprep.subr.bf16.mxu0 0
      %7857 = vmatpush1.bf16.msra.mxu0 0
      %7858 = vmatprep.subr.bf16.mxu0 0
      %7859 = vmatpush1.bf16.msra.mxu0 0
      %7860 = vmatprep.subr.bf16.mxu0 0
      %7861 = vmatpush1.bf16.msra.mxu0 0
      %7862 = vmatprep.subr.bf16.mxu0 0
      %7863 = vmatpush1.bf16.msra.mxu0 0
      %7864 = vmatprep.subr.bf16.mxu0 0
      %7865 = vmatpush1.bf16.msra.mxu0 0
      %7866 = vmatprep.subr.bf16.mxu0 0
      %7867 = vmatpush1.bf16.msra.mxu0 0
      %7868 = vmatprep.subr.bf16.mxu0 0
      %7869 = vmatpush1.bf16.msra.mxu0 0
      %7870 = vmatprep.subr.bf16.mxu0 0
      %7871 = vmatpush1.bf16.msra.mxu0 0
      %7872 = vmatprep.mubr.bf16.mxu0 0
      %7873 = vmatmul.mubr.bf16.gmra.mrb[0].mxu0 %v7808
      %v7874 = vpop.f32.mrb[0].mxu0
      %v7875 = vadd.f32 0.0, %v7874
      %v7876 = vpop.f32.mrb[0].mxu0
      %v7877 = vpop.f32.mrb[0].mxu0
      %v7878 = vadd.f32 0.0, %v7877
      %v7879 = vpop.f32.mrb[0].mxu0
      %7880 = vmatprep.mubr.bf16.mxu0 0
      %7881 = vmatmul.mubr.bf16.gmra.mrb[0].mxu0 %v7811
      %v7882 = vpop.f32.mrb[0].mxu0
      %v7883 = vadd.f32 0.0, %v7882
      %v7884 = vpop.f32.mrb[0].mxu0
      %v7885 = vpop.f32.mrb[0].mxu0
      %v7886 = vadd.f32 0.0, %v7885
      %v7887 = vpop.f32.mrb[0].mxu0
      %7888 = vmatprep.mubr.bf16.mxu0 0
      %7889 = vmatmul.mubr.bf16.gmra.mrb[0].mxu0 %v7814
      %v7890 = vpop.f32.mrb[0].mxu0
      %v7891 = vadd.f32 0.0, %v7890
      %v7892 = vpop.f32.mrb[0].mxu0
      %v7893 = vpop.f32.mrb[0].mxu0
      %v7894 = vadd.f32 0.0, %v7893
      %v7895 = vpop.f32.mrb[0].mxu0
      %7896 = vmatprep.mubr.bf16.mxu0 0
      %7897 = vmatmul.mubr.bf16.gmra.mrb[0].mxu0 %v7817
      %v7898 = vpop.f32.mrb[0].mxu0
      %v7899 = vadd.f32 0.0, %v7898
      %v7900 = vpop.f32.mrb[0].mxu0
      %v7901 = vpop.f32.mrb[0].mxu0
      %v7902 = vadd.f32 0.0, %v7901
      %v7903 = vpop.f32.mrb[0].mxu0
      %7904 = vmatprep.mubr.bf16.mxu0 0
      %7905 = vmatmul.mubr.bf16.gmra.mrb[0].mxu0 %v7820
      %v7906 = vpop.f32.mrb[0].mxu0
      %v7907 = vadd.f32 0.0, %v7906
      %v7908 = vpop.f32.mrb[0].mxu0
      %v7909 = vpop.f32.mrb[0].mxu0
      %v7910 = vadd.f32 0.0, %v7909
      %v7911 = vpop.f32.mrb[0].mxu0
      %7912 = vmatprep.mubr.bf16.mxu0 0
      %7913 = vmatmul.mubr.bf16.gmra.mrb[0].mxu0 %v7823
      %v7914 = vpop.f32.mrb[0].mxu0
      %v7915 = vadd.f32 0.0, %v7914
      %v7916 = vpop.f32.mrb[0].mxu0
      %v7917 = vpop.f32.mrb[0].mxu0
      %v7918 = vadd.f32 0.0, %v7917
      %v7919 = vpop.f32.mrb[0].mxu0
      %7920 = vmatprep.mubr.bf16.mxu0 0
      %7921 = vmatmul.mubr.bf16.gmra.mrb[0].mxu0 %v7826
      %v7922 = vpop.f32.mrb[0].mxu0
      %v7923 = vadd.f32 0.0, %v7922
      %v7924 = vpop.f32.mrb[0].mxu0
      %v7925 = vpop.f32.mrb[0].mxu0
      %v7926 = vadd.f32 0.0, %v7925
      %v7927 = vpop.f32.mrb[0].mxu0
      %7928 = vmatprep.mubr.bf16.mxu0 0
      %7929 = vmatmul.mubr.bf16.gmra.mrb[0].mxu0 %v7829
      %v7930 = vpop.f32.mrb[0].mxu0
      %v7931 = vadd.f32 0.0, %v7930
      %v7932 = vpop.f32.mrb[0].mxu0
      %v7933 = vpop.f32.mrb[0].mxu0
      %v7934 = vadd.f32 0.0, %v7933
      %v7935 = vpop.f32.mrb[0].mxu0
      %7936 = vmatprep.mubr.bf16.mxu0 0
      %7937 = vmatmul.mubr.bf16.gmra.mrb[0].mxu0 %v7832
      %v7938 = vpop.f32.mrb[0].mxu0
      %v7939 = vadd.f32 0.0, %v7938
      %v7940 = vpop.f32.mrb[0].mxu0
      %v7941 = vpop.f32.mrb[0].mxu0
      %v7942 = vadd.f32 0.0, %v7941
      %v7943 = vpop.f32.mrb[0].mxu0
      %7944 = vmatprep.mubr.bf16.mxu0 0
      %7945 = vmatmul.mubr.bf16.gmra.mrb[0].mxu0 %v7835
      %v7946 = vpop.f32.mrb[0].mxu0
      %v7947 = vadd.f32 0.0, %v7946
      %v7948 = vpop.f32.mrb[0].mxu0
      %v7949 = vpop.f32.mrb[0].mxu0
      %v7950 = vadd.f32 0.0, %v7949
      %v7951 = vpop.f32.mrb[0].mxu0
      %7952 = vdwg.mxu0
      %v7953 = vadd.f32 %v7486, %v7875
      %v7954 = vadd.f32 %v7487, %v7878
      %v7955 = vadd.f32 %v7488, %v7883
      %v7956 = vadd.f32 %v7489, %v7886
      %v7957 = vadd.f32 %v7490, %v7891
      %v7958 = vadd.f32 %v7491, %v7894
      %v7959 = vadd.f32 %v7492, %v7899
      %v7960 = vadd.f32 %v7493, %v7902
      %v7961 = vadd.f32 %v7494, %v7907
      %v7962 = vadd.f32 %v7495, %v7910
      %v7963 = vadd.f32 %v7496, %v7915
      %v7964 = vadd.f32 %v7497, %v7918
      %v7965 = vadd.f32 %v7498, %v7923
      %v7966 = vadd.f32 %v7499, %v7926
      %v7967 = vadd.f32 %v7500, %v7931
      %v7968 = vadd.f32 %v7501, %v7934
      %v7969 = vadd.f32 %v7502, %v7939
      %v7970 = vadd.f32 %v7503, %v7942
      %v7971 = vadd.f32 %v7504, %v7947
      %v7972 = vadd.f32 %v7505, %v7950
      %v7973 = vld [vmem:[%s881] sm:$0xe]
      %v7974 = vld [vmem:[%s881 + $0xc] sm:$0xe]
      %v7975 = vld [vmem:[%s881 + $0x18] sm:$0xe]
      %v7976 = vld [vmem:[%s881 + $0x24] sm:$0xe]
      %v7977 = vld [vmem:[%s881 + $0x30] sm:$0xe]
      %v7978 = vld [vmem:[%s881 + $0x3c] sm:$0xe]
      %v7979 = vld [vmem:[%s881 + $0x48] sm:$0xe]
      %v7980 = vld [vmem:[%s881 + $0x54] sm:$0xe]
      %v7981 = vld [vmem:[%s881 + $0x60] sm:$0xe]
      %v7982 = vld [vmem:[%s881 + $0x6c] sm:$0xe]
      %v7983 = vld [vmem:[%s5 + $0x20] sm:$0xf]
      %v8014 = vrot.slane %v7973, 5
      %v8015 = vrot.slane %v8014, 4
      %v8016 = vrot.slane %v7507, 5
      %v8017 = vsel %vm1981, %v8015, %v8016
      %v8018 = vrot.slane %v8016, 4
      %v8019 = vrot.slane %v7508, 5
      %v8020 = vsel %vm1981, %v8018, %v8019
      %v8021 = vrot.slane %v7974, 5
      %v8022 = vrot.slane %v8021, 4
      %v8023 = vrot.slane %v7510, 5
      %v8024 = vsel %vm1981, %v8022, %v8023
      %v8025 = vrot.slane %v8023, 4
      %v8026 = vrot.slane %v7511, 5
      %v8027 = vsel %vm1981, %v8025, %v8026
      %v8028 = vrot.slane %v7975, 5
      %v8029 = vrot.slane %v8028, 4
      %v8030 = vrot.slane %v7513, 5
      %v8031 = vsel %vm1981, %v8029, %v8030
      %v8032 = vrot.slane %v8030, 4
      %v8033 = vrot.slane %v7514, 5
      %v8034 = vsel %vm1981, %v8032, %v8033
      %v8035 = vrot.slane %v7976, 5
      %v8036 = vrot.slane %v8035, 4
      %v8037 = vrot.slane %v7516, 5
      %v8038 = vsel %vm1981, %v8036, %v8037
      %v8039 = vrot.slane %v8037, 4
      %v8040 = vrot.slane %v7517, 5
      %v8041 = vsel %vm1981, %v8039, %v8040
      %v8042 = vrot.slane %v7977, 5
      %v8043 = vrot.slane %v8042, 4
      %v8044 = vrot.slane %v7519, 5
      %v8045 = vsel %vm1981, %v8043, %v8044
      %v8046 = vrot.slane %v8044, 4
      %v8047 = vrot.slane %v7520, 5
      %v8048 = vsel %vm1981, %v8046, %v8047
      %v8049 = vrot.slane %v7978, 5
      %v8050 = vrot.slane %v8049, 4
      %v8051 = vrot.slane %v7522, 5
      %v8052 = vsel %vm1981, %v8050, %v8051
      %v8053 = vrot.slane %v8051, 4
      %v8054 = vrot.slane %v7523, 5
      %v8055 = vsel %vm1981, %v8053, %v8054
      %v8056 = vrot.slane %v7979, 5
      %v8057 = vrot.slane %v8056, 4
      %v8058 = vrot.slane %v7525, 5
      %v8059 = vsel %vm1981, %v8057, %v8058
      %v8060 = vrot.slane %v8058, 4
      %v8061 = vrot.slane %v7526, 5
      %v8062 = vsel %vm1981, %v8060, %v8061
      %v8063 = vrot.slane %v7980, 5
      %v8064 = vrot.slane %v8063, 4
      %v8065 = vrot.slane %v7528, 5
      %v8066 = vsel %vm1981, %v8064, %v8065
      %v8067 = vrot.slane %v8065, 4
      %v8068 = vrot.slane %v7529, 5
      %v8069 = vsel %vm1981, %v8067, %v8068
      %v8070 = vrot.slane %v7981, 5
      %v8071 = vrot.slane %v8070, 4
      %v8072 = vrot.slane %v7531, 5
      %v8073 = vsel %vm1981, %v8071, %v8072
      %v8074 = vrot.slane %v8072, 4
      %v8075 = vrot.slane %v7532, 5
      %v8076 = vsel %vm1981, %v8074, %v8075
      %v8077 = vrot.slane %v7982, 5
      %v8078 = vrot.slane %v8077, 4
      %v8079 = vrot.slane %v7534, 5
      %v8080 = vsel %vm1981, %v8078, %v8079
      %v8081 = vrot.slane %v8079, 4
      %v8082 = vrot.slane %v7535, 5
      %v8083 = vsel %vm1981, %v8081, %v8082
      %v8084 = vunpack.c.l.b16 %v8017
      %v8085 = vunpack.c.l.b16 %v8020
      %v8086 = vunpack.c.l.b16 %v8024
      %v8087 = vunpack.c.l.b16 %v8027
      %v8088 = vunpack.c.l.b16 %v8031
      %v8089 = vunpack.c.l.b16 %v8034
      %v8090 = vunpack.c.l.b16 %v8038
      %v8091 = vunpack.c.l.b16 %v8041
      %v8092 = vunpack.c.l.b16 %v8045
      %v8093 = vunpack.c.l.b16 %v8048
      %v8094 = vunpack.c.l.b16 %v8052
      %v8095 = vunpack.c.l.b16 %v8055
      %v8096 = vunpack.c.l.b16 %v8059
      %v8097 = vunpack.c.l.b16 %v8062
      %v8098 = vunpack.c.l.b16 %v8066
      %v8099 = vunpack.c.l.b16 %v8069
      %v8100 = vunpack.c.l.b16 %v8073
      %v8101 = vunpack.c.l.b16 %v8076
      %v8102 = vunpack.c.l.b16 %v8080
      %v8103 = vunpack.c.l.b16 %v8083
      %v8104 = vpack.c.b16 %v8085, %v8084
      %v8105 = vpack.c.b16 %v8087, %v8086
      %v8106 = vpack.c.b16 %v8089, %v8088
      %v8107 = vpack.c.b16 %v8091, %v8090
      %v8108 = vpack.c.b16 %v8093, %v8092
      %v8109 = vpack.c.b16 %v8095, %v8094
      %v8110 = vpack.c.b16 %v8097, %v8096
      %v8111 = vpack.c.b16 %v8099, %v8098
      %v8112 = vpack.c.b16 %v8101, %v8100
      %v8113 = vpack.c.b16 %v8103, %v8102
      %v8115 = vsel %vm5617, %v8104, 0
      %v8118 = vsel %vm5617, %v8105, 0
      %v8121 = vsel %vm5617, %v8106, 0
      %v8124 = vsel %vm5617, %v8107, 0
      %v8127 = vsel %vm5617, %v8108, 0
      %v8130 = vsel %vm5617, %v8109, 0
      %v8133 = vsel %vm5617, %v8110, 0
      %v8136 = vsel %vm5617, %v8111, 0
      %v8139 = vsel %vm5617, %v8112, 0
      %v8142 = vsel %vm5617, %v8113, 0
      %v8145 = vsel %vm5648, %v7983, 0
      %8147 = vmatprep.subr.bf16.mxu0 0
      %8148 = vmatpush1.bf16.msra.mxu0 %v8145
      %8149 = vmatprep.subr.bf16.mxu0 0
      %8150 = vmatpush1.bf16.msra.mxu0 0
      %8151 = vmatprep.subr.bf16.mxu0 0
      %8152 = vmatpush1.bf16.msra.mxu0 0
      %8153 = vmatprep.subr.bf16.mxu0 0
      %8154 = vmatpush1.bf16.msra.mxu0 0
      %8155 = vmatprep.subr.bf16.mxu0 0
      %8156 = vmatpush1.bf16.msra.mxu0 0
      %8157 = vmatprep.subr.bf16.mxu0 0
      %8158 = vmatpush1.bf16.msra.mxu0 0
      %8159 = vmatprep.subr.bf16.mxu0 0
      %8160 = vmatpush1.bf16.msra.mxu0 0
      %8161 = vmatprep.subr.bf16.mxu0 0
      %8162 = vmatpush1.bf16.msra.mxu0 0
      %8163 = vmatprep.subr.bf16.mxu0 0
      %8164 = vmatpush1.bf16.msra.mxu0 0
      %8165 = vmatprep.subr.bf16.mxu0 0
      %8166 = vmatpush1.bf16.msra.mxu0 0
      %8167 = vmatprep.subr.bf16.mxu0 0
      %8168 = vmatpush1.bf16.msra.mxu0 0
      %8169 = vmatprep.subr.bf16.mxu0 0
      %8170 = vmatpush1.bf16.msra.mxu0 0
      %8171 = vmatprep.subr.bf16.mxu0 0
      %8172 = vmatpush1.bf16.msra.mxu0 0
      %8173 = vmatprep.subr.bf16.mxu0 0
      %8174 = vmatpush1.bf16.msra.mxu0 0
      %8175 = vmatprep.subr.bf16.mxu0 0
      %8176 = vmatpush1.bf16.msra.mxu0 0
      %8177 = vmatprep.subr.bf16.mxu0 0
      %8178 = vmatpush1.bf16.msra.mxu0 0
      %8179 = vmatprep.mubr.bf16.mxu0 0
      %8180 = vmatmul.mubr.bf16.gmra.mrb[0].mxu0 %v8115
      %v8181 = vpop.f32.mrb[0].mxu0
      %v8182 = vadd.f32 0.0, %v8181
      %v8183 = vpop.f32.mrb[0].mxu0
      %v8184 = vpop.f32.mrb[0].mxu0
      %v8185 = vadd.f32 0.0, %v8184
      %v8186 = vpop.f32.mrb[0].mxu0
      %8187 = vmatprep.mubr.bf16.mxu0 0
      %8188 = vmatmul.mubr.bf16.gmra.mrb[0].mxu0 %v8118
      %v8189 = vpop.f32.mrb[0].mxu0
      %v8190 = vadd.f32 0.0, %v8189
      %v8191 = vpop.f32.mrb[0].mxu0
      %v8192 = vpop.f32.mrb[0].mxu0
      %v8193 = vadd.f32 0.0, %v8192
      %v8194 = vpop.f32.mrb[0].mxu0
      %8195 = vmatprep.mubr.bf16.mxu0 0
      %8196 = vmatmul.mubr.bf16.gmra.mrb[0].mxu0 %v8121
      %v8197 = vpop.f32.mrb[0].mxu0
      %v8198 = vadd.f32 0.0, %v8197
      %v8199 = vpop.f32.mrb[0].mxu0
      %v8200 = vpop.f32.mrb[0].mxu0
      %v8201 = vadd.f32 0.0, %v8200
      %v8202 = vpop.f32.mrb[0].mxu0
      %8203 = vmatprep.mubr.bf16.mxu0 0
      %8204 = vmatmul.mubr.bf16.gmra.mrb[0].mxu0 %v8124
      %v8205 = vpop.f32.mrb[0].mxu0
      %v8206 = vadd.f32 0.0, %v8205
      %v8207 = vpop.f32.mrb[0].mxu0
      %v8208 = vpop.f32.mrb[0].mxu0
      %v8209 = vadd.f32 0.0, %v8208
      %v8210 = vpop.f32.mrb[0].mxu0
      %8211 = vmatprep.mubr.bf16.mxu0 0
      %8212 = vmatmul.mubr.bf16.gmra.mrb[0].mxu0 %v8127
      %v8213 = vpop.f32.mrb[0].mxu0
      %v8214 = vadd.f32 0.0, %v8213
      %v8215 = vpop.f32.mrb[0].mxu0
      %v8216 = vpop.f32.mrb[0].mxu0
      %v8217 = vadd.f32 0.0, %v8216
      %v8218 = vpop.f32.mrb[0].mxu0
      %8219 = vmatprep.mubr.bf16.mxu0 0
      %8220 = vmatmul.mubr.bf16.gmra.mrb[0].mxu0 %v8130
      %v8221 = vpop.f32.mrb[0].mxu0
      %v8222 = vadd.f32 0.0, %v8221
      %v8223 = vpop.f32.mrb[0].mxu0
      %v8224 = vpop.f32.mrb[0].mxu0
      %v8225 = vadd.f32 0.0, %v8224
      %v8226 = vpop.f32.mrb[0].mxu0
      %8227 = vmatprep.mubr.bf16.mxu0 0
      %8228 = vmatmul.mubr.bf16.gmra.mrb[0].mxu0 %v8133
      %v8229 = vpop.f32.mrb[0].mxu0
      %v8230 = vadd.f32 0.0, %v8229
      %v8231 = vpop.f32.mrb[0].mxu0
      %v8232 = vpop.f32.mrb[0].mxu0
      %v8233 = vadd.f32 0.0, %v8232
      %v8234 = vpop.f32.mrb[0].mxu0
      %8235 = vmatprep.mubr.bf16.mxu0 0
      %8236 = vmatmul.mubr.bf16.gmra.mrb[0].mxu0 %v8136
      %v8237 = vpop.f32.mrb[0].mxu0
      %v8238 = vadd.f32 0.0, %v8237
      %v8239 = vpop.f32.mrb[0].mxu0
      %v8240 = vpop.f32.mrb[0].mxu0
      %v8241 = vadd.f32 0.0, %v8240
      %v8242 = vpop.f32.mrb[0].mxu0
      %8243 = vmatprep.mubr.bf16.mxu0 0
      %8244 = vmatmul.mubr.bf16.gmra.mrb[0].mxu0 %v8139
      %v8245 = vpop.f32.mrb[0].mxu0
      %v8246 = vadd.f32 0.0, %v8245
      %v8247 = vpop.f32.mrb[0].mxu0
      %v8248 = vpop.f32.mrb[0].mxu0
      %v8249 = vadd.f32 0.0, %v8248
      %v8250 = vpop.f32.mrb[0].mxu0
      %8251 = vmatprep.mubr.bf16.mxu0 0
      %8252 = vmatmul.mubr.bf16.gmra.mrb[0].mxu0 %v8142
      %v8253 = vpop.f32.mrb[0].mxu0
      %v8254 = vadd.f32 0.0, %v8253
      %v8255 = vpop.f32.mrb[0].mxu0
      %v8256 = vpop.f32.mrb[0].mxu0
      %v8257 = vadd.f32 0.0, %v8256
      %v8258 = vpop.f32.mrb[0].mxu0
      %8259 = vdwg.mxu0
      %v8260 = vadd.f32 %v7953, %v8182
      %v8261 = vadd.f32 %v7954, %v8185
      %v8262 = vadd.f32 %v7955, %v8190
      %v8263 = vadd.f32 %v7956, %v8193
      %v8264 = vadd.f32 %v7957, %v8198
      %v8265 = vadd.f32 %v7958, %v8201
      %v8266 = vadd.f32 %v7959, %v8206
      %v8267 = vadd.f32 %v7960, %v8209
      %v8268 = vadd.f32 %v7961, %v8214
      %v8269 = vadd.f32 %v7962, %v8217
      %v8270 = vadd.f32 %v7963, %v8222
      %v8271 = vadd.f32 %v7964, %v8225
      %v8272 = vadd.f32 %v7965, %v8230
      %v8273 = vadd.f32 %v7966, %v8233
      %v8274 = vadd.f32 %v7967, %v8238
      %v8275 = vadd.f32 %v7968, %v8241
      %v8276 = vadd.f32 %v7969, %v8246
      %v8277 = vadd.f32 %v7970, %v8249
      %v8278 = vadd.f32 %v7971, %v8254
      %v8279 = vadd.f32 %v7972, %v8257
      %v8280 = vld [vmem:[%s6] sm:$0x1]
      %v8282 = vlaneseq
      %v8283 = vshrl.u32 %v8282, 7
      %v8284 = vsub.s32 0, %v8283
      %v8285 = vrot.slane %v8280, %v8284
      %v8287 = vadd.f32 %v8260, %v8285
      %v8288 = vadd.f32 %v8261, %v8285
      %v8289 = vadd.f32 %v8262, %v8285
      %v8290 = vadd.f32 %v8263, %v8285
      %v8291 = vadd.f32 %v8264, %v8285
      %v8292 = vadd.f32 %v8265, %v8285
      %v8293 = vadd.f32 %v8266, %v8285
      %v8294 = vadd.f32 %v8267, %v8285
      %v8295 = vadd.f32 %v8268, %v8285
      %v8296 = vadd.f32 %v8269, %v8285
      %v8297 = vadd.f32 %v8270, %v8285
      %v8298 = vadd.f32 %v8271, %v8285
      %v8299 = vadd.f32 %v8272, %v8285
      %v8300 = vadd.f32 %v8273, %v8285
      %v8301 = vadd.f32 %v8274, %v8285
      %v8302 = vadd.f32 %v8275, %v8285
      %v8303 = vadd.f32 %v8276, %v8285
      %v8304 = vadd.f32 %v8277, %v8285
      %v8305 = vadd.f32 %v8278, %v8285
      %v8306 = vadd.f32 %v8279, %v8285
      %v8307 = vmax.f32 %v8287, 0.0
      %v8308 = vmax.f32 %v8288, 0.0
      %v8309 = vmax.f32 %v8289, 0.0
      %v8310 = vmax.f32 %v8290, 0.0
      %v8311 = vmax.f32 %v8291, 0.0
      %v8312 = vmax.f32 %v8292, 0.0
      %v8313 = vmax.f32 %v8293, 0.0
      %v8314 = vmax.f32 %v8294, 0.0
      %v8315 = vmax.f32 %v8295, 0.0
      %v8316 = vmax.f32 %v8296, 0.0
      %v8317 = vmax.f32 %v8297, 0.0
      %v8318 = vmax.f32 %v8298, 0.0
      %v8319 = vmax.f32 %v8299, 0.0
      %v8320 = vmax.f32 %v8300, 0.0
      %v8321 = vmax.f32 %v8301, 0.0
      %v8322 = vmax.f32 %v8302, 0.0
      %v8323 = vmax.f32 %v8303, 0.0
      %v8324 = vmax.f32 %v8304, 0.0
      %v8325 = vmax.f32 %v8305, 0.0
      %v8326 = vmax.f32 %v8306, 0.0
      %s8327 = sadd.s32 %s4745, 4294967295
      %v8328 = vstv %s8327
      %v8329 = vadd.s32 %v8328, 1
      %v8330 = vadd.s32 %v8328, 2
      %v8331 = vadd.s32 %v8328, 3
      %v8332 = vadd.s32 %v8328, 4
      %v8333 = vadd.s32 %v8328, 5
      %v8334 = vadd.s32 %v8328, 6
      %v8335 = vadd.s32 %v8328, 7
      %v8336 = vadd.s32 %v8328, 8
      %v8337 = vadd.s32 %v8328, 9
      %vm8338 = vcmp.ge.s32.totalorder %v8328, 0
      %vm8339 = vcmp.ge.s32.totalorder %v8329, 0
      %vm8340 = vcmp.ge.s32.totalorder %v8330, 0
      %vm8341 = vcmp.ge.s32.totalorder %v8331, 0
      %vm8342 = vcmp.ge.s32.totalorder %v8332, 0
      %vm8343 = vcmp.ge.s32.totalorder %v8333, 0
      %vm8344 = vcmp.ge.s32.totalorder %v8334, 0
      %vm8345 = vcmp.ge.s32.totalorder %v8335, 0
      %vm8346 = vcmp.ge.s32.totalorder %v8336, 0
      %vm8347 = vcmp.ge.s32.totalorder %v8337, 0
      %vm8348 = vcmp.lt.s32.totalorder %v8328, 16
      %vm8349 = vcmp.lt.s32.totalorder %v8329, 16
      %vm8350 = vcmp.lt.s32.totalorder %v8330, 16
      %vm8351 = vcmp.lt.s32.totalorder %v8331, 16
      %vm8352 = vcmp.lt.s32.totalorder %v8332, 16
      %vm8353 = vcmp.lt.s32.totalorder %v8333, 16
      %vm8354 = vcmp.lt.s32.totalorder %v8334, 16
      %vm8355 = vcmp.lt.s32.totalorder %v8335, 16
      %vm8356 = vcmp.lt.s32.totalorder %v8336, 16
      %vm8357 = vcmp.lt.s32.totalorder %v8337, 16
      %vm8358 = vmand %vm8338, %vm8348
      %vm8359 = vmand %vm8339, %vm8349
      %vm8360 = vmand %vm8340, %vm8350
      %vm8361 = vmand %vm8341, %vm8351
      %vm8362 = vmand %vm8342, %vm8352
      %vm8363 = vmand %vm8343, %vm8353
      %vm8364 = vmand %vm8344, %vm8354
      %vm8365 = vmand %vm8345, %vm8355
      %vm8366 = vmand %vm8346, %vm8356
      %vm8367 = vmand %vm8347, %vm8357
      %v8368 = vsel %vm8358, 1, 0
      %v8369 = vsel %vm8359, 1, 0
      %v8370 = vsel %vm8360, 1, 0
      %v8371 = vsel %vm8361, 1, 0
      %v8372 = vsel %vm8362, 1, 0
      %v8373 = vsel %vm8363, 1, 0
      %v8374 = vsel %vm8364, 1, 0
      %v8375 = vsel %vm8365, 1, 0
      %v8376 = vsel %vm8366, 1, 0
      %v8377 = vsel %vm8367, 1, 0
      %v8378 = vcvt.s32.f32 %v8368
      %v8379 = vcvt.s32.f32 %v8369
      %v8380 = vcvt.s32.f32 %v8370
      %v8381 = vcvt.s32.f32 %v8371
      %v8382 = vcvt.s32.f32 %v8372
      %v8383 = vcvt.s32.f32 %v8373
      %v8384 = vcvt.s32.f32 %v8374
      %v8385 = vcvt.s32.f32 %v8375
      %v8386 = vcvt.s32.f32 %v8376
      %v8387 = vcvt.s32.f32 %v8377
      %v8388 = vmul.f32 %v8307, %v8378
      %v8389 = vmul.f32 %v8308, %v8378
      %v8390 = vmul.f32 %v8309, %v8379
      %v8391 = vmul.f32 %v8310, %v8379
      %v8392 = vmul.f32 %v8311, %v8380
      %v8393 = vmul.f32 %v8312, %v8380
      %v8394 = vmul.f32 %v8313, %v8381
      %v8395 = vmul.f32 %v8314, %v8381
      %v8396 = vmul.f32 %v8315, %v8382
      %v8397 = vmul.f32 %v8316, %v8382
      %v8398 = vmul.f32 %v8317, %v8383
      %v8399 = vmul.f32 %v8318, %v8383
      %v8400 = vmul.f32 %v8319, %v8384
      %v8401 = vmul.f32 %v8320, %v8384
      %v8402 = vmul.f32 %v8321, %v8385
      %v8403 = vmul.f32 %v8322, %v8385
      %v8404 = vmul.f32 %v8323, %v8386
      %v8405 = vmul.f32 %v8324, %v8386
      %v8406 = vmul.f32 %v8325, %v8387
      %v8407 = vmul.f32 %v8326, %v8387
      %v8408 = vpack.c.bf16 %v8389, %v8388
      %v8409 = vpack.c.bf16 %v8391, %v8390
      %v8410 = vpack.c.bf16 %v8393, %v8392
      %v8411 = vpack.c.bf16 %v8395, %v8394
      %v8412 = vpack.c.bf16 %v8397, %v8396
      %v8413 = vpack.c.bf16 %v8399, %v8398
      %v8414 = vpack.c.bf16 %v8401, %v8400
      %v8415 = vpack.c.bf16 %v8403, %v8402
      %v8416 = vpack.c.bf16 %v8405, %v8404
      %v8417 = vpack.c.bf16 %v8407, %v8406
      %v8428 = vunpack.c.l.b16 %v8408
      %v8429 = vunpack.c.h.b16 %v8408
      %v8430 = vunpack.c.l.b16 %v8409
      %v8431 = vunpack.c.h.b16 %v8409
      %v8432 = vunpack.c.l.b16 %v8410
      %v8433 = vunpack.c.h.b16 %v8410
      %v8434 = vunpack.c.l.b16 %v8411
      %v8435 = vunpack.c.h.b16 %v8411
      %v8436 = vunpack.c.l.b16 %v8412
      %v8437 = vunpack.c.h.b16 %v8412
      %v8438 = vunpack.c.l.b16 %v8413
      %v8439 = vunpack.c.h.b16 %v8413
      %v8440 = vunpack.c.l.b16 %v8414
      %v8441 = vunpack.c.h.b16 %v8414
      %v8442 = vunpack.c.l.b16 %v8415
      %v8443 = vunpack.c.h.b16 %v8415
      %v8444 = vunpack.c.l.b16 %v8416
      %v8445 = vunpack.c.h.b16 %v8416
      %v8446 = vunpack.c.l.b16 %v8417
      %v8447 = vunpack.c.h.b16 %v8417
      %v8448 = vpack.c.b16 %v8428, %v8428
      %v8449 = vpack.c.b16 %v8429, %v8429
      %v8450 = vpack.c.b16 %v8430, %v8430
      %v8451 = vpack.c.b16 %v8431, %v8431
      %v8452 = vpack.c.b16 %v8432, %v8432
      %v8453 = vpack.c.b16 %v8433, %v8433
      %v8454 = vpack.c.b16 %v8434, %v8434
      %v8455 = vpack.c.b16 %v8435, %v8435
      %v8456 = vpack.c.b16 %v8436, %v8436
      %v8457 = vpack.c.b16 %v8437, %v8437
      %v8458 = vpack.c.b16 %v8438, %v8438
      %v8459 = vpack.c.b16 %v8439, %v8439
      %v8460 = vpack.c.b16 %v8440, %v8440
      %v8461 = vpack.c.b16 %v8441, %v8441
      %v8462 = vpack.c.b16 %v8442, %v8442
      %v8463 = vpack.c.b16 %v8443, %v8443
      %v8464 = vpack.c.b16 %v8444, %v8444
      %v8465 = vpack.c.b16 %v8445, %v8445
      %v8466 = vpack.c.b16 %v8446, %v8446
      %v8467 = vpack.c.b16 %v8447, %v8447
      %v8469 = vshrl.u32 %v8448, 16
      %v8471 = vrot.slane %v8469, 7
      %v8472 = vshll.u32 %v8448, 16
      %v8474 = vor.u32 %v8471, %v8472
      %v8475 = vrot.slane %v8471, 4
      %v8477 = vshrl.u32 %v8449, 16
      %v8479 = vrot.slane %v8477, 7
      %v8480 = vshll.u32 %v8449, 16
      %v8482 = vor.u32 %v8479, %v8480
      %v8483 = vsel %vm720, %v8475, %v8482
      %v8484 = vrot.slane %v8479, 4
      %v8486 = vshrl.u32 %v8450, 16
      %v8488 = vrot.slane %v8486, 7
      %v8489 = vshll.u32 %v8450, 16
      %v8491 = vor.u32 %v8488, %v8489
      %v8492 = vrot.slane %v8488, 4
      %v8494 = vshrl.u32 %v8451, 16
      %v8496 = vrot.slane %v8494, 7
      %v8497 = vshll.u32 %v8451, 16
      %v8499 = vor.u32 %v8496, %v8497
      %v8500 = vsel %vm720, %v8492, %v8499
      %v8501 = vrot.slane %v8496, 4
      %v8503 = vshrl.u32 %v8452, 16
      %v8505 = vrot.slane %v8503, 7
      %v8506 = vshll.u32 %v8452, 16
      %v8508 = vor.u32 %v8505, %v8506
      %v8509 = vrot.slane %v8505, 4
      %v8511 = vshrl.u32 %v8453, 16
      %v8513 = vrot.slane %v8511, 7
      %v8514 = vshll.u32 %v8453, 16
      %v8516 = vor.u32 %v8513, %v8514
      %v8517 = vsel %vm720, %v8509, %v8516
      %v8518 = vrot.slane %v8513, 4
      %v8520 = vshrl.u32 %v8454, 16
      %v8522 = vrot.slane %v8520, 7
      %v8523 = vshll.u32 %v8454, 16
      %v8525 = vor.u32 %v8522, %v8523
      %v8526 = vrot.slane %v8522, 4
      %v8528 = vshrl.u32 %v8455, 16
      %v8530 = vrot.slane %v8528, 7
      %v8531 = vshll.u32 %v8455, 16
      %v8533 = vor.u32 %v8530, %v8531
      %v8534 = vsel %vm720, %v8526, %v8533
      %v8535 = vrot.slane %v8530, 4
      %v8537 = vshrl.u32 %v8456, 16
      %v8539 = vrot.slane %v8537, 7
      %v8540 = vshll.u32 %v8456, 16
      %v8542 = vor.u32 %v8539, %v8540
      %v8543 = vrot.slane %v8539, 4
      %v8545 = vshrl.u32 %v8457, 16
      %v8547 = vrot.slane %v8545, 7
      %v8548 = vshll.u32 %v8457, 16
      %v8550 = vor.u32 %v8547, %v8548
      %v8551 = vsel %vm720, %v8543, %v8550
      %v8552 = vrot.slane %v8547, 4
      %v8554 = vshrl.u32 %v8458, 16
      %v8556 = vrot.slane %v8554, 7
      %v8557 = vshll.u32 %v8458, 16
      %v8559 = vor.u32 %v8556, %v8557
      %v8560 = vrot.slane %v8556, 4
      %v8562 = vshrl.u32 %v8459, 16
      %v8564 = vrot.slane %v8562, 7
      %v8565 = vshll.u32 %v8459, 16
      %v8567 = vor.u32 %v8564, %v8565
      %v8568 = vsel %vm720, %v8560, %v8567
      %v8569 = vrot.slane %v8564, 4
      %v8571 = vshrl.u32 %v8460, 16
      %v8573 = vrot.slane %v8571, 7
      %v8574 = vshll.u32 %v8460, 16
      %v8576 = vor.u32 %v8573, %v8574
      %v8577 = vrot.slane %v8573, 4
      %v8579 = vshrl.u32 %v8461, 16
      %v8581 = vrot.slane %v8579, 7
      %v8582 = vshll.u32 %v8461, 16
      %v8584 = vor.u32 %v8581, %v8582
      %v8585 = vsel %vm720, %v8577, %v8584
      %v8586 = vrot.slane %v8581, 4
      %v8588 = vshrl.u32 %v8462, 16
      %v8590 = vrot.slane %v8588, 7
      %v8591 = vshll.u32 %v8462, 16
      %v8593 = vor.u32 %v8590, %v8591
      %v8594 = vrot.slane %v8590, 4
      %v8596 = vshrl.u32 %v8463, 16
      %v8598 = vrot.slane %v8596, 7
      %v8599 = vshll.u32 %v8463, 16
      %v8601 = vor.u32 %v8598, %v8599
      %v8602 = vsel %vm720, %v8594, %v8601
      %v8603 = vrot.slane %v8598, 4
      %v8605 = vshrl.u32 %v8464, 16
      %v8607 = vrot.slane %v8605, 7
      %v8608 = vshll.u32 %v8464, 16
      %v8610 = vor.u32 %v8607, %v8608
      %v8611 = vrot.slane %v8607, 4
      %v8613 = vshrl.u32 %v8465, 16
      %v8615 = vrot.slane %v8613, 7
      %v8616 = vshll.u32 %v8465, 16
      %v8618 = vor.u32 %v8615, %v8616
      %v8619 = vsel %vm720, %v8611, %v8618
      %v8620 = vrot.slane %v8615, 4
      %v8622 = vshrl.u32 %v8466, 16
      %v8624 = vrot.slane %v8622, 7
      %v8625 = vshll.u32 %v8466, 16
      %v8627 = vor.u32 %v8624, %v8625
      %v8628 = vrot.slane %v8624, 4
      %v8630 = vshrl.u32 %v8467, 16
      %v8632 = vrot.slane %v8630, 7
      %v8633 = vshll.u32 %v8467, 16
      %v8635 = vor.u32 %v8632, %v8633
      %v8636 = vsel %vm720, %v8628, %v8635
      %v8637 = vrot.slane %v8632, 4
      %8638 = vrot.lane.b32.xlu0 %v8474, 8
      %v8639 = vpop.permute.xlu0 %8638
      %8640 = vrot.lane.b32.xlu0 %v8483, 8
      %v8641 = vpop.permute.xlu0 %8640
      %8642 = vrot.lane.b32.xlu0 %v8484, 8
      %v8643 = vpop.permute.xlu0 %8642
      %8644 = vrot.lane.b32.xlu0 %v8491, 8
      %v8645 = vpop.permute.xlu0 %8644
      %8646 = vrot.lane.b32.xlu0 %v8500, 8
      %v8647 = vpop.permute.xlu0 %8646
      %8648 = vrot.lane.b32.xlu0 %v8501, 8
      %v8649 = vpop.permute.xlu0 %8648
      %8650 = vrot.lane.b32.xlu0 %v8508, 8
      %v8651 = vpop.permute.xlu0 %8650
      %8652 = vrot.lane.b32.xlu0 %v8517, 8
      %v8653 = vpop.permute.xlu0 %8652
      %8654 = vrot.lane.b32.xlu0 %v8518, 8
      %v8655 = vpop.permute.xlu0 %8654
      %8656 = vrot.lane.b32.xlu0 %v8525, 8
      %v8657 = vpop.permute.xlu0 %8656
      %8658 = vrot.lane.b32.xlu0 %v8534, 8
      %v8659 = vpop.permute.xlu0 %8658
      %8660 = vrot.lane.b32.xlu0 %v8535, 8
      %v8661 = vpop.permute.xlu0 %8660
      %8662 = vrot.lane.b32.xlu0 %v8542, 8
      %v8663 = vpop.permute.xlu0 %8662
      %8664 = vrot.lane.b32.xlu0 %v8551, 8
      %v8665 = vpop.permute.xlu0 %8664
      %8666 = vrot.lane.b32.xlu0 %v8552, 8
      %v8667 = vpop.permute.xlu0 %8666
      %8668 = vrot.lane.b32.xlu0 %v8559, 8
      %v8669 = vpop.permute.xlu0 %8668
      %8670 = vrot.lane.b32.xlu0 %v8568, 8
      %v8671 = vpop.permute.xlu0 %8670
      %8672 = vrot.lane.b32.xlu0 %v8569, 8
      %v8673 = vpop.permute.xlu0 %8672
      %8674 = vrot.lane.b32.xlu0 %v8576, 8
      %v8675 = vpop.permute.xlu0 %8674
      %8676 = vrot.lane.b32.xlu0 %v8585, 8
      %v8677 = vpop.permute.xlu0 %8676
      %8678 = vrot.lane.b32.xlu0 %v8586, 8
      %v8679 = vpop.permute.xlu0 %8678
      %8680 = vrot.lane.b32.xlu0 %v8593, 8
      %v8681 = vpop.permute.xlu0 %8680
      %8682 = vrot.lane.b32.xlu0 %v8602, 8
      %v8683 = vpop.permute.xlu0 %8682
      %8684 = vrot.lane.b32.xlu0 %v8603, 8
      %v8685 = vpop.permute.xlu0 %8684
      %8686 = vrot.lane.b32.xlu0 %v8610, 8
      %v8687 = vpop.permute.xlu0 %8686
      %8688 = vrot.lane.b32.xlu0 %v8619, 8
      %v8689 = vpop.permute.xlu0 %8688
      %8690 = vrot.lane.b32.xlu0 %v8620, 8
      %v8691 = vpop.permute.xlu0 %8690
      %8692 = vrot.lane.b32.xlu0 %v8627, 8
      %v8693 = vpop.permute.xlu0 %8692
      %8694 = vrot.lane.b32.xlu0 %v8636, 8
      %v8695 = vpop.permute.xlu0 %8694
      %8696 = vrot.lane.b32.xlu0 %v8637, 8
      %v8697 = vpop.permute.xlu0 %8696
      %vm8728 = vcmask 93248
      %vm8729 = vmand %vm8728, %vm611
      %v8730 = vsel %vm8729, %v8639, %v6495
      %8731 = vst [vmem:[%s3494] sm:$0xf] %v8730
      %vm8732 = vcmask 93248
      %8733 = vst.msk [vmem:[%s3494 + $0x4] sm:$0xf] %vm8732, %v8641
      %vm8734 = vcmask 90176
      %vm8735 = vmand %vm8734, %vm567
      %v8736 = vld [vmem:[%s3494 + $0x8] sm:$0x1]
      %v8737 = vsel %vm8735, %v8643, %v8736
      %8738 = vst [vmem:[%s3494 + $0x8] sm:$0x1] %v8737
      %v8739 = vld [vmem:[%s3494 + $0xc] sm:$0xf]
      %v8740 = vsel %vm8729, %v8645, %v8739
      %8741 = vst [vmem:[%s3494 + $0xc] sm:$0xf] %v8740
      %8742 = vst.msk [vmem:[%s3494 + $0x10] sm:$0xf] %vm8732, %v8647
      %v8743 = vld [vmem:[%s3494 + $0x14] sm:$0x1]
      %v8744 = vsel %vm8735, %v8649, %v8743
      %8745 = vst [vmem:[%s3494 + $0x14] sm:$0x1] %v8744
      %v8746 = vld [vmem:[%s3494 + $0x18] sm:$0xf]
      %v8747 = vsel %vm8729, %v8651, %v8746
      %8748 = vst [vmem:[%s3494 + $0x18] sm:$0xf] %v8747
      %8749 = vst.msk [vmem:[%s3494 + $0x1c] sm:$0xf] %vm8732, %v8653
      %v8750 = vld [vmem:[%s3494 + $0x20] sm:$0x1]
      %v8751 = vsel %vm8735, %v8655, %v8750
      %8752 = vst [vmem:[%s3494 + $0x20] sm:$0x1] %v8751
      %v8753 = vld [vmem:[%s3494 + $0x24] sm:$0xf]
      %v8754 = vsel %vm8729, %v8657, %v8753
      %8755 = vst [vmem:[%s3494 + $0x24] sm:$0xf] %v8754
      %8756 = vst.msk [vmem:[%s3494 + $0x28] sm:$0xf] %vm8732, %v8659
      %v8757 = vld [vmem:[%s3494 + $0x2c] sm:$0x1]
      %v8758 = vsel %vm8735, %v8661, %v8757
      %8759 = vst [vmem:[%s3494 + $0x2c] sm:$0x1] %v8758
      %v8760 = vld [vmem:[%s3494 + $0x30] sm:$0xf]
      %v8761 = vsel %vm8729, %v8663, %v8760
      %8762 = vst [vmem:[%s3494 + $0x30] sm:$0xf] %v8761
      %8763 = vst.msk [vmem:[%s3494 + $0x34] sm:$0xf] %vm8732, %v8665
      %v8764 = vld [vmem:[%s3494 + $0x38] sm:$0x1]
      %v8765 = vsel %vm8735, %v8667, %v8764
      %8766 = vst [vmem:[%s3494 + $0x38] sm:$0x1] %v8765
      %v8767 = vld [vmem:[%s3494 + $0x3c] sm:$0xf]
      %v8768 = vsel %vm8729, %v8669, %v8767
      %8769 = vst [vmem:[%s3494 + $0x3c] sm:$0xf] %v8768
      %8770 = vst.msk [vmem:[%s3494 + $0x40] sm:$0xf] %vm8732, %v8671
      %v8771 = vld [vmem:[%s3494 + $0x44] sm:$0x1]
      %v8772 = vsel %vm8735, %v8673, %v8771
      %8773 = vst [vmem:[%s3494 + $0x44] sm:$0x1] %v8772
      %v8774 = vld [vmem:[%s3494 + $0x48] sm:$0xf]
      %v8775 = vsel %vm8729, %v8675, %v8774
      %8776 = vst [vmem:[%s3494 + $0x48] sm:$0xf] %v8775
      %8777 = vst.msk [vmem:[%s3494 + $0x4c] sm:$0xf] %vm8732, %v8677
      %v8778 = vld [vmem:[%s3494 + $0x50] sm:$0x1]
      %v8779 = vsel %vm8735, %v8679, %v8778
      %8780 = vst [vmem:[%s3494 + $0x50] sm:$0x1] %v8779
      %v8781 = vld [vmem:[%s3494 + $0x54] sm:$0xf]
      %v8782 = vsel %vm8729, %v8681, %v8781
      %8783 = vst [vmem:[%s3494 + $0x54] sm:$0xf] %v8782
      %8784 = vst.msk [vmem:[%s3494 + $0x58] sm:$0xf] %vm8732, %v8683
      %v8785 = vld [vmem:[%s3494 + $0x5c] sm:$0x1]
      %v8786 = vsel %vm8735, %v8685, %v8785
      %8787 = vst [vmem:[%s3494 + $0x5c] sm:$0x1] %v8786
      %v8788 = vld [vmem:[%s3494 + $0x60] sm:$0xf]
      %v8789 = vsel %vm8729, %v8687, %v8788
      %8790 = vst [vmem:[%s3494 + $0x60] sm:$0xf] %v8789
      %8791 = vst.msk [vmem:[%s3494 + $0x64] sm:$0xf] %vm8732, %v8689
      %v8792 = vld [vmem:[%s3494 + $0x68] sm:$0x1]
      %v8793 = vsel %vm8735, %v8691, %v8792
      %8794 = vst [vmem:[%s3494 + $0x68] sm:$0x1] %v8793
      %v8795 = vld [vmem:[%s3494 + $0x6c] sm:$0xf]
      %v8796 = vsel %vm8729, %v8693, %v8795
      %8797 = vst [vmem:[%s3494 + $0x6c] sm:$0xf] %v8796
      %8798 = vst.msk [vmem:[%s3494 + $0x70] sm:$0xf] %vm8732, %v8695
      %v8799 = vld [vmem:[%s3494 + $0x74] sm:$0x1]
      %v8800 = vsel %vm8735, %v8697, %v8799
      %8801 = vst [vmem:[%s3494 + $0x74] sm:$0x1] %v8800
      %v8802 = vld [vmem:[%s3494] sm:$0xf]
      %v8803 = vld [vmem:[%s3494 + $0x4] sm:$0xf]
      %v8804 = vld [vmem:[%s3494 + $0xc] sm:$0xf]
      %v8805 = vld [vmem:[%s3494 + $0x10] sm:$0xf]
      %v8806 = vld [vmem:[%s3494 + $0x18] sm:$0xf]
      %v8807 = vld [vmem:[%s3494 + $0x1c] sm:$0xf]
      %v8808 = vld [vmem:[%s3494 + $0x24] sm:$0xf]
      %v8809 = vld [vmem:[%s3494 + $0x28] sm:$0xf]
      %v8810 = vld [vmem:[%s3494 + $0x30] sm:$0xf]
      %v8811 = vld [vmem:[%s3494 + $0x34] sm:$0xf]
      %v8812 = vld [vmem:[%s3494 + $0x3c] sm:$0xf]
      %v8813 = vld [vmem:[%s3494 + $0x40] sm:$0xf]
      %v8814 = vld [vmem:[%s3494 + $0x48] sm:$0xf]
      %v8815 = vld [vmem:[%s3494 + $0x4c] sm:$0xf]
      %v8816 = vld [vmem:[%s3494 + $0x54] sm:$0xf]
      %v8817 = vld [vmem:[%s3494 + $0x58] sm:$0xf]
      %v8818 = vld [vmem:[%s7] sm:$0xf]
      %v8819 = vld [vmem:[%s7 + $0x4] sm:$0x3]
      %v8820 = vld [vmem:[%s3494 + $0x8] sm:$0x1]
      %v8821 = vld [vmem:[%s3494 + $0x14] sm:$0x1]
      %v8822 = vld [vmem:[%s3494 + $0x20] sm:$0x1]
      %v8823 = vld [vmem:[%s3494 + $0x2c] sm:$0x1]
      %v8824 = vld [vmem:[%s3494 + $0x38] sm:$0x1]
      %v8825 = vld [vmem:[%s3494 + $0x44] sm:$0x1]
      %v8826 = vld [vmem:[%s3494 + $0x50] sm:$0x1]
      %v8827 = vld [vmem:[%s3494 + $0x5c] sm:$0x1]
      %v8828 = vld [vmem:[%s7 + $0x4] sm:$0xc]
      %v8829 = vld [vmem:[%s7 + $0x8] sm:$0xf]
      %v8831 = vshrl.u32 %v8802, 16
      %v8833 = vrot.slane %v8831, 4
      %v8834 = vshll.u32 %v8802, 16
      %v8836 = vrot.slane %v8834, 5
      %v8837 = vor.u32 %v8833, %v8836
      %v8838 = vrot.slane %v8837, 4
      %v8840 = vshll.u32 %v8803, 16
      %v8842 = vrot.slane %v8840, 5
      %v8843 = vsel %vm1215, %v8838, %v8842
      %v8844 = vshrl.u32 %v8803, 16
      %v8846 = vrot.slane %v8844, 4
      %v8847 = vor.u32 %v8846, %v8842
      %v8848 = vrot.slane %v8847, 4
      %v8850 = vshll.u32 %v8820, 16
      %v8852 = vrot.slane %v8850, 5
      %v8853 = vsel %vm1215, %v8848, %v8852
      %v8855 = vshrl.u32 %v8804, 16
      %v8857 = vrot.slane %v8855, 4
      %v8858 = vshll.u32 %v8804, 16
      %v8860 = vrot.slane %v8858, 5
      %v8861 = vor.u32 %v8857, %v8860
      %v8862 = vrot.slane %v8861, 4
      %v8864 = vshll.u32 %v8805, 16
      %v8866 = vrot.slane %v8864, 5
      %v8867 = vsel %vm1215, %v8862, %v8866
      %v8868 = vshrl.u32 %v8805, 16
      %v8870 = vrot.slane %v8868, 4
      %v8871 = vor.u32 %v8870, %v8866
      %v8872 = vrot.slane %v8871, 4
      %v8874 = vshll.u32 %v8821, 16
      %v8876 = vrot.slane %v8874, 5
      %v8877 = vsel %vm1215, %v8872, %v8876
      %v8879 = vshrl.u32 %v8806, 16
      %v8881 = vrot.slane %v8879, 4
      %v8882 = vshll.u32 %v8806, 16
      %v8884 = vrot.slane %v8882, 5
      %v8885 = vor.u32 %v8881, %v8884
      %v8886 = vrot.slane %v8885, 4
      %v8888 = vshll.u32 %v8807, 16
      %v8890 = vrot.slane %v8888, 5
      %v8891 = vsel %vm1215, %v8886, %v8890
      %v8892 = vshrl.u32 %v8807, 16
      %v8894 = vrot.slane %v8892, 4
      %v8895 = vor.u32 %v8894, %v8890
      %v8896 = vrot.slane %v8895, 4
      %v8898 = vshll.u32 %v8822, 16
      %v8900 = vrot.slane %v8898, 5
      %v8901 = vsel %vm1215, %v8896, %v8900
      %v8903 = vshrl.u32 %v8808, 16
      %v8905 = vrot.slane %v8903, 4
      %v8906 = vshll.u32 %v8808, 16
      %v8908 = vrot.slane %v8906, 5
      %v8909 = vor.u32 %v8905, %v8908
      %v8910 = vrot.slane %v8909, 4
      %v8912 = vshll.u32 %v8809, 16
      %v8914 = vrot.slane %v8912, 5
      %v8915 = vsel %vm1215, %v8910, %v8914
      %v8916 = vshrl.u32 %v8809, 16
      %v8918 = vrot.slane %v8916, 4
      %v8919 = vor.u32 %v8918, %v8914
      %v8920 = vrot.slane %v8919, 4
      %v8922 = vshll.u32 %v8823, 16
      %v8924 = vrot.slane %v8922, 5
      %v8925 = vsel %vm1215, %v8920, %v8924
      %v8927 = vshrl.u32 %v8810, 16
      %v8929 = vrot.slane %v8927, 4
      %v8930 = vshll.u32 %v8810, 16
      %v8932 = vrot.slane %v8930, 5
      %v8933 = vor.u32 %v8929, %v8932
      %v8934 = vrot.slane %v8933, 4
      %v8936 = vshll.u32 %v8811, 16
      %v8938 = vrot.slane %v8936, 5
      %v8939 = vsel %vm1215, %v8934, %v8938
      %v8940 = vshrl.u32 %v8811, 16
      %v8942 = vrot.slane %v8940, 4
      %v8943 = vor.u32 %v8942, %v8938
      %v8944 = vrot.slane %v8943, 4
      %v8946 = vshll.u32 %v8824, 16
      %v8948 = vrot.slane %v8946, 5
      %v8949 = vsel %vm1215, %v8944, %v8948
      %v8951 = vshrl.u32 %v8812, 16
      %v8953 = vrot.slane %v8951, 4
      %v8954 = vshll.u32 %v8812, 16
      %v8956 = vrot.slane %v8954, 5
      %v8957 = vor.u32 %v8953, %v8956
      %v8958 = vrot.slane %v8957, 4
      %v8960 = vshll.u32 %v8813, 16
      %v8962 = vrot.slane %v8960, 5
      %v8963 = vsel %vm1215, %v8958, %v8962
      %v8964 = vshrl.u32 %v8813, 16
      %v8966 = vrot.slane %v8964, 4
      %v8967 = vor.u32 %v8966, %v8962
      %v8968 = vrot.slane %v8967, 4
      %v8970 = vshll.u32 %v8825, 16
      %v8972 = vrot.slane %v8970, 5
      %v8973 = vsel %vm1215, %v8968, %v8972
      %v8975 = vshrl.u32 %v8814, 16
      %v8977 = vrot.slane %v8975, 4
      %v8978 = vshll.u32 %v8814, 16
      %v8980 = vrot.slane %v8978, 5
      %v8981 = vor.u32 %v8977, %v8980
      %v8982 = vrot.slane %v8981, 4
      %v8984 = vshll.u32 %v8815, 16
      %v8986 = vrot.slane %v8984, 5
      %v8987 = vsel %vm1215, %v8982, %v8986
      %v8988 = vshrl.u32 %v8815, 16
      %v8990 = vrot.slane %v8988, 4
      %v8991 = vor.u32 %v8990, %v8986
      %v8992 = vrot.slane %v8991, 4
      %v8994 = vshll.u32 %v8826, 16
      %v8996 = vrot.slane %v8994, 5
      %v8997 = vsel %vm1215, %v8992, %v8996
      %v8999 = vshrl.u32 %v8816, 16
      %v9001 = vrot.slane %v8999, 4
      %v9002 = vshll.u32 %v8816, 16
      %v9004 = vrot.slane %v9002, 5
      %v9005 = vor.u32 %v9001, %v9004
      %v9006 = vrot.slane %v9005, 4
      %v9008 = vshll.u32 %v8817, 16
      %v9010 = vrot.slane %v9008, 5
      %v9011 = vsel %vm1215, %v9006, %v9010
      %v9012 = vshrl.u32 %v8817, 16
      %v9014 = vrot.slane %v9012, 4
      %v9015 = vor.u32 %v9014, %v9010
      %v9016 = vrot.slane %v9015, 4
      %v9018 = vshll.u32 %v8827, 16
      %v9020 = vrot.slane %v9018, 5
      %v9021 = vsel %vm1215, %v9016, %v9020
      %v9022 = vunpack.c.l.b16 %v8843
      %v9023 = vunpack.c.l.b16 %v8853
      %v9024 = vunpack.c.l.b16 %v8867
      %v9025 = vunpack.c.l.b16 %v8877
      %v9026 = vunpack.c.l.b16 %v8891
      %v9027 = vunpack.c.l.b16 %v8901
      %v9028 = vunpack.c.l.b16 %v8915
      %v9029 = vunpack.c.l.b16 %v8925
      %v9030 = vunpack.c.l.b16 %v8939
      %v9031 = vunpack.c.l.b16 %v8949
      %v9032 = vunpack.c.l.b16 %v8963
      %v9033 = vunpack.c.l.b16 %v8973
      %v9034 = vunpack.c.l.b16 %v8987
      %v9035 = vunpack.c.l.b16 %v8997
      %v9036 = vunpack.c.l.b16 %v9011
      %v9037 = vunpack.c.l.b16 %v9021
      %v9038 = vpack.c.b16 %v9023, %v9022
      %v9039 = vpack.c.b16 %v9025, %v9024
      %v9040 = vpack.c.b16 %v9027, %v9026
      %v9041 = vpack.c.b16 %v9029, %v9028
      %v9042 = vpack.c.b16 %v9031, %v9030
      %v9043 = vpack.c.b16 %v9033, %v9032
      %v9044 = vpack.c.b16 %v9035, %v9034
      %v9045 = vpack.c.b16 %v9037, %v9036
      %v9048 = vunpack.c.l.b16 %v8828
      %v9049 = vunpack.c.l.b16 %v8829
      %v9050 = vpack.c.b16 %v9049, %v9048
      %v9051 = vrot.slane %v9050, 2
      %vm9052 = vcmask 97280
      %v9054 = vsel %vm9052, %v9038, 0
      %v9057 = vsel %vm9052, %v9039, 0
      %v9060 = vsel %vm9052, %v9040, 0
      %v9063 = vsel %vm9052, %v9041, 0
      %v9066 = vsel %vm9052, %v9042, 0
      %v9069 = vsel %vm9052, %v9043, 0
      %v9072 = vsel %vm9052, %v9044, 0
      %v9075 = vsel %vm9052, %v9045, 0
      %vm9077 = vcmask 1045504
      %v9079 = vsel %vm9077, %v9051, 0
      %9081 = vmatprep.subr.bf16.mxu0 0
      %9082 = vmatpush1.bf16.msra.mxu0 %v9079
      %9083 = vmatprep.subr.bf16.mxu0 0
      %9084 = vmatpush1.bf16.msra.mxu0 0
      %9085 = vmatprep.subr.bf16.mxu0 0
      %9086 = vmatpush1.bf16.msra.mxu0 0
      %9087 = vmatprep.subr.bf16.mxu0 0
      %9088 = vmatpush1.bf16.msra.mxu0 0
      %9089 = vmatprep.subr.bf16.mxu0 0
      %9090 = vmatpush1.bf16.msra.mxu0 0
      %9091 = vmatprep.subr.bf16.mxu0 0
      %9092 = vmatpush1.bf16.msra.mxu0 0
      %9093 = vmatprep.subr.bf16.mxu0 0
      %9094 = vmatpush1.bf16.msra.mxu0 0
      %9095 = vmatprep.subr.bf16.mxu0 0
      %9096 = vmatpush1.bf16.msra.mxu0 0
      %9097 = vmatprep.subr.bf16.mxu0 0
      %9098 = vmatpush1.bf16.msra.mxu0 0
      %9099 = vmatprep.subr.bf16.mxu0 0
      %9100 = vmatpush1.bf16.msra.mxu0 0
      %9101 = vmatprep.subr.bf16.mxu0 0
      %9102 = vmatpush1.bf16.msra.mxu0 0
      %9103 = vmatprep.subr.bf16.mxu0 0
      %9104 = vmatpush1.bf16.msra.mxu0 0
      %9105 = vmatprep.subr.bf16.mxu0 0
      %9106 = vmatpush1.bf16.msra.mxu0 0
      %9107 = vmatprep.subr.bf16.mxu0 0
      %9108 = vmatpush1.bf16.msra.mxu0 0
      %9109 = vmatprep.subr.bf16.mxu0 0
      %9110 = vmatpush1.bf16.msra.mxu0 0
      %9111 = vmatprep.subr.bf16.mxu0 0
      %9112 = vmatpush1.bf16.msra.mxu0 0
      %9113 = vmatprep.mubr.bf16.mxu0 0
      %9114 = vmatmul.mubr.bf16.gmra.mrb[0].mxu0 %v9054
      %v9115 = vpop.f32.mrb[0].mxu0
      %v9116 = vadd.f32 0.0, %v9115
      %v9117 = vpop.f32.mrb[0].mxu0
      %v9118 = vpop.f32.mrb[0].mxu0
      %v9119 = vadd.f32 0.0, %v9118
      %v9120 = vpop.f32.mrb[0].mxu0
      %9121 = vmatprep.mubr.bf16.mxu0 0
      %9122 = vmatmul.mubr.bf16.gmra.mrb[0].mxu0 %v9057
      %v9123 = vpop.f32.mrb[0].mxu0
      %v9124 = vadd.f32 0.0, %v9123
      %v9125 = vpop.f32.mrb[0].mxu0
      %v9126 = vpop.f32.mrb[0].mxu0
      %v9127 = vadd.f32 0.0, %v9126
      %v9128 = vpop.f32.mrb[0].mxu0
      %9129 = vmatprep.mubr.bf16.mxu0 0
      %9130 = vmatmul.mubr.bf16.gmra.mrb[0].mxu0 %v9060
      %v9131 = vpop.f32.mrb[0].mxu0
      %v9132 = vadd.f32 0.0, %v9131
      %v9133 = vpop.f32.mrb[0].mxu0
      %v9134 = vpop.f32.mrb[0].mxu0
      %v9135 = vadd.f32 0.0, %v9134
      %v9136 = vpop.f32.mrb[0].mxu0
      %9137 = vmatprep.mubr.bf16.mxu0 0
      %9138 = vmatmul.mubr.bf16.gmra.mrb[0].mxu0 %v9063
      %v9139 = vpop.f32.mrb[0].mxu0
      %v9140 = vadd.f32 0.0, %v9139
      %v9141 = vpop.f32.mrb[0].mxu0
      %v9142 = vpop.f32.mrb[0].mxu0
      %v9143 = vadd.f32 0.0, %v9142
      %v9144 = vpop.f32.mrb[0].mxu0
      %9145 = vmatprep.mubr.bf16.mxu0 0
      %9146 = vmatmul.mubr.bf16.gmra.mrb[0].mxu0 %v9066
      %v9147 = vpop.f32.mrb[0].mxu0
      %v9148 = vadd.f32 0.0, %v9147
      %v9149 = vpop.f32.mrb[0].mxu0
      %v9150 = vpop.f32.mrb[0].mxu0
      %v9151 = vadd.f32 0.0, %v9150
      %v9152 = vpop.f32.mrb[0].mxu0
      %9153 = vmatprep.mubr.bf16.mxu0 0
      %9154 = vmatmul.mubr.bf16.gmra.mrb[0].mxu0 %v9069
      %v9155 = vpop.f32.mrb[0].mxu0
      %v9156 = vadd.f32 0.0, %v9155
      %v9157 = vpop.f32.mrb[0].mxu0
      %v9158 = vpop.f32.mrb[0].mxu0
      %v9159 = vadd.f32 0.0, %v9158
      %v9160 = vpop.f32.mrb[0].mxu0
      %9161 = vmatprep.mubr.bf16.mxu0 0
      %9162 = vmatmul.mubr.bf16.gmra.mrb[0].mxu0 %v9072
      %v9163 = vpop.f32.mrb[0].mxu0
      %v9164 = vadd.f32 0.0, %v9163
      %v9165 = vpop.f32.mrb[0].mxu0
      %v9166 = vpop.f32.mrb[0].mxu0
      %v9167 = vadd.f32 0.0, %v9166
      %v9168 = vpop.f32.mrb[0].mxu0
      %9169 = vmatprep.mubr.bf16.mxu0 0
      %9170 = vmatmul.mubr.bf16.gmra.mrb[0].mxu0 %v9075
      %v9171 = vpop.f32.mrb[0].mxu0
      %v9172 = vadd.f32 0.0, %v9171
      %v9173 = vpop.f32.mrb[0].mxu0
      %v9174 = vpop.f32.mrb[0].mxu0
      %v9175 = vadd.f32 0.0, %v9174
      %v9176 = vpop.f32.mrb[0].mxu0
      %9177 = vdwg.mxu0
      %v9194 = vunpack.c.l.b16 %v8802
      %v9195 = vunpack.c.l.b16 %v8803
      %v9196 = vunpack.c.l.b16 %v8804
      %v9197 = vunpack.c.l.b16 %v8805
      %v9198 = vunpack.c.l.b16 %v8806
      %v9199 = vunpack.c.l.b16 %v8807
      %v9200 = vunpack.c.l.b16 %v8808
      %v9201 = vunpack.c.l.b16 %v8809
      %v9202 = vunpack.c.l.b16 %v8810
      %v9203 = vunpack.c.l.b16 %v8811
      %v9204 = vunpack.c.l.b16 %v8812
      %v9205 = vunpack.c.l.b16 %v8813
      %v9206 = vunpack.c.l.b16 %v8814
      %v9207 = vunpack.c.l.b16 %v8815
      %v9208 = vunpack.c.l.b16 %v8816
      %v9209 = vunpack.c.l.b16 %v8817
      %v9210 = vpack.c.b16 %v9195, %v9194
      %v9211 = vpack.c.b16 %v9197, %v9196
      %v9212 = vpack.c.b16 %v9199, %v9198
      %v9213 = vpack.c.b16 %v9201, %v9200
      %v9214 = vpack.c.b16 %v9203, %v9202
      %v9215 = vpack.c.b16 %v9205, %v9204
      %v9216 = vpack.c.b16 %v9207, %v9206
      %v9217 = vpack.c.b16 %v9209, %v9208
      %v9220 = vunpack.c.l.b16 %v8818
      %v9221 = vunpack.c.l.b16 %v8819
      %v9222 = vpack.c.b16 %v9221, %v9220
      %v9224 = vsel %vm9052, %v9210, 0
      %v9227 = vsel %vm9052, %v9211, 0
      %v9230 = vsel %vm9052, %v9212, 0
      %v9233 = vsel %vm9052, %v9213, 0
      %v9236 = vsel %vm9052, %v9214, 0
      %v9239 = vsel %vm9052, %v9215, 0
      %v9242 = vsel %vm9052, %v9216, 0
      %v9245 = vsel %vm9052, %v9217, 0
      %v9248 = vsel %vm9077, %v9222, 0
      %9250 = vmatprep.subr.bf16.mxu0 0
      %9251 = vmatpush1.bf16.msra.mxu0 %v9248
      %9252 = vmatprep.subr.bf16.mxu0 0
      %9253 = vmatpush1.bf16.msra.mxu0 0
      %9254 = vmatprep.subr.bf16.mxu0 0
      %9255 = vmatpush1.bf16.msra.mxu0 0
      %9256 = vmatprep.subr.bf16.mxu0 0
      %9257 = vmatpush1.bf16.msra.mxu0 0
      %9258 = vmatprep.subr.bf16.mxu0 0
      %9259 = vmatpush1.bf16.msra.mxu0 0
      %9260 = vmatprep.subr.bf16.mxu0 0
      %9261 = vmatpush1.bf16.msra.mxu0 0
      %9262 = vmatprep.subr.bf16.mxu0 0
      %9263 = vmatpush1.bf16.msra.mxu0 0
      %9264 = vmatprep.subr.bf16.mxu0 0
      %9265 = vmatpush1.bf16.msra.mxu0 0
      %9266 = vmatprep.subr.bf16.mxu0 0
      %9267 = vmatpush1.bf16.msra.mxu0 0
      %9268 = vmatprep.subr.bf16.mxu0 0
      %9269 = vmatpush1.bf16.msra.mxu0 0
      %9270 = vmatprep.subr.bf16.mxu0 0
      %9271 = vmatpush1.bf16.msra.mxu0 0
      %9272 = vmatprep.subr.bf16.mxu0 0
      %9273 = vmatpush1.bf16.msra.mxu0 0
      %9274 = vmatprep.subr.bf16.mxu0 0
      %9275 = vmatpush1.bf16.msra.mxu0 0
      %9276 = vmatprep.subr.bf16.mxu0 0
      %9277 = vmatpush1.bf16.msra.mxu0 0
      %9278 = vmatprep.subr.bf16.mxu0 0
      %9279 = vmatpush1.bf16.msra.mxu0 0
      %9280 = vmatprep.subr.bf16.mxu0 0
      %9281 = vmatpush1.bf16.msra.mxu0 0
      %9282 = vmatprep.mubr.bf16.mxu0 0
      %9283 = vmatmul.mubr.bf16.gmra.mrb[0].mxu0 %v9224
      %v9284 = vpop.f32.mrb[0].mxu0
      %v9285 = vadd.f32 %v9116, %v9284
      %v9286 = vpop.f32.mrb[0].mxu0
      %v9287 = vpop.f32.mrb[0].mxu0
      %v9288 = vadd.f32 %v9119, %v9287
      %v9289 = vpop.f32.mrb[0].mxu0
      %9290 = vmatprep.mubr.bf16.mxu0 0
      %9291 = vmatmul.mubr.bf16.gmra.mrb[0].mxu0 %v9227
      %v9292 = vpop.f32.mrb[0].mxu0
      %v9293 = vadd.f32 %v9124, %v9292
      %v9294 = vpop.f32.mrb[0].mxu0
      %v9295 = vpop.f32.mrb[0].mxu0
      %v9296 = vadd.f32 %v9127, %v9295
      %v9297 = vpop.f32.mrb[0].mxu0
      %9298 = vmatprep.mubr.bf16.mxu0 0
      %9299 = vmatmul.mubr.bf16.gmra.mrb[0].mxu0 %v9230
      %v9300 = vpop.f32.mrb[0].mxu0
      %v9301 = vadd.f32 %v9132, %v9300
      %v9302 = vpop.f32.mrb[0].mxu0
      %v9303 = vpop.f32.mrb[0].mxu0
      %v9304 = vadd.f32 %v9135, %v9303
      %v9305 = vpop.f32.mrb[0].mxu0
      %9306 = vmatprep.mubr.bf16.mxu0 0
      %9307 = vmatmul.mubr.bf16.gmra.mrb[0].mxu0 %v9233
      %v9308 = vpop.f32.mrb[0].mxu0
      %v9309 = vadd.f32 %v9140, %v9308
      %v9310 = vpop.f32.mrb[0].mxu0
      %v9311 = vpop.f32.mrb[0].mxu0
      %v9312 = vadd.f32 %v9143, %v9311
      %v9313 = vpop.f32.mrb[0].mxu0
      %9314 = vmatprep.mubr.bf16.mxu0 0
      %9315 = vmatmul.mubr.bf16.gmra.mrb[0].mxu0 %v9236
      %v9316 = vpop.f32.mrb[0].mxu0
      %v9317 = vadd.f32 %v9148, %v9316
      %v9318 = vpop.f32.mrb[0].mxu0
      %v9319 = vpop.f32.mrb[0].mxu0
      %v9320 = vadd.f32 %v9151, %v9319
      %v9321 = vpop.f32.mrb[0].mxu0
      %9322 = vmatprep.mubr.bf16.mxu0 0
      %9323 = vmatmul.mubr.bf16.gmra.mrb[0].mxu0 %v9239
      %v9324 = vpop.f32.mrb[0].mxu0
      %v9325 = vadd.f32 %v9156, %v9324
      %v9326 = vpop.f32.mrb[0].mxu0
      %v9327 = vpop.f32.mrb[0].mxu0
      %v9328 = vadd.f32 %v9159, %v9327
      %v9329 = vpop.f32.mrb[0].mxu0
      %9330 = vmatprep.mubr.bf16.mxu0 0
      %9331 = vmatmul.mubr.bf16.gmra.mrb[0].mxu0 %v9242
      %v9332 = vpop.f32.mrb[0].mxu0
      %v9333 = vadd.f32 %v9164, %v9332
      %v9334 = vpop.f32.mrb[0].mxu0
      %v9335 = vpop.f32.mrb[0].mxu0
      %v9336 = vadd.f32 %v9167, %v9335
      %v9337 = vpop.f32.mrb[0].mxu0
      %9338 = vmatprep.mubr.bf16.mxu0 0
      %9339 = vmatmul.mubr.bf16.gmra.mrb[0].mxu0 %v9245
      %v9340 = vpop.f32.mrb[0].mxu0
      %v9341 = vadd.f32 %v9172, %v9340
      %v9342 = vpop.f32.mrb[0].mxu0
      %v9343 = vpop.f32.mrb[0].mxu0
      %v9344 = vadd.f32 %v9175, %v9343
      %v9345 = vpop.f32.mrb[0].mxu0
      %9346 = vdwg.mxu0
      %v9347 = vld [vmem:[%s3494] sm:$0xe]
      %v9348 = vld [vmem:[%s3494 + $0xc] sm:$0xe]
      %v9349 = vld [vmem:[%s3494 + $0x18] sm:$0xe]
      %v9350 = vld [vmem:[%s3494 + $0x24] sm:$0xe]
      %v9351 = vld [vmem:[%s3494 + $0x30] sm:$0xe]
      %v9352 = vld [vmem:[%s3494 + $0x3c] sm:$0xe]
      %v9353 = vld [vmem:[%s3494 + $0x48] sm:$0xe]
      %v9354 = vld [vmem:[%s3494 + $0x54] sm:$0xe]
      %v9355 = vld [vmem:[%s7 + $0xc] sm:$0xf]
      %v9356 = vld [vmem:[%s7 + $0x10] sm:$0x3]
      %v9373 = vrot.slane %v9347, 5
      %v9374 = vrot.slane %v9373, 4
      %v9375 = vrot.slane %v8803, 5
      %v9376 = vsel %vm1981, %v9374, %v9375
      %v9377 = vrot.slane %v9375, 4
      %v9378 = vrot.slane %v8820, 5
      %v9379 = vsel %vm1981, %v9377, %v9378
      %v9380 = vrot.slane %v9348, 5
      %v9381 = vrot.slane %v9380, 4
      %v9382 = vrot.slane %v8805, 5
      %v9383 = vsel %vm1981, %v9381, %v9382
      %v9384 = vrot.slane %v9382, 4
      %v9385 = vrot.slane %v8821, 5
      %v9386 = vsel %vm1981, %v9384, %v9385
      %v9387 = vrot.slane %v9349, 5
      %v9388 = vrot.slane %v9387, 4
      %v9389 = vrot.slane %v8807, 5
      %v9390 = vsel %vm1981, %v9388, %v9389
      %v9391 = vrot.slane %v9389, 4
      %v9392 = vrot.slane %v8822, 5
      %v9393 = vsel %vm1981, %v9391, %v9392
      %v9394 = vrot.slane %v9350, 5
      %v9395 = vrot.slane %v9394, 4
      %v9396 = vrot.slane %v8809, 5
      %v9397 = vsel %vm1981, %v9395, %v9396
      %v9398 = vrot.slane %v9396, 4
      %v9399 = vrot.slane %v8823, 5
      %v9400 = vsel %vm1981, %v9398, %v9399
      %v9401 = vrot.slane %v9351, 5
      %v9402 = vrot.slane %v9401, 4
      %v9403 = vrot.slane %v8811, 5
      %v9404 = vsel %vm1981, %v9402, %v9403
      %v9405 = vrot.slane %v9403, 4
      %v9406 = vrot.slane %v8824, 5
      %v9407 = vsel %vm1981, %v9405, %v9406
      %v9408 = vrot.slane %v9352, 5
      %v9409 = vrot.slane %v9408, 4
      %v9410 = vrot.slane %v8813, 5
      %v9411 = vsel %vm1981, %v9409, %v9410
      %v9412 = vrot.slane %v9410, 4
      %v9413 = vrot.slane %v8825, 5
      %v9414 = vsel %vm1981, %v9412, %v9413
      %v9415 = vrot.slane %v9353, 5
      %v9416 = vrot.slane %v9415, 4
      %v9417 = vrot.slane %v8815, 5
      %v9418 = vsel %vm1981, %v9416, %v9417
      %v9419 = vrot.slane %v9417, 4
      %v9420 = vrot.slane %v8826, 5
      %v9421 = vsel %vm1981, %v9419, %v9420
      %v9422 = vrot.slane %v9354, 5
      %v9423 = vrot.slane %v9422, 4
      %v9424 = vrot.slane %v8817, 5
      %v9425 = vsel %vm1981, %v9423, %v9424
      %v9426 = vrot.slane %v9424, 4
      %v9427 = vrot.slane %v8827, 5
      %v9428 = vsel %vm1981, %v9426, %v9427
      %v9429 = vunpack.c.l.b16 %v9376
      %v9430 = vunpack.c.l.b16 %v9379
      %v9431 = vunpack.c.l.b16 %v9383
      %v9432 = vunpack.c.l.b16 %v9386
      %v9433 = vunpack.c.l.b16 %v9390
      %v9434 = vunpack.c.l.b16 %v9393
      %v9435 = vunpack.c.l.b16 %v9397
      %v9436 = vunpack.c.l.b16 %v9400
      %v9437 = vunpack.c.l.b16 %v9404
      %v9438 = vunpack.c.l.b16 %v9407
      %v9439 = vunpack.c.l.b16 %v9411
      %v9440 = vunpack.c.l.b16 %v9414
      %v9441 = vunpack.c.l.b16 %v9418
      %v9442 = vunpack.c.l.b16 %v9421
      %v9443 = vunpack.c.l.b16 %v9425
      %v9444 = vunpack.c.l.b16 %v9428
      %v9445 = vpack.c.b16 %v9430, %v9429
      %v9446 = vpack.c.b16 %v9432, %v9431
      %v9447 = vpack.c.b16 %v9434, %v9433
      %v9448 = vpack.c.b16 %v9436, %v9435
      %v9449 = vpack.c.b16 %v9438, %v9437
      %v9450 = vpack.c.b16 %v9440, %v9439
      %v9451 = vpack.c.b16 %v9442, %v9441
      %v9452 = vpack.c.b16 %v9444, %v9443
      %v9455 = vunpack.c.l.b16 %v9355
      %v9456 = vunpack.c.l.b16 %v9356
      %v9457 = vpack.c.b16 %v9456, %v9455
      %v9459 = vsel %vm9052, %v9445, 0
      %v9462 = vsel %vm9052, %v9446, 0
      %v9465 = vsel %vm9052, %v9447, 0
      %v9468 = vsel %vm9052, %v9448, 0
      %v9471 = vsel %vm9052, %v9449, 0
      %v9474 = vsel %vm9052, %v9450, 0
      %v9477 = vsel %vm9052, %v9451, 0
      %v9480 = vsel %vm9052, %v9452, 0
      %v9483 = vsel %vm9077, %v9457, 0
      %9485 = vmatprep.subr.bf16.mxu0 0
      %9486 = vmatpush1.bf16.msra.mxu0 %v9483
      %9487 = vmatprep.subr.bf16.mxu0 0
      %9488 = vmatpush1.bf16.msra.mxu0 0
      %9489 = vmatprep.subr.bf16.mxu0 0
      %9490 = vmatpush1.bf16.msra.mxu0 0
      %9491 = vmatprep.subr.bf16.mxu0 0
      %9492 = vmatpush1.bf16.msra.mxu0 0
      %9493 = vmatprep.subr.bf16.mxu0 0
      %9494 = vmatpush1.bf16.msra.mxu0 0
      %9495 = vmatprep.subr.bf16.mxu0 0
      %9496 = vmatpush1.bf16.msra.mxu0 0
      %9497 = vmatprep.subr.bf16.mxu0 0
      %9498 = vmatpush1.bf16.msra.mxu0 0
      %9499 = vmatprep.subr.bf16.mxu0 0
      %9500 = vmatpush1.bf16.msra.mxu0 0
      %9501 = vmatprep.subr.bf16.mxu0 0
      %9502 = vmatpush1.bf16.msra.mxu0 0
      %9503 = vmatprep.subr.bf16.mxu0 0
      %9504 = vmatpush1.bf16.msra.mxu0 0
      %9505 = vmatprep.subr.bf16.mxu0 0
      %9506 = vmatpush1.bf16.msra.mxu0 0
      %9507 = vmatprep.subr.bf16.mxu0 0
      %9508 = vmatpush1.bf16.msra.mxu0 0
      %9509 = vmatprep.subr.bf16.mxu0 0
      %9510 = vmatpush1.bf16.msra.mxu0 0
      %9511 = vmatprep.subr.bf16.mxu0 0
      %9512 = vmatpush1.bf16.msra.mxu0 0
      %9513 = vmatprep.subr.bf16.mxu0 0
      %9514 = vmatpush1.bf16.msra.mxu0 0
      %9515 = vmatprep.subr.bf16.mxu0 0
      %9516 = vmatpush1.bf16.msra.mxu0 0
      %9517 = vmatprep.mubr.bf16.mxu0 0
      %9518 = vmatmul.mubr.bf16.gmra.mrb[0].mxu0 %v9459
      %v9519 = vpop.f32.mrb[0].mxu0
      %v9520 = vadd.f32 0.0, %v9519
      %v9521 = vpop.f32.mrb[0].mxu0
      %v9522 = vpop.f32.mrb[0].mxu0
      %v9523 = vadd.f32 0.0, %v9522
      %v9524 = vpop.f32.mrb[0].mxu0
      %9525 = vmatprep.mubr.bf16.mxu0 0
      %9526 = vmatmul.mubr.bf16.gmra.mrb[0].mxu0 %v9462
      %v9527 = vpop.f32.mrb[0].mxu0
      %v9528 = vadd.f32 0.0, %v9527
      %v9529 = vpop.f32.mrb[0].mxu0
      %v9530 = vpop.f32.mrb[0].mxu0
      %v9531 = vadd.f32 0.0, %v9530
      %v9532 = vpop.f32.mrb[0].mxu0
      %9533 = vmatprep.mubr.bf16.mxu0 0
      %9534 = vmatmul.mubr.bf16.gmra.mrb[0].mxu0 %v9465
      %v9535 = vpop.f32.mrb[0].mxu0
      %v9536 = vadd.f32 0.0, %v9535
      %v9537 = vpop.f32.mrb[0].mxu0
      %v9538 = vpop.f32.mrb[0].mxu0
      %v9539 = vadd.f32 0.0, %v9538
      %v9540 = vpop.f32.mrb[0].mxu0
      %9541 = vmatprep.mubr.bf16.mxu0 0
      %9542 = vmatmul.mubr.bf16.gmra.mrb[0].mxu0 %v9468
      %v9543 = vpop.f32.mrb[0].mxu0
      %v9544 = vadd.f32 0.0, %v9543
      %v9545 = vpop.f32.mrb[0].mxu0
      %v9546 = vpop.f32.mrb[0].mxu0
      %v9547 = vadd.f32 0.0, %v9546
      %v9548 = vpop.f32.mrb[0].mxu0
      %9549 = vmatprep.mubr.bf16.mxu0 0
      %9550 = vmatmul.mubr.bf16.gmra.mrb[0].mxu0 %v9471
      %v9551 = vpop.f32.mrb[0].mxu0
      %v9552 = vadd.f32 0.0, %v9551
      %v9553 = vpop.f32.mrb[0].mxu0
      %v9554 = vpop.f32.mrb[0].mxu0
      %v9555 = vadd.f32 0.0, %v9554
      %v9556 = vpop.f32.mrb[0].mxu0
      %9557 = vmatprep.mubr.bf16.mxu0 0
      %9558 = vmatmul.mubr.bf16.gmra.mrb[0].mxu0 %v9474
      %v9559 = vpop.f32.mrb[0].mxu0
      %v9560 = vadd.f32 0.0, %v9559
      %v9561 = vpop.f32.mrb[0].mxu0
      %v9562 = vpop.f32.mrb[0].mxu0
      %v9563 = vadd.f32 0.0, %v9562
      %v9564 = vpop.f32.mrb[0].mxu0
      %9565 = vmatprep.mubr.bf16.mxu0 0
      %9566 = vmatmul.mubr.bf16.gmra.mrb[0].mxu0 %v9477
      %v9567 = vpop.f32.mrb[0].mxu0
      %v9568 = vadd.f32 0.0, %v9567
      %v9569 = vpop.f32.mrb[0].mxu0
      %v9570 = vpop.f32.mrb[0].mxu0
      %v9571 = vadd.f32 0.0, %v9570
      %v9572 = vpop.f32.mrb[0].mxu0
      %9573 = vmatprep.mubr.bf16.mxu0 0
      %9574 = vmatmul.mubr.bf16.gmra.mrb[0].mxu0 %v9480
      %v9575 = vpop.f32.mrb[0].mxu0
      %v9576 = vadd.f32 0.0, %v9575
      %v9577 = vpop.f32.mrb[0].mxu0
      %v9578 = vpop.f32.mrb[0].mxu0
      %v9579 = vadd.f32 0.0, %v9578
      %v9580 = vpop.f32.mrb[0].mxu0
      %9581 = vdwg.mxu0
      %v9582 = vadd.f32 %v9285, %v9520
      %v9583 = vadd.f32 %v9288, %v9523
      %v9584 = vadd.f32 %v9293, %v9528
      %v9585 = vadd.f32 %v9296, %v9531
      %v9586 = vadd.f32 %v9301, %v9536
      %v9587 = vadd.f32 %v9304, %v9539
      %v9588 = vadd.f32 %v9309, %v9544
      %v9589 = vadd.f32 %v9312, %v9547
      %v9590 = vadd.f32 %v9317, %v9552
      %v9591 = vadd.f32 %v9320, %v9555
      %v9592 = vadd.f32 %v9325, %v9560
      %v9593 = vadd.f32 %v9328, %v9563
      %v9594 = vadd.f32 %v9333, %v9568
      %v9595 = vadd.f32 %v9336, %v9571
      %v9596 = vadd.f32 %v9341, %v9576
      %v9597 = vadd.f32 %v9344, %v9579
      %v9598 = vld [vmem:[%s881] sm:$0xf]
      %v9599 = vld [vmem:[%s881 + $0x4] sm:$0xf]
      %v9600 = vld [vmem:[%s881 + $0xc] sm:$0xf]
      %v9601 = vld [vmem:[%s881 + $0x10] sm:$0xf]
      %v9602 = vld [vmem:[%s881 + $0x18] sm:$0xf]
      %v9603 = vld [vmem:[%s881 + $0x1c] sm:$0xf]
      %v9604 = vld [vmem:[%s881 + $0x24] sm:$0xf]
      %v9605 = vld [vmem:[%s881 + $0x28] sm:$0xf]
      %v9606 = vld [vmem:[%s881 + $0x30] sm:$0xf]
      %v9607 = vld [vmem:[%s881 + $0x34] sm:$0xf]
      %v9608 = vld [vmem:[%s881 + $0x3c] sm:$0xf]
      %v9609 = vld [vmem:[%s881 + $0x40] sm:$0xf]
      %v9610 = vld [vmem:[%s881 + $0x48] sm:$0xf]
      %v9611 = vld [vmem:[%s881 + $0x4c] sm:$0xf]
      %v9612 = vld [vmem:[%s881 + $0x54] sm:$0xf]
      %v9613 = vld [vmem:[%s881 + $0x58] sm:$0xf]
      %v9614 = vld [vmem:[%s7 + $0x10] sm:$0xc]
      %v9615 = vld [vmem:[%s7 + $0x14] sm:$0xf]
      %v9632 = vunpack.c.l.b16 %v9598
      %v9633 = vunpack.c.l.b16 %v9599
      %v9634 = vunpack.c.l.b16 %v9600
      %v9635 = vunpack.c.l.b16 %v9601
      %v9636 = vunpack.c.l.b16 %v9602
      %v9637 = vunpack.c.l.b16 %v9603
      %v9638 = vunpack.c.l.b16 %v9604
      %v9639 = vunpack.c.l.b16 %v9605
      %v9640 = vunpack.c.l.b16 %v9606
      %v9641 = vunpack.c.l.b16 %v9607
      %v9642 = vunpack.c.l.b16 %v9608
      %v9643 = vunpack.c.l.b16 %v9609
      %v9644 = vunpack.c.l.b16 %v9610
      %v9645 = vunpack.c.l.b16 %v9611
      %v9646 = vunpack.c.l.b16 %v9612
      %v9647 = vunpack.c.l.b16 %v9613
      %v9648 = vpack.c.b16 %v9633, %v9632
      %v9649 = vpack.c.b16 %v9635, %v9634
      %v9650 = vpack.c.b16 %v9637, %v9636
      %v9651 = vpack.c.b16 %v9639, %v9638
      %v9652 = vpack.c.b16 %v9641, %v9640
      %v9653 = vpack.c.b16 %v9643, %v9642
      %v9654 = vpack.c.b16 %v9645, %v9644
      %v9655 = vpack.c.b16 %v9647, %v9646
      %v9658 = vunpack.c.l.b16 %v9614
      %v9659 = vunpack.c.l.b16 %v9615
      %v9660 = vpack.c.b16 %v9659, %v9658
      %v9661 = vrot.slane %v9660, 2
      %v9663 = vsel %vm9052, %v9648, 0
      %v9666 = vsel %vm9052, %v9649, 0
      %v9669 = vsel %vm9052, %v9650, 0
      %v9672 = vsel %vm9052, %v9651, 0
      %v9675 = vsel %vm9052, %v9652, 0
      %v9678 = vsel %vm9052, %v9653, 0
      %v9681 = vsel %vm9052, %v9654, 0
      %v9684 = vsel %vm9052, %v9655, 0
      %v9687 = vsel %vm9077, %v9661, 0
      %9689 = vmatprep.subr.bf16.mxu0 0
      %9690 = vmatpush1.bf16.msra.mxu0 %v9687
      %9691 = vmatprep.subr.bf16.mxu0 0
      %9692 = vmatpush1.bf16.msra.mxu0 0
      %9693 = vmatprep.subr.bf16.mxu0 0
      %9694 = vmatpush1.bf16.msra.mxu0 0
      %9695 = vmatprep.subr.bf16.mxu0 0
      %9696 = vmatpush1.bf16.msra.mxu0 0
      %9697 = vmatprep.subr.bf16.mxu0 0
      %9698 = vmatpush1.bf16.msra.mxu0 0
      %9699 = vmatprep.subr.bf16.mxu0 0
      %9700 = vmatpush1.bf16.msra.mxu0 0
      %9701 = vmatprep.subr.bf16.mxu0 0
      %9702 = vmatpush1.bf16.msra.mxu0 0
      %9703 = vmatprep.subr.bf16.mxu0 0
      %9704 = vmatpush1.bf16.msra.mxu0 0
      %9705 = vmatprep.subr.bf16.mxu0 0
      %9706 = vmatpush1.bf16.msra.mxu0 0
      %9707 = vmatprep.subr.bf16.mxu0 0
      %9708 = vmatpush1.bf16.msra.mxu0 0
      %9709 = vmatprep.subr.bf16.mxu0 0
      %9710 = vmatpush1.bf16.msra.mxu0 0
      %9711 = vmatprep.subr.bf16.mxu0 0
      %9712 = vmatpush1.bf16.msra.mxu0 0
      %9713 = vmatprep.subr.bf16.mxu0 0
      %9714 = vmatpush1.bf16.msra.mxu0 0
      %9715 = vmatprep.subr.bf16.mxu0 0
      %9716 = vmatpush1.bf16.msra.mxu0 0
      %9717 = vmatprep.subr.bf16.mxu0 0
      %9718 = vmatpush1.bf16.msra.mxu0 0
      %9719 = vmatprep.subr.bf16.mxu0 0
      %9720 = vmatpush1.bf16.msra.mxu0 0
      %9721 = vmatprep.mubr.bf16.mxu0 0
      %9722 = vmatmul.mubr.bf16.gmra.mrb[0].mxu0 %v9663
      %v9723 = vpop.f32.mrb[0].mxu0
      %v9724 = vadd.f32 0.0, %v9723
      %v9725 = vpop.f32.mrb[0].mxu0
      %v9726 = vpop.f32.mrb[0].mxu0
      %v9727 = vadd.f32 0.0, %v9726
      %v9728 = vpop.f32.mrb[0].mxu0
      %9729 = vmatprep.mubr.bf16.mxu0 0
      %9730 = vmatmul.mubr.bf16.gmra.mrb[0].mxu0 %v9666
      %v9731 = vpop.f32.mrb[0].mxu0
      %v9732 = vadd.f32 0.0, %v9731
      %v9733 = vpop.f32.mrb[0].mxu0
      %v9734 = vpop.f32.mrb[0].mxu0
      %v9735 = vadd.f32 0.0, %v9734
      %v9736 = vpop.f32.mrb[0].mxu0
      %9737 = vmatprep.mubr.bf16.mxu0 0
      %9738 = vmatmul.mubr.bf16.gmra.mrb[0].mxu0 %v9669
      %v9739 = vpop.f32.mrb[0].mxu0
      %v9740 = vadd.f32 0.0, %v9739
      %v9741 = vpop.f32.mrb[0].mxu0
      %v9742 = vpop.f32.mrb[0].mxu0
      %v9743 = vadd.f32 0.0, %v9742
      %v9744 = vpop.f32.mrb[0].mxu0
      %9745 = vmatprep.mubr.bf16.mxu0 0
      %9746 = vmatmul.mubr.bf16.gmra.mrb[0].mxu0 %v9672
      %v9747 = vpop.f32.mrb[0].mxu0
      %v9748 = vadd.f32 0.0, %v9747
      %v9749 = vpop.f32.mrb[0].mxu0
      %v9750 = vpop.f32.mrb[0].mxu0
      %v9751 = vadd.f32 0.0, %v9750
      %v9752 = vpop.f32.mrb[0].mxu0
      %9753 = vmatprep.mubr.bf16.mxu0 0
      %9754 = vmatmul.mubr.bf16.gmra.mrb[0].mxu0 %v9675
      %v9755 = vpop.f32.mrb[0].mxu0
      %v9756 = vadd.f32 0.0, %v9755
      %v9757 = vpop.f32.mrb[0].mxu0
      %v9758 = vpop.f32.mrb[0].mxu0
      %v9759 = vadd.f32 0.0, %v9758
      %v9760 = vpop.f32.mrb[0].mxu0
      %9761 = vmatprep.mubr.bf16.mxu0 0
      %9762 = vmatmul.mubr.bf16.gmra.mrb[0].mxu0 %v9678
      %v9763 = vpop.f32.mrb[0].mxu0
      %v9764 = vadd.f32 0.0, %v9763
      %v9765 = vpop.f32.mrb[0].mxu0
      %v9766 = vpop.f32.mrb[0].mxu0
      %v9767 = vadd.f32 0.0, %v9766
      %v9768 = vpop.f32.mrb[0].mxu0
      %9769 = vmatprep.mubr.bf16.mxu0 0
      %9770 = vmatmul.mubr.bf16.gmra.mrb[0].mxu0 %v9681
      %v9771 = vpop.f32.mrb[0].mxu0
      %v9772 = vadd.f32 0.0, %v9771
      %v9773 = vpop.f32.mrb[0].mxu0
      %v9774 = vpop.f32.mrb[0].mxu0
      %v9775 = vadd.f32 0.0, %v9774
      %v9776 = vpop.f32.mrb[0].mxu0
      %9777 = vmatprep.mubr.bf16.mxu0 0
      %9778 = vmatmul.mubr.bf16.gmra.mrb[0].mxu0 %v9684
      %v9779 = vpop.f32.mrb[0].mxu0
      %v9780 = vadd.f32 0.0, %v9779
      %v9781 = vpop.f32.mrb[0].mxu0
      %v9782 = vpop.f32.mrb[0].mxu0
      %v9783 = vadd.f32 0.0, %v9782
      %v9784 = vpop.f32.mrb[0].mxu0
      %9785 = vdwg.mxu0
      %v9786 = vadd.f32 %v9582, %v9724
      %v9787 = vadd.f32 %v9583, %v9727
      %v9788 = vadd.f32 %v9584, %v9732
      %v9789 = vadd.f32 %v9585, %v9735
      %v9790 = vadd.f32 %v9586, %v9740
      %v9791 = vadd.f32 %v9587, %v9743
      %v9792 = vadd.f32 %v9588, %v9748
      %v9793 = vadd.f32 %v9589, %v9751
      %v9794 = vadd.f32 %v9590, %v9756
      %v9795 = vadd.f32 %v9591, %v9759
      %v9796 = vadd.f32 %v9592, %v9764
      %v9797 = vadd.f32 %v9593, %v9767
      %v9798 = vadd.f32 %v9594, %v9772
      %v9799 = vadd.f32 %v9595, %v9775
      %v9800 = vadd.f32 %v9596, %v9780
      %v9801 = vadd.f32 %v9597, %v9783
      %v9802 = vld [vmem:[%s881] sm:$0xf]
      %v9803 = vld [vmem:[%s881 + $0x4] sm:$0xf]
      %v9804 = vld [vmem:[%s881 + $0x8] sm:$0x1]
      %v9805 = vld [vmem:[%s881 + $0xc] sm:$0xf]
      %v9806 = vld [vmem:[%s881 + $0x10] sm:$0xf]
      %v9807 = vld [vmem:[%s881 + $0x14] sm:$0x1]
      %v9808 = vld [vmem:[%s881 + $0x18] sm:$0xf]
      %v9809 = vld [vmem:[%s881 + $0x1c] sm:$0xf]
      %v9810 = vld [vmem:[%s881 + $0x20] sm:$0x1]
      %v9811 = vld [vmem:[%s881 + $0x24] sm:$0xf]
      %v9812 = vld [vmem:[%s881 + $0x28] sm:$0xf]
      %v9813 = vld [vmem:[%s881 + $0x2c] sm:$0x1]
      %v9814 = vld [vmem:[%s881 + $0x30] sm:$0xf]
      %v9815 = vld [vmem:[%s881 + $0x34] sm:$0xf]
      %v9816 = vld [vmem:[%s881 + $0x38] sm:$0x1]
      %v9817 = vld [vmem:[%s881 + $0x3c] sm:$0xf]
      %v9818 = vld [vmem:[%s881 + $0x40] sm:$0xf]
      %v9819 = vld [vmem:[%s881 + $0x44] sm:$0x1]
      %v9820 = vld [vmem:[%s881 + $0x48] sm:$0xf]
      %v9821 = vld [vmem:[%s881 + $0x4c] sm:$0xf]
      %v9822 = vld [vmem:[%s881 + $0x50] sm:$0x1]
      %v9823 = vld [vmem:[%s881 + $0x54] sm:$0xf]
      %v9824 = vld [vmem:[%s881 + $0x58] sm:$0xf]
      %v9825 = vld [vmem:[%s881 + $0x5c] sm:$0x1]
      %v9826 = vld [vmem:[%s7 + $0x18] sm:$0xf]
      %v9827 = vld [vmem:[%s7 + $0x1c] sm:$0x3]
      %v9829 = vshrl.u32 %v9802, 16
      %v9831 = vrot.slane %v9829, 4
      %v9832 = vshll.u32 %v9802, 16
      %v9834 = vrot.slane %v9832, 5
      %v9835 = vor.u32 %v9831, %v9834
      %v9836 = vrot.slane %v9835, 4
      %v9838 = vshll.u32 %v9803, 16
      %v9840 = vrot.slane %v9838, 5
      %v9841 = vsel %vm1215, %v9836, %v9840
      %v9842 = vshrl.u32 %v9803, 16
      %v9844 = vrot.slane %v9842, 4
      %v9845 = vor.u32 %v9844, %v9840
      %v9846 = vrot.slane %v9845, 4
      %v9848 = vshll.u32 %v9804, 16
      %v9850 = vrot.slane %v9848, 5
      %v9851 = vsel %vm1215, %v9846, %v9850
      %v9853 = vshrl.u32 %v9805, 16
      %v9855 = vrot.slane %v9853, 4
      %v9856 = vshll.u32 %v9805, 16
      %v9858 = vrot.slane %v9856, 5
      %v9859 = vor.u32 %v9855, %v9858
      %v9860 = vrot.slane %v9859, 4
      %v9862 = vshll.u32 %v9806, 16
      %v9864 = vrot.slane %v9862, 5
      %v9865 = vsel %vm1215, %v9860, %v9864
      %v9866 = vshrl.u32 %v9806, 16
      %v9868 = vrot.slane %v9866, 4
      %v9869 = vor.u32 %v9868, %v9864
      %v9870 = vrot.slane %v9869, 4
      %v9872 = vshll.u32 %v9807, 16
      %v9874 = vrot.slane %v9872, 5
      %v9875 = vsel %vm1215, %v9870, %v9874
      %v9877 = vshrl.u32 %v9808, 16
      %v9879 = vrot.slane %v9877, 4
      %v9880 = vshll.u32 %v9808, 16
      %v9882 = vrot.slane %v9880, 5
      %v9883 = vor.u32 %v9879, %v9882
      %v9884 = vrot.slane %v9883, 4
      %v9886 = vshll.u32 %v9809, 16
      %v9888 = vrot.slane %v9886, 5
      %v9889 = vsel %vm1215, %v9884, %v9888
      %v9890 = vshrl.u32 %v9809, 16
      %v9892 = vrot.slane %v9890, 4
      %v9893 = vor.u32 %v9892, %v9888
      %v9894 = vrot.slane %v9893, 4
      %v9896 = vshll.u32 %v9810, 16
      %v9898 = vrot.slane %v9896, 5
      %v9899 = vsel %vm1215, %v9894, %v9898
      %v9901 = vshrl.u32 %v9811, 16
      %v9903 = vrot.slane %v9901, 4
      %v9904 = vshll.u32 %v9811, 16
      %v9906 = vrot.slane %v9904, 5
      %v9907 = vor.u32 %v9903, %v9906
      %v9908 = vrot.slane %v9907, 4
      %v9910 = vshll.u32 %v9812, 16
      %v9912 = vrot.slane %v9910, 5
      %v9913 = vsel %vm1215, %v9908, %v9912
      %v9914 = vshrl.u32 %v9812, 16
      %v9916 = vrot.slane %v9914, 4
      %v9917 = vor.u32 %v9916, %v9912
      %v9918 = vrot.slane %v9917, 4
      %v9920 = vshll.u32 %v9813, 16
      %v9922 = vrot.slane %v9920, 5
      %v9923 = vsel %vm1215, %v9918, %v9922
      %v9925 = vshrl.u32 %v9814, 16
      %v9927 = vrot.slane %v9925, 4
      %v9928 = vshll.u32 %v9814, 16
      %v9930 = vrot.slane %v9928, 5
      %v9931 = vor.u32 %v9927, %v9930
      %v9932 = vrot.slane %v9931, 4
      %v9934 = vshll.u32 %v9815, 16
      %v9936 = vrot.slane %v9934, 5
      %v9937 = vsel %vm1215, %v9932, %v9936
      %v9938 = vshrl.u32 %v9815, 16
      %v9940 = vrot.slane %v9938, 4
      %v9941 = vor.u32 %v9940, %v9936
      %v9942 = vrot.slane %v9941, 4
      %v9944 = vshll.u32 %v9816, 16
      %v9946 = vrot.slane %v9944, 5
      %v9947 = vsel %vm1215, %v9942, %v9946
      %v9949 = vshrl.u32 %v9817, 16
      %v9951 = vrot.slane %v9949, 4
      %v9952 = vshll.u32 %v9817, 16
      %v9954 = vrot.slane %v9952, 5
      %v9955 = vor.u32 %v9951, %v9954
      %v9956 = vrot.slane %v9955, 4
      %v9958 = vshll.u32 %v9818, 16
      %v9960 = vrot.slane %v9958, 5
      %v9961 = vsel %vm1215, %v9956, %v9960
      %v9962 = vshrl.u32 %v9818, 16
      %v9964 = vrot.slane %v9962, 4
      %v9965 = vor.u32 %v9964, %v9960
      %v9966 = vrot.slane %v9965, 4
      %v9968 = vshll.u32 %v9819, 16
      %v9970 = vrot.slane %v9968, 5
      %v9971 = vsel %vm1215, %v9966, %v9970
      %v9973 = vshrl.u32 %v9820, 16
      %v9975 = vrot.slane %v9973, 4
      %v9976 = vshll.u32 %v9820, 16
      %v9978 = vrot.slane %v9976, 5
      %v9979 = vor.u32 %v9975, %v9978
      %v9980 = vrot.slane %v9979, 4
      %v9982 = vshll.u32 %v9821, 16
      %v9984 = vrot.slane %v9982, 5
      %v9985 = vsel %vm1215, %v9980, %v9984
      %v9986 = vshrl.u32 %v9821, 16
      %v9988 = vrot.slane %v9986, 4
      %v9989 = vor.u32 %v9988, %v9984
      %v9990 = vrot.slane %v9989, 4
      %v9992 = vshll.u32 %v9822, 16
      %v9994 = vrot.slane %v9992, 5
      %v9995 = vsel %vm1215, %v9990, %v9994
      %v9997 = vshrl.u32 %v9823, 16
      %v9999 = vrot.slane %v9997, 4
      %v10000 = vshll.u32 %v9823, 16
      %v10002 = vrot.slane %v10000, 5
      %v10003 = vor.u32 %v9999, %v10002
      %v10004 = vrot.slane %v10003, 4
      %v10006 = vshll.u32 %v9824, 16
      %v10008 = vrot.slane %v10006, 5
      %v10009 = vsel %vm1215, %v10004, %v10008
      %v10010 = vshrl.u32 %v9824, 16
      %v10012 = vrot.slane %v10010, 4
      %v10013 = vor.u32 %v10012, %v10008
      %v10014 = vrot.slane %v10013, 4
      %v10016 = vshll.u32 %v9825, 16
      %v10018 = vrot.slane %v10016, 5
      %v10019 = vsel %vm1215, %v10014, %v10018
      %v10020 = vunpack.c.l.b16 %v9841
      %v10021 = vunpack.c.l.b16 %v9851
      %v10022 = vunpack.c.l.b16 %v9865
      %v10023 = vunpack.c.l.b16 %v9875
      %v10024 = vunpack.c.l.b16 %v9889
      %v10025 = vunpack.c.l.b16 %v9899
      %v10026 = vunpack.c.l.b16 %v9913
      %v10027 = vunpack.c.l.b16 %v9923
      %v10028 = vunpack.c.l.b16 %v9937
      %v10029 = vunpack.c.l.b16 %v9947
      %v10030 = vunpack.c.l.b16 %v9961
      %v10031 = vunpack.c.l.b16 %v9971
      %v10032 = vunpack.c.l.b16 %v9985
      %v10033 = vunpack.c.l.b16 %v9995
      %v10034 = vunpack.c.l.b16 %v10009
      %v10035 = vunpack.c.l.b16 %v10019
      %v10036 = vpack.c.b16 %v10021, %v10020
      %v10037 = vpack.c.b16 %v10023, %v10022
      %v10038 = vpack.c.b16 %v10025, %v10024
      %v10039 = vpack.c.b16 %v10027, %v10026
      %v10040 = vpack.c.b16 %v10029, %v10028
      %v10041 = vpack.c.b16 %v10031, %v10030
      %v10042 = vpack.c.b16 %v10033, %v10032
      %v10043 = vpack.c.b16 %v10035, %v10034
      %v10046 = vunpack.c.l.b16 %v9826
      %v10047 = vunpack.c.l.b16 %v9827
      %v10048 = vpack.c.b16 %v10047, %v10046
      %v10050 = vsel %vm9052, %v10036, 0
      %v10053 = vsel %vm9052, %v10037, 0
      %v10056 = vsel %vm9052, %v10038, 0
      %v10059 = vsel %vm9052, %v10039, 0
      %v10062 = vsel %vm9052, %v10040, 0
      %v10065 = vsel %vm9052, %v10041, 0
      %v10068 = vsel %vm9052, %v10042, 0
      %v10071 = vsel %vm9052, %v10043, 0
      %v10074 = vsel %vm9077, %v10048, 0
      %10076 = vmatprep.subr.bf16.mxu0 0
      %10077 = vmatpush1.bf16.msra.mxu0 %v10074
      %10078 = vmatprep.subr.bf16.mxu0 0
      %10079 = vmatpush1.bf16.msra.mxu0 0
      %10080 = vmatprep.subr.bf16.mxu0 0
      %10081 = vmatpush1.bf16.msra.mxu0 0
      %10082 = vmatprep.subr.bf16.mxu0 0
      %10083 = vmatpush1.bf16.msra.mxu0 0
      %10084 = vmatprep.subr.bf16.mxu0 0
      %10085 = vmatpush1.bf16.msra.mxu0 0
      %10086 = vmatprep.subr.bf16.mxu0 0
      %10087 = vmatpush1.bf16.msra.mxu0 0
      %10088 = vmatprep.subr.bf16.mxu0 0
      %10089 = vmatpush1.bf16.msra.mxu0 0
      %10090 = vmatprep.subr.bf16.mxu0 0
      %10091 = vmatpush1.bf16.msra.mxu0 0
      %10092 = vmatprep.subr.bf16.mxu0 0
      %10093 = vmatpush1.bf16.msra.mxu0 0
      %10094 = vmatprep.subr.bf16.mxu0 0
      %10095 = vmatpush1.bf16.msra.mxu0 0
      %10096 = vmatprep.subr.bf16.mxu0 0
      %10097 = vmatpush1.bf16.msra.mxu0 0
      %10098 = vmatprep.subr.bf16.mxu0 0
      %10099 = vmatpush1.bf16.msra.mxu0 0
      %10100 = vmatprep.subr.bf16.mxu0 0
      %10101 = vmatpush1.bf16.msra.mxu0 0
      %10102 = vmatprep.subr.bf16.mxu0 0
      %10103 = vmatpush1.bf16.msra.mxu0 0
      %10104 = vmatprep.subr.bf16.mxu0 0
      %10105 = vmatpush1.bf16.msra.mxu0 0
      %10106 = vmatprep.subr.bf16.mxu0 0
      %10107 = vmatpush1.bf16.msra.mxu0 0
      %10108 = vmatprep.mubr.bf16.mxu0 0
      %10109 = vmatmul.mubr.bf16.gmra.mrb[0].mxu0 %v10050
      %v10110 = vpop.f32.mrb[0].mxu0
      %v10111 = vadd.f32 0.0, %v10110
      %v10112 = vpop.f32.mrb[0].mxu0
      %v10113 = vpop.f32.mrb[0].mxu0
      %v10114 = vadd.f32 0.0, %v10113
      %v10115 = vpop.f32.mrb[0].mxu0
      %10116 = vmatprep.mubr.bf16.mxu0 0
      %10117 = vmatmul.mubr.bf16.gmra.mrb[0].mxu0 %v10053
      %v10118 = vpop.f32.mrb[0].mxu0
      %v10119 = vadd.f32 0.0, %v10118
      %v10120 = vpop.f32.mrb[0].mxu0
      %v10121 = vpop.f32.mrb[0].mxu0
      %v10122 = vadd.f32 0.0, %v10121
      %v10123 = vpop.f32.mrb[0].mxu0
      %10124 = vmatprep.mubr.bf16.mxu0 0
      %10125 = vmatmul.mubr.bf16.gmra.mrb[0].mxu0 %v10056
      %v10126 = vpop.f32.mrb[0].mxu0
      %v10127 = vadd.f32 0.0, %v10126
      %v10128 = vpop.f32.mrb[0].mxu0
      %v10129 = vpop.f32.mrb[0].mxu0
      %v10130 = vadd.f32 0.0, %v10129
      %v10131 = vpop.f32.mrb[0].mxu0
      %10132 = vmatprep.mubr.bf16.mxu0 0
      %10133 = vmatmul.mubr.bf16.gmra.mrb[0].mxu0 %v10059
      %v10134 = vpop.f32.mrb[0].mxu0
      %v10135 = vadd.f32 0.0, %v10134
      %v10136 = vpop.f32.mrb[0].mxu0
      %v10137 = vpop.f32.mrb[0].mxu0
      %v10138 = vadd.f32 0.0, %v10137
      %v10139 = vpop.f32.mrb[0].mxu0
      %10140 = vmatprep.mubr.bf16.mxu0 0
      %10141 = vmatmul.mubr.bf16.gmra.mrb[0].mxu0 %v10062
      %v10142 = vpop.f32.mrb[0].mxu0
      %v10143 = vadd.f32 0.0, %v10142
      %v10144 = vpop.f32.mrb[0].mxu0
      %v10145 = vpop.f32.mrb[0].mxu0
      %v10146 = vadd.f32 0.0, %v10145
      %v10147 = vpop.f32.mrb[0].mxu0
      %10148 = vmatprep.mubr.bf16.mxu0 0
      %10149 = vmatmul.mubr.bf16.gmra.mrb[0].mxu0 %v10065
      %v10150 = vpop.f32.mrb[0].mxu0
      %v10151 = vadd.f32 0.0, %v10150
      %v10152 = vpop.f32.mrb[0].mxu0
      %v10153 = vpop.f32.mrb[0].mxu0
      %v10154 = vadd.f32 0.0, %v10153
      %v10155 = vpop.f32.mrb[0].mxu0
      %10156 = vmatprep.mubr.bf16.mxu0 0
      %10157 = vmatmul.mubr.bf16.gmra.mrb[0].mxu0 %v10068
      %v10158 = vpop.f32.mrb[0].mxu0
      %v10159 = vadd.f32 0.0, %v10158
      %v10160 = vpop.f32.mrb[0].mxu0
      %v10161 = vpop.f32.mrb[0].mxu0
      %v10162 = vadd.f32 0.0, %v10161
      %v10163 = vpop.f32.mrb[0].mxu0
      %10164 = vmatprep.mubr.bf16.mxu0 0
      %10165 = vmatmul.mubr.bf16.gmra.mrb[0].mxu0 %v10071
      %v10166 = vpop.f32.mrb[0].mxu0
      %v10167 = vadd.f32 0.0, %v10166
      %v10168 = vpop.f32.mrb[0].mxu0
      %v10169 = vpop.f32.mrb[0].mxu0
      %v10170 = vadd.f32 0.0, %v10169
      %v10171 = vpop.f32.mrb[0].mxu0
      %10172 = vdwg.mxu0
      %v10173 = vadd.f32 %v9786, %v10111
      %v10174 = vadd.f32 %v9787, %v10114
      %v10175 = vadd.f32 %v9788, %v10119
      %v10176 = vadd.f32 %v9789, %v10122
      %v10177 = vadd.f32 %v9790, %v10127
      %v10178 = vadd.f32 %v9791, %v10130
      %v10179 = vadd.f32 %v9792, %v10135
      %v10180 = vadd.f32 %v9793, %v10138
      %v10181 = vadd.f32 %v9794, %v10143
      %v10182 = vadd.f32 %v9795, %v10146
      %v10183 = vadd.f32 %v9796, %v10151
      %v10184 = vadd.f32 %v9797, %v10154
      %v10185 = vadd.f32 %v9798, %v10159
      %v10186 = vadd.f32 %v9799, %v10162
      %v10187 = vadd.f32 %v9800, %v10167
      %v10188 = vadd.f32 %v9801, %v10170
      %v10189 = vld [vmem:[%s881] sm:$0xe]
      %v10190 = vld [vmem:[%s881 + $0xc] sm:$0xe]
      %v10191 = vld [vmem:[%s881 + $0x18] sm:$0xe]
      %v10192 = vld [vmem:[%s881 + $0x24] sm:$0xe]
      %v10193 = vld [vmem:[%s881 + $0x30] sm:$0xe]
      %v10194 = vld [vmem:[%s881 + $0x3c] sm:$0xe]
      %v10195 = vld [vmem:[%s881 + $0x48] sm:$0xe]
      %v10196 = vld [vmem:[%s881 + $0x54] sm:$0xe]
      %v10197 = vld [vmem:[%s7 + $0x1c] sm:$0xc]
      %v10198 = vld [vmem:[%s7 + $0x20] sm:$0xf]
      %v10223 = vrot.slane %v10189, 5
      %v10224 = vrot.slane %v10223, 4
      %v10225 = vrot.slane %v9803, 5
      %v10226 = vsel %vm1981, %v10224, %v10225
      %v10227 = vrot.slane %v10225, 4
      %v10228 = vrot.slane %v9804, 5
      %v10229 = vsel %vm1981, %v10227, %v10228
      %v10230 = vrot.slane %v10190, 5
      %v10231 = vrot.slane %v10230, 4
      %v10232 = vrot.slane %v9806, 5
      %v10233 = vsel %vm1981, %v10231, %v10232
      %v10234 = vrot.slane %v10232, 4
      %v10235 = vrot.slane %v9807, 5
      %v10236 = vsel %vm1981, %v10234, %v10235
      %v10237 = vrot.slane %v10191, 5
      %v10238 = vrot.slane %v10237, 4
      %v10239 = vrot.slane %v9809, 5
      %v10240 = vsel %vm1981, %v10238, %v10239
      %v10241 = vrot.slane %v10239, 4
      %v10242 = vrot.slane %v9810, 5
      %v10243 = vsel %vm1981, %v10241, %v10242
      %v10244 = vrot.slane %v10192, 5
      %v10245 = vrot.slane %v10244, 4
      %v10246 = vrot.slane %v9812, 5
      %v10247 = vsel %vm1981, %v10245, %v10246
      %v10248 = vrot.slane %v10246, 4
      %v10249 = vrot.slane %v9813, 5
      %v10250 = vsel %vm1981, %v10248, %v10249
      %v10251 = vrot.slane %v10193, 5
      %v10252 = vrot.slane %v10251, 4
      %v10253 = vrot.slane %v9815, 5
      %v10254 = vsel %vm1981, %v10252, %v10253
      %v10255 = vrot.slane %v10253, 4
      %v10256 = vrot.slane %v9816, 5
      %v10257 = vsel %vm1981, %v10255, %v10256
      %v10258 = vrot.slane %v10194, 5
      %v10259 = vrot.slane %v10258, 4
      %v10260 = vrot.slane %v9818, 5
      %v10261 = vsel %vm1981, %v10259, %v10260
      %v10262 = vrot.slane %v10260, 4
      %v10263 = vrot.slane %v9819, 5
      %v10264 = vsel %vm1981, %v10262, %v10263
      %v10265 = vrot.slane %v10195, 5
      %v10266 = vrot.slane %v10265, 4
      %v10267 = vrot.slane %v9821, 5
      %v10268 = vsel %vm1981, %v10266, %v10267
      %v10269 = vrot.slane %v10267, 4
      %v10270 = vrot.slane %v9822, 5
      %v10271 = vsel %vm1981, %v10269, %v10270
      %v10272 = vrot.slane %v10196, 5
      %v10273 = vrot.slane %v10272, 4
      %v10274 = vrot.slane %v9824, 5
      %v10275 = vsel %vm1981, %v10273, %v10274
      %v10276 = vrot.slane %v10274, 4
      %v10277 = vrot.slane %v9825, 5
      %v10278 = vsel %vm1981, %v10276, %v10277
      %v10279 = vunpack.c.l.b16 %v10226
      %v10280 = vunpack.c.l.b16 %v10229
      %v10281 = vunpack.c.l.b16 %v10233
      %v10282 = vunpack.c.l.b16 %v10236
      %v10283 = vunpack.c.l.b16 %v10240
      %v10284 = vunpack.c.l.b16 %v10243
      %v10285 = vunpack.c.l.b16 %v10247
      %v10286 = vunpack.c.l.b16 %v10250
      %v10287 = vunpack.c.l.b16 %v10254
      %v10288 = vunpack.c.l.b16 %v10257
      %v10289 = vunpack.c.l.b16 %v10261
      %v10290 = vunpack.c.l.b16 %v10264
      %v10291 = vunpack.c.l.b16 %v10268
      %v10292 = vunpack.c.l.b16 %v10271
      %v10293 = vunpack.c.l.b16 %v10275
      %v10294 = vunpack.c.l.b16 %v10278
      %v10295 = vpack.c.b16 %v10280, %v10279
      %v10296 = vpack.c.b16 %v10282, %v10281
      %v10297 = vpack.c.b16 %v10284, %v10283
      %v10298 = vpack.c.b16 %v10286, %v10285
      %v10299 = vpack.c.b16 %v10288, %v10287
      %v10300 = vpack.c.b16 %v10290, %v10289
      %v10301 = vpack.c.b16 %v10292, %v10291
      %v10302 = vpack.c.b16 %v10294, %v10293
      %v10305 = vunpack.c.l.b16 %v10197
      %v10306 = vunpack.c.l.b16 %v10198
      %v10307 = vpack.c.b16 %v10306, %v10305
      %v10308 = vrot.slane %v10307, 2
      %v10310 = vsel %vm9052, %v10295, 0
      %v10313 = vsel %vm9052, %v10296, 0
      %v10316 = vsel %vm9052, %v10297, 0
      %v10319 = vsel %vm9052, %v10298, 0
      %v10322 = vsel %vm9052, %v10299, 0
      %v10325 = vsel %vm9052, %v10300, 0
      %v10328 = vsel %vm9052, %v10301, 0
      %v10331 = vsel %vm9052, %v10302, 0
      %v10334 = vsel %vm9077, %v10308, 0
      %10336 = vmatprep.subr.bf16.mxu0 0
      %10337 = vmatpush1.bf16.msra.mxu0 %v10334
      %10338 = vmatprep.subr.bf16.mxu0 0
      %10339 = vmatpush1.bf16.msra.mxu0 0
      %10340 = vmatprep.subr.bf16.mxu0 0
      %10341 = vmatpush1.bf16.msra.mxu0 0
      %10342 = vmatprep.subr.bf16.mxu0 0
      %10343 = vmatpush1.bf16.msra.mxu0 0
      %10344 = vmatprep.subr.bf16.mxu0 0
      %10345 = vmatpush1.bf16.msra.mxu0 0
      %10346 = vmatprep.subr.bf16.mxu0 0
      %10347 = vmatpush1.bf16.msra.mxu0 0
      %10348 = vmatprep.subr.bf16.mxu0 0
      %10349 = vmatpush1.bf16.msra.mxu0 0
      %10350 = vmatprep.subr.bf16.mxu0 0
      %10351 = vmatpush1.bf16.msra.mxu0 0
      %10352 = vmatprep.subr.bf16.mxu0 0
      %10353 = vmatpush1.bf16.msra.mxu0 0
      %10354 = vmatprep.subr.bf16.mxu0 0
      %10355 = vmatpush1.bf16.msra.mxu0 0
      %10356 = vmatprep.subr.bf16.mxu0 0
      %10357 = vmatpush1.bf16.msra.mxu0 0
      %10358 = vmatprep.subr.bf16.mxu0 0
      %10359 = vmatpush1.bf16.msra.mxu0 0
      %10360 = vmatprep.subr.bf16.mxu0 0
      %10361 = vmatpush1.bf16.msra.mxu0 0
      %10362 = vmatprep.subr.bf16.mxu0 0
      %10363 = vmatpush1.bf16.msra.mxu0 0
      %10364 = vmatprep.subr.bf16.mxu0 0
      %10365 = vmatpush1.bf16.msra.mxu0 0
      %10366 = vmatprep.subr.bf16.mxu0 0
      %10367 = vmatpush1.bf16.msra.mxu0 0
      %10368 = vmatprep.mubr.bf16.mxu0 0
      %10369 = vmatmul.mubr.bf16.gmra.mrb[0].mxu0 %v10310
      %v10370 = vpop.f32.mrb[0].mxu0
      %v10371 = vadd.f32 0.0, %v10370
      %v10372 = vpop.f32.mrb[0].mxu0
      %v10373 = vpop.f32.mrb[0].mxu0
      %v10374 = vadd.f32 0.0, %v10373
      %v10375 = vpop.f32.mrb[0].mxu0
      %10376 = vmatprep.mubr.bf16.mxu0 0
      %10377 = vmatmul.mubr.bf16.gmra.mrb[0].mxu0 %v10313
      %v10378 = vpop.f32.mrb[0].mxu0
      %v10379 = vadd.f32 0.0, %v10378
      %v10380 = vpop.f32.mrb[0].mxu0
      %v10381 = vpop.f32.mrb[0].mxu0
      %v10382 = vadd.f32 0.0, %v10381
      %v10383 = vpop.f32.mrb[0].mxu0
      %10384 = vmatprep.mubr.bf16.mxu0 0
      %10385 = vmatmul.mubr.bf16.gmra.mrb[0].mxu0 %v10316
      %v10386 = vpop.f32.mrb[0].mxu0
      %v10387 = vadd.f32 0.0, %v10386
      %v10388 = vpop.f32.mrb[0].mxu0
      %v10389 = vpop.f32.mrb[0].mxu0
      %v10390 = vadd.f32 0.0, %v10389
      %v10391 = vpop.f32.mrb[0].mxu0
      %10392 = vmatprep.mubr.bf16.mxu0 0
      %10393 = vmatmul.mubr.bf16.gmra.mrb[0].mxu0 %v10319
      %v10394 = vpop.f32.mrb[0].mxu0
      %v10395 = vadd.f32 0.0, %v10394
      %v10396 = vpop.f32.mrb[0].mxu0
      %v10397 = vpop.f32.mrb[0].mxu0
      %v10398 = vadd.f32 0.0, %v10397
      %v10399 = vpop.f32.mrb[0].mxu0
      %10400 = vmatprep.mubr.bf16.mxu0 0
      %10401 = vmatmul.mubr.bf16.gmra.mrb[0].mxu0 %v10322
      %v10402 = vpop.f32.mrb[0].mxu0
      %v10403 = vadd.f32 0.0, %v10402
      %v10404 = vpop.f32.mrb[0].mxu0
      %v10405 = vpop.f32.mrb[0].mxu0
      %v10406 = vadd.f32 0.0, %v10405
      %v10407 = vpop.f32.mrb[0].mxu0
      %10408 = vmatprep.mubr.bf16.mxu0 0
      %10409 = vmatmul.mubr.bf16.gmra.mrb[0].mxu0 %v10325
      %v10410 = vpop.f32.mrb[0].mxu0
      %v10411 = vadd.f32 0.0, %v10410
      %v10412 = vpop.f32.mrb[0].mxu0
      %v10413 = vpop.f32.mrb[0].mxu0
      %v10414 = vadd.f32 0.0, %v10413
      %v10415 = vpop.f32.mrb[0].mxu0
      %10416 = vmatprep.mubr.bf16.mxu0 0
      %10417 = vmatmul.mubr.bf16.gmra.mrb[0].mxu0 %v10328
      %v10418 = vpop.f32.mrb[0].mxu0
      %v10419 = vadd.f32 0.0, %v10418
      %v10420 = vpop.f32.mrb[0].mxu0
      %v10421 = vpop.f32.mrb[0].mxu0
      %v10422 = vadd.f32 0.0, %v10421
      %v10423 = vpop.f32.mrb[0].mxu0
      %10424 = vmatprep.mubr.bf16.mxu0 0
      %10425 = vmatmul.mubr.bf16.gmra.mrb[0].mxu0 %v10331
      %v10426 = vpop.f32.mrb[0].mxu0
      %v10427 = vadd.f32 0.0, %v10426
      %v10428 = vpop.f32.mrb[0].mxu0
      %v10429 = vpop.f32.mrb[0].mxu0
      %v10430 = vadd.f32 0.0, %v10429
      %v10431 = vpop.f32.mrb[0].mxu0
      %10432 = vdwg.mxu0
      %v10433 = vadd.f32 %v10173, %v10371
      %v10434 = vadd.f32 %v10174, %v10374
      %v10435 = vadd.f32 %v10175, %v10379
      %v10436 = vadd.f32 %v10176, %v10382
      %v10437 = vadd.f32 %v10177, %v10387
      %v10438 = vadd.f32 %v10178, %v10390
      %v10439 = vadd.f32 %v10179, %v10395
      %v10440 = vadd.f32 %v10180, %v10398
      %v10441 = vadd.f32 %v10181, %v10403
      %v10442 = vadd.f32 %v10182, %v10406
      %v10443 = vadd.f32 %v10183, %v10411
      %v10444 = vadd.f32 %v10184, %v10414
      %v10445 = vadd.f32 %v10185, %v10419
      %v10446 = vadd.f32 %v10186, %v10422
      %v10447 = vadd.f32 %v10187, %v10427
      %v10448 = vadd.f32 %v10188, %v10430
      %s10449 = scalar_lea.vmem [#allocation2], 48
      %v10450 = vld [vmem:[%s10449] sm:$0xf]
      %v10451 = vld [vmem:[%s10449 + $0x4] sm:$0xf]
      %v10452 = vld [vmem:[%s10449 + $0xc] sm:$0xf]
      %v10453 = vld [vmem:[%s10449 + $0x10] sm:$0xf]
      %v10454 = vld [vmem:[%s10449 + $0x18] sm:$0xf]
      %v10455 = vld [vmem:[%s10449 + $0x1c] sm:$0xf]
      %v10456 = vld [vmem:[%s10449 + $0x24] sm:$0xf]
      %v10457 = vld [vmem:[%s10449 + $0x28] sm:$0xf]
      %v10458 = vld [vmem:[%s10449 + $0x30] sm:$0xf]
      %v10459 = vld [vmem:[%s10449 + $0x34] sm:$0xf]
      %v10460 = vld [vmem:[%s10449 + $0x3c] sm:$0xf]
      %v10461 = vld [vmem:[%s10449 + $0x40] sm:$0xf]
      %v10462 = vld [vmem:[%s10449 + $0x48] sm:$0xf]
      %v10463 = vld [vmem:[%s10449 + $0x4c] sm:$0xf]
      %v10464 = vld [vmem:[%s10449 + $0x54] sm:$0xf]
      %v10465 = vld [vmem:[%s10449 + $0x58] sm:$0xf]
      %v10466 = vld [vmem:[%s7 + $0x24] sm:$0xf]
      %v10467 = vld [vmem:[%s7 + $0x28] sm:$0x3]
      %v10484 = vunpack.c.l.b16 %v10450
      %v10485 = vunpack.c.l.b16 %v10451
      %v10486 = vunpack.c.l.b16 %v10452
      %v10487 = vunpack.c.l.b16 %v10453
      %v10488 = vunpack.c.l.b16 %v10454
      %v10489 = vunpack.c.l.b16 %v10455
      %v10490 = vunpack.c.l.b16 %v10456
      %v10491 = vunpack.c.l.b16 %v10457
      %v10492 = vunpack.c.l.b16 %v10458
      %v10493 = vunpack.c.l.b16 %v10459
      %v10494 = vunpack.c.l.b16 %v10460
      %v10495 = vunpack.c.l.b16 %v10461
      %v10496 = vunpack.c.l.b16 %v10462
      %v10497 = vunpack.c.l.b16 %v10463
      %v10498 = vunpack.c.l.b16 %v10464
      %v10499 = vunpack.c.l.b16 %v10465
      %v10500 = vpack.c.b16 %v10485, %v10484
      %v10501 = vpack.c.b16 %v10487, %v10486
      %v10502 = vpack.c.b16 %v10489, %v10488
      %v10503 = vpack.c.b16 %v10491, %v10490
      %v10504 = vpack.c.b16 %v10493, %v10492
      %v10505 = vpack.c.b16 %v10495, %v10494
      %v10506 = vpack.c.b16 %v10497, %v10496
      %v10507 = vpack.c.b16 %v10499, %v10498
      %v10510 = vunpack.c.l.b16 %v10466
      %v10511 = vunpack.c.l.b16 %v10467
      %v10512 = vpack.c.b16 %v10511, %v10510
      %v10514 = vsel %vm9052, %v10500, 0
      %v10517 = vsel %vm9052, %v10501, 0
      %v10520 = vsel %vm9052, %v10502, 0
      %v10523 = vsel %vm9052, %v10503, 0
      %v10526 = vsel %vm9052, %v10504, 0
      %v10529 = vsel %vm9052, %v10505, 0
      %v10532 = vsel %vm9052, %v10506, 0
      %v10535 = vsel %vm9052, %v10507, 0
      %v10538 = vsel %vm9077, %v10512, 0
      %10540 = vmatprep.subr.bf16.mxu0 0
      %10541 = vmatpush1.bf16.msra.mxu0 %v10538
      %10542 = vmatprep.subr.bf16.mxu0 0
      %10543 = vmatpush1.bf16.msra.mxu0 0
      %10544 = vmatprep.subr.bf16.mxu0 0
      %10545 = vmatpush1.bf16.msra.mxu0 0
      %10546 = vmatprep.subr.bf16.mxu0 0
      %10547 = vmatpush1.bf16.msra.mxu0 0
      %10548 = vmatprep.subr.bf16.mxu0 0
      %10549 = vmatpush1.bf16.msra.mxu0 0
      %10550 = vmatprep.subr.bf16.mxu0 0
      %10551 = vmatpush1.bf16.msra.mxu0 0
      %10552 = vmatprep.subr.bf16.mxu0 0
      %10553 = vmatpush1.bf16.msra.mxu0 0
      %10554 = vmatprep.subr.bf16.mxu0 0
      %10555 = vmatpush1.bf16.msra.mxu0 0
      %10556 = vmatprep.subr.bf16.mxu0 0
      %10557 = vmatpush1.bf16.msra.mxu0 0
      %10558 = vmatprep.subr.bf16.mxu0 0
      %10559 = vmatpush1.bf16.msra.mxu0 0
      %10560 = vmatprep.subr.bf16.mxu0 0
      %10561 = vmatpush1.bf16.msra.mxu0 0
      %10562 = vmatprep.subr.bf16.mxu0 0
      %10563 = vmatpush1.bf16.msra.mxu0 0
      %10564 = vmatprep.subr.bf16.mxu0 0
      %10565 = vmatpush1.bf16.msra.mxu0 0
      %10566 = vmatprep.subr.bf16.mxu0 0
      %10567 = vmatpush1.bf16.msra.mxu0 0
      %10568 = vmatprep.subr.bf16.mxu0 0
      %10569 = vmatpush1.bf16.msra.mxu0 0
      %10570 = vmatprep.subr.bf16.mxu0 0
      %10571 = vmatpush1.bf16.msra.mxu0 0
      %10572 = vmatprep.mubr.bf16.mxu0 0
      %10573 = vmatmul.mubr.bf16.gmra.mrb[0].mxu0 %v10514
      %v10574 = vpop.f32.mrb[0].mxu0
      %v10575 = vadd.f32 0.0, %v10574
      %v10576 = vpop.f32.mrb[0].mxu0
      %v10577 = vpop.f32.mrb[0].mxu0
      %v10578 = vadd.f32 0.0, %v10577
      %v10579 = vpop.f32.mrb[0].mxu0
      %10580 = vmatprep.mubr.bf16.mxu0 0
      %10581 = vmatmul.mubr.bf16.gmra.mrb[0].mxu0 %v10517
      %v10582 = vpop.f32.mrb[0].mxu0
      %v10583 = vadd.f32 0.0, %v10582
      %v10584 = vpop.f32.mrb[0].mxu0
      %v10585 = vpop.f32.mrb[0].mxu0
      %v10586 = vadd.f32 0.0, %v10585
      %v10587 = vpop.f32.mrb[0].mxu0
      %10588 = vmatprep.mubr.bf16.mxu0 0
      %10589 = vmatmul.mubr.bf16.gmra.mrb[0].mxu0 %v10520
      %v10590 = vpop.f32.mrb[0].mxu0
      %v10591 = vadd.f32 0.0, %v10590
      %v10592 = vpop.f32.mrb[0].mxu0
      %v10593 = vpop.f32.mrb[0].mxu0
      %v10594 = vadd.f32 0.0, %v10593
      %v10595 = vpop.f32.mrb[0].mxu0
      %10596 = vmatprep.mubr.bf16.mxu0 0
      %10597 = vmatmul.mubr.bf16.gmra.mrb[0].mxu0 %v10523
      %v10598 = vpop.f32.mrb[0].mxu0
      %v10599 = vadd.f32 0.0, %v10598
      %v10600 = vpop.f32.mrb[0].mxu0
      %v10601 = vpop.f32.mrb[0].mxu0
      %v10602 = vadd.f32 0.0, %v10601
      %v10603 = vpop.f32.mrb[0].mxu0
      %10604 = vmatprep.mubr.bf16.mxu0 0
      %10605 = vmatmul.mubr.bf16.gmra.mrb[0].mxu0 %v10526
      %v10606 = vpop.f32.mrb[0].mxu0
      %v10607 = vadd.f32 0.0, %v10606
      %v10608 = vpop.f32.mrb[0].mxu0
      %v10609 = vpop.f32.mrb[0].mxu0
      %v10610 = vadd.f32 0.0, %v10609
      %v10611 = vpop.f32.mrb[0].mxu0
      %10612 = vmatprep.mubr.bf16.mxu0 0
      %10613 = vmatmul.mubr.bf16.gmra.mrb[0].mxu0 %v10529
      %v10614 = vpop.f32.mrb[0].mxu0
      %v10615 = vadd.f32 0.0, %v10614
      %v10616 = vpop.f32.mrb[0].mxu0
      %v10617 = vpop.f32.mrb[0].mxu0
      %v10618 = vadd.f32 0.0, %v10617
      %v10619 = vpop.f32.mrb[0].mxu0
      %10620 = vmatprep.mubr.bf16.mxu0 0
      %10621 = vmatmul.mubr.bf16.gmra.mrb[0].mxu0 %v10532
      %v10622 = vpop.f32.mrb[0].mxu0
      %v10623 = vadd.f32 0.0, %v10622
      %v10624 = vpop.f32.mrb[0].mxu0
      %v10625 = vpop.f32.mrb[0].mxu0
      %v10626 = vadd.f32 0.0, %v10625
      %v10627 = vpop.f32.mrb[0].mxu0
      %10628 = vmatprep.mubr.bf16.mxu0 0
      %10629 = vmatmul.mubr.bf16.gmra.mrb[0].mxu0 %v10535
      %v10630 = vpop.f32.mrb[0].mxu0
      %v10631 = vadd.f32 0.0, %v10630
      %v10632 = vpop.f32.mrb[0].mxu0
      %v10633 = vpop.f32.mrb[0].mxu0
      %v10634 = vadd.f32 0.0, %v10633
      %v10635 = vpop.f32.mrb[0].mxu0
      %10636 = vdwg.mxu0
      %v10637 = vadd.f32 %v10433, %v10575
      %v10638 = vadd.f32 %v10434, %v10578
      %v10639 = vadd.f32 %v10435, %v10583
      %v10640 = vadd.f32 %v10436, %v10586
      %v10641 = vadd.f32 %v10437, %v10591
      %v10642 = vadd.f32 %v10438, %v10594
      %v10643 = vadd.f32 %v10439, %v10599
      %v10644 = vadd.f32 %v10440, %v10602
      %v10645 = vadd.f32 %v10441, %v10607
      %v10646 = vadd.f32 %v10442, %v10610
      %v10647 = vadd.f32 %v10443, %v10615
      %v10648 = vadd.f32 %v10444, %v10618
      %v10649 = vadd.f32 %v10445, %v10623
      %v10650 = vadd.f32 %v10446, %v10626
      %v10651 = vadd.f32 %v10447, %v10631
      %v10652 = vadd.f32 %v10448, %v10634
      %v10653 = vld [vmem:[%s10449] sm:$0xf]
      %v10654 = vld [vmem:[%s10449 + $0x4] sm:$0xf]
      %v10655 = vld [vmem:[%s10449 + $0x8] sm:$0x1]
      %v10656 = vld [vmem:[%s10449 + $0xc] sm:$0xf]
      %v10657 = vld [vmem:[%s10449 + $0x10] sm:$0xf]
      %v10658 = vld [vmem:[%s10449 + $0x14] sm:$0x1]
      %v10659 = vld [vmem:[%s10449 + $0x18] sm:$0xf]
      %v10660 = vld [vmem:[%s10449 + $0x1c] sm:$0xf]
      %v10661 = vld [vmem:[%s10449 + $0x20] sm:$0x1]
      %v10662 = vld [vmem:[%s10449 + $0x24] sm:$0xf]
      %v10663 = vld [vmem:[%s10449 + $0x28] sm:$0xf]
      %v10664 = vld [vmem:[%s10449 + $0x2c] sm:$0x1]
      %v10665 = vld [vmem:[%s10449 + $0x30] sm:$0xf]
      %v10666 = vld [vmem:[%s10449 + $0x34] sm:$0xf]
      %v10667 = vld [vmem:[%s10449 + $0x38] sm:$0x1]
      %v10668 = vld [vmem:[%s10449 + $0x3c] sm:$0xf]
      %v10669 = vld [vmem:[%s10449 + $0x40] sm:$0xf]
      %v10670 = vld [vmem:[%s10449 + $0x44] sm:$0x1]
      %v10671 = vld [vmem:[%s10449 + $0x48] sm:$0xf]
      %v10672 = vld [vmem:[%s10449 + $0x4c] sm:$0xf]
      %v10673 = vld [vmem:[%s10449 + $0x50] sm:$0x1]
      %v10674 = vld [vmem:[%s10449 + $0x54] sm:$0xf]
      %v10675 = vld [vmem:[%s10449 + $0x58] sm:$0xf]
      %v10676 = vld [vmem:[%s10449 + $0x5c] sm:$0x1]
      %v10677 = vld [vmem:[%s7 + $0x28] sm:$0xc]
      %v10678 = vld [vmem:[%s7 + $0x2c] sm:$0xf]
      %v10680 = vshrl.u32 %v10653, 16
      %v10682 = vrot.slane %v10680, 4
      %v10683 = vshll.u32 %v10653, 16
      %v10685 = vrot.slane %v10683, 5
      %v10686 = vor.u32 %v10682, %v10685
      %v10687 = vrot.slane %v10686, 4
      %v10689 = vshll.u32 %v10654, 16
      %v10691 = vrot.slane %v10689, 5
      %v10692 = vsel %vm1215, %v10687, %v10691
      %v10693 = vshrl.u32 %v10654, 16
      %v10695 = vrot.slane %v10693, 4
      %v10696 = vor.u32 %v10695, %v10691
      %v10697 = vrot.slane %v10696, 4
      %v10699 = vshll.u32 %v10655, 16
      %v10701 = vrot.slane %v10699, 5
      %v10702 = vsel %vm1215, %v10697, %v10701
      %v10704 = vshrl.u32 %v10656, 16
      %v10706 = vrot.slane %v10704, 4
      %v10707 = vshll.u32 %v10656, 16
      %v10709 = vrot.slane %v10707, 5
      %v10710 = vor.u32 %v10706, %v10709
      %v10711 = vrot.slane %v10710, 4
      %v10713 = vshll.u32 %v10657, 16
      %v10715 = vrot.slane %v10713, 5
      %v10716 = vsel %vm1215, %v10711, %v10715
      %v10717 = vshrl.u32 %v10657, 16
      %v10719 = vrot.slane %v10717, 4
      %v10720 = vor.u32 %v10719, %v10715
      %v10721 = vrot.slane %v10720, 4
      %v10723 = vshll.u32 %v10658, 16
      %v10725 = vrot.slane %v10723, 5
      %v10726 = vsel %vm1215, %v10721, %v10725
      %v10728 = vshrl.u32 %v10659, 16
      %v10730 = vrot.slane %v10728, 4
      %v10731 = vshll.u32 %v10659, 16
      %v10733 = vrot.slane %v10731, 5
      %v10734 = vor.u32 %v10730, %v10733
      %v10735 = vrot.slane %v10734, 4
      %v10737 = vshll.u32 %v10660, 16
      %v10739 = vrot.slane %v10737, 5
      %v10740 = vsel %vm1215, %v10735, %v10739
      %v10741 = vshrl.u32 %v10660, 16
      %v10743 = vrot.slane %v10741, 4
      %v10744 = vor.u32 %v10743, %v10739
      %v10745 = vrot.slane %v10744, 4
      %v10747 = vshll.u32 %v10661, 16
      %v10749 = vrot.slane %v10747, 5
      %v10750 = vsel %vm1215, %v10745, %v10749
      %v10752 = vshrl.u32 %v10662, 16
      %v10754 = vrot.slane %v10752, 4
      %v10755 = vshll.u32 %v10662, 16
      %v10757 = vrot.slane %v10755, 5
      %v10758 = vor.u32 %v10754, %v10757
      %v10759 = vrot.slane %v10758, 4
      %v10761 = vshll.u32 %v10663, 16
      %v10763 = vrot.slane %v10761, 5
      %v10764 = vsel %vm1215, %v10759, %v10763
      %v10765 = vshrl.u32 %v10663, 16
      %v10767 = vrot.slane %v10765, 4
      %v10768 = vor.u32 %v10767, %v10763
      %v10769 = vrot.slane %v10768, 4
      %v10771 = vshll.u32 %v10664, 16
      %v10773 = vrot.slane %v10771, 5
      %v10774 = vsel %vm1215, %v10769, %v10773
      %v10776 = vshrl.u32 %v10665, 16
      %v10778 = vrot.slane %v10776, 4
      %v10779 = vshll.u32 %v10665, 16
      %v10781 = vrot.slane %v10779, 5
      %v10782 = vor.u32 %v10778, %v10781
      %v10783 = vrot.slane %v10782, 4
      %v10785 = vshll.u32 %v10666, 16
      %v10787 = vrot.slane %v10785, 5
      %v10788 = vsel %vm1215, %v10783, %v10787
      %v10789 = vshrl.u32 %v10666, 16
      %v10791 = vrot.slane %v10789, 4
      %v10792 = vor.u32 %v10791, %v10787
      %v10793 = vrot.slane %v10792, 4
      %v10795 = vshll.u32 %v10667, 16
      %v10797 = vrot.slane %v10795, 5
      %v10798 = vsel %vm1215, %v10793, %v10797
      %v10800 = vshrl.u32 %v10668, 16
      %v10802 = vrot.slane %v10800, 4
      %v10803 = vshll.u32 %v10668, 16
      %v10805 = vrot.slane %v10803, 5
      %v10806 = vor.u32 %v10802, %v10805
      %v10807 = vrot.slane %v10806, 4
      %v10809 = vshll.u32 %v10669, 16
      %v10811 = vrot.slane %v10809, 5
      %v10812 = vsel %vm1215, %v10807, %v10811
      %v10813 = vshrl.u32 %v10669, 16
      %v10815 = vrot.slane %v10813, 4
      %v10816 = vor.u32 %v10815, %v10811
      %v10817 = vrot.slane %v10816, 4
      %v10819 = vshll.u32 %v10670, 16
      %v10821 = vrot.slane %v10819, 5
      %v10822 = vsel %vm1215, %v10817, %v10821
      %v10824 = vshrl.u32 %v10671, 16
      %v10826 = vrot.slane %v10824, 4
      %v10827 = vshll.u32 %v10671, 16
      %v10829 = vrot.slane %v10827, 5
      %v10830 = vor.u32 %v10826, %v10829
      %v10831 = vrot.slane %v10830, 4
      %v10833 = vshll.u32 %v10672, 16
      %v10835 = vrot.slane %v10833, 5
      %v10836 = vsel %vm1215, %v10831, %v10835
      %v10837 = vshrl.u32 %v10672, 16
      %v10839 = vrot.slane %v10837, 4
      %v10840 = vor.u32 %v10839, %v10835
      %v10841 = vrot.slane %v10840, 4
      %v10843 = vshll.u32 %v10673, 16
      %v10845 = vrot.slane %v10843, 5
      %v10846 = vsel %vm1215, %v10841, %v10845
      %v10848 = vshrl.u32 %v10674, 16
      %v10850 = vrot.slane %v10848, 4
      %v10851 = vshll.u32 %v10674, 16
      %v10853 = vrot.slane %v10851, 5
      %v10854 = vor.u32 %v10850, %v10853
      %v10855 = vrot.slane %v10854, 4
      %v10857 = vshll.u32 %v10675, 16
      %v10859 = vrot.slane %v10857, 5
      %v10860 = vsel %vm1215, %v10855, %v10859
      %v10861 = vshrl.u32 %v10675, 16
      %v10863 = vrot.slane %v10861, 4
      %v10864 = vor.u32 %v10863, %v10859
      %v10865 = vrot.slane %v10864, 4
      %v10867 = vshll.u32 %v10676, 16
      %v10869 = vrot.slane %v10867, 5
      %v10870 = vsel %vm1215, %v10865, %v10869
      %v10871 = vunpack.c.l.b16 %v10692
      %v10872 = vunpack.c.l.b16 %v10702
      %v10873 = vunpack.c.l.b16 %v10716
      %v10874 = vunpack.c.l.b16 %v10726
      %v10875 = vunpack.c.l.b16 %v10740
      %v10876 = vunpack.c.l.b16 %v10750
      %v10877 = vunpack.c.l.b16 %v10764
      %v10878 = vunpack.c.l.b16 %v10774
      %v10879 = vunpack.c.l.b16 %v10788
      %v10880 = vunpack.c.l.b16 %v10798
      %v10881 = vunpack.c.l.b16 %v10812
      %v10882 = vunpack.c.l.b16 %v10822
      %v10883 = vunpack.c.l.b16 %v10836
      %v10884 = vunpack.c.l.b16 %v10846
      %v10885 = vunpack.c.l.b16 %v10860
      %v10886 = vunpack.c.l.b16 %v10870
      %v10887 = vpack.c.b16 %v10872, %v10871
      %v10888 = vpack.c.b16 %v10874, %v10873
      %v10889 = vpack.c.b16 %v10876, %v10875
      %v10890 = vpack.c.b16 %v10878, %v10877
      %v10891 = vpack.c.b16 %v10880, %v10879
      %v10892 = vpack.c.b16 %v10882, %v10881
      %v10893 = vpack.c.b16 %v10884, %v10883
      %v10894 = vpack.c.b16 %v10886, %v10885
      %v10897 = vunpack.c.l.b16 %v10677
      %v10898 = vunpack.c.l.b16 %v10678
      %v10899 = vpack.c.b16 %v10898, %v10897
      %v10900 = vrot.slane %v10899, 2
      %v10902 = vsel %vm9052, %v10887, 0
      %v10905 = vsel %vm9052, %v10888, 0
      %v10908 = vsel %vm9052, %v10889, 0
      %v10911 = vsel %vm9052, %v10890, 0
      %v10914 = vsel %vm9052, %v10891, 0
      %v10917 = vsel %vm9052, %v10892, 0
      %v10920 = vsel %vm9052, %v10893, 0
      %v10923 = vsel %vm9052, %v10894, 0
      %v10926 = vsel %vm9077, %v10900, 0
      %10928 = vmatprep.subr.bf16.mxu0 0
      %10929 = vmatpush1.bf16.msra.mxu0 %v10926
      %10930 = vmatprep.subr.bf16.mxu0 0
      %10931 = vmatpush1.bf16.msra.mxu0 0
      %10932 = vmatprep.subr.bf16.mxu0 0
      %10933 = vmatpush1.bf16.msra.mxu0 0
      %10934 = vmatprep.subr.bf16.mxu0 0
      %10935 = vmatpush1.bf16.msra.mxu0 0
      %10936 = vmatprep.subr.bf16.mxu0 0
      %10937 = vmatpush1.bf16.msra.mxu0 0
      %10938 = vmatprep.subr.bf16.mxu0 0
      %10939 = vmatpush1.bf16.msra.mxu0 0
      %10940 = vmatprep.subr.bf16.mxu0 0
      %10941 = vmatpush1.bf16.msra.mxu0 0
      %10942 = vmatprep.subr.bf16.mxu0 0
      %10943 = vmatpush1.bf16.msra.mxu0 0
      %10944 = vmatprep.subr.bf16.mxu0 0
      %10945 = vmatpush1.bf16.msra.mxu0 0
      %10946 = vmatprep.subr.bf16.mxu0 0
      %10947 = vmatpush1.bf16.msra.mxu0 0
      %10948 = vmatprep.subr.bf16.mxu0 0
      %10949 = vmatpush1.bf16.msra.mxu0 0
      %10950 = vmatprep.subr.bf16.mxu0 0
      %10951 = vmatpush1.bf16.msra.mxu0 0
      %10952 = vmatprep.subr.bf16.mxu0 0
      %10953 = vmatpush1.bf16.msra.mxu0 0
      %10954 = vmatprep.subr.bf16.mxu0 0
      %10955 = vmatpush1.bf16.msra.mxu0 0
      %10956 = vmatprep.subr.bf16.mxu0 0
      %10957 = vmatpush1.bf16.msra.mxu0 0
      %10958 = vmatprep.subr.bf16.mxu0 0
      %10959 = vmatpush1.bf16.msra.mxu0 0
      %10960 = vmatprep.mubr.bf16.mxu0 0
      %10961 = vmatmul.mubr.bf16.gmra.mrb[0].mxu0 %v10902
      %v10962 = vpop.f32.mrb[0].mxu0
      %v10963 = vadd.f32 0.0, %v10962
      %v10964 = vpop.f32.mrb[0].mxu0
      %v10965 = vpop.f32.mrb[0].mxu0
      %v10966 = vadd.f32 0.0, %v10965
      %v10967 = vpop.f32.mrb[0].mxu0
      %10968 = vmatprep.mubr.bf16.mxu0 0
      %10969 = vmatmul.mubr.bf16.gmra.mrb[0].mxu0 %v10905
      %v10970 = vpop.f32.mrb[0].mxu0
      %v10971 = vadd.f32 0.0, %v10970
      %v10972 = vpop.f32.mrb[0].mxu0
      %v10973 = vpop.f32.mrb[0].mxu0
      %v10974 = vadd.f32 0.0, %v10973
      %v10975 = vpop.f32.mrb[0].mxu0
      %10976 = vmatprep.mubr.bf16.mxu0 0
      %10977 = vmatmul.mubr.bf16.gmra.mrb[0].mxu0 %v10908
      %v10978 = vpop.f32.mrb[0].mxu0
      %v10979 = vadd.f32 0.0, %v10978
      %v10980 = vpop.f32.mrb[0].mxu0
      %v10981 = vpop.f32.mrb[0].mxu0
      %v10982 = vadd.f32 0.0, %v10981
      %v10983 = vpop.f32.mrb[0].mxu0
      %10984 = vmatprep.mubr.bf16.mxu0 0
      %10985 = vmatmul.mubr.bf16.gmra.mrb[0].mxu0 %v10911
      %v10986 = vpop.f32.mrb[0].mxu0
      %v10987 = vadd.f32 0.0, %v10986
      %v10988 = vpop.f32.mrb[0].mxu0
      %v10989 = vpop.f32.mrb[0].mxu0
      %v10990 = vadd.f32 0.0, %v10989
      %v10991 = vpop.f32.mrb[0].mxu0
      %10992 = vmatprep.mubr.bf16.mxu0 0
      %10993 = vmatmul.mubr.bf16.gmra.mrb[0].mxu0 %v10914
      %v10994 = vpop.f32.mrb[0].mxu0
      %v10995 = vadd.f32 0.0, %v10994
      %v10996 = vpop.f32.mrb[0].mxu0
      %v10997 = vpop.f32.mrb[0].mxu0
      %v10998 = vadd.f32 0.0, %v10997
      %v10999 = vpop.f32.mrb[0].mxu0
      %11000 = vmatprep.mubr.bf16.mxu0 0
      %11001 = vmatmul.mubr.bf16.gmra.mrb[0].mxu0 %v10917
      %v11002 = vpop.f32.mrb[0].mxu0
      %v11003 = vadd.f32 0.0, %v11002
      %v11004 = vpop.f32.mrb[0].mxu0
      %v11005 = vpop.f32.mrb[0].mxu0
      %v11006 = vadd.f32 0.0, %v11005
      %v11007 = vpop.f32.mrb[0].mxu0
      %11008 = vmatprep.mubr.bf16.mxu0 0
      %11009 = vmatmul.mubr.bf16.gmra.mrb[0].mxu0 %v10920
      %v11010 = vpop.f32.mrb[0].mxu0
      %v11011 = vadd.f32 0.0, %v11010
      %v11012 = vpop.f32.mrb[0].mxu0
      %v11013 = vpop.f32.mrb[0].mxu0
      %v11014 = vadd.f32 0.0, %v11013
      %v11015 = vpop.f32.mrb[0].mxu0
      %11016 = vmatprep.mubr.bf16.mxu0 0
      %11017 = vmatmul.mubr.bf16.gmra.mrb[0].mxu0 %v10923
      %v11018 = vpop.f32.mrb[0].mxu0
      %v11019 = vadd.f32 0.0, %v11018
      %v11020 = vpop.f32.mrb[0].mxu0
      %v11021 = vpop.f32.mrb[0].mxu0
      %v11022 = vadd.f32 0.0, %v11021
      %v11023 = vpop.f32.mrb[0].mxu0
      %11024 = vdwg.mxu0
      %v11025 = vadd.f32 %v10637, %v10963
      %v11026 = vadd.f32 %v10638, %v10966
      %v11027 = vadd.f32 %v10639, %v10971
      %v11028 = vadd.f32 %v10640, %v10974
      %v11029 = vadd.f32 %v10641, %v10979
      %v11030 = vadd.f32 %v10642, %v10982
      %v11031 = vadd.f32 %v10643, %v10987
      %v11032 = vadd.f32 %v10644, %v10990
      %v11033 = vadd.f32 %v10645, %v10995
      %v11034 = vadd.f32 %v10646, %v10998
      %v11035 = vadd.f32 %v10647, %v11003
      %v11036 = vadd.f32 %v10648, %v11006
      %v11037 = vadd.f32 %v10649, %v11011
      %v11038 = vadd.f32 %v10650, %v11014
      %v11039 = vadd.f32 %v10651, %v11019
      %v11040 = vadd.f32 %v10652, %v11022
      %v11041 = vld [vmem:[%s10449] sm:$0xe]
      %v11042 = vld [vmem:[%s10449 + $0xc] sm:$0xe]
      %v11043 = vld [vmem:[%s10449 + $0x18] sm:$0xe]
      %v11044 = vld [vmem:[%s10449 + $0x24] sm:$0xe]
      %v11045 = vld [vmem:[%s10449 + $0x30] sm:$0xe]
      %v11046 = vld [vmem:[%s10449 + $0x3c] sm:$0xe]
      %v11047 = vld [vmem:[%s10449 + $0x48] sm:$0xe]
      %v11048 = vld [vmem:[%s10449 + $0x54] sm:$0xe]
      %v11049 = vld [vmem:[%s7 + $0x30] sm:$0xf]
      %v11050 = vld [vmem:[%s7 + $0x34] sm:$0x3]
      %v11075 = vrot.slane %v11041, 5
      %v11076 = vrot.slane %v11075, 4
      %v11077 = vrot.slane %v10654, 5
      %v11078 = vsel %vm1981, %v11076, %v11077
      %v11079 = vrot.slane %v11077, 4
      %v11080 = vrot.slane %v10655, 5
      %v11081 = vsel %vm1981, %v11079, %v11080
      %v11082 = vrot.slane %v11042, 5
      %v11083 = vrot.slane %v11082, 4
      %v11084 = vrot.slane %v10657, 5
      %v11085 = vsel %vm1981, %v11083, %v11084
      %v11086 = vrot.slane %v11084, 4
      %v11087 = vrot.slane %v10658, 5
      %v11088 = vsel %vm1981, %v11086, %v11087
      %v11089 = vrot.slane %v11043, 5
      %v11090 = vrot.slane %v11089, 4
      %v11091 = vrot.slane %v10660, 5
      %v11092 = vsel %vm1981, %v11090, %v11091
      %v11093 = vrot.slane %v11091, 4
      %v11094 = vrot.slane %v10661, 5
      %v11095 = vsel %vm1981, %v11093, %v11094
      %v11096 = vrot.slane %v11044, 5
      %v11097 = vrot.slane %v11096, 4
      %v11098 = vrot.slane %v10663, 5
      %v11099 = vsel %vm1981, %v11097, %v11098
      %v11100 = vrot.slane %v11098, 4
      %v11101 = vrot.slane %v10664, 5
      %v11102 = vsel %vm1981, %v11100, %v11101
      %v11103 = vrot.slane %v11045, 5
      %v11104 = vrot.slane %v11103, 4
      %v11105 = vrot.slane %v10666, 5
      %v11106 = vsel %vm1981, %v11104, %v11105
      %v11107 = vrot.slane %v11105, 4
      %v11108 = vrot.slane %v10667, 5
      %v11109 = vsel %vm1981, %v11107, %v11108
      %v11110 = vrot.slane %v11046, 5
      %v11111 = vrot.slane %v11110, 4
      %v11112 = vrot.slane %v10669, 5
      %v11113 = vsel %vm1981, %v11111, %v11112
      %v11114 = vrot.slane %v11112, 4
      %v11115 = vrot.slane %v10670, 5
      %v11116 = vsel %vm1981, %v11114, %v11115
      %v11117 = vrot.slane %v11047, 5
      %v11118 = vrot.slane %v11117, 4
      %v11119 = vrot.slane %v10672, 5
      %v11120 = vsel %vm1981, %v11118, %v11119
      %v11121 = vrot.slane %v11119, 4
      %v11122 = vrot.slane %v10673, 5
      %v11123 = vsel %vm1981, %v11121, %v11122
      %v11124 = vrot.slane %v11048, 5
      %v11125 = vrot.slane %v11124, 4
      %v11126 = vrot.slane %v10675, 5
      %v11127 = vsel %vm1981, %v11125, %v11126
      %v11128 = vrot.slane %v11126, 4
      %v11129 = vrot.slane %v10676, 5
      %v11130 = vsel %vm1981, %v11128, %v11129
      %v11131 = vunpack.c.l.b16 %v11078
      %v11132 = vunpack.c.l.b16 %v11081
      %v11133 = vunpack.c.l.b16 %v11085
      %v11134 = vunpack.c.l.b16 %v11088
      %v11135 = vunpack.c.l.b16 %v11092
      %v11136 = vunpack.c.l.b16 %v11095
      %v11137 = vunpack.c.l.b16 %v11099
      %v11138 = vunpack.c.l.b16 %v11102
      %v11139 = vunpack.c.l.b16 %v11106
      %v11140 = vunpack.c.l.b16 %v11109
      %v11141 = vunpack.c.l.b16 %v11113
      %v11142 = vunpack.c.l.b16 %v11116
      %v11143 = vunpack.c.l.b16 %v11120
      %v11144 = vunpack.c.l.b16 %v11123
      %v11145 = vunpack.c.l.b16 %v11127
      %v11146 = vunpack.c.l.b16 %v11130
      %v11147 = vpack.c.b16 %v11132, %v11131
      %v11148 = vpack.c.b16 %v11134, %v11133
      %v11149 = vpack.c.b16 %v11136, %v11135
      %v11150 = vpack.c.b16 %v11138, %v11137
      %v11151 = vpack.c.b16 %v11140, %v11139
      %v11152 = vpack.c.b16 %v11142, %v11141
      %v11153 = vpack.c.b16 %v11144, %v11143
      %v11154 = vpack.c.b16 %v11146, %v11145
      %v11157 = vunpack.c.l.b16 %v11049
      %v11158 = vunpack.c.l.b16 %v11050
      %v11159 = vpack.c.b16 %v11158, %v11157
      %v11161 = vsel %vm9052, %v11147, 0
      %v11164 = vsel %vm9052, %v11148, 0
      %v11167 = vsel %vm9052, %v11149, 0
      %v11170 = vsel %vm9052, %v11150, 0
      %v11173 = vsel %vm9052, %v11151, 0
      %v11176 = vsel %vm9052, %v11152, 0
      %v11179 = vsel %vm9052, %v11153, 0
      %v11182 = vsel %vm9052, %v11154, 0
      %v11185 = vsel %vm9077, %v11159, 0
      %11187 = vmatprep.subr.bf16.mxu0 0
      %11188 = vmatpush1.bf16.msra.mxu0 %v11185
      %11189 = vmatprep.subr.bf16.mxu0 0
      %11190 = vmatpush1.bf16.msra.mxu0 0
      %11191 = vmatprep.subr.bf16.mxu0 0
      %11192 = vmatpush1.bf16.msra.mxu0 0
      %11193 = vmatprep.subr.bf16.mxu0 0
      %11194 = vmatpush1.bf16.msra.mxu0 0
      %11195 = vmatprep.subr.bf16.mxu0 0
      %11196 = vmatpush1.bf16.msra.mxu0 0
      %11197 = vmatprep.subr.bf16.mxu0 0
      %11198 = vmatpush1.bf16.msra.mxu0 0
      %11199 = vmatprep.subr.bf16.mxu0 0
      %11200 = vmatpush1.bf16.msra.mxu0 0
      %11201 = vmatprep.subr.bf16.mxu0 0
      %11202 = vmatpush1.bf16.msra.mxu0 0
      %11203 = vmatprep.subr.bf16.mxu0 0
      %11204 = vmatpush1.bf16.msra.mxu0 0
      %11205 = vmatprep.subr.bf16.mxu0 0
      %11206 = vmatpush1.bf16.msra.mxu0 0
      %11207 = vmatprep.subr.bf16.mxu0 0
      %11208 = vmatpush1.bf16.msra.mxu0 0
      %11209 = vmatprep.subr.bf16.mxu0 0
      %11210 = vmatpush1.bf16.msra.mxu0 0
      %11211 = vmatprep.subr.bf16.mxu0 0
      %11212 = vmatpush1.bf16.msra.mxu0 0
      %11213 = vmatprep.subr.bf16.mxu0 0
      %11214 = vmatpush1.bf16.msra.mxu0 0
      %11215 = vmatprep.subr.bf16.mxu0 0
      %11216 = vmatpush1.bf16.msra.mxu0 0
      %11217 = vmatprep.subr.bf16.mxu0 0
      %11218 = vmatpush1.bf16.msra.mxu0 0
      %11219 = vmatprep.mubr.bf16.mxu0 0
      %11220 = vmatmul.mubr.bf16.gmra.mrb[0].mxu0 %v11161
      %v11221 = vpop.f32.mrb[0].mxu0
      %v11222 = vadd.f32 0.0, %v11221
      %v11223 = vpop.f32.mrb[0].mxu0
      %v11224 = vpop.f32.mrb[0].mxu0
      %v11225 = vadd.f32 0.0, %v11224
      %v11226 = vpop.f32.mrb[0].mxu0
      %11227 = vmatprep.mubr.bf16.mxu0 0
      %11228 = vmatmul.mubr.bf16.gmra.mrb[0].mxu0 %v11164
      %v11229 = vpop.f32.mrb[0].mxu0
      %v11230 = vadd.f32 0.0, %v11229
      %v11231 = vpop.f32.mrb[0].mxu0
      %v11232 = vpop.f32.mrb[0].mxu0
      %v11233 = vadd.f32 0.0, %v11232
      %v11234 = vpop.f32.mrb[0].mxu0
      %11235 = vmatprep.mubr.bf16.mxu0 0
      %11236 = vmatmul.mubr.bf16.gmra.mrb[0].mxu0 %v11167
      %v11237 = vpop.f32.mrb[0].mxu0
      %v11238 = vadd.f32 0.0, %v11237
      %v11239 = vpop.f32.mrb[0].mxu0
      %v11240 = vpop.f32.mrb[0].mxu0
      %v11241 = vadd.f32 0.0, %v11240
      %v11242 = vpop.f32.mrb[0].mxu0
      %11243 = vmatprep.mubr.bf16.mxu0 0
      %11244 = vmatmul.mubr.bf16.gmra.mrb[0].mxu0 %v11170
      %v11245 = vpop.f32.mrb[0].mxu0
      %v11246 = vadd.f32 0.0, %v11245
      %v11247 = vpop.f32.mrb[0].mxu0
      %v11248 = vpop.f32.mrb[0].mxu0
      %v11249 = vadd.f32 0.0, %v11248
      %v11250 = vpop.f32.mrb[0].mxu0
      %11251 = vmatprep.mubr.bf16.mxu0 0
      %11252 = vmatmul.mubr.bf16.gmra.mrb[0].mxu0 %v11173
      %v11253 = vpop.f32.mrb[0].mxu0
      %v11254 = vadd.f32 0.0, %v11253
      %v11255 = vpop.f32.mrb[0].mxu0
      %v11256 = vpop.f32.mrb[0].mxu0
      %v11257 = vadd.f32 0.0, %v11256
      %v11258 = vpop.f32.mrb[0].mxu0
      %11259 = vmatprep.mubr.bf16.mxu0 0
      %11260 = vmatmul.mubr.bf16.gmra.mrb[0].mxu0 %v11176
      %v11261 = vpop.f32.mrb[0].mxu0
      %v11262 = vadd.f32 0.0, %v11261
      %v11263 = vpop.f32.mrb[0].mxu0
      %v11264 = vpop.f32.mrb[0].mxu0
      %v11265 = vadd.f32 0.0, %v11264
      %v11266 = vpop.f32.mrb[0].mxu0
      %11267 = vmatprep.mubr.bf16.mxu0 0
      %11268 = vmatmul.mubr.bf16.gmra.mrb[0].mxu0 %v11179
      %v11269 = vpop.f32.mrb[0].mxu0
      %v11270 = vadd.f32 0.0, %v11269
      %v11271 = vpop.f32.mrb[0].mxu0
      %v11272 = vpop.f32.mrb[0].mxu0
      %v11273 = vadd.f32 0.0, %v11272
      %v11274 = vpop.f32.mrb[0].mxu0
      %11275 = vmatprep.mubr.bf16.mxu0 0
      %11276 = vmatmul.mubr.bf16.gmra.mrb[0].mxu0 %v11182
      %v11277 = vpop.f32.mrb[0].mxu0
      %v11278 = vadd.f32 0.0, %v11277
      %v11279 = vpop.f32.mrb[0].mxu0
      %v11280 = vpop.f32.mrb[0].mxu0
      %v11281 = vadd.f32 0.0, %v11280
      %v11282 = vpop.f32.mrb[0].mxu0
      %11283 = vdwg.mxu0
      %v11284 = vadd.f32 %v11025, %v11222
      %v11285 = vadd.f32 %v11026, %v11225
      %v11286 = vadd.f32 %v11027, %v11230
      %v11287 = vadd.f32 %v11028, %v11233
      %v11288 = vadd.f32 %v11029, %v11238
      %v11289 = vadd.f32 %v11030, %v11241
      %v11290 = vadd.f32 %v11031, %v11246
      %v11291 = vadd.f32 %v11032, %v11249
      %v11292 = vadd.f32 %v11033, %v11254
      %v11293 = vadd.f32 %v11034, %v11257
      %v11294 = vadd.f32 %v11035, %v11262
      %v11295 = vadd.f32 %v11036, %v11265
      %v11296 = vadd.f32 %v11037, %v11270
      %v11297 = vadd.f32 %v11038, %v11273
      %v11298 = vadd.f32 %v11039, %v11278
      %v11299 = vadd.f32 %v11040, %v11281
      %v11300 = vld [vmem:[%s8] sm:$0x1]
      %v11302 = vlaneseq
      %v11303 = vshrl.u32 %v11302, 7
      %v11304 = vsub.s32 0, %v11303
      %v11305 = vrot.slane %v11300, %v11304
      %v11307 = vadd.f32 %v11284, %v11305
      %v11308 = vadd.f32 %v11285, %v11305
      %v11309 = vadd.f32 %v11286, %v11305
      %v11310 = vadd.f32 %v11287, %v11305
      %v11311 = vadd.f32 %v11288, %v11305
      %v11312 = vadd.f32 %v11289, %v11305
      %v11313 = vadd.f32 %v11290, %v11305
      %v11314 = vadd.f32 %v11291, %v11305
      %v11315 = vadd.f32 %v11292, %v11305
      %v11316 = vadd.f32 %v11293, %v11305
      %v11317 = vadd.f32 %v11294, %v11305
      %v11318 = vadd.f32 %v11295, %v11305
      %v11319 = vadd.f32 %v11296, %v11305
      %v11320 = vadd.f32 %v11297, %v11305
      %v11321 = vadd.f32 %v11298, %v11305
      %v11322 = vadd.f32 %v11299, %v11305
      %v11323 = vmax.f32 %v11307, 0.0
      %v11324 = vmax.f32 %v11308, 0.0
      %v11325 = vmax.f32 %v11309, 0.0
      %v11326 = vmax.f32 %v11310, 0.0
      %v11327 = vmax.f32 %v11311, 0.0
      %v11328 = vmax.f32 %v11312, 0.0
      %v11329 = vmax.f32 %v11313, 0.0
      %v11330 = vmax.f32 %v11314, 0.0
      %v11331 = vmax.f32 %v11315, 0.0
      %v11332 = vmax.f32 %v11316, 0.0
      %v11333 = vmax.f32 %v11317, 0.0
      %v11334 = vmax.f32 %v11318, 0.0
      %v11335 = vmax.f32 %v11319, 0.0
      %v11336 = vmax.f32 %v11320, 0.0
      %v11337 = vmax.f32 %v11321, 0.0
      %v11338 = vmax.f32 %v11322, 0.0
      %v11339 = vstv %s4745
      %v11340 = vadd.s32 %v11339, 1
      %v11341 = vadd.s32 %v11339, 2
      %v11342 = vadd.s32 %v11339, 3
      %v11343 = vadd.s32 %v11339, 4
      %v11344 = vadd.s32 %v11339, 5
      %v11345 = vadd.s32 %v11339, 6
      %v11346 = vadd.s32 %v11339, 7
      %vm11347 = vcmp.ge.s32.totalorder %v11339, 0
      %vm11348 = vcmp.ge.s32.totalorder %v11340, 0
      %vm11349 = vcmp.ge.s32.totalorder %v11341, 0
      %vm11350 = vcmp.ge.s32.totalorder %v11342, 0
      %vm11351 = vcmp.ge.s32.totalorder %v11343, 0
      %vm11352 = vcmp.ge.s32.totalorder %v11344, 0
      %vm11353 = vcmp.ge.s32.totalorder %v11345, 0
      %vm11354 = vcmp.ge.s32.totalorder %v11346, 0
      %vm11355 = vcmp.lt.s32.totalorder %v11339, 16
      %vm11356 = vcmp.lt.s32.totalorder %v11340, 16
      %vm11357 = vcmp.lt.s32.totalorder %v11341, 16
      %vm11358 = vcmp.lt.s32.totalorder %v11342, 16
      %vm11359 = vcmp.lt.s32.totalorder %v11343, 16
      %vm11360 = vcmp.lt.s32.totalorder %v11344, 16
      %vm11361 = vcmp.lt.s32.totalorder %v11345, 16
      %vm11362 = vcmp.lt.s32.totalorder %v11346, 16
      %vm11363 = vmand %vm11347, %vm11355
      %vm11364 = vmand %vm11348, %vm11356
      %vm11365 = vmand %vm11349, %vm11357
      %vm11366 = vmand %vm11350, %vm11358
      %vm11367 = vmand %vm11351, %vm11359
      %vm11368 = vmand %vm11352, %vm11360
      %vm11369 = vmand %vm11353, %vm11361
      %vm11370 = vmand %vm11354, %vm11362
      %v11371 = vsel %vm11363, 1, 0
      %v11372 = vsel %vm11364, 1, 0
      %v11373 = vsel %vm11365, 1, 0
      %v11374 = vsel %vm11366, 1, 0
      %v11375 = vsel %vm11367, 1, 0
      %v11376 = vsel %vm11368, 1, 0
      %v11377 = vsel %vm11369, 1, 0
      %v11378 = vsel %vm11370, 1, 0
      %v11379 = vcvt.s32.f32 %v11371
      %v11380 = vcvt.s32.f32 %v11372
      %v11381 = vcvt.s32.f32 %v11373
      %v11382 = vcvt.s32.f32 %v11374
      %v11383 = vcvt.s32.f32 %v11375
      %v11384 = vcvt.s32.f32 %v11376
      %v11385 = vcvt.s32.f32 %v11377
      %v11386 = vcvt.s32.f32 %v11378
      %v11387 = vmul.f32 %v11323, %v11379
      %v11388 = vmul.f32 %v11324, %v11379
      %v11389 = vmul.f32 %v11325, %v11380
      %v11390 = vmul.f32 %v11326, %v11380
      %v11391 = vmul.f32 %v11327, %v11381
      %v11392 = vmul.f32 %v11328, %v11381
      %v11393 = vmul.f32 %v11329, %v11382
      %v11394 = vmul.f32 %v11330, %v11382
      %v11395 = vmul.f32 %v11331, %v11383
      %v11396 = vmul.f32 %v11332, %v11383
      %v11397 = vmul.f32 %v11333, %v11384
      %v11398 = vmul.f32 %v11334, %v11384
      %v11399 = vmul.f32 %v11335, %v11385
      %v11400 = vmul.f32 %v11336, %v11385
      %v11401 = vmul.f32 %v11337, %v11386
      %v11402 = vmul.f32 %v11338, %v11386
      %v11403 = vpack.c.bf16 %v11388, %v11387
      %v11404 = vpack.c.bf16 %v11390, %v11389
      %v11405 = vpack.c.bf16 %v11392, %v11391
      %v11406 = vpack.c.bf16 %v11394, %v11393
      %v11407 = vpack.c.bf16 %v11396, %v11395
      %v11408 = vpack.c.bf16 %v11398, %v11397
      %v11409 = vpack.c.bf16 %v11400, %v11399
      %v11410 = vpack.c.bf16 %v11402, %v11401
      %v11419 = vunpack.c.l.b16 %v11403
      %v11420 = vunpack.c.h.b16 %v11403
      %v11421 = vunpack.c.l.b16 %v11404
      %v11422 = vunpack.c.h.b16 %v11404
      %v11423 = vunpack.c.l.b16 %v11405
      %v11424 = vunpack.c.h.b16 %v11405
      %v11425 = vunpack.c.l.b16 %v11406
      %v11426 = vunpack.c.h.b16 %v11406
      %v11427 = vunpack.c.l.b16 %v11407
      %v11428 = vunpack.c.h.b16 %v11407
      %v11429 = vunpack.c.l.b16 %v11408
      %v11430 = vunpack.c.h.b16 %v11408
      %v11431 = vunpack.c.l.b16 %v11409
      %v11432 = vunpack.c.h.b16 %v11409
      %v11433 = vunpack.c.l.b16 %v11410
      %v11434 = vunpack.c.h.b16 %v11410
      %v11435 = vpack.c.b16 %v11419, %v11419
      %v11436 = vpack.c.b16 %v11420, %v11420
      %v11437 = vpack.c.b16 %v11421, %v11421
      %v11438 = vpack.c.b16 %v11422, %v11422
      %v11439 = vpack.c.b16 %v11423, %v11423
      %v11440 = vpack.c.b16 %v11424, %v11424
      %v11441 = vpack.c.b16 %v11425, %v11425
      %v11442 = vpack.c.b16 %v11426, %v11426
      %v11443 = vpack.c.b16 %v11427, %v11427
      %v11444 = vpack.c.b16 %v11428, %v11428
      %v11445 = vpack.c.b16 %v11429, %v11429
      %v11446 = vpack.c.b16 %v11430, %v11430
      %v11447 = vpack.c.b16 %v11431, %v11431
      %v11448 = vpack.c.b16 %v11432, %v11432
      %v11449 = vpack.c.b16 %v11433, %v11433
      %v11450 = vpack.c.b16 %v11434, %v11434
      %v11452 = vshrl.u32 %v11435, 16
      %v11454 = vrot.slane %v11452, 7
      %v11455 = vshll.u32 %v11435, 16
      %v11457 = vor.u32 %v11454, %v11455
      %v11458 = vrot.slane %v11454, 4
      %v11460 = vshrl.u32 %v11436, 16
      %v11462 = vrot.slane %v11460, 7
      %v11463 = vshll.u32 %v11436, 16
      %v11465 = vor.u32 %v11462, %v11463
      %v11466 = vsel %vm720, %v11458, %v11465
      %v11467 = vrot.slane %v11462, 4
      %v11469 = vshrl.u32 %v11437, 16
      %v11471 = vrot.slane %v11469, 7
      %v11472 = vshll.u32 %v11437, 16
      %v11474 = vor.u32 %v11471, %v11472
      %v11475 = vrot.slane %v11471, 4
      %v11477 = vshrl.u32 %v11438, 16
      %v11479 = vrot.slane %v11477, 7
      %v11480 = vshll.u32 %v11438, 16
      %v11482 = vor.u32 %v11479, %v11480
      %v11483 = vsel %vm720, %v11475, %v11482
      %v11484 = vrot.slane %v11479, 4
      %v11486 = vshrl.u32 %v11439, 16
      %v11488 = vrot.slane %v11486, 7
      %v11489 = vshll.u32 %v11439, 16
      %v11491 = vor.u32 %v11488, %v11489
      %v11492 = vrot.slane %v11488, 4
      %v11494 = vshrl.u32 %v11440, 16
      %v11496 = vrot.slane %v11494, 7
      %v11497 = vshll.u32 %v11440, 16
      %v11499 = vor.u32 %v11496, %v11497
      %v11500 = vsel %vm720, %v11492, %v11499
      %v11501 = vrot.slane %v11496, 4
      %v11503 = vshrl.u32 %v11441, 16
      %v11505 = vrot.slane %v11503, 7
      %v11506 = vshll.u32 %v11441, 16
      %v11508 = vor.u32 %v11505, %v11506
      %v11509 = vrot.slane %v11505, 4
      %v11511 = vshrl.u32 %v11442, 16
      %v11513 = vrot.slane %v11511, 7
      %v11514 = vshll.u32 %v11442, 16
      %v11516 = vor.u32 %v11513, %v11514
      %v11517 = vsel %vm720, %v11509, %v11516
      %v11518 = vrot.slane %v11513, 4
      %v11520 = vshrl.u32 %v11443, 16
      %v11522 = vrot.slane %v11520, 7
      %v11523 = vshll.u32 %v11443, 16
      %v11525 = vor.u32 %v11522, %v11523
      %v11526 = vrot.slane %v11522, 4
      %v11528 = vshrl.u32 %v11444, 16
      %v11530 = vrot.slane %v11528, 7
      %v11531 = vshll.u32 %v11444, 16
      %v11533 = vor.u32 %v11530, %v11531
      %v11534 = vsel %vm720, %v11526, %v11533
      %v11535 = vrot.slane %v11530, 4
      %v11537 = vshrl.u32 %v11445, 16
      %v11539 = vrot.slane %v11537, 7
      %v11540 = vshll.u32 %v11445, 16
      %v11542 = vor.u32 %v11539, %v11540
      %v11543 = vrot.slane %v11539, 4
      %v11545 = vshrl.u32 %v11446, 16
      %v11547 = vrot.slane %v11545, 7
      %v11548 = vshll.u32 %v11446, 16
      %v11550 = vor.u32 %v11547, %v11548
      %v11551 = vsel %vm720, %v11543, %v11550
      %v11552 = vrot.slane %v11547, 4
      %v11554 = vshrl.u32 %v11447, 16
      %v11556 = vrot.slane %v11554, 7
      %v11557 = vshll.u32 %v11447, 16
      %v11559 = vor.u32 %v11556, %v11557
      %v11560 = vrot.slane %v11556, 4
      %v11562 = vshrl.u32 %v11448, 16
      %v11564 = vrot.slane %v11562, 7
      %v11565 = vshll.u32 %v11448, 16
      %v11567 = vor.u32 %v11564, %v11565
      %v11568 = vsel %vm720, %v11560, %v11567
      %v11569 = vrot.slane %v11564, 4
      %v11571 = vshrl.u32 %v11449, 16
      %v11573 = vrot.slane %v11571, 7
      %v11574 = vshll.u32 %v11449, 16
      %v11576 = vor.u32 %v11573, %v11574
      %v11577 = vrot.slane %v11573, 4
      %v11579 = vshrl.u32 %v11450, 16
      %v11581 = vrot.slane %v11579, 7
      %v11582 = vshll.u32 %v11450, 16
      %v11584 = vor.u32 %v11581, %v11582
      %v11585 = vsel %vm720, %v11577, %v11584
      %v11586 = vrot.slane %v11581, 4
      %11587 = vrot.lane.b32.xlu0 %v11457, 12
      %v11588 = vpop.permute.xlu0 %11587
      %11589 = vrot.lane.b32.xlu0 %v11466, 12
      %v11590 = vpop.permute.xlu0 %11589
      %11591 = vrot.lane.b32.xlu0 %v11467, 12
      %v11592 = vpop.permute.xlu0 %11591
      %11593 = vrot.lane.b32.xlu0 %v11474, 12
      %v11594 = vpop.permute.xlu0 %11593
      %11595 = vrot.lane.b32.xlu0 %v11483, 12
      %v11596 = vpop.permute.xlu0 %11595
      %11597 = vrot.lane.b32.xlu0 %v11484, 12
      %v11598 = vpop.permute.xlu0 %11597
      %11599 = vrot.lane.b32.xlu0 %v11491, 12
      %v11600 = vpop.permute.xlu0 %11599
      %11601 = vrot.lane.b32.xlu0 %v11500, 12
      %v11602 = vpop.permute.xlu0 %11601
      %11603 = vrot.lane.b32.xlu0 %v11501, 12
      %v11604 = vpop.permute.xlu0 %11603
      %11605 = vrot.lane.b32.xlu0 %v11508, 12
      %v11606 = vpop.permute.xlu0 %11605
      %11607 = vrot.lane.b32.xlu0 %v11517, 12
      %v11608 = vpop.permute.xlu0 %11607
      %11609 = vrot.lane.b32.xlu0 %v11518, 12
      %v11610 = vpop.permute.xlu0 %11609
      %11611 = vrot.lane.b32.xlu0 %v11525, 12
      %v11612 = vpop.permute.xlu0 %11611
      %11613 = vrot.lane.b32.xlu0 %v11534, 12
      %v11614 = vpop.permute.xlu0 %11613
      %11615 = vrot.lane.b32.xlu0 %v11535, 12
      %v11616 = vpop.permute.xlu0 %11615
      %11617 = vrot.lane.b32.xlu0 %v11542, 12
      %v11618 = vpop.permute.xlu0 %11617
      %11619 = vrot.lane.b32.xlu0 %v11551, 12
      %v11620 = vpop.permute.xlu0 %11619
      %11621 = vrot.lane.b32.xlu0 %v11552, 12
      %v11622 = vpop.permute.xlu0 %11621
      %11623 = vrot.lane.b32.xlu0 %v11559, 12
      %v11624 = vpop.permute.xlu0 %11623
      %11625 = vrot.lane.b32.xlu0 %v11568, 12
      %v11626 = vpop.permute.xlu0 %11625
      %11627 = vrot.lane.b32.xlu0 %v11569, 12
      %v11628 = vpop.permute.xlu0 %11627
      %11629 = vrot.lane.b32.xlu0 %v11576, 12
      %v11630 = vpop.permute.xlu0 %11629
      %11631 = vrot.lane.b32.xlu0 %v11585, 12
      %v11632 = vpop.permute.xlu0 %11631
      %11633 = vrot.lane.b32.xlu0 %v11586, 12
      %v11634 = vpop.permute.xlu0 %11633
      %vm11659 = vcmask 126048
      %vm11660 = vmand %vm11659, %vm611
      %v11661 = vsel %vm11660, %v11588, %v9802
      %11662 = vst [vmem:[%s881] sm:$0xf] %v11661
      %vm11663 = vcmask 126048
      %11664 = vst.msk [vmem:[%s881 + $0x4] sm:$0xf] %vm11663, %v11590
      %vm11665 = vcmask 122976
      %vm11666 = vmand %vm11665, %vm567
      %v11667 = vld [vmem:[%s881 + $0x8] sm:$0x1]
      %v11668 = vsel %vm11666, %v11592, %v11667
      %11669 = vst [vmem:[%s881 + $0x8] sm:$0x1] %v11668
      %v11670 = vld [vmem:[%s881 + $0xc] sm:$0xf]
      %v11671 = vsel %vm11660, %v11594, %v11670
      %11672 = vst [vmem:[%s881 + $0xc] sm:$0xf] %v11671
      %11673 = vst.msk [vmem:[%s881 + $0x10] sm:$0xf] %vm11663, %v11596
      %v11674 = vld [vmem:[%s881 + $0x14] sm:$0x1]
      %v11675 = vsel %vm11666, %v11598, %v11674
      %11676 = vst [vmem:[%s881 + $0x14] sm:$0x1] %v11675
      %v11677 = vld [vmem:[%s881 + $0x18] sm:$0xf]
      %v11678 = vsel %vm11660, %v11600, %v11677
      %11679 = vst [vmem:[%s881 + $0x18] sm:$0xf] %v11678
      %11680 = vst.msk [vmem:[%s881 + $0x1c] sm:$0xf] %vm11663, %v11602
      %v11681 = vld [vmem:[%s881 + $0x20] sm:$0x1]
      %v11682 = vsel %vm11666, %v11604, %v11681
      %11683 = vst [vmem:[%s881 + $0x20] sm:$0x1] %v11682
      %v11684 = vld [vmem:[%s881 + $0x24] sm:$0xf]
      %v11685 = vsel %vm11660, %v11606, %v11684
      %11686 = vst [vmem:[%s881 + $0x24] sm:$0xf] %v11685
      %11687 = vst.msk [vmem:[%s881 + $0x28] sm:$0xf] %vm11663, %v11608
      %v11688 = vld [vmem:[%s881 + $0x2c] sm:$0x1]
      %v11689 = vsel %vm11666, %v11610, %v11688
      %11690 = vst [vmem:[%s881 + $0x2c] sm:$0x1] %v11689
      %v11691 = vld [vmem:[%s881 + $0x30] sm:$0xf]
      %v11692 = vsel %vm11660, %v11612, %v11691
      %11693 = vst [vmem:[%s881 + $0x30] sm:$0xf] %v11692
      %11694 = vst.msk [vmem:[%s881 + $0x34] sm:$0xf] %vm11663, %v11614
      %v11695 = vld [vmem:[%s881 + $0x38] sm:$0x1]
      %v11696 = vsel %vm11666, %v11616, %v11695
      %11697 = vst [vmem:[%s881 + $0x38] sm:$0x1] %v11696
      %v11698 = vld [vmem:[%s881 + $0x3c] sm:$0xf]
      %v11699 = vsel %vm11660, %v11618, %v11698
      %11700 = vst [vmem:[%s881 + $0x3c] sm:$0xf] %v11699
      %11701 = vst.msk [vmem:[%s881 + $0x40] sm:$0xf] %vm11663, %v11620
      %v11702 = vld [vmem:[%s881 + $0x44] sm:$0x1]
      %v11703 = vsel %vm11666, %v11622, %v11702
      %11704 = vst [vmem:[%s881 + $0x44] sm:$0x1] %v11703
      %v11705 = vld [vmem:[%s881 + $0x48] sm:$0xf]
      %v11706 = vsel %vm11660, %v11624, %v11705
      %11707 = vst [vmem:[%s881 + $0x48] sm:$0xf] %v11706
      %11708 = vst.msk [vmem:[%s881 + $0x4c] sm:$0xf] %vm11663, %v11626
      %v11709 = vld [vmem:[%s881 + $0x50] sm:$0x1]
      %v11710 = vsel %vm11666, %v11628, %v11709
      %11711 = vst [vmem:[%s881 + $0x50] sm:$0x1] %v11710
      %v11712 = vld [vmem:[%s881 + $0x54] sm:$0xf]
      %v11713 = vsel %vm11660, %v11630, %v11712
      %11714 = vst [vmem:[%s881 + $0x54] sm:$0xf] %v11713
      %11715 = vst.msk [vmem:[%s881 + $0x58] sm:$0xf] %vm11663, %v11632
      %v11716 = vld [vmem:[%s881 + $0x5c] sm:$0x1]
      %v11717 = vsel %vm11666, %v11634, %v11716
      %11718 = vst [vmem:[%s881 + $0x5c] sm:$0x1] %v11717
      %v11719 = vld [vmem:[%s881] sm:$0xf]
      %v11720 = vld [vmem:[%s881 + $0x4] sm:$0xf]
      %v11721 = vld [vmem:[%s881 + $0x8] sm:$0x1]
      %v11722 = vld [vmem:[%s881 + $0xc] sm:$0xf]
      %v11723 = vld [vmem:[%s881 + $0x10] sm:$0xf]
      %v11724 = vld [vmem:[%s881 + $0x14] sm:$0x1]
      %v11725 = vld [vmem:[%s881 + $0x18] sm:$0xf]
      %v11726 = vld [vmem:[%s881 + $0x1c] sm:$0xf]
      %v11727 = vld [vmem:[%s881 + $0x20] sm:$0x1]
      %v11728 = vld [vmem:[%s881 + $0x24] sm:$0xf]
      %v11729 = vld [vmem:[%s881 + $0x28] sm:$0xf]
      %v11730 = vld [vmem:[%s881 + $0x2c] sm:$0x1]
      %v11731 = vld [vmem:[%s881 + $0x30] sm:$0xf]
      %v11732 = vld [vmem:[%s881 + $0x34] sm:$0xf]
      %v11733 = vld [vmem:[%s881 + $0x38] sm:$0x1]
      %v11734 = vld [vmem:[%s881 + $0x3c] sm:$0xf]
      %v11735 = vld [vmem:[%s881 + $0x40] sm:$0xf]
      %v11736 = vld [vmem:[%s881 + $0x44] sm:$0x1]
      %v11737 = vld [vmem:[%s881 + $0x48] sm:$0xf]
      %v11738 = vld [vmem:[%s881 + $0x4c] sm:$0xf]
      %v11739 = vld [vmem:[%s881 + $0x50] sm:$0x1]
      %v11740 = vld [vmem:[%s881 + $0x54] sm:$0xf]
      %v11741 = vld [vmem:[%s881 + $0x58] sm:$0xf]
      %v11742 = vld [vmem:[%s881 + $0x5c] sm:$0x1]
      %v11743 = vld [vmem:[%s9] sm:$0xf]
      %v11744 = vld [vmem:[%s9 + $0x4] sm:$0xf]
      %v11745 = vld [vmem:[%s10] sm:$0x1]
      %v11747 = vlaneseq
      %v11748 = vshrl.u32 %v11747, 7
      %v11749 = vsub.s32 0, %v11748
      %v11750 = vrot.slane %v11745, %v11749
      %v11753 = vshrl.u32 %v11719, 16
      %v11755 = vrot.slane %v11753, 4
      %v11756 = vshll.u32 %v11719, 16
      %v11758 = vrot.slane %v11756, 5
      %v11759 = vor.u32 %v11755, %v11758
      %v11760 = vrot.slane %v11759, 4
      %v11762 = vshll.u32 %v11720, 16
      %v11764 = vrot.slane %v11762, 5
      %v11765 = vsel %vm1215, %v11760, %v11764
      %v11766 = vshrl.u32 %v11720, 16
      %v11768 = vrot.slane %v11766, 4
      %v11769 = vor.u32 %v11768, %v11764
      %v11770 = vrot.slane %v11769, 4
      %v11772 = vshll.u32 %v11721, 16
      %v11774 = vrot.slane %v11772, 5
      %v11775 = vsel %vm1215, %v11770, %v11774
      %v11777 = vshrl.u32 %v11722, 16
      %v11779 = vrot.slane %v11777, 4
      %v11780 = vshll.u32 %v11722, 16
      %v11782 = vrot.slane %v11780, 5
      %v11783 = vor.u32 %v11779, %v11782
      %v11784 = vrot.slane %v11783, 4
      %v11786 = vshll.u32 %v11723, 16
      %v11788 = vrot.slane %v11786, 5
      %v11789 = vsel %vm1215, %v11784, %v11788
      %v11790 = vshrl.u32 %v11723, 16
      %v11792 = vrot.slane %v11790, 4
      %v11793 = vor.u32 %v11792, %v11788
      %v11794 = vrot.slane %v11793, 4
      %v11796 = vshll.u32 %v11724, 16
      %v11798 = vrot.slane %v11796, 5
      %v11799 = vsel %vm1215, %v11794, %v11798
      %v11801 = vshrl.u32 %v11725, 16
      %v11803 = vrot.slane %v11801, 4
      %v11804 = vshll.u32 %v11725, 16
      %v11806 = vrot.slane %v11804, 5
      %v11807 = vor.u32 %v11803, %v11806
      %v11808 = vrot.slane %v11807, 4
      %v11810 = vshll.u32 %v11726, 16
      %v11812 = vrot.slane %v11810, 5
      %v11813 = vsel %vm1215, %v11808, %v11812
      %v11814 = vshrl.u32 %v11726, 16
      %v11816 = vrot.slane %v11814, 4
      %v11817 = vor.u32 %v11816, %v11812
      %v11818 = vrot.slane %v11817, 4
      %v11820 = vshll.u32 %v11727, 16
      %v11822 = vrot.slane %v11820, 5
      %v11823 = vsel %vm1215, %v11818, %v11822
      %v11825 = vshrl.u32 %v11728, 16
      %v11827 = vrot.slane %v11825, 4
      %v11828 = vshll.u32 %v11728, 16
      %v11830 = vrot.slane %v11828, 5
      %v11831 = vor.u32 %v11827, %v11830
      %v11832 = vrot.slane %v11831, 4
      %v11834 = vshll.u32 %v11729, 16
      %v11836 = vrot.slane %v11834, 5
      %v11837 = vsel %vm1215, %v11832, %v11836
      %v11838 = vshrl.u32 %v11729, 16
      %v11840 = vrot.slane %v11838, 4
      %v11841 = vor.u32 %v11840, %v11836
      %v11842 = vrot.slane %v11841, 4
      %v11844 = vshll.u32 %v11730, 16
      %v11846 = vrot.slane %v11844, 5
      %v11847 = vsel %vm1215, %v11842, %v11846
      %v11849 = vshrl.u32 %v11731, 16
      %v11851 = vrot.slane %v11849, 4
      %v11852 = vshll.u32 %v11731, 16
      %v11854 = vrot.slane %v11852, 5
      %v11855 = vor.u32 %v11851, %v11854
      %v11856 = vrot.slane %v11855, 4
      %v11858 = vshll.u32 %v11732, 16
      %v11860 = vrot.slane %v11858, 5
      %v11861 = vsel %vm1215, %v11856, %v11860
      %v11862 = vshrl.u32 %v11732, 16
      %v11864 = vrot.slane %v11862, 4
      %v11865 = vor.u32 %v11864, %v11860
      %v11866 = vrot.slane %v11865, 4
      %v11868 = vshll.u32 %v11733, 16
      %v11870 = vrot.slane %v11868, 5
      %v11871 = vsel %vm1215, %v11866, %v11870
      %v11873 = vshrl.u32 %v11734, 16
      %v11875 = vrot.slane %v11873, 4
      %v11876 = vshll.u32 %v11734, 16
      %v11878 = vrot.slane %v11876, 5
      %v11879 = vor.u32 %v11875, %v11878
      %v11880 = vrot.slane %v11879, 4
      %v11882 = vshll.u32 %v11735, 16
      %v11884 = vrot.slane %v11882, 5
      %v11885 = vsel %vm1215, %v11880, %v11884
      %v11886 = vshrl.u32 %v11735, 16
      %v11888 = vrot.slane %v11886, 4
      %v11889 = vor.u32 %v11888, %v11884
      %v11890 = vrot.slane %v11889, 4
      %v11892 = vshll.u32 %v11736, 16
      %v11894 = vrot.slane %v11892, 5
      %v11895 = vsel %vm1215, %v11890, %v11894
      %v11897 = vshrl.u32 %v11737, 16
      %v11899 = vrot.slane %v11897, 4
      %v11900 = vshll.u32 %v11737, 16
      %v11902 = vrot.slane %v11900, 5
      %v11903 = vor.u32 %v11899, %v11902
      %v11904 = vrot.slane %v11903, 4
      %v11906 = vshll.u32 %v11738, 16
      %v11908 = vrot.slane %v11906, 5
      %v11909 = vsel %vm1215, %v11904, %v11908
      %v11910 = vshrl.u32 %v11738, 16
      %v11912 = vrot.slane %v11910, 4
      %v11913 = vor.u32 %v11912, %v11908
      %v11914 = vrot.slane %v11913, 4
      %v11916 = vshll.u32 %v11739, 16
      %v11918 = vrot.slane %v11916, 5
      %v11919 = vsel %vm1215, %v11914, %v11918
      %v11921 = vshrl.u32 %v11740, 16
      %v11923 = vrot.slane %v11921, 4
      %v11924 = vshll.u32 %v11740, 16
      %v11926 = vrot.slane %v11924, 5
      %v11927 = vor.u32 %v11923, %v11926
      %v11928 = vrot.slane %v11927, 4
      %v11930 = vshll.u32 %v11741, 16
      %v11932 = vrot.slane %v11930, 5
      %v11933 = vsel %vm1215, %v11928, %v11932
      %v11934 = vshrl.u32 %v11741, 16
      %v11936 = vrot.slane %v11934, 4
      %v11937 = vor.u32 %v11936, %v11932
      %v11938 = vrot.slane %v11937, 4
      %v11940 = vshll.u32 %v11742, 16
      %v11942 = vrot.slane %v11940, 5
      %v11943 = vsel %vm1215, %v11938, %v11942
      %v11944 = vunpack.c.l.b16 %v11765
      %v11945 = vunpack.c.l.b16 %v11775
      %v11946 = vunpack.c.l.b16 %v11789
      %v11947 = vunpack.c.l.b16 %v11799
      %v11948 = vunpack.c.l.b16 %v11813
      %v11949 = vunpack.c.l.b16 %v11823
      %v11950 = vunpack.c.l.b16 %v11837
      %v11951 = vunpack.c.l.b16 %v11847
      %v11952 = vunpack.c.l.b16 %v11861
      %v11953 = vunpack.c.l.b16 %v11871
      %v11954 = vunpack.c.l.b16 %v11885
      %v11955 = vunpack.c.l.b16 %v11895
      %v11956 = vunpack.c.l.b16 %v11909
      %v11957 = vunpack.c.l.b16 %v11919
      %v11958 = vunpack.c.l.b16 %v11933
      %v11959 = vunpack.c.l.b16 %v11943
      %v11960 = vpack.c.b16 %v11945, %v11944
      %v11961 = vpack.c.b16 %v11947, %v11946
      %v11962 = vpack.c.b16 %v11949, %v11948
      %v11963 = vpack.c.b16 %v11951, %v11950
      %v11964 = vpack.c.b16 %v11953, %v11952
      %v11965 = vpack.c.b16 %v11955, %v11954
      %v11966 = vpack.c.b16 %v11957, %v11956
      %v11967 = vpack.c.b16 %v11959, %v11958
      %v11970 = vunpack.c.l.b16 %v11743
      %v11971 = vunpack.c.l.b16 %v11744
      %v11972 = vpack.c.b16 %v11971, %v11970
      %vm11974 = vcmask 130048
      %v11976 = vsel %vm11974, %v11960, 0
      %v11979 = vsel %vm11974, %v11961, 0
      %v11982 = vsel %vm11974, %v11962, 0
      %v11985 = vsel %vm11974, %v11963, 0
      %v11988 = vsel %vm11974, %v11964, 0
      %v11991 = vsel %vm11974, %v11965, 0
      %v11994 = vsel %vm11974, %v11966, 0
      %v11997 = vsel %vm11974, %v11967, 0
      %11999 = vmatprep.subr.bf16.mxu0 0
      %12000 = vmatpush1.bf16.msra.mxu0 %v11972
      %12001 = vmatprep.subr.bf16.mxu0 0
      %12002 = vmatpush1.bf16.msra.mxu0 0
      %12003 = vmatprep.subr.bf16.mxu0 0
      %12004 = vmatpush1.bf16.msra.mxu0 0
      %12005 = vmatprep.subr.bf16.mxu0 0
      %12006 = vmatpush1.bf16.msra.mxu0 0
      %12007 = vmatprep.subr.bf16.mxu0 0
      %12008 = vmatpush1.bf16.msra.mxu0 0
      %12009 = vmatprep.subr.bf16.mxu0 0
      %12010 = vmatpush1.bf16.msra.mxu0 0
      %12011 = vmatprep.subr.bf16.mxu0 0
      %12012 = vmatpush1.bf16.msra.mxu0 0
      %12013 = vmatprep.subr.bf16.mxu0 0
      %12014 = vmatpush1.bf16.msra.mxu0 0
      %12015 = vmatprep.subr.bf16.mxu0 0
      %12016 = vmatpush1.bf16.msra.mxu0 0
      %12017 = vmatprep.subr.bf16.mxu0 0
      %12018 = vmatpush1.bf16.msra.mxu0 0
      %12019 = vmatprep.subr.bf16.mxu0 0
      %12020 = vmatpush1.bf16.msra.mxu0 0
      %12021 = vmatprep.subr.bf16.mxu0 0
      %12022 = vmatpush1.bf16.msra.mxu0 0
      %12023 = vmatprep.subr.bf16.mxu0 0
      %12024 = vmatpush1.bf16.msra.mxu0 0
      %12025 = vmatprep.subr.bf16.mxu0 0
      %12026 = vmatpush1.bf16.msra.mxu0 0
      %12027 = vmatprep.subr.bf16.mxu0 0
      %12028 = vmatpush1.bf16.msra.mxu0 0
      %12029 = vmatprep.subr.bf16.mxu0 0
      %12030 = vmatpush1.bf16.msra.mxu0 0
      %12031 = vmatprep.mubr.bf16.mxu0 0
      %12032 = vmatmul.mubr.bf16.gmra.mrb[0].mxu0 %v11976
      %v12033 = vpop.f32.mrb[0].mxu0
      %v12034 = vadd.f32 %v11750, %v12033
      %v12035 = vpop.f32.mrb[0].mxu0
      %v12036 = vpop.f32.mrb[0].mxu0
      %v12037 = vadd.f32 %v11750, %v12036
      %v12038 = vpop.f32.mrb[0].mxu0
      %12039 = vmatprep.mubr.bf16.mxu0 0
      %12040 = vmatmul.mubr.bf16.gmra.mrb[0].mxu0 %v11979
      %v12041 = vpop.f32.mrb[0].mxu0
      %v12042 = vadd.f32 %v11750, %v12041
      %v12043 = vpop.f32.mrb[0].mxu0
      %v12044 = vpop.f32.mrb[0].mxu0
      %v12045 = vadd.f32 %v11750, %v12044
      %v12046 = vpop.f32.mrb[0].mxu0
      %12047 = vmatprep.mubr.bf16.mxu0 0
      %12048 = vmatmul.mubr.bf16.gmra.mrb[0].mxu0 %v11982
      %v12049 = vpop.f32.mrb[0].mxu0
      %v12050 = vadd.f32 %v11750, %v12049
      %v12051 = vpop.f32.mrb[0].mxu0
      %v12052 = vpop.f32.mrb[0].mxu0
      %v12053 = vadd.f32 %v11750, %v12052
      %v12054 = vpop.f32.mrb[0].mxu0
      %12055 = vmatprep.mubr.bf16.mxu0 0
      %12056 = vmatmul.mubr.bf16.gmra.mrb[0].mxu0 %v11985
      %v12057 = vpop.f32.mrb[0].mxu0
      %v12058 = vadd.f32 %v11750, %v12057
      %v12059 = vpop.f32.mrb[0].mxu0
      %v12060 = vpop.f32.mrb[0].mxu0
      %v12061 = vadd.f32 %v11750, %v12060
      %v12062 = vpop.f32.mrb[0].mxu0
      %12063 = vmatprep.mubr.bf16.mxu0 0
      %12064 = vmatmul.mubr.bf16.gmra.mrb[0].mxu0 %v11988
      %v12065 = vpop.f32.mrb[0].mxu0
      %v12066 = vadd.f32 %v11750, %v12065
      %v12067 = vpop.f32.mrb[0].mxu0
      %v12068 = vpop.f32.mrb[0].mxu0
      %v12069 = vadd.f32 %v11750, %v12068
      %v12070 = vpop.f32.mrb[0].mxu0
      %12071 = vmatprep.mubr.bf16.mxu0 0
      %12072 = vmatmul.mubr.bf16.gmra.mrb[0].mxu0 %v11991
      %v12073 = vpop.f32.mrb[0].mxu0
      %v12074 = vadd.f32 %v11750, %v12073
      %v12075 = vpop.f32.mrb[0].mxu0
      %v12076 = vpop.f32.mrb[0].mxu0
      %v12077 = vadd.f32 %v11750, %v12076
      %v12078 = vpop.f32.mrb[0].mxu0
      %12079 = vmatprep.mubr.bf16.mxu0 0
      %12080 = vmatmul.mubr.bf16.gmra.mrb[0].mxu0 %v11994
      %v12081 = vpop.f32.mrb[0].mxu0
      %v12082 = vadd.f32 %v11750, %v12081
      %v12083 = vpop.f32.mrb[0].mxu0
      %v12084 = vpop.f32.mrb[0].mxu0
      %v12085 = vadd.f32 %v11750, %v12084
      %v12086 = vpop.f32.mrb[0].mxu0
      %12087 = vmatprep.mubr.bf16.mxu0 0
      %12088 = vmatmul.mubr.bf16.gmra.mrb[0].mxu0 %v11997
      %v12089 = vpop.f32.mrb[0].mxu0
      %v12090 = vadd.f32 %v11750, %v12089
      %v12091 = vpop.f32.mrb[0].mxu0
      %v12092 = vpop.f32.mrb[0].mxu0
      %v12093 = vadd.f32 %v11750, %v12092
      %v12094 = vpop.f32.mrb[0].mxu0
      %12095 = vdwg.mxu0
      %v12096 = vld [vmem:[%s533] sm:$0xff]
      %v12097 = vld [vmem:[%s533 + $0x8] sm:$0xff]
      %v12098 = vld [vmem:[%s533 + $0x10] sm:$0xff]
      %v12099 = vld [vmem:[%s533 + $0x18] sm:$0xff]
      %v12100 = vld [vmem:[%s533 + $0x20] sm:$0xff]
      %v12101 = vld [vmem:[%s533 + $0x28] sm:$0xff]
      %v12102 = vld [vmem:[%s533 + $0x30] sm:$0xff]
      %v12103 = vld [vmem:[%s533 + $0x38] sm:$0xff]
      %v12104 = vld [vmem:[%s533 + $0x40] sm:$0xff]
      %v12105 = vld [vmem:[%s533 + $0x48] sm:$0xff]
      %v12106 = vld [vmem:[%s533 + $0x50] sm:$0xff]
      %v12107 = vld [vmem:[%s533 + $0x58] sm:$0xff]
      %v12108 = vld [vmem:[%s533 + $0x60] sm:$0xff]
      %v12109 = vld [vmem:[%s533 + $0x68] sm:$0xff]
      %v12110 = vld [vmem:[%s533 + $0x70] sm:$0xff]
      %v12111 = vld [vmem:[%s533 + $0x78] sm:$0xff]
      %v12112 = vadd.f32 %v12034, %v12096
      %v12113 = vadd.f32 %v12037, %v12097
      %v12114 = vadd.f32 %v12042, %v12098
      %v12115 = vadd.f32 %v12045, %v12099
      %v12116 = vadd.f32 %v12050, %v12100
      %v12117 = vadd.f32 %v12053, %v12101
      %v12118 = vadd.f32 %v12058, %v12102
      %v12119 = vadd.f32 %v12061, %v12103
      %v12120 = vadd.f32 %v12066, %v12104
      %v12121 = vadd.f32 %v12069, %v12105
      %v12122 = vadd.f32 %v12074, %v12106
      %v12123 = vadd.f32 %v12077, %v12107
      %v12124 = vadd.f32 %v12082, %v12108
      %v12125 = vadd.f32 %v12085, %v12109
      %v12126 = vadd.f32 %v12090, %v12110
      %v12127 = vadd.f32 %v12093, %v12111
      %12128 = vst.msk [vmem:[%s563] sm:$0xff] %vm1544, %v12112
      %12129 = vst.msk [vmem:[%s563 + $0x8] sm:$0xff] %vm1544, %v12113
      %12130 = vst.msk [vmem:[%s563 + $0x10] sm:$0xff] %vm1544, %v12114
      %12131 = vst.msk [vmem:[%s563 + $0x18] sm:$0xff] %vm1544, %v12115
      %12132 = vst.msk [vmem:[%s563 + $0x20] sm:$0xff] %vm1544, %v12116
      %12133 = vst.msk [vmem:[%s563 + $0x28] sm:$0xff] %vm1544, %v12117
      %12134 = vst.msk [vmem:[%s563 + $0x30] sm:$0xff] %vm1544, %v12118
      %12135 = vst.msk [vmem:[%s563 + $0x38] sm:$0xff] %vm1544, %v12119
      %12136 = vst.msk [vmem:[%s563 + $0x40] sm:$0xff] %vm1544, %v12120
      %12137 = vst.msk [vmem:[%s563 + $0x48] sm:$0xff] %vm1544, %v12121
      %12138 = vst.msk [vmem:[%s563 + $0x50] sm:$0xff] %vm1544, %v12122
      %12139 = vst.msk [vmem:[%s563 + $0x58] sm:$0xff] %vm1544, %v12123
      %12140 = vst.msk [vmem:[%s563 + $0x60] sm:$0xff] %vm1544, %v12124
      %12141 = vst.msk [vmem:[%s563 + $0x68] sm:$0xff] %vm1544, %v12125
      %12142 = vst.msk [vmem:[%s563 + $0x70] sm:$0xff] %vm1544, %v12126
      %12143 = vst.msk [vmem:[%s563 + $0x78] sm:$0xff] %vm1544, %v12127
      %s12144 = smul.u32 8, %s27
      %p12145 = scmp.lt.s32.totalorder %s26, 1
      %s12146 = scalar_select %p12145, %s26, 1
      %p12147 = scmp.lt.s32.totalorder %s12144, 15
      %s12148 = scalar_select %p12147, %s12144, 15
      %s12149 = smul.addr %s12148, 2
      %s12150 = smul.addr %s12146, 32
      %s12151 = sadd.s32 %s12149, %s12150
      %s12152 = smul.addr %s12151, 8
      %s12153 = scalar_lea.vmem %s11, %s12152
      // Predicated region
      $region65: #{denoise_rdb_forward_nchw.1} parent=63 // pred_check
        %p12154 = pneg %p322
      $region66: #{denoise_rdb_forward_nchw.1} parent=63 // pred_check_branch
        %12156 = sbr.rel (%p12154) target = $region68
      $region67: #{denoise_rdb_forward_nchw.1} parent=63 // pred_region
        %s12157 = smul.u32 8, %s27
      $region68: #{denoise_rdb_forward_nchw.1} parent=63 // pred_fallthru
        _
    $region64: #{denoise_rdb_forward_nchw.1} parent=5 // pred_fallthru
      _
    %p12158 = scmp.le.s32.totalorder 2, %s17
    // Predicated region
    $region69: #{denoise_rdb_forward_nchw.1} parent=5 // pred_check
      %p12159 = pneg %p12158
    $region70: #{denoise_rdb_forward_nchw.1} parent=5 // pred_check_branch
      %12161 = sbr.rel (%p12159) target = $region72
    $region71: #{denoise_rdb_forward_nchw.1} parent=5 // pred_region
      %s12162 = ssub.s32 %s17, 2
      // Predicated region
      $region73: #{denoise_rdb_forward_nchw.1} parent=71 // pred_check
        %p12163 = pneg %p328
      $region74: #{denoise_rdb_forward_nchw.1} parent=71 // pred_check_branch
        %12165 = sbr.rel (%p12163) target = $region76
      $region75: #{denoise_rdb_forward_nchw.1} parent=71 // pred_region
        %s12166 = smul.u32 8, %s29
        %p12167 = scmp.lt.s32.totalorder %s28, 1
        %s12168 = scalar_select %p12167, %s28, 1
        %p12169 = scmp.lt.s32.totalorder %s12166, 15
        %s12170 = scalar_select %p12169, %s12166, 15
        %s12171 = smul.addr %s12170, 2
        %s12172 = smul.addr %s12168, 32
        %s12173 = sadd.s32 %s12171, %s12172
        %s12174 = smul.addr %s12173, 8
        %s12175 = scalar_lea.vmem %s11, %s12174
      $region76: #{denoise_rdb_forward_nchw.1} parent=71 // pred_fallthru
        _
    $region72: #{denoise_rdb_forward_nchw.1} parent=5 // pred_fallthru
      _
  $region6: #{denoise_rdb_forward_nchw.1} parent=0 // loop_footer
    %s21 = sadd.s32 1, %s17
  $region7: #{denoise_rdb_forward_nchw.1} parent=0 // loop_footer_branch
    %16 = sbr.rel target = $region3
  $region8: #{denoise_rdb_forward_nchw.1} parent=0 // loop_exit
    _

</llo_original>
